<compile_context>
chip_gen: v5e
topology: v5e:2x2
jax: 0.10.0
libtpu: 0.0.40
codegen_flags: <defaults>
</compile_context>

<pallas_src>
import math

import jax
import jax.numpy as jnp
from jax.experimental import pallas as pl
from jax.experimental.pallas import tpu as pltpu

LEAKY_SLOPE = 0.01            # PyTorch nn.LeakyReLU default negative_slope
WEIGHT_DTYPE = jnp.bfloat16
BIG_WEIGHT_ELEMS = 512 * 1024  # weights at/above this size use manual DMA overlap


def layer_sizes(in_shape, out_shape):
    return [in_shape, 64, 128, 256, 512, 1024, 1024, 512, 256, 128, 64, out_shape]


def make_kernel(n_layers, big_layers, bias_offs, bias_ns, n_small, n_big):
    """Build the fused kernel body with static layer metadata baked in."""
    big_slot = {layer: j for j, layer in enumerate(big_layers)}

    def kernel(*refs):
        # refs = (x, packed_bias, small_w..., big_w_hbm..., o,
        #         big_w_vmem..., dma_sem)
        x_ref = refs[0]
        bias_ref = refs[1]
        small_w = refs[2:2 + n_small]
        big_hbm = refs[2 + n_small:2 + n_small + n_big]
        o_ref = refs[2 + n_small + n_big]
        big_vmem = refs[3 + n_small + n_big:3 + n_small + 2 * n_big]
        sem = refs[3 + n_small + 2 * n_big]

        # Kick off ALL big-weight HBM->VMEM copies now; wait right before the
        # layer that consumes each one, so the transfers hide behind the
        # earlier small-layer compute (manual double-buffer-style overlap).
        copies = []
        for j in range(n_big):
            cp = pltpu.make_async_copy(big_hbm[j], big_vmem[j], sem.at[j])
            cp.start()
            copies.append(cp)

        h = x_ref[...]                                   # (M, K0) f32
        si = 0
        for i in range(n_layers):
            if i in big_slot:
                j = big_slot[i]
                copies[j].wait()
                w = big_vmem[j][...]                     # (K, N) bf16
            else:
                w = small_w[si][...]
                si += 1
            b = bias_ref[:, pl.ds(bias_offs[i], bias_ns[i])]   # (1, N) f32
            y = jnp.dot(h.astype(w.dtype), w,
                        preferred_element_type=jnp.float32) + b
            if i < n_layers - 1:
                y = jnp.maximum(y, LEAKY_SLOPE * y)      # LeakyReLU (one VALU op)
                h = y.astype(WEIGHT_DTYPE)               # single explicit cast
            else:
                h = y
        o_ref[...] = h.astype(o_ref.dtype)

    return kernel


def nett_forward(x, params):
    """x: (M, in_shape) f32; params: list of (W_bf16 (fan_in, fan_out), b_f32 (fan_out,))."""
    M = x.shape[0]
    n_layers = len(params)
    n_out = params[-1][0].shape[1]

    # --- Pack all biases into one lane(128)-aligned buffer (single DMA). ---
    bias_offs, bias_ns = [], []
    off = 0
    for _, b in params:
        bias_offs.append(off)
        bias_ns.append(b.shape[0])
        off += ((b.shape[0] + 127) // 128) * 128
    packed_bias = jnp.zeros((1, off), jnp.float32)
    for (_, b), o in zip(params, bias_offs):
        packed_bias = packed_bias.at[0, o:o + b.shape[0]].set(b)

    # --- Split weights: big ones get manual DMA overlap, small ones ride the
    #     normal pallas input DMA (auto VMEM residents). ---
    big_layers = tuple(i for i, (w, _) in enumerate(params)
                       if w.size >= BIG_WEIGHT_ELEMS)
    small_ws = [params[i][0] for i in range(n_layers) if i not in big_layers]
    big_ws = [params[i][0] for i in big_layers]
    n_small, n_big = len(small_ws), len(big_ws)

    kernel = make_kernel(n_layers, big_layers, tuple(bias_offs), tuple(bias_ns),
                         n_small, n_big)

    vmem = pl.BlockSpec(memory_space=pltpu.MemorySpace.VMEM)
    hbm = pl.BlockSpec(memory_space=pl.ANY)

    scratch = [pltpu.VMEM(w.shape, w.dtype) for w in big_ws]
    scratch.append(pltpu.SemaphoreType.DMA((n_big,)))

    # NOTE: at batch=2 no grid is used on purpose (one TC, no pipeline
    # bookkeeping). For large batches, add a leading "parallel" M-tile grid
    # axis over x / out to engage v7x's second TensorCore.
    return pl.pallas_call(
        kernel,
        out_shape=jax.ShapeDtypeStruct((M, n_out), jnp.float32),
        in_specs=[vmem, vmem] + [vmem] * n_small + [hbm] * n_big,
        out_specs=vmem,
        scratch_shapes=scratch,
        compiler_params=pltpu.CompilerParams(
            vmem_limit_bytes=16 * 1024 * 1024),
    )(x, packed_bias, *small_ws, *big_ws)


def init_params(in_shape, out_shape, key):
    """PyTorch nn.Linear-style init: U(-1/sqrt(fan_in), 1/sqrt(fan_in)).
    Weights are stored (fan_in, fan_out) — i.e. already transposed relative to
    nn.Linear's (out, in) storage — and cast once to bf16; biases stay f32."""
    sizes = layer_sizes(in_shape, out_shape)
    params = []
    for i in range(len(sizes) - 1):
        fan_in, fan_out = sizes[i], sizes[i + 1]
        key, kw, kb = jax.random.split(key, 3)
        bound = 1.0 / math.sqrt(fan_in)
        w = jax.random.uniform(kw, (fan_in, fan_out), jnp.float32,
                               minval=-bound, maxval=bound).astype(WEIGHT_DTYPE)
        b = jax.random.uniform(kb, (fan_out,), jnp.float32,
                               minval=-bound, maxval=bound)
        params.append((w, b))
    return params


def nett_reference(x, params):
    """Pure-JAX reference with identical numerics (bf16 weights/activations,
    f32 bias + accumulation) for correctness checking."""
    h = x
    n_layers = len(params)
    for i, (w, b) in enumerate(params):
        y = jnp.dot(h.astype(w.dtype), w,
                    preferred_element_type=jnp.float32) + b[None, :]
        if i < n_layers - 1:
            y = jnp.maximum(y, LEAKY_SLOPE * y)
            h = y.astype(WEIGHT_DTYPE)
        else:
            h = y
    return h


if __name__ == "__main__":
    in_shape, out_shape, batch = 32, 16, 2

    key = jax.random.PRNGKey(0)
    key, kx = jax.random.split(key)
    x = jax.random.normal(kx, (batch, in_shape), dtype=jnp.float32)

    params = init_params(in_shape, out_shape, key)

    out = jax.block_until_ready(nett_forward(x, params))
    ref = nett_reference(x, params)

    assert out.shape == (batch, out_shape)
    assert jnp.allclose(out, ref, atol=1e-2, rtol=1e-2), (
        float(jnp.max(jnp.abs(out - ref))))

    print("KERNEL_OK")
</pallas_src>

<mosaic_0001>
module attributes {stable_mosaic.version = 11 : i64} {
  func.func @kernel(%arg0: memref<2x32xf32, #tpu.memory_space<vmem>>, %arg1: memref<1x4224xf32, #tpu.memory_space<vmem>>, %arg2: memref<32x64xbf16, #tpu.memory_space<vmem>>, %arg3: memref<64x128xbf16, #tpu.memory_space<vmem>>, %arg4: memref<128x256xbf16, #tpu.memory_space<vmem>>, %arg5: memref<256x512xbf16, #tpu.memory_space<vmem>>, %arg6: memref<512x256xbf16, #tpu.memory_space<vmem>>, %arg7: memref<256x128xbf16, #tpu.memory_space<vmem>>, %arg8: memref<128x64xbf16, #tpu.memory_space<vmem>>, %arg9: memref<64x16xbf16, #tpu.memory_space<vmem>>, %arg10: memref<512x1024xbf16, #tpu.memory_space<any>>, %arg11: memref<1024x1024xbf16, #tpu.memory_space<any>>, %arg12: memref<1024x512xbf16, #tpu.memory_space<any>>, %arg13: memref<2x16xf32, #tpu.memory_space<vmem>>, %arg14: memref<512x1024xbf16, #tpu.memory_space<vmem>>, %arg15: memref<1024x1024xbf16, #tpu.memory_space<vmem>>, %arg16: memref<1024x512xbf16, #tpu.memory_space<vmem>>, %arg17: memref<3x!tpu.dma_semaphore, #tpu.memory_space<semaphore_mem>>) attributes {dimension_semantics = [], scalar_prefetch = 0 : i64, scratch_operands = 4 : i64, tpu.core_type = #tpu.core_type<tc>} {
    %c0_i32 = arith.constant 0 : i32
    %0 = tpu.memref_slice %arg17[%c0_i32] : memref<3x!tpu.dma_semaphore, #tpu.memory_space<semaphore_mem>> -> memref<1x!tpu.dma_semaphore, #tpu.memory_space<semaphore_mem>>
    %1 = tpu.memref_squeeze %0 : memref<1x!tpu.dma_semaphore, #tpu.memory_space<semaphore_mem>> -> memref<!tpu.dma_semaphore, #tpu.memory_space<semaphore_mem>>
    tpu.enqueue_dma source(%arg10 : memref<512x1024xbf16, #tpu.memory_space<any>>) target(%arg14 : memref<512x1024xbf16, #tpu.memory_space<vmem>>) target_semaphore(%1 : memref<!tpu.dma_semaphore, #tpu.memory_space<semaphore_mem>>)
    %c1_i32 = arith.constant 1 : i32
    %2 = tpu.memref_slice %arg17[%c1_i32] : memref<3x!tpu.dma_semaphore, #tpu.memory_space<semaphore_mem>> -> memref<1x!tpu.dma_semaphore, #tpu.memory_space<semaphore_mem>>
    %3 = tpu.memref_squeeze %2 : memref<1x!tpu.dma_semaphore, #tpu.memory_space<semaphore_mem>> -> memref<!tpu.dma_semaphore, #tpu.memory_space<semaphore_mem>>
    tpu.enqueue_dma source(%arg11 : memref<1024x1024xbf16, #tpu.memory_space<any>>) target(%arg15 : memref<1024x1024xbf16, #tpu.memory_space<vmem>>) target_semaphore(%3 : memref<!tpu.dma_semaphore, #tpu.memory_space<semaphore_mem>>)
    %c2_i32 = arith.constant 2 : i32
    %4 = tpu.memref_slice %arg17[%c2_i32] : memref<3x!tpu.dma_semaphore, #tpu.memory_space<semaphore_mem>> -> memref<1x!tpu.dma_semaphore, #tpu.memory_space<semaphore_mem>>
    %5 = tpu.memref_squeeze %4 : memref<1x!tpu.dma_semaphore, #tpu.memory_space<semaphore_mem>> -> memref<!tpu.dma_semaphore, #tpu.memory_space<semaphore_mem>>
    tpu.enqueue_dma source(%arg12 : memref<1024x512xbf16, #tpu.memory_space<any>>) target(%arg16 : memref<1024x512xbf16, #tpu.memory_space<vmem>>) target_semaphore(%5 : memref<!tpu.dma_semaphore, #tpu.memory_space<semaphore_mem>>)
    %c0 = arith.constant 0 : index
    %c0_0 = arith.constant 0 : index
    %6 = vector.load %arg0[%c0, %c0_0] : memref<2x32xf32, #tpu.memory_space<vmem>>, vector<2x32xf32>
    %c0_1 = arith.constant 0 : index
    %c0_2 = arith.constant 0 : index
    %7 = vector.load %arg2[%c0_1, %c0_2] : memref<32x64xbf16, #tpu.memory_space<vmem>>, vector<32x64xbf16>
    %c0_3 = arith.constant 0 : index
    %c0_4 = arith.constant 0 : index
    %8 = vector.load %arg1[%c0_3, %c0_4] : memref<1x4224xf32, #tpu.memory_space<vmem>>, vector<1x64xf32>
    %9 = arith.truncf %6 : vector<2x32xf32> to vector<2x32xbf16>
    %cst = arith.constant dense<0.000000e+00> : vector<2x64xf32>
    %10 = tpu.matmul %9, %7, %cst {dimension_numbers = #tpu.dot_dimension_numbers<[1], [0], [0], [1], [0, 0, 1, 1], [], []>} : vector<2x32xbf16>, vector<32x64xbf16>, vector<2x64xf32> -> vector<2x64xf32>
    %11 = vector.broadcast %8 : vector<1x64xf32> to vector<2x64xf32>
    %12 = arith.addf %10, %11 : vector<2x64xf32>
    %cst_5 = arith.constant 0.00999999977 : f32
    %13 = vector.broadcast %cst_5 : f32 to vector<2x64xf32>
    %14 = arith.mulf %13, %12 : vector<2x64xf32>
    %15 = arith.maximumf %12, %14 : vector<2x64xf32>
    %16 = arith.truncf %15 : vector<2x64xf32> to vector<2x64xbf16>
    %c0_6 = arith.constant 0 : index
    %c0_7 = arith.constant 0 : index
    %17 = vector.load %arg3[%c0_6, %c0_7] : memref<64x128xbf16, #tpu.memory_space<vmem>>, vector<64x128xbf16>
    %c0_8 = arith.constant 0 : index
    %c128 = arith.constant 128 : index
    %18 = vector.load %arg1[%c0_8, %c128] : memref<1x4224xf32, #tpu.memory_space<vmem>>, vector<1x128xf32>
    %cst_9 = arith.constant dense<0.000000e+00> : vector<2x128xf32>
    %19 = tpu.matmul %16, %17, %cst_9 {dimension_numbers = #tpu.dot_dimension_numbers<[1], [0], [0], [1], [0, 0, 1, 1], [], []>} : vector<2x64xbf16>, vector<64x128xbf16>, vector<2x128xf32> -> vector<2x128xf32>
    %20 = vector.broadcast %18 : vector<1x128xf32> to vector<2x128xf32>
    %21 = arith.addf %19, %20 : vector<2x128xf32>
    %cst_10 = arith.constant 0.00999999977 : f32
    %22 = vector.broadcast %cst_10 : f32 to vector<2x128xf32>
    %23 = arith.mulf %22, %21 : vector<2x128xf32>
    %24 = arith.maximumf %21, %23 : vector<2x128xf32>
    %25 = arith.truncf %24 : vector<2x128xf32> to vector<2x128xbf16>
    %c0_11 = arith.constant 0 : index
    %c0_12 = arith.constant 0 : index
    %26 = vector.load %arg4[%c0_11, %c0_12] : memref<128x256xbf16, #tpu.memory_space<vmem>>, vector<128x256xbf16>
    %c0_13 = arith.constant 0 : index
    %c256 = arith.constant 256 : index
    %27 = vector.load %arg1[%c0_13, %c256] : memref<1x4224xf32, #tpu.memory_space<vmem>>, vector<1x256xf32>
    %cst_14 = arith.constant dense<0.000000e+00> : vector<2x256xf32>
    %28 = tpu.matmul %25, %26, %cst_14 {dimension_numbers = #tpu.dot_dimension_numbers<[1], [0], [0], [1], [0, 0, 1, 1], [], []>} : vector<2x128xbf16>, vector<128x256xbf16>, vector<2x256xf32> -> vector<2x256xf32>
    %29 = vector.broadcast %27 : vector<1x256xf32> to vector<2x256xf32>
    %30 = arith.addf %28, %29 : vector<2x256xf32>
    %cst_15 = arith.constant 0.00999999977 : f32
    %31 = vector.broadcast %cst_15 : f32 to vector<2x256xf32>
    %32 = arith.mulf %31, %30 : vector<2x256xf32>
    %33 = arith.maximumf %30, %32 : vector<2x256xf32>
    %34 = arith.truncf %33 : vector<2x256xf32> to vector<2x256xbf16>
    %c0_16 = arith.constant 0 : index
    %c0_17 = arith.constant 0 : index
    %35 = vector.load %arg5[%c0_16, %c0_17] : memref<256x512xbf16, #tpu.memory_space<vmem>>, vector<256x512xbf16>
    %c0_18 = arith.constant 0 : index
    %c512 = arith.constant 512 : index
    %36 = vector.load %arg1[%c0_18, %c512] : memref<1x4224xf32, #tpu.memory_space<vmem>>, vector<1x512xf32>
    %cst_19 = arith.constant dense<0.000000e+00> : vector<2x512xf32>
    %37 = tpu.matmul %34, %35, %cst_19 {dimension_numbers = #tpu.dot_dimension_numbers<[1], [0], [0], [1], [0, 0, 1, 1], [], []>} : vector<2x256xbf16>, vector<256x512xbf16>, vector<2x512xf32> -> vector<2x512xf32>
    %38 = vector.broadcast %36 : vector<1x512xf32> to vector<2x512xf32>
    %39 = arith.addf %37, %38 : vector<2x512xf32>
    %cst_20 = arith.constant 0.00999999977 : f32
    %40 = vector.broadcast %cst_20 : f32 to vector<2x512xf32>
    %41 = arith.mulf %40, %39 : vector<2x512xf32>
    %42 = arith.maximumf %39, %41 : vector<2x512xf32>
    %43 = arith.truncf %42 : vector<2x512xf32> to vector<2x512xbf16>
    %c0_i32_21 = arith.constant 0 : i32
    %44 = tpu.memref_slice %arg17[%c0_i32_21] : memref<3x!tpu.dma_semaphore, #tpu.memory_space<semaphore_mem>> -> memref<1x!tpu.dma_semaphore, #tpu.memory_space<semaphore_mem>>
    %45 = tpu.memref_squeeze %44 : memref<1x!tpu.dma_semaphore, #tpu.memory_space<semaphore_mem>> -> memref<!tpu.dma_semaphore, #tpu.memory_space<semaphore_mem>>
    tpu.wait_dma2 semaphore(%45 : memref<!tpu.dma_semaphore, #tpu.memory_space<semaphore_mem>>) src(%arg10 : memref<512x1024xbf16, #tpu.memory_space<any>>) dst(%arg14 : memref<512x1024xbf16, #tpu.memory_space<vmem>>)
    %c0_22 = arith.constant 0 : index
    %c0_23 = arith.constant 0 : index
    %46 = vector.load %arg14[%c0_22, %c0_23] : memref<512x1024xbf16, #tpu.memory_space<vmem>>, vector<512x1024xbf16>
    %c0_24 = arith.constant 0 : index
    %c1024 = arith.constant 1024 : index
    %47 = vector.load %arg1[%c0_24, %c1024] : memref<1x4224xf32, #tpu.memory_space<vmem>>, vector<1x1024xf32>
    %cst_25 = arith.constant dense<0.000000e+00> : vector<2x1024xf32>
    %48 = tpu.matmul %43, %46, %cst_25 {dimension_numbers = #tpu.dot_dimension_numbers<[1], [0], [0], [1], [0, 0, 1, 1], [], []>} : vector<2x512xbf16>, vector<512x1024xbf16>, vector<2x1024xf32> -> vector<2x1024xf32>
    %49 = vector.broadcast %47 : vector<1x1024xf32> to vector<2x1024xf32>
    %50 = arith.addf %48, %49 : vector<2x1024xf32>
    %cst_26 = arith.constant 0.00999999977 : f32
    %51 = vector.broadcast %cst_26 : f32 to vector<2x1024xf32>
    %52 = arith.mulf %51, %50 : vector<2x1024xf32>
    %53 = arith.maximumf %50, %52 : vector<2x1024xf32>
    %54 = arith.truncf %53 : vector<2x1024xf32> to vector<2x1024xbf16>
    %c1_i32_27 = arith.constant 1 : i32
    %55 = tpu.memref_slice %arg17[%c1_i32_27] : memref<3x!tpu.dma_semaphore, #tpu.memory_space<semaphore_mem>> -> memref<1x!tpu.dma_semaphore, #tpu.memory_space<semaphore_mem>>
    %56 = tpu.memref_squeeze %55 : memref<1x!tpu.dma_semaphore, #tpu.memory_space<semaphore_mem>> -> memref<!tpu.dma_semaphore, #tpu.memory_space<semaphore_mem>>
    tpu.wait_dma2 semaphore(%56 : memref<!tpu.dma_semaphore, #tpu.memory_space<semaphore_mem>>) src(%arg11 : memref<1024x1024xbf16, #tpu.memory_space<any>>) dst(%arg15 : memref<1024x1024xbf16, #tpu.memory_space<vmem>>)
    %c0_28 = arith.constant 0 : index
    %c0_29 = arith.constant 0 : index
    %57 = vector.load %arg15[%c0_28, %c0_29] : memref<1024x1024xbf16, #tpu.memory_space<vmem>>, vector<1024x1024xbf16>
    %c0_30 = arith.constant 0 : index
    %c2048 = arith.constant 2048 : index
    %58 = vector.load %arg1[%c0_30, %c2048] : memref<1x4224xf32, #tpu.memory_space<vmem>>, vector<1x1024xf32>
    %cst_31 = arith.constant dense<0.000000e+00> : vector<2x1024xf32>
    %59 = tpu.matmul %54, %57, %cst_31 {dimension_numbers = #tpu.dot_dimension_numbers<[1], [0], [0], [1], [0, 0, 1, 1], [], []>} : vector<2x1024xbf16>, vector<1024x1024xbf16>, vector<2x1024xf32> -> vector<2x1024xf32>
    %60 = vector.broadcast %58 : vector<1x1024xf32> to vector<2x1024xf32>
    %61 = arith.addf %59, %60 : vector<2x1024xf32>
    %cst_32 = arith.constant 0.00999999977 : f32
    %62 = vector.broadcast %cst_32 : f32 to vector<2x1024xf32>
    %63 = arith.mulf %62, %61 : vector<2x1024xf32>
    %64 = arith.maximumf %61, %63 : vector<2x1024xf32>
    %65 = arith.truncf %64 : vector<2x1024xf32> to vector<2x1024xbf16>
    %c2_i32_33 = arith.constant 2 : i32
    %66 = tpu.memref_slice %arg17[%c2_i32_33] : memref<3x!tpu.dma_semaphore, #tpu.memory_space<semaphore_mem>> -> memref<1x!tpu.dma_semaphore, #tpu.memory_space<semaphore_mem>>
    %67 = tpu.memref_squeeze %66 : memref<1x!tpu.dma_semaphore, #tpu.memory_space<semaphore_mem>> -> memref<!tpu.dma_semaphore, #tpu.memory_space<semaphore_mem>>
    tpu.wait_dma2 semaphore(%67 : memref<!tpu.dma_semaphore, #tpu.memory_space<semaphore_mem>>) src(%arg12 : memref<1024x512xbf16, #tpu.memory_space<any>>) dst(%arg16 : memref<1024x512xbf16, #tpu.memory_space<vmem>>)
    %c0_34 = arith.constant 0 : index
    %c0_35 = arith.constant 0 : index
    %68 = vector.load %arg16[%c0_34, %c0_35] : memref<1024x512xbf16, #tpu.memory_space<vmem>>, vector<1024x512xbf16>
    %c0_36 = arith.constant 0 : index
    %c3072 = arith.constant 3072 : index
    %69 = vector.load %arg1[%c0_36, %c3072] : memref<1x4224xf32, #tpu.memory_space<vmem>>, vector<1x512xf32>
    %cst_37 = arith.constant dense<0.000000e+00> : vector<2x512xf32>
    %70 = tpu.matmul %65, %68, %cst_37 {dimension_numbers = #tpu.dot_dimension_numbers<[1], [0], [0], [1], [0, 0, 1, 1], [], []>} : vector<2x1024xbf16>, vector<1024x512xbf16>, vector<2x512xf32> -> vector<2x512xf32>
    %71 = vector.broadcast %69 : vector<1x512xf32> to vector<2x512xf32>
    %72 = arith.addf %70, %71 : vector<2x512xf32>
    %cst_38 = arith.constant 0.00999999977 : f32
    %73 = vector.broadcast %cst_38 : f32 to vector<2x512xf32>
    %74 = arith.mulf %73, %72 : vector<2x512xf32>
    %75 = arith.maximumf %72, %74 : vector<2x512xf32>
    %76 = arith.truncf %75 : vector<2x512xf32> to vector<2x512xbf16>
    %c0_39 = arith.constant 0 : index
    %c0_40 = arith.constant 0 : index
    %77 = vector.load %arg6[%c0_39, %c0_40] : memref<512x256xbf16, #tpu.memory_space<vmem>>, vector<512x256xbf16>
    %c0_41 = arith.constant 0 : index
    %c3584 = arith.constant 3584 : index
    %78 = vector.load %arg1[%c0_41, %c3584] : memref<1x4224xf32, #tpu.memory_space<vmem>>, vector<1x256xf32>
    %cst_42 = arith.constant dense<0.000000e+00> : vector<2x256xf32>
    %79 = tpu.matmul %76, %77, %cst_42 {dimension_numbers = #tpu.dot_dimension_numbers<[1], [0], [0], [1], [0, 0, 1, 1], [], []>} : vector<2x512xbf16>, vector<512x256xbf16>, vector<2x256xf32> -> vector<2x256xf32>
    %80 = vector.broadcast %78 : vector<1x256xf32> to vector<2x256xf32>
    %81 = arith.addf %79, %80 : vector<2x256xf32>
    %cst_43 = arith.constant 0.00999999977 : f32
    %82 = vector.broadcast %cst_43 : f32 to vector<2x256xf32>
    %83 = arith.mulf %82, %81 : vector<2x256xf32>
    %84 = arith.maximumf %81, %83 : vector<2x256xf32>
    %85 = arith.truncf %84 : vector<2x256xf32> to vector<2x256xbf16>
    %c0_44 = arith.constant 0 : index
    %c0_45 = arith.constant 0 : index
    %86 = vector.load %arg7[%c0_44, %c0_45] : memref<256x128xbf16, #tpu.memory_space<vmem>>, vector<256x128xbf16>
    %c0_46 = arith.constant 0 : index
    %c3840 = arith.constant 3840 : index
    %87 = vector.load %arg1[%c0_46, %c3840] : memref<1x4224xf32, #tpu.memory_space<vmem>>, vector<1x128xf32>
    %cst_47 = arith.constant dense<0.000000e+00> : vector<2x128xf32>
    %88 = tpu.matmul %85, %86, %cst_47 {dimension_numbers = #tpu.dot_dimension_numbers<[1], [0], [0], [1], [0, 0, 1, 1], [], []>} : vector<2x256xbf16>, vector<256x128xbf16>, vector<2x128xf32> -> vector<2x128xf32>
    %89 = vector.broadcast %87 : vector<1x128xf32> to vector<2x128xf32>
    %90 = arith.addf %88, %89 : vector<2x128xf32>
    %cst_48 = arith.constant 0.00999999977 : f32
    %91 = vector.broadcast %cst_48 : f32 to vector<2x128xf32>
    %92 = arith.mulf %91, %90 : vector<2x128xf32>
    %93 = arith.maximumf %90, %92 : vector<2x128xf32>
    %94 = arith.truncf %93 : vector<2x128xf32> to vector<2x128xbf16>
    %c0_49 = arith.constant 0 : index
    %c0_50 = arith.constant 0 : index
    %95 = vector.load %arg8[%c0_49, %c0_50] : memref<128x64xbf16, #tpu.memory_space<vmem>>, vector<128x64xbf16>
    %c0_51 = arith.constant 0 : index
    %c3968 = arith.constant 3968 : index
    %96 = vector.load %arg1[%c0_51, %c3968] : memref<1x4224xf32, #tpu.memory_space<vmem>>, vector<1x64xf32>
    %cst_52 = arith.constant dense<0.000000e+00> : vector<2x64xf32>
    %97 = tpu.matmul %94, %95, %cst_52 {dimension_numbers = #tpu.dot_dimension_numbers<[1], [0], [0], [1], [0, 0, 1, 1], [], []>} : vector<2x128xbf16>, vector<128x64xbf16>, vector<2x64xf32> -> vector<2x64xf32>
    %98 = vector.broadcast %96 : vector<1x64xf32> to vector<2x64xf32>
    %99 = arith.addf %97, %98 : vector<2x64xf32>
    %cst_53 = arith.constant 0.00999999977 : f32
    %100 = vector.broadcast %cst_53 : f32 to vector<2x64xf32>
    %101 = arith.mulf %100, %99 : vector<2x64xf32>
    %102 = arith.maximumf %99, %101 : vector<2x64xf32>
    %103 = arith.truncf %102 : vector<2x64xf32> to vector<2x64xbf16>
    %c0_54 = arith.constant 0 : index
    %c0_55 = arith.constant 0 : index
    %104 = vector.load %arg9[%c0_54, %c0_55] : memref<64x16xbf16, #tpu.memory_space<vmem>>, vector<64x16xbf16>
    %c0_56 = arith.constant 0 : index
    %c4096 = arith.constant 4096 : index
    %105 = vector.load %arg1[%c0_56, %c4096] : memref<1x4224xf32, #tpu.memory_space<vmem>>, vector<1x16xf32>
    %cst_57 = arith.constant dense<0.000000e+00> : vector<2x16xf32>
    %106 = tpu.matmul %103, %104, %cst_57 {dimension_numbers = #tpu.dot_dimension_numbers<[1], [0], [0], [1], [0, 0, 1, 1], [], []>} : vector<2x64xbf16>, vector<64x16xbf16>, vector<2x16xf32> -> vector<2x16xf32>
    %107 = vector.broadcast %105 : vector<1x16xf32> to vector<2x16xf32>
    %108 = arith.addf %106, %107 : vector<2x16xf32>
    %c0_58 = arith.constant 0 : index
    %c0_59 = arith.constant 0 : index
    %109 = vector.load %arg13[%c0_58, %c0_59] : memref<2x16xf32, #tpu.memory_space<vmem>>, vector<2x16xf32>
    tpu.vector_store %arg13[%c0_58, %c0_59], %108 {strides = array<i32>} : memref<2x16xf32, #tpu.memory_space<vmem>>, vector<2x16xf32>,
    return
  }
}

</mosaic_0001>

<llo_original>
// kernel: tpu_custom_call.1
$region0: #{tpu_custom_call.1}
  #allocation0 [shape = 'u32[]', space=smem, size = 0x4, offset = 0x4, fixed_abs, tag = 'smem constant byte address 0x4 - core index']
  #allocation1 [shape = 'u32[72,128]{1,0:T(1,128)}', space=vmem, size = 0x9000, scoped, tag = 'internal scratch']
  #allocation2 [shape = 'bf16[512,1024]{1,0:T(8,128)(2,1)}', space=vmem, size = 0x100000, scoped, tag = 'scratch operand']
  #allocation3 [shape = 'bf16[1024,1024]{1,0:T(8,128)(2,1)}', space=vmem, size = 0x200000, scoped, tag = 'scratch operand']
  #allocation4 [shape = 'bf16[1024,512]{1,0:T(8,128)(2,1)}', space=vmem, size = 0x100000, scoped, tag = 'scratch operand']
  #allocation5 [shape = 's32[3]{0}', space=sflag, size = 0xc, scoped, tag = 'scratch operand']
  #allocation21 [shape = 's32[]', space=sflag, size = 0x4, offset = 0, fixed_abs, tag = 'sflag constant byte address 0x0 - dummy sync flag']
  #allocation22 [shape = 's32[]', space=sflag, size = 0x4, offset = 0, fixed_abs, tag = 'sflag constant byte address 0x0 - dummy sync flag']
  #allocation23 [shape = 'u32[]', space=smem, size = 0x4, offset = 0x44, fixed_abs, tag = 'smem constant byte address 0x44 - assertion arg 0']
  #allocation24 [shape = 'u32[]', space=smem, size = 0x4, offset = 0x48, fixed_abs, tag = 'smem constant byte address 0x48 - assertion arg 1']
  #allocation25 [shape = 's32[]', space=sflag, size = 0x4, offset = 0, fixed_abs, tag = 'sflag constant byte address 0x0 - dummy sync flag']
  #allocation26 [shape = 's32[]', space=sflag, size = 0x4, offset = 0, fixed_abs, tag = 'sflag constant byte address 0x0 - dummy sync flag']
  #allocation27 [shape = 's32[]', space=sflag, size = 0x4, offset = 0, fixed_abs, tag = 'sflag constant byte address 0x0 - dummy sync flag']
  #allocation28 [shape = 's32[]', space=sflag, size = 0x4, offset = 0, fixed_abs, tag = 'sflag constant byte address 0x0 - dummy sync flag']
  %s0 = inlined_call_operand.hbm [shape: f32[2,32], index: 0, kind: input, shape index: {}]
  %s1 = inlined_call_operand.hbm [shape: f32[1,4224], index: 1, kind: input, shape index: {}]
  %s2 = inlined_call_operand.hbm [shape: bf16[32,64], index: 2, kind: input, shape index: {}]
  %s3 = inlined_call_operand.hbm [shape: bf16[64,128], index: 3, kind: input, shape index: {}]
  %s4 = inlined_call_operand.hbm [shape: bf16[128,256], index: 4, kind: input, shape index: {}]
  %s5 = inlined_call_operand.hbm [shape: bf16[256,512], index: 5, kind: input, shape index: {}]
  %s6 = inlined_call_operand.hbm [shape: bf16[512,256], index: 6, kind: input, shape index: {}]
  %s7 = inlined_call_operand.hbm [shape: bf16[256,128], index: 7, kind: input, shape index: {}]
  %s8 = inlined_call_operand.vmem [shape: bf16[128,64], index: 8, kind: input, shape index: {}]
  %s9 = inlined_call_operand.vmem [shape: bf16[64,16], index: 9, kind: input, shape index: {}]
  %s10 = inlined_call_operand.hbm [shape: bf16[512,1024], index: 10, kind: input, shape index: {}]
  %s11 = inlined_call_operand.hbm [shape: bf16[1024,1024], index: 11, kind: input, shape index: {}]
  %s12 = inlined_call_operand.hbm [shape: bf16[1024,512], index: 12, kind: input, shape index: {}]
  %s13 = inlined_call_operand.hbm [shape: f32[2,16], index: 13, kind: output, shape index: {}]
  %s14 = sld [smem:[#allocation0]]
  $region94: #{tpu_custom_call.1} parent=0
    _
  %s16 = ssub.s32 1, %s14
  %s17 = scalar_select 0, %s16, %s14
  $region1: #{tpu_custom_call.1} parent=0
    #allocation6 [shape = 'u8[1024]{0}', space=vmem, size = 0x400, scoped, tag = 'input window, operand 0, single buffered']
    #allocation7 [shape = 's32[1]{0}', space=sflag, size = 0x4, scoped, tag = 'scoped memory for tpu_custom_call.1']
    #allocation8 [shape = 's32[1]{0}', space=sflag, size = 0x4, scoped, tag = 'scoped memory for tpu_custom_call.1']
    #allocation9 [shape = 'u8[16896]{0}', space=vmem, size = 0x4400, scoped, tag = 'input window, operand 1, single buffered']
    #allocation10 [shape = 's32[1]{0}', space=sflag, size = 0x4, scoped, tag = 'scoped memory for tpu_custom_call.1']
    #allocation11 [shape = 'u8[8192]{0}', space=vmem, size = 0x2000, scoped, tag = 'input window, operand 2, single buffered']
    #allocation12 [shape = 'u8[16384]{0}', space=vmem, size = 0x4000, scoped, tag = 'input window, operand 3, single buffered']
    #allocation13 [shape = 's32[1]{0}', space=sflag, size = 0x4, scoped, tag = 'scoped memory for tpu_custom_call.1']
    #allocation14 [shape = 'u8[65536]{0}', space=vmem, size = 0x10000, scoped, tag = 'input window, operand 4, single buffered']
    #allocation15 [shape = 'u8[262144]{0}', space=vmem, size = 0x40000, scoped, tag = 'input window, operand 5, single buffered']
    #allocation16 [shape = 's32[1]{0}', space=sflag, size = 0x4, scoped, tag = 'scoped memory for tpu_custom_call.1']
    #allocation17 [shape = 'u8[262144]{0}', space=vmem, size = 0x40000, scoped, tag = 'input window, operand 6, single buffered']
    #allocation18 [shape = 'u8[65536]{0}', space=vmem, size = 0x10000, scoped, tag = 'input window, operand 7, single buffered']
    #allocation19 [shape = 's32[1]{0}', space=sflag, size = 0x4, scoped, tag = 'scoped memory for tpu_custom_call.1']
    #allocation20 [shape = 'u8[1024]{0}', space=vmem, size = 0x400, scoped, tag = 'output window, operand 0, single buffered']
    %18 = vsyncpa [#allocation7], 0
    %19 = vsyncpa [#allocation10], 0
    %20 = vsyncpa [#allocation13], 0
    %21 = vsyncpa [#allocation16], 0
    %22 = vsyncpa [#allocation19], 0
    %23 = vsyncpa [#allocation8], 0
    // Predicated region
    $region2: #{tpu_custom_call.1} parent=1 // pred_check
      _
    $region3: #{tpu_custom_call.1} parent=1 // pred_check_branch
      %25 = sbr.rel (0) target = $region5
    $region4: #{tpu_custom_call.1} parent=1 // pred_region
      %27 = vsyncadd [#allocation7], 0
      %s29 = sshll.u32 %s0, 4
      %s30 = int_to_ptr.hbm [resolvable:$true] %s29
      %s31 = sshll.u32 [#allocation6], 4
      %s32 = int_to_ptr.vmem [resolvable:$true] %s31
      %34 = dma.hbm_to_vmem [thread:$0]  %s30, 32, %s32, [#allocation7]
    $region5: #{tpu_custom_call.1} parent=1 // pred_fallthru
      _
    // Predicated region
    $region6: #{tpu_custom_call.1} parent=1 // pred_check
      _
    $region7: #{tpu_custom_call.1} parent=1 // pred_check_branch
      %36 = sbr.rel (0) target = $region9
    $region8: #{tpu_custom_call.1} parent=1 // pred_region
      %38 = vsyncadd [#allocation10], 0
      %s40 = sshll.u32 %s1, 4
      %s41 = int_to_ptr.hbm [resolvable:$true] %s40
      %s42 = sshll.u32 [#allocation9], 4
      %s43 = int_to_ptr.vmem [resolvable:$true] %s42
      %45 = dma.hbm_to_vmem [thread:$0]  %s41, 528, %s43, [#allocation10]
    $region9: #{tpu_custom_call.1} parent=1 // pred_fallthru
      _
    // Predicated region
    $region10: #{tpu_custom_call.1} parent=1 // pred_check
      _
    $region11: #{tpu_custom_call.1} parent=1 // pred_check_branch
      %47 = sbr.rel (0) target = $region13
    $region12: #{tpu_custom_call.1} parent=1 // pred_region
      %49 = vsyncadd [#allocation10], 0
      %s50 = sshll.u32 %s2, 4
      %s51 = int_to_ptr.hbm [resolvable:$true] %s50
      %s52 = sshll.u32 [#allocation11], 4
      %s53 = int_to_ptr.vmem [resolvable:$true] %s52
      %58 = dma.hbm_to_vmem [thread:$0]  %s51, 256, %s53, [#allocation10], 64, 64, 4
    $region13: #{tpu_custom_call.1} parent=1 // pred_fallthru
      _
    // Predicated region
    $region14: #{tpu_custom_call.1} parent=1 // pred_check
      _
    $region15: #{tpu_custom_call.1} parent=1 // pred_check_branch
      %60 = sbr.rel (0) target = $region17
    $region16: #{tpu_custom_call.1} parent=1 // pred_region
      %62 = vsyncadd [#allocation13], 0
      %s63 = sshll.u32 %s3, 4
      %s64 = int_to_ptr.hbm [resolvable:$true] %s63
      %s65 = sshll.u32 [#allocation12], 4
      %s66 = int_to_ptr.vmem [resolvable:$true] %s65
      %71 = dma.hbm_to_vmem [thread:$0]  %s64, 512, %s66, [#allocation13], 64, 64, 4
    $region17: #{tpu_custom_call.1} parent=1 // pred_fallthru
      _
    // Predicated region
    $region18: #{tpu_custom_call.1} parent=1 // pred_check
      _
    $region19: #{tpu_custom_call.1} parent=1 // pred_check_branch
      %73 = sbr.rel (0) target = $region21
    $region20: #{tpu_custom_call.1} parent=1 // pred_region
      %75 = vsyncadd [#allocation13], 0
      %s76 = sshll.u32 %s4, 4
      %s77 = int_to_ptr.hbm [resolvable:$true] %s76
      %s78 = sshll.u32 [#allocation14], 4
      %s79 = int_to_ptr.vmem [resolvable:$true] %s78
      %84 = dma.hbm_to_vmem [thread:$0]  %s77, 2048, %s79, [#allocation13], 128, 128, 8
    $region21: #{tpu_custom_call.1} parent=1 // pred_fallthru
      _
    // Predicated region
    $region22: #{tpu_custom_call.1} parent=1 // pred_check
      _
    $region23: #{tpu_custom_call.1} parent=1 // pred_check_branch
      %86 = sbr.rel (0) target = $region25
    $region24: #{tpu_custom_call.1} parent=1 // pred_region
      %88 = vsyncadd [#allocation16], 0
      %s89 = sshll.u32 %s5, 4
      %s90 = int_to_ptr.hbm [resolvable:$true] %s89
      %s91 = sshll.u32 [#allocation15], 4
      %s92 = int_to_ptr.vmem [resolvable:$true] %s91
      %97 = dma.hbm_to_vmem [thread:$0]  %s90, 8192, %s92, [#allocation16], 256, 256, 16
    $region25: #{tpu_custom_call.1} parent=1 // pred_fallthru
      _
    // Predicated region
    $region26: #{tpu_custom_call.1} parent=1 // pred_check
      _
    $region27: #{tpu_custom_call.1} parent=1 // pred_check_branch
      %99 = sbr.rel (0) target = $region29
    $region28: #{tpu_custom_call.1} parent=1 // pred_region
      %101 = vsyncadd [#allocation16], 0
      %s102 = sshll.u32 %s6, 4
      %s103 = int_to_ptr.hbm [resolvable:$true] %s102
      %s104 = sshll.u32 [#allocation17], 4
      %s105 = int_to_ptr.vmem [resolvable:$true] %s104
      %110 = dma.hbm_to_vmem [thread:$0]  %s103, 8192, %s105, [#allocation16], 128, 128, 8
    $region29: #{tpu_custom_call.1} parent=1 // pred_fallthru
      _
    // Predicated region
    $region30: #{tpu_custom_call.1} parent=1 // pred_check
      _
    $region31: #{tpu_custom_call.1} parent=1 // pred_check_branch
      %112 = sbr.rel (0) target = $region33
    $region32: #{tpu_custom_call.1} parent=1 // pred_region
      %114 = vsyncadd [#allocation19], 0
      %s115 = sshll.u32 %s7, 4
      %s116 = int_to_ptr.hbm [resolvable:$true] %s115
      %s117 = sshll.u32 [#allocation18], 4
      %s118 = int_to_ptr.vmem [resolvable:$true] %s117
      %123 = dma.hbm_to_vmem [thread:$0]  %s116, 2048, %s118, [#allocation19], 64, 64, 4
    $region33: #{tpu_custom_call.1} parent=1 // pred_fallthru
      _
    // Predicated region
    $region34: #{tpu_custom_call.1} parent=1 // pred_check
      _
    $region35: #{tpu_custom_call.1} parent=1 // pred_check_branch
      %125 = sbr.rel (0) target = $region37
    $region36: #{tpu_custom_call.1} parent=1 // pred_region
      _
    $region37: #{tpu_custom_call.1} parent=1 // pred_fallthru
      _
    // Predicated region
    $region38: #{tpu_custom_call.1} parent=1 // pred_check
      _
    $region39: #{tpu_custom_call.1} parent=1 // pred_check_branch
      %127 = sbr.rel (0) target = $region41
    $region40: #{tpu_custom_call.1} parent=1 // pred_region
      _
    $region41: #{tpu_custom_call.1} parent=1 // pred_fallthru
      _
    // Predicated region
    $region42: #{tpu_custom_call.1} parent=1 // pred_check
      _
    $region43: #{tpu_custom_call.1} parent=1 // pred_check_branch
      %129 = sbr.rel (0) target = $region45
    $region44: #{tpu_custom_call.1} parent=1 // pred_region
      %131 = dma.done [#allocation7], 32
    $region45: #{tpu_custom_call.1} parent=1 // pred_fallthru
      _
    // Predicated region
    $region46: #{tpu_custom_call.1} parent=1 // pred_check
      _
    $region47: #{tpu_custom_call.1} parent=1 // pred_check_branch
      %133 = sbr.rel (0) target = $region49
    $region48: #{tpu_custom_call.1} parent=1 // pred_region
      %135 = dma.done [#allocation10], 528
    $region49: #{tpu_custom_call.1} parent=1 // pred_fallthru
      _
    // Predicated region
    $region50: #{tpu_custom_call.1} parent=1 // pred_check
      _
    $region51: #{tpu_custom_call.1} parent=1 // pred_check_branch
      %137 = sbr.rel (0) target = $region53
    $region52: #{tpu_custom_call.1} parent=1 // pred_region
      %139 = dma.done [#allocation10], 256
    $region53: #{tpu_custom_call.1} parent=1 // pred_fallthru
      _
    // Predicated region
    $region54: #{tpu_custom_call.1} parent=1 // pred_check
      _
    $region55: #{tpu_custom_call.1} parent=1 // pred_check_branch
      %141 = sbr.rel (0) target = $region57
    $region56: #{tpu_custom_call.1} parent=1 // pred_region
      %143 = dma.done [#allocation13], 512
    $region57: #{tpu_custom_call.1} parent=1 // pred_fallthru
      _
    // Predicated region
    $region58: #{tpu_custom_call.1} parent=1 // pred_check
      _
    $region59: #{tpu_custom_call.1} parent=1 // pred_check_branch
      %145 = sbr.rel (0) target = $region61
    $region60: #{tpu_custom_call.1} parent=1 // pred_region
      %147 = dma.done [#allocation13], 2048
    $region61: #{tpu_custom_call.1} parent=1 // pred_fallthru
      _
    // Predicated region
    $region62: #{tpu_custom_call.1} parent=1 // pred_check
      _
    $region63: #{tpu_custom_call.1} parent=1 // pred_check_branch
      %149 = sbr.rel (0) target = $region65
    $region64: #{tpu_custom_call.1} parent=1 // pred_region
      %151 = dma.done [#allocation16], 8192
    $region65: #{tpu_custom_call.1} parent=1 // pred_fallthru
      _
    // Predicated region
    $region66: #{tpu_custom_call.1} parent=1 // pred_check
      _
    $region67: #{tpu_custom_call.1} parent=1 // pred_check_branch
      %153 = sbr.rel (0) target = $region69
    $region68: #{tpu_custom_call.1} parent=1 // pred_region
      %155 = dma.done [#allocation16], 8192
    $region69: #{tpu_custom_call.1} parent=1 // pred_fallthru
      _
    // Predicated region
    $region70: #{tpu_custom_call.1} parent=1 // pred_check
      _
    $region71: #{tpu_custom_call.1} parent=1 // pred_check_branch
      %157 = sbr.rel (0) target = $region73
    $region72: #{tpu_custom_call.1} parent=1 // pred_region
      %159 = dma.done [#allocation19], 2048
    $region73: #{tpu_custom_call.1} parent=1 // pred_fallthru
      _
    // Predicated region
    $region74: #{tpu_custom_call.1} parent=1 // pred_check
      _
    $region75: #{tpu_custom_call.1} parent=1 // pred_check_branch
      %162 = sbr.rel target = $region77
    $region76: #{tpu_custom_call.1} parent=1 // pred_region
      %163 = sst [smem:[#allocation23]] [#allocation22]
      %164 = sst [smem:[#allocation24]] [#allocation21]
    $region77: #{tpu_custom_call.1} parent=1 // pred_fallthru
      _
    %166 = shalt.err (0)
    %s168 = sshll.u32 %s10, 4
    %s169 = int_to_ptr.hbm [resolvable:$true] %s168
    %s170 = sshll.u32 [#allocation2], 4
    %s171 = int_to_ptr.vmem [resolvable:$true] %s170
    %173 = dma.hbm_to_vmem [thread:$0]  %s169, 32768, %s171, [#allocation5]
    %s174 = scalar_lea.sflag [#allocation5], 1
    // Predicated region
    $region78: #{tpu_custom_call.1} parent=1 // pred_check
      _
    $region79: #{tpu_custom_call.1} parent=1 // pred_check_branch
      %176 = sbr.rel target = $region81
    $region80: #{tpu_custom_call.1} parent=1 // pred_region
      %177 = sst [smem:[#allocation23]] [#allocation26]
      %178 = sst [smem:[#allocation24]] [#allocation25]
    $region81: #{tpu_custom_call.1} parent=1 // pred_fallthru
      _
    %180 = shalt.err (0)
    %s182 = sshll.u32 %s11, 4
    %s183 = int_to_ptr.hbm [resolvable:$true] %s182
    %s184 = sshll.u32 [#allocation3], 4
    %s185 = int_to_ptr.vmem [resolvable:$true] %s184
    %187 = dma.hbm_to_vmem [thread:$0]  %s183, 65536, %s185, %s174
    %s188 = scalar_lea.sflag [#allocation5], 2
    // Predicated region
    $region82: #{tpu_custom_call.1} parent=1 // pred_check
      _
    $region83: #{tpu_custom_call.1} parent=1 // pred_check_branch
      %190 = sbr.rel target = $region85
    $region84: #{tpu_custom_call.1} parent=1 // pred_region
      %191 = sst [smem:[#allocation23]] [#allocation28]
      %192 = sst [smem:[#allocation24]] [#allocation27]
    $region85: #{tpu_custom_call.1} parent=1 // pred_fallthru
      _
    %194 = shalt.err (0)
    %s196 = sshll.u32 %s12, 4
    %s197 = int_to_ptr.hbm [resolvable:$true] %s196
    %s198 = sshll.u32 [#allocation4], 4
    %s199 = int_to_ptr.vmem [resolvable:$true] %s198
    %201 = dma.hbm_to_vmem [thread:$0]  %s197, 32768, %s199, %s188
    %v202 = vld [vmem:[#allocation6] sm:$0x3]
    %v203 = vld [vmem:[#allocation11] sm:$0xf]
    %v204 = vld [vmem:[#allocation11 + $0x4] sm:$0xf]
    %v205 = vld [vmem:[#allocation11 + $0x8] sm:$0xf]
    %v206 = vld [vmem:[#allocation11 + $0xc] sm:$0xf]
    %v207 = vld [vmem:[#allocation9] sm:$0x1]
    %v208 = vpack.c.bf16 %v202, %v202
    %v210 = vperm.slane %v207, 0
    %v216 = vunpack.c.l.b16 %v203
    %v217 = vunpack.c.l.b16 %v204
    %v218 = vunpack.c.l.b16 %v205
    %v219 = vunpack.c.l.b16 %v206
    %v220 = vpack.c.b16 %v217, %v216
    %v221 = vpack.c.b16 %v219, %v218
    %vm224 = vcmask 261120
    %v226 = vsel %vm224, %v208, 0
    %228 = vmatpush.bf16.msra.mxu0 0
    %229 = vmatpush.bf16.msra.mxu0 0
    %230 = vmatpush.bf16.msra.mxu0 0
    %231 = vmatpush.bf16.msra.mxu0 0
    %232 = vmatpush.bf16.msra.mxu0 0
    %233 = vmatpush.bf16.msra.mxu0 0
    %234 = vmatpush.bf16.msra.mxu0 %v221
    %235 = vmatpush.bf16.msra.mxu0 %v220
    %236 = vmatmul.bf16.gmra.mxu0 %v226
    %v237 = vpop.f32.mrf.mxu0
    %v238 = vadd.f32 %v210, %v237
    %v239 = vpop.f32.mrf.mxu0
    %240 = vdwg.mxu0
    %v241 = vmul.f32 %v238, 0.01
    %v242 = vmax.f32 %v238, %v241
    %v243 = vpack.c.bf16 %v242, %v242
    %v244 = vld [vmem:[#allocation12] sm:$0xf]
    %v245 = vld [vmem:[#allocation12 + $0x4] sm:$0xf]
    %v246 = vld [vmem:[#allocation12 + $0x8] sm:$0xf]
    %v247 = vld [vmem:[#allocation12 + $0xc] sm:$0xf]
    %v248 = vld [vmem:[#allocation12 + $0x10] sm:$0xf]
    %v249 = vld [vmem:[#allocation12 + $0x14] sm:$0xf]
    %v250 = vld [vmem:[#allocation12 + $0x18] sm:$0xf]
    %v251 = vld [vmem:[#allocation12 + $0x1c] sm:$0xf]
    %v252 = vld [vmem:[#allocation9 + $0x1] sm:$0x1]
    %v254 = vperm.slane %v252, 0
    %v264 = vunpack.c.l.b16 %v244
    %v265 = vunpack.c.l.b16 %v245
    %v266 = vunpack.c.l.b16 %v246
    %v267 = vunpack.c.l.b16 %v247
    %v268 = vunpack.c.l.b16 %v248
    %v269 = vunpack.c.l.b16 %v249
    %v270 = vunpack.c.l.b16 %v250
    %v271 = vunpack.c.l.b16 %v251
    %v272 = vpack.c.b16 %v265, %v264
    %v273 = vpack.c.b16 %v267, %v266
    %v274 = vpack.c.b16 %v269, %v268
    %v275 = vpack.c.b16 %v271, %v270
    %vm280 = vcmask 523264
    %v282 = vsel %vm280, %v243, 0
    %284 = vmatpush.bf16.msra.mxu0 0
    %285 = vmatpush.bf16.msra.mxu0 0
    %286 = vmatpush.bf16.msra.mxu0 0
    %287 = vmatpush.bf16.msra.mxu0 0
    %288 = vmatpush.bf16.msra.mxu0 %v275
    %289 = vmatpush.bf16.msra.mxu0 %v274
    %290 = vmatpush.bf16.msra.mxu0 %v273
    %291 = vmatpush.bf16.msra.mxu0 %v272
    %292 = vmatmul.bf16.gmra.mxu0 %v282
    %v293 = vpop.f32.mrf.mxu0
    %v294 = vadd.f32 %v254, %v293
    %v295 = vpop.f32.mrf.mxu0
    %296 = vdwg.mxu0
    %v297 = vmul.f32 %v294, 0.01
    %v298 = vmax.f32 %v294, %v297
    %v299 = vpack.c.bf16 %v298, %v298
    %v300 = vld [vmem:[#allocation14] sm:$0xff]
    %v301 = vld [vmem:[#allocation14 + $0x8] sm:$0xff]
    %v302 = vld [vmem:[#allocation14 + $0x10] sm:$0xff]
    %v303 = vld [vmem:[#allocation14 + $0x18] sm:$0xff]
    %v304 = vld [vmem:[#allocation14 + $0x20] sm:$0xff]
    %v305 = vld [vmem:[#allocation14 + $0x28] sm:$0xff]
    %v306 = vld [vmem:[#allocation14 + $0x30] sm:$0xff]
    %v307 = vld [vmem:[#allocation14 + $0x38] sm:$0xff]
    %v308 = vld [vmem:[#allocation14 + $0x40] sm:$0xff]
    %v309 = vld [vmem:[#allocation14 + $0x48] sm:$0xff]
    %v310 = vld [vmem:[#allocation14 + $0x50] sm:$0xff]
    %v311 = vld [vmem:[#allocation14 + $0x58] sm:$0xff]
    %v312 = vld [vmem:[#allocation14 + $0x60] sm:$0xff]
    %v313 = vld [vmem:[#allocation14 + $0x68] sm:$0xff]
    %v314 = vld [vmem:[#allocation14 + $0x70] sm:$0xff]
    %v315 = vld [vmem:[#allocation14 + $0x78] sm:$0xff]
    %v316 = vld [vmem:[#allocation9 + $0x2] sm:$0x3]
    %v318 = vperm.slane %v316, 0
    %v319 = vperm.slane %v316, 1
    %v338 = vunpack.c.l.b16 %v300
    %v339 = vunpack.c.h.b16 %v300
    %v340 = vunpack.c.l.b16 %v301
    %v341 = vunpack.c.h.b16 %v301
    %v342 = vunpack.c.l.b16 %v302
    %v343 = vunpack.c.h.b16 %v302
    %v344 = vunpack.c.l.b16 %v303
    %v345 = vunpack.c.h.b16 %v303
    %v346 = vunpack.c.l.b16 %v304
    %v347 = vunpack.c.h.b16 %v304
    %v348 = vunpack.c.l.b16 %v305
    %v349 = vunpack.c.h.b16 %v305
    %v350 = vunpack.c.l.b16 %v306
    %v351 = vunpack.c.h.b16 %v306
    %v352 = vunpack.c.l.b16 %v307
    %v353 = vunpack.c.h.b16 %v307
    %v354 = vunpack.c.l.b16 %v308
    %v355 = vunpack.c.h.b16 %v308
    %v356 = vunpack.c.l.b16 %v309
    %v357 = vunpack.c.h.b16 %v309
    %v358 = vunpack.c.l.b16 %v310
    %v359 = vunpack.c.h.b16 %v310
    %v360 = vunpack.c.l.b16 %v311
    %v361 = vunpack.c.h.b16 %v311
    %v362 = vunpack.c.l.b16 %v312
    %v363 = vunpack.c.h.b16 %v312
    %v364 = vunpack.c.l.b16 %v313
    %v365 = vunpack.c.h.b16 %v313
    %v366 = vunpack.c.l.b16 %v314
    %v367 = vunpack.c.h.b16 %v314
    %v368 = vunpack.c.l.b16 %v315
    %v369 = vunpack.c.h.b16 %v315
    %v370 = vpack.c.b16 %v340, %v338
    %v371 = vpack.c.b16 %v341, %v339
    %v372 = vpack.c.b16 %v344, %v342
    %v373 = vpack.c.b16 %v345, %v343
    %v374 = vpack.c.b16 %v348, %v346
    %v375 = vpack.c.b16 %v349, %v347
    %v376 = vpack.c.b16 %v352, %v350
    %v377 = vpack.c.b16 %v353, %v351
    %v378 = vpack.c.b16 %v356, %v354
    %v379 = vpack.c.b16 %v357, %v355
    %v380 = vpack.c.b16 %v360, %v358
    %v381 = vpack.c.b16 %v361, %v359
    %v382 = vpack.c.b16 %v364, %v362
    %v383 = vpack.c.b16 %v365, %v363
    %v384 = vpack.c.b16 %v368, %v366
    %v385 = vpack.c.b16 %v369, %v367
    %402 = vmatpush.bf16.msra.mxu0 %v384
    %403 = vmatpush.bf16.msra.mxu0 %v382
    %404 = vmatpush.bf16.msra.mxu0 %v380
    %405 = vmatpush.bf16.msra.mxu0 %v378
    %406 = vmatpush.bf16.msra.mxu0 %v376
    %407 = vmatpush.bf16.msra.mxu0 %v374
    %408 = vmatpush.bf16.msra.mxu0 %v372
    %409 = vmatpush.bf16.msra.mxu0 %v370
    %410 = vmatmul.bf16.gmra.mxu0 %v299
    %v411 = vpop.f32.mrf.mxu0
    %v412 = vadd.f32 %v318, %v411
    %v413 = vpop.f32.mrf.mxu0
    %414 = vdwg.mxu0
    %415 = vmatpush.bf16.msra.mxu0 %v385
    %416 = vmatpush.bf16.msra.mxu0 %v383
    %417 = vmatpush.bf16.msra.mxu0 %v381
    %418 = vmatpush.bf16.msra.mxu0 %v379
    %419 = vmatpush.bf16.msra.mxu0 %v377
    %420 = vmatpush.bf16.msra.mxu0 %v375
    %421 = vmatpush.bf16.msra.mxu0 %v373
    %422 = vmatpush.bf16.msra.mxu0 %v371
    %423 = vmatmul.bf16.gmra.mxu0 %v299
    %v424 = vpop.f32.mrf.mxu0
    %v425 = vadd.f32 %v319, %v424
    %v426 = vpop.f32.mrf.mxu0
    %427 = vdwg.mxu0
    %v428 = vmul.f32 %v412, 0.01
    %v429 = vmul.f32 %v425, 0.01
    %v430 = vmax.f32 %v412, %v428
    %v431 = vmax.f32 %v425, %v429
    %v432 = vpack.c.bf16 %v430, %v430
    %v433 = vpack.c.bf16 %v431, %v431
    %v434 = vld [vmem:[#allocation15] sm:$0xff]
    %v435 = vld [vmem:[#allocation15 + $0x8] sm:$0xff]
    %v436 = vld [vmem:[#allocation15 + $0x10] sm:$0xff]
    %v437 = vld [vmem:[#allocation15 + $0x18] sm:$0xff]
    %v438 = vld [vmem:[#allocation15 + $0x20] sm:$0xff]
    %v439 = vld [vmem:[#allocation15 + $0x28] sm:$0xff]
    %v440 = vld [vmem:[#allocation15 + $0x30] sm:$0xff]
    %v441 = vld [vmem:[#allocation15 + $0x38] sm:$0xff]
    %v442 = vld [vmem:[#allocation15 + $0x40] sm:$0xff]
    %v443 = vld [vmem:[#allocation15 + $0x48] sm:$0xff]
    %v444 = vld [vmem:[#allocation15 + $0x50] sm:$0xff]
    %v445 = vld [vmem:[#allocation15 + $0x58] sm:$0xff]
    %v446 = vld [vmem:[#allocation15 + $0x60] sm:$0xff]
    %v447 = vld [vmem:[#allocation15 + $0x68] sm:$0xff]
    %v448 = vld [vmem:[#allocation15 + $0x70] sm:$0xff]
    %v449 = vld [vmem:[#allocation15 + $0x78] sm:$0xff]
    %v450 = vld [vmem:[#allocation15 + $0x80] sm:$0xff]
    %v451 = vld [vmem:[#allocation15 + $0x88] sm:$0xff]
    %v452 = vld [vmem:[#allocation15 + $0x90] sm:$0xff]
    %v453 = vld [vmem:[#allocation15 + $0x98] sm:$0xff]
    %v454 = vld [vmem:[#allocation15 + $0xa0] sm:$0xff]
    %v455 = vld [vmem:[#allocation15 + $0xa8] sm:$0xff]
    %v456 = vld [vmem:[#allocation15 + $0xb0] sm:$0xff]
    %v457 = vld [vmem:[#allocation15 + $0xb8] sm:$0xff]
    %v458 = vld [vmem:[#allocation15 + $0xc0] sm:$0xff]
    %v459 = vld [vmem:[#allocation15 + $0xc8] sm:$0xff]
    %v460 = vld [vmem:[#allocation15 + $0xd0] sm:$0xff]
    %v461 = vld [vmem:[#allocation15 + $0xd8] sm:$0xff]
    %v462 = vld [vmem:[#allocation15 + $0xe0] sm:$0xff]
    %v463 = vld [vmem:[#allocation15 + $0xe8] sm:$0xff]
    %v464 = vld [vmem:[#allocation15 + $0xf0] sm:$0xff]
    %v465 = vld [vmem:[#allocation15 + $0xf8] sm:$0xff]
    %v466 = vld [vmem:[#allocation15 + $0x100] sm:$0xff]
    %v467 = vld [vmem:[#allocation15 + $0x108] sm:$0xff]
    %v468 = vld [vmem:[#allocation15 + $0x110] sm:$0xff]
    %v469 = vld [vmem:[#allocation15 + $0x118] sm:$0xff]
    %v470 = vld [vmem:[#allocation15 + $0x120] sm:$0xff]
    %v471 = vld [vmem:[#allocation15 + $0x128] sm:$0xff]
    %v472 = vld [vmem:[#allocation15 + $0x130] sm:$0xff]
    %v473 = vld [vmem:[#allocation15 + $0x138] sm:$0xff]
    %v474 = vld [vmem:[#allocation15 + $0x140] sm:$0xff]
    %v475 = vld [vmem:[#allocation15 + $0x148] sm:$0xff]
    %v476 = vld [vmem:[#allocation15 + $0x150] sm:$0xff]
    %v477 = vld [vmem:[#allocation15 + $0x158] sm:$0xff]
    %v478 = vld [vmem:[#allocation15 + $0x160] sm:$0xff]
    %v479 = vld [vmem:[#allocation15 + $0x168] sm:$0xff]
    %v480 = vld [vmem:[#allocation15 + $0x170] sm:$0xff]
    %v481 = vld [vmem:[#allocation15 + $0x178] sm:$0xff]
    %v482 = vld [vmem:[#allocation15 + $0x180] sm:$0xff]
    %v483 = vld [vmem:[#allocation15 + $0x188] sm:$0xff]
    %v484 = vld [vmem:[#allocation15 + $0x190] sm:$0xff]
    %v485 = vld [vmem:[#allocation15 + $0x198] sm:$0xff]
    %v486 = vld [vmem:[#allocation15 + $0x1a0] sm:$0xff]
    %v487 = vld [vmem:[#allocation15 + $0x1a8] sm:$0xff]
    %v488 = vld [vmem:[#allocation15 + $0x1b0] sm:$0xff]
    %v489 = vld [vmem:[#allocation15 + $0x1b8] sm:$0xff]
    %v490 = vld [vmem:[#allocation15 + $0x1c0] sm:$0xff]
    %v491 = vld [vmem:[#allocation15 + $0x1c8] sm:$0xff]
    %v492 = vld [vmem:[#allocation15 + $0x1d0] sm:$0xff]
    %v493 = vld [vmem:[#allocation15 + $0x1d8] sm:$0xff]
    %v494 = vld [vmem:[#allocation15 + $0x1e0] sm:$0xff]
    %v495 = vld [vmem:[#allocation15 + $0x1e8] sm:$0xff]
    %v496 = vld [vmem:[#allocation15 + $0x1f0] sm:$0xff]
    %v497 = vld [vmem:[#allocation15 + $0x1f8] sm:$0xff]
    %v498 = vld [vmem:[#allocation9 + $0x4] sm:$0xf]
    %v500 = vperm.slane %v498, 0
    %v501 = vperm.slane %v498, 1
    %v502 = vperm.slane %v498, 2
    %v503 = vperm.slane %v498, 3
    %v572 = vunpack.c.l.b16 %v434
    %v573 = vunpack.c.h.b16 %v434
    %v574 = vunpack.c.l.b16 %v435
    %v575 = vunpack.c.h.b16 %v435
    %v576 = vunpack.c.l.b16 %v436
    %v577 = vunpack.c.h.b16 %v436
    %v578 = vunpack.c.l.b16 %v437
    %v579 = vunpack.c.h.b16 %v437
    %v580 = vunpack.c.l.b16 %v438
    %v581 = vunpack.c.h.b16 %v438
    %v582 = vunpack.c.l.b16 %v439
    %v583 = vunpack.c.h.b16 %v439
    %v584 = vunpack.c.l.b16 %v440
    %v585 = vunpack.c.h.b16 %v440
    %v586 = vunpack.c.l.b16 %v441
    %v587 = vunpack.c.h.b16 %v441
    %v588 = vunpack.c.l.b16 %v442
    %v589 = vunpack.c.h.b16 %v442
    %v590 = vunpack.c.l.b16 %v443
    %v591 = vunpack.c.h.b16 %v443
    %v592 = vunpack.c.l.b16 %v444
    %v593 = vunpack.c.h.b16 %v444
    %v594 = vunpack.c.l.b16 %v445
    %v595 = vunpack.c.h.b16 %v445
    %v596 = vunpack.c.l.b16 %v446
    %v597 = vunpack.c.h.b16 %v446
    %v598 = vunpack.c.l.b16 %v447
    %v599 = vunpack.c.h.b16 %v447
    %v600 = vunpack.c.l.b16 %v448
    %v601 = vunpack.c.h.b16 %v448
    %v602 = vunpack.c.l.b16 %v449
    %v603 = vunpack.c.h.b16 %v449
    %v604 = vunpack.c.l.b16 %v450
    %v605 = vunpack.c.h.b16 %v450
    %v606 = vunpack.c.l.b16 %v451
    %v607 = vunpack.c.h.b16 %v451
    %v608 = vunpack.c.l.b16 %v452
    %v609 = vunpack.c.h.b16 %v452
    %v610 = vunpack.c.l.b16 %v453
    %v611 = vunpack.c.h.b16 %v453
    %v612 = vunpack.c.l.b16 %v454
    %v613 = vunpack.c.h.b16 %v454
    %v614 = vunpack.c.l.b16 %v455
    %v615 = vunpack.c.h.b16 %v455
    %v616 = vunpack.c.l.b16 %v456
    %v617 = vunpack.c.h.b16 %v456
    %v618 = vunpack.c.l.b16 %v457
    %v619 = vunpack.c.h.b16 %v457
    %v620 = vunpack.c.l.b16 %v458
    %v621 = vunpack.c.h.b16 %v458
    %v622 = vunpack.c.l.b16 %v459
    %v623 = vunpack.c.h.b16 %v459
    %v624 = vunpack.c.l.b16 %v460
    %v625 = vunpack.c.h.b16 %v460
    %v626 = vunpack.c.l.b16 %v461
    %v627 = vunpack.c.h.b16 %v461
    %v628 = vunpack.c.l.b16 %v462
    %v629 = vunpack.c.h.b16 %v462
    %v630 = vunpack.c.l.b16 %v463
    %v631 = vunpack.c.h.b16 %v463
    %v632 = vunpack.c.l.b16 %v464
    %v633 = vunpack.c.h.b16 %v464
    %v634 = vunpack.c.l.b16 %v465
    %v635 = vunpack.c.h.b16 %v465
    %v636 = vunpack.c.l.b16 %v466
    %v637 = vunpack.c.h.b16 %v466
    %v638 = vunpack.c.l.b16 %v467
    %v639 = vunpack.c.h.b16 %v467
    %v640 = vunpack.c.l.b16 %v468
    %v641 = vunpack.c.h.b16 %v468
    %v642 = vunpack.c.l.b16 %v469
    %v643 = vunpack.c.h.b16 %v469
    %v644 = vunpack.c.l.b16 %v470
    %v645 = vunpack.c.h.b16 %v470
    %v646 = vunpack.c.l.b16 %v471
    %v647 = vunpack.c.h.b16 %v471
    %v648 = vunpack.c.l.b16 %v472
    %v649 = vunpack.c.h.b16 %v472
    %v650 = vunpack.c.l.b16 %v473
    %v651 = vunpack.c.h.b16 %v473
    %v652 = vunpack.c.l.b16 %v474
    %v653 = vunpack.c.h.b16 %v474
    %v654 = vunpack.c.l.b16 %v475
    %v655 = vunpack.c.h.b16 %v475
    %v656 = vunpack.c.l.b16 %v476
    %v657 = vunpack.c.h.b16 %v476
    %v658 = vunpack.c.l.b16 %v477
    %v659 = vunpack.c.h.b16 %v477
    %v660 = vunpack.c.l.b16 %v478
    %v661 = vunpack.c.h.b16 %v478
    %v662 = vunpack.c.l.b16 %v479
    %v663 = vunpack.c.h.b16 %v479
    %v664 = vunpack.c.l.b16 %v480
    %v665 = vunpack.c.h.b16 %v480
    %v666 = vunpack.c.l.b16 %v481
    %v667 = vunpack.c.h.b16 %v481
    %v668 = vunpack.c.l.b16 %v482
    %v669 = vunpack.c.h.b16 %v482
    %v670 = vunpack.c.l.b16 %v483
    %v671 = vunpack.c.h.b16 %v483
    %v672 = vunpack.c.l.b16 %v484
    %v673 = vunpack.c.h.b16 %v484
    %v674 = vunpack.c.l.b16 %v485
    %v675 = vunpack.c.h.b16 %v485
    %v676 = vunpack.c.l.b16 %v486
    %v677 = vunpack.c.h.b16 %v486
    %v678 = vunpack.c.l.b16 %v487
    %v679 = vunpack.c.h.b16 %v487
    %v680 = vunpack.c.l.b16 %v488
    %v681 = vunpack.c.h.b16 %v488
    %v682 = vunpack.c.l.b16 %v489
    %v683 = vunpack.c.h.b16 %v489
    %v684 = vunpack.c.l.b16 %v490
    %v685 = vunpack.c.h.b16 %v490
    %v686 = vunpack.c.l.b16 %v491
    %v687 = vunpack.c.h.b16 %v491
    %v688 = vunpack.c.l.b16 %v492
    %v689 = vunpack.c.h.b16 %v492
    %v690 = vunpack.c.l.b16 %v493
    %v691 = vunpack.c.h.b16 %v493
    %v692 = vunpack.c.l.b16 %v494
    %v693 = vunpack.c.h.b16 %v494
    %v694 = vunpack.c.l.b16 %v495
    %v695 = vunpack.c.h.b16 %v495
    %v696 = vunpack.c.l.b16 %v496
    %v697 = vunpack.c.h.b16 %v496
    %v698 = vunpack.c.l.b16 %v497
    %v699 = vunpack.c.h.b16 %v497
    %v700 = vpack.c.b16 %v576, %v572
    %v701 = vpack.c.b16 %v577, %v573
    %v702 = vpack.c.b16 %v578, %v574
    %v703 = vpack.c.b16 %v579, %v575
    %v704 = vpack.c.b16 %v584, %v580
    %v705 = vpack.c.b16 %v585, %v581
    %v706 = vpack.c.b16 %v586, %v582
    %v707 = vpack.c.b16 %v587, %v583
    %v708 = vpack.c.b16 %v592, %v588
    %v709 = vpack.c.b16 %v593, %v589
    %v710 = vpack.c.b16 %v594, %v590
    %v711 = vpack.c.b16 %v595, %v591
    %v712 = vpack.c.b16 %v600, %v596
    %v713 = vpack.c.b16 %v601, %v597
    %v714 = vpack.c.b16 %v602, %v598
    %v715 = vpack.c.b16 %v603, %v599
    %v716 = vpack.c.b16 %v608, %v604
    %v717 = vpack.c.b16 %v609, %v605
    %v718 = vpack.c.b16 %v610, %v606
    %v719 = vpack.c.b16 %v611, %v607
    %v720 = vpack.c.b16 %v616, %v612
    %v721 = vpack.c.b16 %v617, %v613
    %v722 = vpack.c.b16 %v618, %v614
    %v723 = vpack.c.b16 %v619, %v615
    %v724 = vpack.c.b16 %v624, %v620
    %v725 = vpack.c.b16 %v625, %v621
    %v726 = vpack.c.b16 %v626, %v622
    %v727 = vpack.c.b16 %v627, %v623
    %v728 = vpack.c.b16 %v632, %v628
    %v729 = vpack.c.b16 %v633, %v629
    %v730 = vpack.c.b16 %v634, %v630
    %v731 = vpack.c.b16 %v635, %v631
    %v732 = vpack.c.b16 %v640, %v636
    %v733 = vpack.c.b16 %v641, %v637
    %v734 = vpack.c.b16 %v642, %v638
    %v735 = vpack.c.b16 %v643, %v639
    %v736 = vpack.c.b16 %v648, %v644
    %v737 = vpack.c.b16 %v649, %v645
    %v738 = vpack.c.b16 %v650, %v646
    %v739 = vpack.c.b16 %v651, %v647
    %v740 = vpack.c.b16 %v656, %v652
    %v741 = vpack.c.b16 %v657, %v653
    %v742 = vpack.c.b16 %v658, %v654
    %v743 = vpack.c.b16 %v659, %v655
    %v744 = vpack.c.b16 %v664, %v660
    %v745 = vpack.c.b16 %v665, %v661
    %v746 = vpack.c.b16 %v666, %v662
    %v747 = vpack.c.b16 %v667, %v663
    %v748 = vpack.c.b16 %v672, %v668
    %v749 = vpack.c.b16 %v673, %v669
    %v750 = vpack.c.b16 %v674, %v670
    %v751 = vpack.c.b16 %v675, %v671
    %v752 = vpack.c.b16 %v680, %v676
    %v753 = vpack.c.b16 %v681, %v677
    %v754 = vpack.c.b16 %v682, %v678
    %v755 = vpack.c.b16 %v683, %v679
    %v756 = vpack.c.b16 %v688, %v684
    %v757 = vpack.c.b16 %v689, %v685
    %v758 = vpack.c.b16 %v690, %v686
    %v759 = vpack.c.b16 %v691, %v687
    %v760 = vpack.c.b16 %v696, %v692
    %v761 = vpack.c.b16 %v697, %v693
    %v762 = vpack.c.b16 %v698, %v694
    %v763 = vpack.c.b16 %v699, %v695
    %828 = vmatpush.bf16.msra.mxu0 %v728
    %829 = vmatpush.bf16.msra.mxu0 %v724
    %830 = vmatpush.bf16.msra.mxu0 %v720
    %831 = vmatpush.bf16.msra.mxu0 %v716
    %832 = vmatpush.bf16.msra.mxu0 %v712
    %833 = vmatpush.bf16.msra.mxu0 %v708
    %834 = vmatpush.bf16.msra.mxu0 %v704
    %835 = vmatpush.bf16.msra.mxu0 %v700
    %836 = vmatmul.bf16.gmra.mxu0 %v432
    %v837 = vpop.f32.mrf.mxu0
    %v838 = vadd.f32 %v500, %v837
    %v839 = vpop.f32.mrf.mxu0
    %840 = vdwg.mxu0
    %841 = vmatpush.bf16.msra.mxu0 %v760
    %842 = vmatpush.bf16.msra.mxu0 %v756
    %843 = vmatpush.bf16.msra.mxu0 %v752
    %844 = vmatpush.bf16.msra.mxu0 %v748
    %845 = vmatpush.bf16.msra.mxu0 %v744
    %846 = vmatpush.bf16.msra.mxu0 %v740
    %847 = vmatpush.bf16.msra.mxu0 %v736
    %848 = vmatpush.bf16.msra.mxu0 %v732
    %849 = vmatmul.bf16.gmra.mxu0 %v433
    %v850 = vpop.f32.mrf.mxu0
    %v851 = vadd.f32 %v838, %v850
    %v852 = vpop.f32.mrf.mxu0
    %853 = vdwg.mxu0
    %854 = vmatpush.bf16.msra.mxu0 %v729
    %855 = vmatpush.bf16.msra.mxu0 %v725
    %856 = vmatpush.bf16.msra.mxu0 %v721
    %857 = vmatpush.bf16.msra.mxu0 %v717
    %858 = vmatpush.bf16.msra.mxu0 %v713
    %859 = vmatpush.bf16.msra.mxu0 %v709
    %860 = vmatpush.bf16.msra.mxu0 %v705
    %861 = vmatpush.bf16.msra.mxu0 %v701
    %862 = vmatmul.bf16.gmra.mxu0 %v432
    %v863 = vpop.f32.mrf.mxu0
    %v864 = vadd.f32 %v501, %v863
    %v865 = vpop.f32.mrf.mxu0
    %866 = vdwg.mxu0
    %867 = vmatpush.bf16.msra.mxu0 %v761
    %868 = vmatpush.bf16.msra.mxu0 %v757
    %869 = vmatpush.bf16.msra.mxu0 %v753
    %870 = vmatpush.bf16.msra.mxu0 %v749
    %871 = vmatpush.bf16.msra.mxu0 %v745
    %872 = vmatpush.bf16.msra.mxu0 %v741
    %873 = vmatpush.bf16.msra.mxu0 %v737
    %874 = vmatpush.bf16.msra.mxu0 %v733
    %875 = vmatmul.bf16.gmra.mxu0 %v433
    %v876 = vpop.f32.mrf.mxu0
    %v877 = vadd.f32 %v864, %v876
    %v878 = vpop.f32.mrf.mxu0
    %879 = vdwg.mxu0
    %880 = vmatpush.bf16.msra.mxu0 %v730
    %881 = vmatpush.bf16.msra.mxu0 %v726
    %882 = vmatpush.bf16.msra.mxu0 %v722
    %883 = vmatpush.bf16.msra.mxu0 %v718
    %884 = vmatpush.bf16.msra.mxu0 %v714
    %885 = vmatpush.bf16.msra.mxu0 %v710
    %886 = vmatpush.bf16.msra.mxu0 %v706
    %887 = vmatpush.bf16.msra.mxu0 %v702
    %888 = vmatmul.bf16.gmra.mxu0 %v432
    %v889 = vpop.f32.mrf.mxu0
    %v890 = vadd.f32 %v502, %v889
    %v891 = vpop.f32.mrf.mxu0
    %892 = vdwg.mxu0
    %893 = vmatpush.bf16.msra.mxu0 %v762
    %894 = vmatpush.bf16.msra.mxu0 %v758
    %895 = vmatpush.bf16.msra.mxu0 %v754
    %896 = vmatpush.bf16.msra.mxu0 %v750
    %897 = vmatpush.bf16.msra.mxu0 %v746
    %898 = vmatpush.bf16.msra.mxu0 %v742
    %899 = vmatpush.bf16.msra.mxu0 %v738
    %900 = vmatpush.bf16.msra.mxu0 %v734
    %901 = vmatmul.bf16.gmra.mxu0 %v433
    %v902 = vpop.f32.mrf.mxu0
    %v903 = vadd.f32 %v890, %v902
    %v904 = vpop.f32.mrf.mxu0
    %905 = vdwg.mxu0
    %906 = vmatpush.bf16.msra.mxu0 %v731
    %907 = vmatpush.bf16.msra.mxu0 %v727
    %908 = vmatpush.bf16.msra.mxu0 %v723
    %909 = vmatpush.bf16.msra.mxu0 %v719
    %910 = vmatpush.bf16.msra.mxu0 %v715
    %911 = vmatpush.bf16.msra.mxu0 %v711
    %912 = vmatpush.bf16.msra.mxu0 %v707
    %913 = vmatpush.bf16.msra.mxu0 %v703
    %914 = vmatmul.bf16.gmra.mxu0 %v432
    %v915 = vpop.f32.mrf.mxu0
    %v916 = vadd.f32 %v503, %v915
    %v917 = vpop.f32.mrf.mxu0
    %918 = vdwg.mxu0
    %919 = vmatpush.bf16.msra.mxu0 %v763
    %920 = vmatpush.bf16.msra.mxu0 %v759
    %921 = vmatpush.bf16.msra.mxu0 %v755
    %922 = vmatpush.bf16.msra.mxu0 %v751
    %923 = vmatpush.bf16.msra.mxu0 %v747
    %924 = vmatpush.bf16.msra.mxu0 %v743
    %925 = vmatpush.bf16.msra.mxu0 %v739
    %926 = vmatpush.bf16.msra.mxu0 %v735
    %927 = vmatmul.bf16.gmra.mxu0 %v433
    %v928 = vpop.f32.mrf.mxu0
    %v929 = vadd.f32 %v916, %v928
    %v930 = vpop.f32.mrf.mxu0
    %931 = vdwg.mxu0
    %v932 = vmul.f32 %v851, 0.01
    %v933 = vmul.f32 %v877, 0.01
    %v934 = vmul.f32 %v903, 0.01
    %v935 = vmul.f32 %v929, 0.01
    %v936 = vmax.f32 %v851, %v932
    %v937 = vmax.f32 %v877, %v933
    %v938 = vmax.f32 %v903, %v934
    %v939 = vmax.f32 %v929, %v935
    %v940 = vpack.c.bf16 %v936, %v936
    %v941 = vpack.c.bf16 %v937, %v937
    %v942 = vpack.c.bf16 %v938, %v938
    %v943 = vpack.c.bf16 %v939, %v939
    %s944 = smul.u32 4, 64
    %s945 = smul.u32 %s944, 8
    %s946 = sshll.u32 %s945, 4
    %947 = dma.done [#allocation5], %s946
    %v948 = vld [vmem:[#allocation2] sm:$0xff]
    %v949 = vld [vmem:[#allocation2 + $0x8] sm:$0xff]
    %v950 = vld [vmem:[#allocation2 + $0x10] sm:$0xff]
    %v951 = vld [vmem:[#allocation2 + $0x18] sm:$0xff]
    %v952 = vld [vmem:[#allocation2 + $0x20] sm:$0xff]
    %v953 = vld [vmem:[#allocation2 + $0x28] sm:$0xff]
    %v954 = vld [vmem:[#allocation2 + $0x30] sm:$0xff]
    %v955 = vld [vmem:[#allocation2 + $0x38] sm:$0xff]
    %v956 = vld [vmem:[#allocation2 + $0x40] sm:$0xff]
    %v957 = vld [vmem:[#allocation2 + $0x48] sm:$0xff]
    %v958 = vld [vmem:[#allocation2 + $0x50] sm:$0xff]
    %v959 = vld [vmem:[#allocation2 + $0x58] sm:$0xff]
    %v960 = vld [vmem:[#allocation2 + $0x60] sm:$0xff]
    %v961 = vld [vmem:[#allocation2 + $0x68] sm:$0xff]
    %v962 = vld [vmem:[#allocation2 + $0x70] sm:$0xff]
    %v963 = vld [vmem:[#allocation2 + $0x78] sm:$0xff]
    %v964 = vld [vmem:[#allocation2 + $0x80] sm:$0xff]
    %v965 = vld [vmem:[#allocation2 + $0x88] sm:$0xff]
    %v966 = vld [vmem:[#allocation2 + $0x90] sm:$0xff]
    %v967 = vld [vmem:[#allocation2 + $0x98] sm:$0xff]
    %v968 = vld [vmem:[#allocation2 + $0xa0] sm:$0xff]
    %v969 = vld [vmem:[#allocation2 + $0xa8] sm:$0xff]
    %v970 = vld [vmem:[#allocation2 + $0xb0] sm:$0xff]
    %v971 = vld [vmem:[#allocation2 + $0xb8] sm:$0xff]
    %v972 = vld [vmem:[#allocation2 + $0xc0] sm:$0xff]
    %v973 = vld [vmem:[#allocation2 + $0xc8] sm:$0xff]
    %v974 = vld [vmem:[#allocation2 + $0xd0] sm:$0xff]
    %v975 = vld [vmem:[#allocation2 + $0xd8] sm:$0xff]
    %v976 = vld [vmem:[#allocation2 + $0xe0] sm:$0xff]
    %v977 = vld [vmem:[#allocation2 + $0xe8] sm:$0xff]
    %v978 = vld [vmem:[#allocation2 + $0xf0] sm:$0xff]
    %v979 = vld [vmem:[#allocation2 + $0xf8] sm:$0xff]
    %v980 = vld [vmem:[#allocation2 + $0x100] sm:$0xff]
    %v981 = vld [vmem:[#allocation2 + $0x108] sm:$0xff]
    %v982 = vld [vmem:[#allocation2 + $0x110] sm:$0xff]
    %v983 = vld [vmem:[#allocation2 + $0x118] sm:$0xff]
    %v984 = vld [vmem:[#allocation2 + $0x120] sm:$0xff]
    %v985 = vld [vmem:[#allocation2 + $0x128] sm:$0xff]
    %v986 = vld [vmem:[#allocation2 + $0x130] sm:$0xff]
    %v987 = vld [vmem:[#allocation2 + $0x138] sm:$0xff]
    %v988 = vld [vmem:[#allocation2 + $0x140] sm:$0xff]
    %v989 = vld [vmem:[#allocation2 + $0x148] sm:$0xff]
    %v990 = vld [vmem:[#allocation2 + $0x150] sm:$0xff]
    %v991 = vld [vmem:[#allocation2 + $0x158] sm:$0xff]
    %v992 = vld [vmem:[#allocation2 + $0x160] sm:$0xff]
    %v993 = vld [vmem:[#allocation2 + $0x168] sm:$0xff]
    %v994 = vld [vmem:[#allocation2 + $0x170] sm:$0xff]
    %v995 = vld [vmem:[#allocation2 + $0x178] sm:$0xff]
    %v996 = vld [vmem:[#allocation2 + $0x180] sm:$0xff]
    %v997 = vld [vmem:[#allocation2 + $0x188] sm:$0xff]
    %v998 = vld [vmem:[#allocation2 + $0x190] sm:$0xff]
    %v999 = vld [vmem:[#allocation2 + $0x198] sm:$0xff]
    %v1000 = vld [vmem:[#allocation2 + $0x1a0] sm:$0xff]
    %v1001 = vld [vmem:[#allocation2 + $0x1a8] sm:$0xff]
    %v1002 = vld [vmem:[#allocation2 + $0x1b0] sm:$0xff]
    %v1003 = vld [vmem:[#allocation2 + $0x1b8] sm:$0xff]
    %v1004 = vld [vmem:[#allocation2 + $0x1c0] sm:$0xff]
    %v1005 = vld [vmem:[#allocation2 + $0x1c8] sm:$0xff]
    %v1006 = vld [vmem:[#allocation2 + $0x1d0] sm:$0xff]
    %v1007 = vld [vmem:[#allocation2 + $0x1d8] sm:$0xff]
    %v1008 = vld [vmem:[#allocation2 + $0x1e0] sm:$0xff]
    %v1009 = vld [vmem:[#allocation2 + $0x1e8] sm:$0xff]
    %v1010 = vld [vmem:[#allocation2 + $0x1f0] sm:$0xff]
    %v1011 = vld [vmem:[#allocation2 + $0x1f8] sm:$0xff]
    %v1012 = vld [vmem:[#allocation2 + $0x200] sm:$0xff]
    %v1013 = vld [vmem:[#allocation2 + $0x208] sm:$0xff]
    %v1014 = vld [vmem:[#allocation2 + $0x210] sm:$0xff]
    %v1015 = vld [vmem:[#allocation2 + $0x218] sm:$0xff]
    %v1016 = vld [vmem:[#allocation2 + $0x220] sm:$0xff]
    %v1017 = vld [vmem:[#allocation2 + $0x228] sm:$0xff]
    %v1018 = vld [vmem:[#allocation2 + $0x230] sm:$0xff]
    %v1019 = vld [vmem:[#allocation2 + $0x238] sm:$0xff]
    %v1020 = vld [vmem:[#allocation2 + $0x240] sm:$0xff]
    %v1021 = vld [vmem:[#allocation2 + $0x248] sm:$0xff]
    %v1022 = vld [vmem:[#allocation2 + $0x250] sm:$0xff]
    %v1023 = vld [vmem:[#allocation2 + $0x258] sm:$0xff]
    %v1024 = vld [vmem:[#allocation2 + $0x260] sm:$0xff]
    %v1025 = vld [vmem:[#allocation2 + $0x268] sm:$0xff]
    %v1026 = vld [vmem:[#allocation2 + $0x270] sm:$0xff]
    %v1027 = vld [vmem:[#allocation2 + $0x278] sm:$0xff]
    %v1028 = vld [vmem:[#allocation2 + $0x280] sm:$0xff]
    %v1029 = vld [vmem:[#allocation2 + $0x288] sm:$0xff]
    %v1030 = vld [vmem:[#allocation2 + $0x290] sm:$0xff]
    %v1031 = vld [vmem:[#allocation2 + $0x298] sm:$0xff]
    %v1032 = vld [vmem:[#allocation2 + $0x2a0] sm:$0xff]
    %v1033 = vld [vmem:[#allocation2 + $0x2a8] sm:$0xff]
    %v1034 = vld [vmem:[#allocation2 + $0x2b0] sm:$0xff]
    %v1035 = vld [vmem:[#allocation2 + $0x2b8] sm:$0xff]
    %v1036 = vld [vmem:[#allocation2 + $0x2c0] sm:$0xff]
    %v1037 = vld [vmem:[#allocation2 + $0x2c8] sm:$0xff]
    %v1038 = vld [vmem:[#allocation2 + $0x2d0] sm:$0xff]
    %v1039 = vld [vmem:[#allocation2 + $0x2d8] sm:$0xff]
    %v1040 = vld [vmem:[#allocation2 + $0x2e0] sm:$0xff]
    %v1041 = vld [vmem:[#allocation2 + $0x2e8] sm:$0xff]
    %v1042 = vld [vmem:[#allocation2 + $0x2f0] sm:$0xff]
    %v1043 = vld [vmem:[#allocation2 + $0x2f8] sm:$0xff]
    %v1044 = vld [vmem:[#allocation2 + $0x300] sm:$0xff]
    %v1045 = vld [vmem:[#allocation2 + $0x308] sm:$0xff]
    %v1046 = vld [vmem:[#allocation2 + $0x310] sm:$0xff]
    %v1047 = vld [vmem:[#allocation2 + $0x318] sm:$0xff]
    %v1048 = vld [vmem:[#allocation2 + $0x320] sm:$0xff]
    %v1049 = vld [vmem:[#allocation2 + $0x328] sm:$0xff]
    %v1050 = vld [vmem:[#allocation2 + $0x330] sm:$0xff]
    %v1051 = vld [vmem:[#allocation2 + $0x338] sm:$0xff]
    %v1052 = vld [vmem:[#allocation2 + $0x340] sm:$0xff]
    %v1053 = vld [vmem:[#allocation2 + $0x348] sm:$0xff]
    %v1054 = vld [vmem:[#allocation2 + $0x350] sm:$0xff]
    %v1055 = vld [vmem:[#allocation2 + $0x358] sm:$0xff]
    %v1056 = vld [vmem:[#allocation2 + $0x360] sm:$0xff]
    %v1057 = vld [vmem:[#allocation2 + $0x368] sm:$0xff]
    %v1058 = vld [vmem:[#allocation2 + $0x370] sm:$0xff]
    %v1059 = vld [vmem:[#allocation2 + $0x378] sm:$0xff]
    %v1060 = vld [vmem:[#allocation2 + $0x380] sm:$0xff]
    %v1061 = vld [vmem:[#allocation2 + $0x388] sm:$0xff]
    %v1062 = vld [vmem:[#allocation2 + $0x390] sm:$0xff]
    %v1063 = vld [vmem:[#allocation2 + $0x398] sm:$0xff]
    %v1064 = vld [vmem:[#allocation2 + $0x3a0] sm:$0xff]
    %v1065 = vld [vmem:[#allocation2 + $0x3a8] sm:$0xff]
    %v1066 = vld [vmem:[#allocation2 + $0x3b0] sm:$0xff]
    %v1067 = vld [vmem:[#allocation2 + $0x3b8] sm:$0xff]
    %v1068 = vld [vmem:[#allocation2 + $0x3c0] sm:$0xff]
    %v1069 = vld [vmem:[#allocation2 + $0x3c8] sm:$0xff]
    %v1070 = vld [vmem:[#allocation2 + $0x3d0] sm:$0xff]
    %v1071 = vld [vmem:[#allocation2 + $0x3d8] sm:$0xff]
    %v1072 = vld [vmem:[#allocation2 + $0x3e0] sm:$0xff]
    %v1073 = vld [vmem:[#allocation2 + $0x3e8] sm:$0xff]
    %v1074 = vld [vmem:[#allocation2 + $0x3f0] sm:$0xff]
    %v1075 = vld [vmem:[#allocation2 + $0x3f8] sm:$0xff]
    %v1076 = vld [vmem:[#allocation2 + $0x400] sm:$0xff]
    %v1077 = vld [vmem:[#allocation2 + $0x408] sm:$0xff]
    %v1078 = vld [vmem:[#allocation2 + $0x410] sm:$0xff]
    %v1079 = vld [vmem:[#allocation2 + $0x418] sm:$0xff]
    %v1080 = vld [vmem:[#allocation2 + $0x420] sm:$0xff]
    %v1081 = vld [vmem:[#allocation2 + $0x428] sm:$0xff]
    %v1082 = vld [vmem:[#allocation2 + $0x430] sm:$0xff]
    %v1083 = vld [vmem:[#allocation2 + $0x438] sm:$0xff]
    %v1084 = vld [vmem:[#allocation2 + $0x440] sm:$0xff]
    %v1085 = vld [vmem:[#allocation2 + $0x448] sm:$0xff]
    %v1086 = vld [vmem:[#allocation2 + $0x450] sm:$0xff]
    %v1087 = vld [vmem:[#allocation2 + $0x458] sm:$0xff]
    %v1088 = vld [vmem:[#allocation2 + $0x460] sm:$0xff]
    %v1089 = vld [vmem:[#allocation2 + $0x468] sm:$0xff]
    %v1090 = vld [vmem:[#allocation2 + $0x470] sm:$0xff]
    %v1091 = vld [vmem:[#allocation2 + $0x478] sm:$0xff]
    %v1092 = vld [vmem:[#allocation2 + $0x480] sm:$0xff]
    %v1093 = vld [vmem:[#allocation2 + $0x488] sm:$0xff]
    %v1094 = vld [vmem:[#allocation2 + $0x490] sm:$0xff]
    %v1095 = vld [vmem:[#allocation2 + $0x498] sm:$0xff]
    %v1096 = vld [vmem:[#allocation2 + $0x4a0] sm:$0xff]
    %v1097 = vld [vmem:[#allocation2 + $0x4a8] sm:$0xff]
    %v1098 = vld [vmem:[#allocation2 + $0x4b0] sm:$0xff]
    %v1099 = vld [vmem:[#allocation2 + $0x4b8] sm:$0xff]
    %v1100 = vld [vmem:[#allocation2 + $0x4c0] sm:$0xff]
    %v1101 = vld [vmem:[#allocation2 + $0x4c8] sm:$0xff]
    %v1102 = vld [vmem:[#allocation2 + $0x4d0] sm:$0xff]
    %v1103 = vld [vmem:[#allocation2 + $0x4d8] sm:$0xff]
    %v1104 = vld [vmem:[#allocation2 + $0x4e0] sm:$0xff]
    %v1105 = vld [vmem:[#allocation2 + $0x4e8] sm:$0xff]
    %v1106 = vld [vmem:[#allocation2 + $0x4f0] sm:$0xff]
    %v1107 = vld [vmem:[#allocation2 + $0x4f8] sm:$0xff]
    %v1108 = vld [vmem:[#allocation2 + $0x500] sm:$0xff]
    %v1109 = vld [vmem:[#allocation2 + $0x508] sm:$0xff]
    %v1110 = vld [vmem:[#allocation2 + $0x510] sm:$0xff]
    %v1111 = vld [vmem:[#allocation2 + $0x518] sm:$0xff]
    %v1112 = vld [vmem:[#allocation2 + $0x520] sm:$0xff]
    %v1113 = vld [vmem:[#allocation2 + $0x528] sm:$0xff]
    %v1114 = vld [vmem:[#allocation2 + $0x530] sm:$0xff]
    %v1115 = vld [vmem:[#allocation2 + $0x538] sm:$0xff]
    %v1116 = vld [vmem:[#allocation2 + $0x540] sm:$0xff]
    %v1117 = vld [vmem:[#allocation2 + $0x548] sm:$0xff]
    %v1118 = vld [vmem:[#allocation2 + $0x550] sm:$0xff]
    %v1119 = vld [vmem:[#allocation2 + $0x558] sm:$0xff]
    %v1120 = vld [vmem:[#allocation2 + $0x560] sm:$0xff]
    %v1121 = vld [vmem:[#allocation2 + $0x568] sm:$0xff]
    %v1122 = vld [vmem:[#allocation2 + $0x570] sm:$0xff]
    %v1123 = vld [vmem:[#allocation2 + $0x578] sm:$0xff]
    %v1124 = vld [vmem:[#allocation2 + $0x580] sm:$0xff]
    %v1125 = vld [vmem:[#allocation2 + $0x588] sm:$0xff]
    %v1126 = vld [vmem:[#allocation2 + $0x590] sm:$0xff]
    %v1127 = vld [vmem:[#allocation2 + $0x598] sm:$0xff]
    %v1128 = vld [vmem:[#allocation2 + $0x5a0] sm:$0xff]
    %v1129 = vld [vmem:[#allocation2 + $0x5a8] sm:$0xff]
    %v1130 = vld [vmem:[#allocation2 + $0x5b0] sm:$0xff]
    %v1131 = vld [vmem:[#allocation2 + $0x5b8] sm:$0xff]
    %v1132 = vld [vmem:[#allocation2 + $0x5c0] sm:$0xff]
    %v1133 = vld [vmem:[#allocation2 + $0x5c8] sm:$0xff]
    %v1134 = vld [vmem:[#allocation2 + $0x5d0] sm:$0xff]
    %v1135 = vld [vmem:[#allocation2 + $0x5d8] sm:$0xff]
    %v1136 = vld [vmem:[#allocation2 + $0x5e0] sm:$0xff]
    %v1137 = vld [vmem:[#allocation2 + $0x5e8] sm:$0xff]
    %v1138 = vld [vmem:[#allocation2 + $0x5f0] sm:$0xff]
    %v1139 = vld [vmem:[#allocation2 + $0x5f8] sm:$0xff]
    %v1140 = vld [vmem:[#allocation2 + $0x600] sm:$0xff]
    %v1141 = vld [vmem:[#allocation2 + $0x608] sm:$0xff]
    %v1142 = vld [vmem:[#allocation2 + $0x610] sm:$0xff]
    %v1143 = vld [vmem:[#allocation2 + $0x618] sm:$0xff]
    %v1144 = vld [vmem:[#allocation2 + $0x620] sm:$0xff]
    %v1145 = vld [vmem:[#allocation2 + $0x628] sm:$0xff]
    %v1146 = vld [vmem:[#allocation2 + $0x630] sm:$0xff]
    %v1147 = vld [vmem:[#allocation2 + $0x638] sm:$0xff]
    %v1148 = vld [vmem:[#allocation2 + $0x640] sm:$0xff]
    %v1149 = vld [vmem:[#allocation2 + $0x648] sm:$0xff]
    %v1150 = vld [vmem:[#allocation2 + $0x650] sm:$0xff]
    %v1151 = vld [vmem:[#allocation2 + $0x658] sm:$0xff]
    %v1152 = vld [vmem:[#allocation2 + $0x660] sm:$0xff]
    %v1153 = vld [vmem:[#allocation2 + $0x668] sm:$0xff]
    %v1154 = vld [vmem:[#allocation2 + $0x670] sm:$0xff]
    %v1155 = vld [vmem:[#allocation2 + $0x678] sm:$0xff]
    %v1156 = vld [vmem:[#allocation2 + $0x680] sm:$0xff]
    %v1157 = vld [vmem:[#allocation2 + $0x688] sm:$0xff]
    %v1158 = vld [vmem:[#allocation2 + $0x690] sm:$0xff]
    %v1159 = vld [vmem:[#allocation2 + $0x698] sm:$0xff]
    %v1160 = vld [vmem:[#allocation2 + $0x6a0] sm:$0xff]
    %v1161 = vld [vmem:[#allocation2 + $0x6a8] sm:$0xff]
    %v1162 = vld [vmem:[#allocation2 + $0x6b0] sm:$0xff]
    %v1163 = vld [vmem:[#allocation2 + $0x6b8] sm:$0xff]
    %v1164 = vld [vmem:[#allocation2 + $0x6c0] sm:$0xff]
    %v1165 = vld [vmem:[#allocation2 + $0x6c8] sm:$0xff]
    %v1166 = vld [vmem:[#allocation2 + $0x6d0] sm:$0xff]
    %v1167 = vld [vmem:[#allocation2 + $0x6d8] sm:$0xff]
    %v1168 = vld [vmem:[#allocation2 + $0x6e0] sm:$0xff]
    %v1169 = vld [vmem:[#allocation2 + $0x6e8] sm:$0xff]
    %v1170 = vld [vmem:[#allocation2 + $0x6f0] sm:$0xff]
    %v1171 = vld [vmem:[#allocation2 + $0x6f8] sm:$0xff]
    %v1172 = vld [vmem:[#allocation2 + $0x700] sm:$0xff]
    %v1173 = vld [vmem:[#allocation2 + $0x708] sm:$0xff]
    %v1174 = vld [vmem:[#allocation2 + $0x710] sm:$0xff]
    %v1175 = vld [vmem:[#allocation2 + $0x718] sm:$0xff]
    %v1176 = vld [vmem:[#allocation2 + $0x720] sm:$0xff]
    %v1177 = vld [vmem:[#allocation2 + $0x728] sm:$0xff]
    %v1178 = vld [vmem:[#allocation2 + $0x730] sm:$0xff]
    %v1179 = vld [vmem:[#allocation2 + $0x738] sm:$0xff]
    %v1180 = vld [vmem:[#allocation2 + $0x740] sm:$0xff]
    %v1181 = vld [vmem:[#allocation2 + $0x748] sm:$0xff]
    %v1182 = vld [vmem:[#allocation2 + $0x750] sm:$0xff]
    %v1183 = vld [vmem:[#allocation2 + $0x758] sm:$0xff]
    %v1184 = vld [vmem:[#allocation2 + $0x760] sm:$0xff]
    %v1185 = vld [vmem:[#allocation2 + $0x768] sm:$0xff]
    %v1186 = vld [vmem:[#allocation2 + $0x770] sm:$0xff]
    %v1187 = vld [vmem:[#allocation2 + $0x778] sm:$0xff]
    %v1188 = vld [vmem:[#allocation2 + $0x780] sm:$0xff]
    %v1189 = vld [vmem:[#allocation2 + $0x788] sm:$0xff]
    %v1190 = vld [vmem:[#allocation2 + $0x790] sm:$0xff]
    %v1191 = vld [vmem:[#allocation2 + $0x798] sm:$0xff]
    %v1192 = vld [vmem:[#allocation2 + $0x7a0] sm:$0xff]
    %v1193 = vld [vmem:[#allocation2 + $0x7a8] sm:$0xff]
    %v1194 = vld [vmem:[#allocation2 + $0x7b0] sm:$0xff]
    %v1195 = vld [vmem:[#allocation2 + $0x7b8] sm:$0xff]
    %v1196 = vld [vmem:[#allocation2 + $0x7c0] sm:$0xff]
    %v1197 = vld [vmem:[#allocation2 + $0x7c8] sm:$0xff]
    %v1198 = vld [vmem:[#allocation2 + $0x7d0] sm:$0xff]
    %v1199 = vld [vmem:[#allocation2 + $0x7d8] sm:$0xff]
    %v1200 = vld [vmem:[#allocation2 + $0x7e0] sm:$0xff]
    %v1201 = vld [vmem:[#allocation2 + $0x7e8] sm:$0xff]
    %v1202 = vld [vmem:[#allocation2 + $0x7f0] sm:$0xff]
    %v1203 = vld [vmem:[#allocation2 + $0x7f8] sm:$0xff]
    %v1204 = vld [vmem:[#allocation9 + $0x8] sm:$0xff]
    %v1206 = vperm.slane %v1204, 0
    %v1207 = vperm.slane %v1204, 1
    %v1208 = vperm.slane %v1204, 2
    %v1209 = vperm.slane %v1204, 3
    %v1210 = vperm.slane %v1204, 4
    %v1211 = vperm.slane %v1204, 5
    %v1212 = vperm.slane %v1204, 6
    %v1213 = vperm.slane %v1204, 7
    %v1478 = vunpack.c.l.b16 %v948
    %v1479 = vunpack.c.h.b16 %v948
    %v1480 = vunpack.c.l.b16 %v949
    %v1481 = vunpack.c.h.b16 %v949
    %v1482 = vunpack.c.l.b16 %v950
    %v1483 = vunpack.c.h.b16 %v950
    %v1484 = vunpack.c.l.b16 %v951
    %v1485 = vunpack.c.h.b16 %v951
    %v1486 = vunpack.c.l.b16 %v952
    %v1487 = vunpack.c.h.b16 %v952
    %v1488 = vunpack.c.l.b16 %v953
    %v1489 = vunpack.c.h.b16 %v953
    %v1490 = vunpack.c.l.b16 %v954
    %v1491 = vunpack.c.h.b16 %v954
    %v1492 = vunpack.c.l.b16 %v955
    %v1493 = vunpack.c.h.b16 %v955
    %v1494 = vunpack.c.l.b16 %v956
    %v1495 = vunpack.c.h.b16 %v956
    %v1496 = vunpack.c.l.b16 %v957
    %v1497 = vunpack.c.h.b16 %v957
    %v1498 = vunpack.c.l.b16 %v958
    %v1499 = vunpack.c.h.b16 %v958
    %v1500 = vunpack.c.l.b16 %v959
    %v1501 = vunpack.c.h.b16 %v959
    %v1502 = vunpack.c.l.b16 %v960
    %v1503 = vunpack.c.h.b16 %v960
    %v1504 = vunpack.c.l.b16 %v961
    %v1505 = vunpack.c.h.b16 %v961
    %v1506 = vunpack.c.l.b16 %v962
    %v1507 = vunpack.c.h.b16 %v962
    %v1508 = vunpack.c.l.b16 %v963
    %v1509 = vunpack.c.h.b16 %v963
    %v1510 = vunpack.c.l.b16 %v964
    %v1511 = vunpack.c.h.b16 %v964
    %v1512 = vunpack.c.l.b16 %v965
    %v1513 = vunpack.c.h.b16 %v965
    %v1514 = vunpack.c.l.b16 %v966
    %v1515 = vunpack.c.h.b16 %v966
    %v1516 = vunpack.c.l.b16 %v967
    %v1517 = vunpack.c.h.b16 %v967
    %v1518 = vunpack.c.l.b16 %v968
    %v1519 = vunpack.c.h.b16 %v968
    %v1520 = vunpack.c.l.b16 %v969
    %v1521 = vunpack.c.h.b16 %v969
    %v1522 = vunpack.c.l.b16 %v970
    %v1523 = vunpack.c.h.b16 %v970
    %v1524 = vunpack.c.l.b16 %v971
    %v1525 = vunpack.c.h.b16 %v971
    %v1526 = vunpack.c.l.b16 %v972
    %v1527 = vunpack.c.h.b16 %v972
    %v1528 = vunpack.c.l.b16 %v973
    %v1529 = vunpack.c.h.b16 %v973
    %v1530 = vunpack.c.l.b16 %v974
    %v1531 = vunpack.c.h.b16 %v974
    %v1532 = vunpack.c.l.b16 %v975
    %v1533 = vunpack.c.h.b16 %v975
    %v1534 = vunpack.c.l.b16 %v976
    %v1535 = vunpack.c.h.b16 %v976
    %v1536 = vunpack.c.l.b16 %v977
    %v1537 = vunpack.c.h.b16 %v977
    %v1538 = vunpack.c.l.b16 %v978
    %v1539 = vunpack.c.h.b16 %v978
    %v1540 = vunpack.c.l.b16 %v979
    %v1541 = vunpack.c.h.b16 %v979
    %v1542 = vunpack.c.l.b16 %v980
    %v1543 = vunpack.c.h.b16 %v980
    %v1544 = vunpack.c.l.b16 %v981
    %v1545 = vunpack.c.h.b16 %v981
    %v1546 = vunpack.c.l.b16 %v982
    %v1547 = vunpack.c.h.b16 %v982
    %v1548 = vunpack.c.l.b16 %v983
    %v1549 = vunpack.c.h.b16 %v983
    %v1550 = vunpack.c.l.b16 %v984
    %v1551 = vunpack.c.h.b16 %v984
    %v1552 = vunpack.c.l.b16 %v985
    %v1553 = vunpack.c.h.b16 %v985
    %v1554 = vunpack.c.l.b16 %v986
    %v1555 = vunpack.c.h.b16 %v986
    %v1556 = vunpack.c.l.b16 %v987
    %v1557 = vunpack.c.h.b16 %v987
    %v1558 = vunpack.c.l.b16 %v988
    %v1559 = vunpack.c.h.b16 %v988
    %v1560 = vunpack.c.l.b16 %v989
    %v1561 = vunpack.c.h.b16 %v989
    %v1562 = vunpack.c.l.b16 %v990
    %v1563 = vunpack.c.h.b16 %v990
    %v1564 = vunpack.c.l.b16 %v991
    %v1565 = vunpack.c.h.b16 %v991
    %v1566 = vunpack.c.l.b16 %v992
    %v1567 = vunpack.c.h.b16 %v992
    %v1568 = vunpack.c.l.b16 %v993
    %v1569 = vunpack.c.h.b16 %v993
    %v1570 = vunpack.c.l.b16 %v994
    %v1571 = vunpack.c.h.b16 %v994
    %v1572 = vunpack.c.l.b16 %v995
    %v1573 = vunpack.c.h.b16 %v995
    %v1574 = vunpack.c.l.b16 %v996
    %v1575 = vunpack.c.h.b16 %v996
    %v1576 = vunpack.c.l.b16 %v997
    %v1577 = vunpack.c.h.b16 %v997
    %v1578 = vunpack.c.l.b16 %v998
    %v1579 = vunpack.c.h.b16 %v998
    %v1580 = vunpack.c.l.b16 %v999
    %v1581 = vunpack.c.h.b16 %v999
    %v1582 = vunpack.c.l.b16 %v1000
    %v1583 = vunpack.c.h.b16 %v1000
    %v1584 = vunpack.c.l.b16 %v1001
    %v1585 = vunpack.c.h.b16 %v1001
    %v1586 = vunpack.c.l.b16 %v1002
    %v1587 = vunpack.c.h.b16 %v1002
    %v1588 = vunpack.c.l.b16 %v1003
    %v1589 = vunpack.c.h.b16 %v1003
    %v1590 = vunpack.c.l.b16 %v1004
    %v1591 = vunpack.c.h.b16 %v1004
    %v1592 = vunpack.c.l.b16 %v1005
    %v1593 = vunpack.c.h.b16 %v1005
    %v1594 = vunpack.c.l.b16 %v1006
    %v1595 = vunpack.c.h.b16 %v1006
    %v1596 = vunpack.c.l.b16 %v1007
    %v1597 = vunpack.c.h.b16 %v1007
    %v1598 = vunpack.c.l.b16 %v1008
    %v1599 = vunpack.c.h.b16 %v1008
    %v1600 = vunpack.c.l.b16 %v1009
    %v1601 = vunpack.c.h.b16 %v1009
    %v1602 = vunpack.c.l.b16 %v1010
    %v1603 = vunpack.c.h.b16 %v1010
    %v1604 = vunpack.c.l.b16 %v1011
    %v1605 = vunpack.c.h.b16 %v1011
    %v1606 = vunpack.c.l.b16 %v1012
    %v1607 = vunpack.c.h.b16 %v1012
    %v1608 = vunpack.c.l.b16 %v1013
    %v1609 = vunpack.c.h.b16 %v1013
    %v1610 = vunpack.c.l.b16 %v1014
    %v1611 = vunpack.c.h.b16 %v1014
    %v1612 = vunpack.c.l.b16 %v1015
    %v1613 = vunpack.c.h.b16 %v1015
    %v1614 = vunpack.c.l.b16 %v1016
    %v1615 = vunpack.c.h.b16 %v1016
    %v1616 = vunpack.c.l.b16 %v1017
    %v1617 = vunpack.c.h.b16 %v1017
    %v1618 = vunpack.c.l.b16 %v1018
    %v1619 = vunpack.c.h.b16 %v1018
    %v1620 = vunpack.c.l.b16 %v1019
    %v1621 = vunpack.c.h.b16 %v1019
    %v1622 = vunpack.c.l.b16 %v1020
    %v1623 = vunpack.c.h.b16 %v1020
    %v1624 = vunpack.c.l.b16 %v1021
    %v1625 = vunpack.c.h.b16 %v1021
    %v1626 = vunpack.c.l.b16 %v1022
    %v1627 = vunpack.c.h.b16 %v1022
    %v1628 = vunpack.c.l.b16 %v1023
    %v1629 = vunpack.c.h.b16 %v1023
    %v1630 = vunpack.c.l.b16 %v1024
    %v1631 = vunpack.c.h.b16 %v1024
    %v1632 = vunpack.c.l.b16 %v1025
    %v1633 = vunpack.c.h.b16 %v1025
    %v1634 = vunpack.c.l.b16 %v1026
    %v1635 = vunpack.c.h.b16 %v1026
    %v1636 = vunpack.c.l.b16 %v1027
    %v1637 = vunpack.c.h.b16 %v1027
    %v1638 = vunpack.c.l.b16 %v1028
    %v1639 = vunpack.c.h.b16 %v1028
    %v1640 = vunpack.c.l.b16 %v1029
    %v1641 = vunpack.c.h.b16 %v1029
    %v1642 = vunpack.c.l.b16 %v1030
    %v1643 = vunpack.c.h.b16 %v1030
    %v1644 = vunpack.c.l.b16 %v1031
    %v1645 = vunpack.c.h.b16 %v1031
    %v1646 = vunpack.c.l.b16 %v1032
    %v1647 = vunpack.c.h.b16 %v1032
    %v1648 = vunpack.c.l.b16 %v1033
    %v1649 = vunpack.c.h.b16 %v1033
    %v1650 = vunpack.c.l.b16 %v1034
    %v1651 = vunpack.c.h.b16 %v1034
    %v1652 = vunpack.c.l.b16 %v1035
    %v1653 = vunpack.c.h.b16 %v1035
    %v1654 = vunpack.c.l.b16 %v1036
    %v1655 = vunpack.c.h.b16 %v1036
    %v1656 = vunpack.c.l.b16 %v1037
    %v1657 = vunpack.c.h.b16 %v1037
    %v1658 = vunpack.c.l.b16 %v1038
    %v1659 = vunpack.c.h.b16 %v1038
    %v1660 = vunpack.c.l.b16 %v1039
    %v1661 = vunpack.c.h.b16 %v1039
    %v1662 = vunpack.c.l.b16 %v1040
    %v1663 = vunpack.c.h.b16 %v1040
    %v1664 = vunpack.c.l.b16 %v1041
    %v1665 = vunpack.c.h.b16 %v1041
    %v1666 = vunpack.c.l.b16 %v1042
    %v1667 = vunpack.c.h.b16 %v1042
    %v1668 = vunpack.c.l.b16 %v1043
    %v1669 = vunpack.c.h.b16 %v1043
    %v1670 = vunpack.c.l.b16 %v1044
    %v1671 = vunpack.c.h.b16 %v1044
    %v1672 = vunpack.c.l.b16 %v1045
    %v1673 = vunpack.c.h.b16 %v1045
    %v1674 = vunpack.c.l.b16 %v1046
    %v1675 = vunpack.c.h.b16 %v1046
    %v1676 = vunpack.c.l.b16 %v1047
    %v1677 = vunpack.c.h.b16 %v1047
    %v1678 = vunpack.c.l.b16 %v1048
    %v1679 = vunpack.c.h.b16 %v1048
    %v1680 = vunpack.c.l.b16 %v1049
    %v1681 = vunpack.c.h.b16 %v1049
    %v1682 = vunpack.c.l.b16 %v1050
    %v1683 = vunpack.c.h.b16 %v1050
    %v1684 = vunpack.c.l.b16 %v1051
    %v1685 = vunpack.c.h.b16 %v1051
    %v1686 = vunpack.c.l.b16 %v1052
    %v1687 = vunpack.c.h.b16 %v1052
    %v1688 = vunpack.c.l.b16 %v1053
    %v1689 = vunpack.c.h.b16 %v1053
    %v1690 = vunpack.c.l.b16 %v1054
    %v1691 = vunpack.c.h.b16 %v1054
    %v1692 = vunpack.c.l.b16 %v1055
    %v1693 = vunpack.c.h.b16 %v1055
    %v1694 = vunpack.c.l.b16 %v1056
    %v1695 = vunpack.c.h.b16 %v1056
    %v1696 = vunpack.c.l.b16 %v1057
    %v1697 = vunpack.c.h.b16 %v1057
    %v1698 = vunpack.c.l.b16 %v1058
    %v1699 = vunpack.c.h.b16 %v1058
    %v1700 = vunpack.c.l.b16 %v1059
    %v1701 = vunpack.c.h.b16 %v1059
    %v1702 = vunpack.c.l.b16 %v1060
    %v1703 = vunpack.c.h.b16 %v1060
    %v1704 = vunpack.c.l.b16 %v1061
    %v1705 = vunpack.c.h.b16 %v1061
    %v1706 = vunpack.c.l.b16 %v1062
    %v1707 = vunpack.c.h.b16 %v1062
    %v1708 = vunpack.c.l.b16 %v1063
    %v1709 = vunpack.c.h.b16 %v1063
    %v1710 = vunpack.c.l.b16 %v1064
    %v1711 = vunpack.c.h.b16 %v1064
    %v1712 = vunpack.c.l.b16 %v1065
    %v1713 = vunpack.c.h.b16 %v1065
    %v1714 = vunpack.c.l.b16 %v1066
    %v1715 = vunpack.c.h.b16 %v1066
    %v1716 = vunpack.c.l.b16 %v1067
    %v1717 = vunpack.c.h.b16 %v1067
    %v1718 = vunpack.c.l.b16 %v1068
    %v1719 = vunpack.c.h.b16 %v1068
    %v1720 = vunpack.c.l.b16 %v1069
    %v1721 = vunpack.c.h.b16 %v1069
    %v1722 = vunpack.c.l.b16 %v1070
    %v1723 = vunpack.c.h.b16 %v1070
    %v1724 = vunpack.c.l.b16 %v1071
    %v1725 = vunpack.c.h.b16 %v1071
    %v1726 = vunpack.c.l.b16 %v1072
    %v1727 = vunpack.c.h.b16 %v1072
    %v1728 = vunpack.c.l.b16 %v1073
    %v1729 = vunpack.c.h.b16 %v1073
    %v1730 = vunpack.c.l.b16 %v1074
    %v1731 = vunpack.c.h.b16 %v1074
    %v1732 = vunpack.c.l.b16 %v1075
    %v1733 = vunpack.c.h.b16 %v1075
    %v1734 = vunpack.c.l.b16 %v1076
    %v1735 = vunpack.c.h.b16 %v1076
    %v1736 = vunpack.c.l.b16 %v1077
    %v1737 = vunpack.c.h.b16 %v1077
    %v1738 = vunpack.c.l.b16 %v1078
    %v1739 = vunpack.c.h.b16 %v1078
    %v1740 = vunpack.c.l.b16 %v1079
    %v1741 = vunpack.c.h.b16 %v1079
    %v1742 = vunpack.c.l.b16 %v1080
    %v1743 = vunpack.c.h.b16 %v1080
    %v1744 = vunpack.c.l.b16 %v1081
    %v1745 = vunpack.c.h.b16 %v1081
    %v1746 = vunpack.c.l.b16 %v1082
    %v1747 = vunpack.c.h.b16 %v1082
    %v1748 = vunpack.c.l.b16 %v1083
    %v1749 = vunpack.c.h.b16 %v1083
    %v1750 = vunpack.c.l.b16 %v1084
    %v1751 = vunpack.c.h.b16 %v1084
    %v1752 = vunpack.c.l.b16 %v1085
    %v1753 = vunpack.c.h.b16 %v1085
    %v1754 = vunpack.c.l.b16 %v1086
    %v1755 = vunpack.c.h.b16 %v1086
    %v1756 = vunpack.c.l.b16 %v1087
    %v1757 = vunpack.c.h.b16 %v1087
    %v1758 = vunpack.c.l.b16 %v1088
    %v1759 = vunpack.c.h.b16 %v1088
    %v1760 = vunpack.c.l.b16 %v1089
    %v1761 = vunpack.c.h.b16 %v1089
    %v1762 = vunpack.c.l.b16 %v1090
    %v1763 = vunpack.c.h.b16 %v1090
    %v1764 = vunpack.c.l.b16 %v1091
    %v1765 = vunpack.c.h.b16 %v1091
    %v1766 = vunpack.c.l.b16 %v1092
    %v1767 = vunpack.c.h.b16 %v1092
    %v1768 = vunpack.c.l.b16 %v1093
    %v1769 = vunpack.c.h.b16 %v1093
    %v1770 = vunpack.c.l.b16 %v1094
    %v1771 = vunpack.c.h.b16 %v1094
    %v1772 = vunpack.c.l.b16 %v1095
    %v1773 = vunpack.c.h.b16 %v1095
    %v1774 = vunpack.c.l.b16 %v1096
    %v1775 = vunpack.c.h.b16 %v1096
    %v1776 = vunpack.c.l.b16 %v1097
    %v1777 = vunpack.c.h.b16 %v1097
    %v1778 = vunpack.c.l.b16 %v1098
    %v1779 = vunpack.c.h.b16 %v1098
    %v1780 = vunpack.c.l.b16 %v1099
    %v1781 = vunpack.c.h.b16 %v1099
    %v1782 = vunpack.c.l.b16 %v1100
    %v1783 = vunpack.c.h.b16 %v1100
    %v1784 = vunpack.c.l.b16 %v1101
    %v1785 = vunpack.c.h.b16 %v1101
    %v1786 = vunpack.c.l.b16 %v1102
    %v1787 = vunpack.c.h.b16 %v1102
    %v1788 = vunpack.c.l.b16 %v1103
    %v1789 = vunpack.c.h.b16 %v1103
    %v1790 = vunpack.c.l.b16 %v1104
    %v1791 = vunpack.c.h.b16 %v1104
    %v1792 = vunpack.c.l.b16 %v1105
    %v1793 = vunpack.c.h.b16 %v1105
    %v1794 = vunpack.c.l.b16 %v1106
    %v1795 = vunpack.c.h.b16 %v1106
    %v1796 = vunpack.c.l.b16 %v1107
    %v1797 = vunpack.c.h.b16 %v1107
    %v1798 = vunpack.c.l.b16 %v1108
    %v1799 = vunpack.c.h.b16 %v1108
    %v1800 = vunpack.c.l.b16 %v1109
    %v1801 = vunpack.c.h.b16 %v1109
    %v1802 = vunpack.c.l.b16 %v1110
    %v1803 = vunpack.c.h.b16 %v1110
    %v1804 = vunpack.c.l.b16 %v1111
    %v1805 = vunpack.c.h.b16 %v1111
    %v1806 = vunpack.c.l.b16 %v1112
    %v1807 = vunpack.c.h.b16 %v1112
    %v1808 = vunpack.c.l.b16 %v1113
    %v1809 = vunpack.c.h.b16 %v1113
    %v1810 = vunpack.c.l.b16 %v1114
    %v1811 = vunpack.c.h.b16 %v1114
    %v1812 = vunpack.c.l.b16 %v1115
    %v1813 = vunpack.c.h.b16 %v1115
    %v1814 = vunpack.c.l.b16 %v1116
    %v1815 = vunpack.c.h.b16 %v1116
    %v1816 = vunpack.c.l.b16 %v1117
    %v1817 = vunpack.c.h.b16 %v1117
    %v1818 = vunpack.c.l.b16 %v1118
    %v1819 = vunpack.c.h.b16 %v1118
    %v1820 = vunpack.c.l.b16 %v1119
    %v1821 = vunpack.c.h.b16 %v1119
    %v1822 = vunpack.c.l.b16 %v1120
    %v1823 = vunpack.c.h.b16 %v1120
    %v1824 = vunpack.c.l.b16 %v1121
    %v1825 = vunpack.c.h.b16 %v1121
    %v1826 = vunpack.c.l.b16 %v1122
    %v1827 = vunpack.c.h.b16 %v1122
    %v1828 = vunpack.c.l.b16 %v1123
    %v1829 = vunpack.c.h.b16 %v1123
    %v1830 = vunpack.c.l.b16 %v1124
    %v1831 = vunpack.c.h.b16 %v1124
    %v1832 = vunpack.c.l.b16 %v1125
    %v1833 = vunpack.c.h.b16 %v1125
    %v1834 = vunpack.c.l.b16 %v1126
    %v1835 = vunpack.c.h.b16 %v1126
    %v1836 = vunpack.c.l.b16 %v1127
    %v1837 = vunpack.c.h.b16 %v1127
    %v1838 = vunpack.c.l.b16 %v1128
    %v1839 = vunpack.c.h.b16 %v1128
    %v1840 = vunpack.c.l.b16 %v1129
    %v1841 = vunpack.c.h.b16 %v1129
    %v1842 = vunpack.c.l.b16 %v1130
    %v1843 = vunpack.c.h.b16 %v1130
    %v1844 = vunpack.c.l.b16 %v1131
    %v1845 = vunpack.c.h.b16 %v1131
    %v1846 = vunpack.c.l.b16 %v1132
    %v1847 = vunpack.c.h.b16 %v1132
    %v1848 = vunpack.c.l.b16 %v1133
    %v1849 = vunpack.c.h.b16 %v1133
    %v1850 = vunpack.c.l.b16 %v1134
    %v1851 = vunpack.c.h.b16 %v1134
    %v1852 = vunpack.c.l.b16 %v1135
    %v1853 = vunpack.c.h.b16 %v1135
    %v1854 = vunpack.c.l.b16 %v1136
    %v1855 = vunpack.c.h.b16 %v1136
    %v1856 = vunpack.c.l.b16 %v1137
    %v1857 = vunpack.c.h.b16 %v1137
    %v1858 = vunpack.c.l.b16 %v1138
    %v1859 = vunpack.c.h.b16 %v1138
    %v1860 = vunpack.c.l.b16 %v1139
    %v1861 = vunpack.c.h.b16 %v1139
    %v1862 = vunpack.c.l.b16 %v1140
    %v1863 = vunpack.c.h.b16 %v1140
    %v1864 = vunpack.c.l.b16 %v1141
    %v1865 = vunpack.c.h.b16 %v1141
    %v1866 = vunpack.c.l.b16 %v1142
    %v1867 = vunpack.c.h.b16 %v1142
    %v1868 = vunpack.c.l.b16 %v1143
    %v1869 = vunpack.c.h.b16 %v1143
    %v1870 = vunpack.c.l.b16 %v1144
    %v1871 = vunpack.c.h.b16 %v1144
    %v1872 = vunpack.c.l.b16 %v1145
    %v1873 = vunpack.c.h.b16 %v1145
    %v1874 = vunpack.c.l.b16 %v1146
    %v1875 = vunpack.c.h.b16 %v1146
    %v1876 = vunpack.c.l.b16 %v1147
    %v1877 = vunpack.c.h.b16 %v1147
    %v1878 = vunpack.c.l.b16 %v1148
    %v1879 = vunpack.c.h.b16 %v1148
    %v1880 = vunpack.c.l.b16 %v1149
    %v1881 = vunpack.c.h.b16 %v1149
    %v1882 = vunpack.c.l.b16 %v1150
    %v1883 = vunpack.c.h.b16 %v1150
    %v1884 = vunpack.c.l.b16 %v1151
    %v1885 = vunpack.c.h.b16 %v1151
    %v1886 = vunpack.c.l.b16 %v1152
    %v1887 = vunpack.c.h.b16 %v1152
    %v1888 = vunpack.c.l.b16 %v1153
    %v1889 = vunpack.c.h.b16 %v1153
    %v1890 = vunpack.c.l.b16 %v1154
    %v1891 = vunpack.c.h.b16 %v1154
    %v1892 = vunpack.c.l.b16 %v1155
    %v1893 = vunpack.c.h.b16 %v1155
    %v1894 = vunpack.c.l.b16 %v1156
    %v1895 = vunpack.c.h.b16 %v1156
    %v1896 = vunpack.c.l.b16 %v1157
    %v1897 = vunpack.c.h.b16 %v1157
    %v1898 = vunpack.c.l.b16 %v1158
    %v1899 = vunpack.c.h.b16 %v1158
    %v1900 = vunpack.c.l.b16 %v1159
    %v1901 = vunpack.c.h.b16 %v1159
    %v1902 = vunpack.c.l.b16 %v1160
    %v1903 = vunpack.c.h.b16 %v1160
    %v1904 = vunpack.c.l.b16 %v1161
    %v1905 = vunpack.c.h.b16 %v1161
    %v1906 = vunpack.c.l.b16 %v1162
    %v1907 = vunpack.c.h.b16 %v1162
    %v1908 = vunpack.c.l.b16 %v1163
    %v1909 = vunpack.c.h.b16 %v1163
    %v1910 = vunpack.c.l.b16 %v1164
    %v1911 = vunpack.c.h.b16 %v1164
    %v1912 = vunpack.c.l.b16 %v1165
    %v1913 = vunpack.c.h.b16 %v1165
    %v1914 = vunpack.c.l.b16 %v1166
    %v1915 = vunpack.c.h.b16 %v1166
    %v1916 = vunpack.c.l.b16 %v1167
    %v1917 = vunpack.c.h.b16 %v1167
    %v1918 = vunpack.c.l.b16 %v1168
    %v1919 = vunpack.c.h.b16 %v1168
    %v1920 = vunpack.c.l.b16 %v1169
    %v1921 = vunpack.c.h.b16 %v1169
    %v1922 = vunpack.c.l.b16 %v1170
    %v1923 = vunpack.c.h.b16 %v1170
    %v1924 = vunpack.c.l.b16 %v1171
    %v1925 = vunpack.c.h.b16 %v1171
    %v1926 = vunpack.c.l.b16 %v1172
    %v1927 = vunpack.c.h.b16 %v1172
    %v1928 = vunpack.c.l.b16 %v1173
    %v1929 = vunpack.c.h.b16 %v1173
    %v1930 = vunpack.c.l.b16 %v1174
    %v1931 = vunpack.c.h.b16 %v1174
    %v1932 = vunpack.c.l.b16 %v1175
    %v1933 = vunpack.c.h.b16 %v1175
    %v1934 = vunpack.c.l.b16 %v1176
    %v1935 = vunpack.c.h.b16 %v1176
    %v1936 = vunpack.c.l.b16 %v1177
    %v1937 = vunpack.c.h.b16 %v1177
    %v1938 = vunpack.c.l.b16 %v1178
    %v1939 = vunpack.c.h.b16 %v1178
    %v1940 = vunpack.c.l.b16 %v1179
    %v1941 = vunpack.c.h.b16 %v1179
    %v1942 = vunpack.c.l.b16 %v1180
    %v1943 = vunpack.c.h.b16 %v1180
    %v1944 = vunpack.c.l.b16 %v1181
    %v1945 = vunpack.c.h.b16 %v1181
    %v1946 = vunpack.c.l.b16 %v1182
    %v1947 = vunpack.c.h.b16 %v1182
    %v1948 = vunpack.c.l.b16 %v1183
    %v1949 = vunpack.c.h.b16 %v1183
    %v1950 = vunpack.c.l.b16 %v1184
    %v1951 = vunpack.c.h.b16 %v1184
    %v1952 = vunpack.c.l.b16 %v1185
    %v1953 = vunpack.c.h.b16 %v1185
    %v1954 = vunpack.c.l.b16 %v1186
    %v1955 = vunpack.c.h.b16 %v1186
    %v1956 = vunpack.c.l.b16 %v1187
    %v1957 = vunpack.c.h.b16 %v1187
    %v1958 = vunpack.c.l.b16 %v1188
    %v1959 = vunpack.c.h.b16 %v1188
    %v1960 = vunpack.c.l.b16 %v1189
    %v1961 = vunpack.c.h.b16 %v1189
    %v1962 = vunpack.c.l.b16 %v1190
    %v1963 = vunpack.c.h.b16 %v1190
    %v1964 = vunpack.c.l.b16 %v1191
    %v1965 = vunpack.c.h.b16 %v1191
    %v1966 = vunpack.c.l.b16 %v1192
    %v1967 = vunpack.c.h.b16 %v1192
    %v1968 = vunpack.c.l.b16 %v1193
    %v1969 = vunpack.c.h.b16 %v1193
    %v1970 = vunpack.c.l.b16 %v1194
    %v1971 = vunpack.c.h.b16 %v1194
    %v1972 = vunpack.c.l.b16 %v1195
    %v1973 = vunpack.c.h.b16 %v1195
    %v1974 = vunpack.c.l.b16 %v1196
    %v1975 = vunpack.c.h.b16 %v1196
    %v1976 = vunpack.c.l.b16 %v1197
    %v1977 = vunpack.c.h.b16 %v1197
    %v1978 = vunpack.c.l.b16 %v1198
    %v1979 = vunpack.c.h.b16 %v1198
    %v1980 = vunpack.c.l.b16 %v1199
    %v1981 = vunpack.c.h.b16 %v1199
    %v1982 = vunpack.c.l.b16 %v1200
    %v1983 = vunpack.c.h.b16 %v1200
    %v1984 = vunpack.c.l.b16 %v1201
    %v1985 = vunpack.c.h.b16 %v1201
    %v1986 = vunpack.c.l.b16 %v1202
    %v1987 = vunpack.c.h.b16 %v1202
    %v1988 = vunpack.c.l.b16 %v1203
    %v1989 = vunpack.c.h.b16 %v1203
    %v1990 = vpack.c.b16 %v1486, %v1478
    %v1991 = vpack.c.b16 %v1487, %v1479
    %v1992 = vpack.c.b16 %v1488, %v1480
    %v1993 = vpack.c.b16 %v1489, %v1481
    %v1994 = vpack.c.b16 %v1490, %v1482
    %v1995 = vpack.c.b16 %v1491, %v1483
    %v1996 = vpack.c.b16 %v1492, %v1484
    %v1997 = vpack.c.b16 %v1493, %v1485
    %v1998 = vpack.c.b16 %v1502, %v1494
    %v1999 = vpack.c.b16 %v1503, %v1495
    %v2000 = vpack.c.b16 %v1504, %v1496
    %v2001 = vpack.c.b16 %v1505, %v1497
    %v2002 = vpack.c.b16 %v1506, %v1498
    %v2003 = vpack.c.b16 %v1507, %v1499
    %v2004 = vpack.c.b16 %v1508, %v1500
    %v2005 = vpack.c.b16 %v1509, %v1501
    %v2006 = vpack.c.b16 %v1518, %v1510
    %v2007 = vpack.c.b16 %v1519, %v1511
    %v2008 = vpack.c.b16 %v1520, %v1512
    %v2009 = vpack.c.b16 %v1521, %v1513
    %v2010 = vpack.c.b16 %v1522, %v1514
    %v2011 = vpack.c.b16 %v1523, %v1515
    %v2012 = vpack.c.b16 %v1524, %v1516
    %v2013 = vpack.c.b16 %v1525, %v1517
    %v2014 = vpack.c.b16 %v1534, %v1526
    %v2015 = vpack.c.b16 %v1535, %v1527
    %v2016 = vpack.c.b16 %v1536, %v1528
    %v2017 = vpack.c.b16 %v1537, %v1529
    %v2018 = vpack.c.b16 %v1538, %v1530
    %v2019 = vpack.c.b16 %v1539, %v1531
    %v2020 = vpack.c.b16 %v1540, %v1532
    %v2021 = vpack.c.b16 %v1541, %v1533
    %v2022 = vpack.c.b16 %v1550, %v1542
    %v2023 = vpack.c.b16 %v1551, %v1543
    %v2024 = vpack.c.b16 %v1552, %v1544
    %v2025 = vpack.c.b16 %v1553, %v1545
    %v2026 = vpack.c.b16 %v1554, %v1546
    %v2027 = vpack.c.b16 %v1555, %v1547
    %v2028 = vpack.c.b16 %v1556, %v1548
    %v2029 = vpack.c.b16 %v1557, %v1549
    %v2030 = vpack.c.b16 %v1566, %v1558
    %v2031 = vpack.c.b16 %v1567, %v1559
    %v2032 = vpack.c.b16 %v1568, %v1560
    %v2033 = vpack.c.b16 %v1569, %v1561
    %v2034 = vpack.c.b16 %v1570, %v1562
    %v2035 = vpack.c.b16 %v1571, %v1563
    %v2036 = vpack.c.b16 %v1572, %v1564
    %v2037 = vpack.c.b16 %v1573, %v1565
    %v2038 = vpack.c.b16 %v1582, %v1574
    %v2039 = vpack.c.b16 %v1583, %v1575
    %v2040 = vpack.c.b16 %v1584, %v1576
    %v2041 = vpack.c.b16 %v1585, %v1577
    %v2042 = vpack.c.b16 %v1586, %v1578
    %v2043 = vpack.c.b16 %v1587, %v1579
    %v2044 = vpack.c.b16 %v1588, %v1580
    %v2045 = vpack.c.b16 %v1589, %v1581
    %v2046 = vpack.c.b16 %v1598, %v1590
    %v2047 = vpack.c.b16 %v1599, %v1591
    %v2048 = vpack.c.b16 %v1600, %v1592
    %v2049 = vpack.c.b16 %v1601, %v1593
    %v2050 = vpack.c.b16 %v1602, %v1594
    %v2051 = vpack.c.b16 %v1603, %v1595
    %v2052 = vpack.c.b16 %v1604, %v1596
    %v2053 = vpack.c.b16 %v1605, %v1597
    %v2054 = vpack.c.b16 %v1614, %v1606
    %v2055 = vpack.c.b16 %v1615, %v1607
    %v2056 = vpack.c.b16 %v1616, %v1608
    %v2057 = vpack.c.b16 %v1617, %v1609
    %v2058 = vpack.c.b16 %v1618, %v1610
    %v2059 = vpack.c.b16 %v1619, %v1611
    %v2060 = vpack.c.b16 %v1620, %v1612
    %v2061 = vpack.c.b16 %v1621, %v1613
    %v2062 = vpack.c.b16 %v1630, %v1622
    %v2063 = vpack.c.b16 %v1631, %v1623
    %v2064 = vpack.c.b16 %v1632, %v1624
    %v2065 = vpack.c.b16 %v1633, %v1625
    %v2066 = vpack.c.b16 %v1634, %v1626
    %v2067 = vpack.c.b16 %v1635, %v1627
    %v2068 = vpack.c.b16 %v1636, %v1628
    %v2069 = vpack.c.b16 %v1637, %v1629
    %v2070 = vpack.c.b16 %v1646, %v1638
    %v2071 = vpack.c.b16 %v1647, %v1639
    %v2072 = vpack.c.b16 %v1648, %v1640
    %v2073 = vpack.c.b16 %v1649, %v1641
    %v2074 = vpack.c.b16 %v1650, %v1642
    %v2075 = vpack.c.b16 %v1651, %v1643
    %v2076 = vpack.c.b16 %v1652, %v1644
    %v2077 = vpack.c.b16 %v1653, %v1645
    %v2078 = vpack.c.b16 %v1662, %v1654
    %v2079 = vpack.c.b16 %v1663, %v1655
    %v2080 = vpack.c.b16 %v1664, %v1656
    %v2081 = vpack.c.b16 %v1665, %v1657
    %v2082 = vpack.c.b16 %v1666, %v1658
    %v2083 = vpack.c.b16 %v1667, %v1659
    %v2084 = vpack.c.b16 %v1668, %v1660
    %v2085 = vpack.c.b16 %v1669, %v1661
    %v2086 = vpack.c.b16 %v1678, %v1670
    %v2087 = vpack.c.b16 %v1679, %v1671
    %v2088 = vpack.c.b16 %v1680, %v1672
    %v2089 = vpack.c.b16 %v1681, %v1673
    %v2090 = vpack.c.b16 %v1682, %v1674
    %v2091 = vpack.c.b16 %v1683, %v1675
    %v2092 = vpack.c.b16 %v1684, %v1676
    %v2093 = vpack.c.b16 %v1685, %v1677
    %v2094 = vpack.c.b16 %v1694, %v1686
    %v2095 = vpack.c.b16 %v1695, %v1687
    %v2096 = vpack.c.b16 %v1696, %v1688
    %v2097 = vpack.c.b16 %v1697, %v1689
    %v2098 = vpack.c.b16 %v1698, %v1690
    %v2099 = vpack.c.b16 %v1699, %v1691
    %v2100 = vpack.c.b16 %v1700, %v1692
    %v2101 = vpack.c.b16 %v1701, %v1693
    %v2102 = vpack.c.b16 %v1710, %v1702
    %v2103 = vpack.c.b16 %v1711, %v1703
    %v2104 = vpack.c.b16 %v1712, %v1704
    %v2105 = vpack.c.b16 %v1713, %v1705
    %v2106 = vpack.c.b16 %v1714, %v1706
    %v2107 = vpack.c.b16 %v1715, %v1707
    %v2108 = vpack.c.b16 %v1716, %v1708
    %v2109 = vpack.c.b16 %v1717, %v1709
    %v2110 = vpack.c.b16 %v1726, %v1718
    %v2111 = vpack.c.b16 %v1727, %v1719
    %v2112 = vpack.c.b16 %v1728, %v1720
    %v2113 = vpack.c.b16 %v1729, %v1721
    %v2114 = vpack.c.b16 %v1730, %v1722
    %v2115 = vpack.c.b16 %v1731, %v1723
    %v2116 = vpack.c.b16 %v1732, %v1724
    %v2117 = vpack.c.b16 %v1733, %v1725
    %v2118 = vpack.c.b16 %v1742, %v1734
    %v2119 = vpack.c.b16 %v1743, %v1735
    %v2120 = vpack.c.b16 %v1744, %v1736
    %v2121 = vpack.c.b16 %v1745, %v1737
    %v2122 = vpack.c.b16 %v1746, %v1738
    %v2123 = vpack.c.b16 %v1747, %v1739
    %v2124 = vpack.c.b16 %v1748, %v1740
    %v2125 = vpack.c.b16 %v1749, %v1741
    %v2126 = vpack.c.b16 %v1758, %v1750
    %v2127 = vpack.c.b16 %v1759, %v1751
    %v2128 = vpack.c.b16 %v1760, %v1752
    %v2129 = vpack.c.b16 %v1761, %v1753
    %v2130 = vpack.c.b16 %v1762, %v1754
    %v2131 = vpack.c.b16 %v1763, %v1755
    %v2132 = vpack.c.b16 %v1764, %v1756
    %v2133 = vpack.c.b16 %v1765, %v1757
    %v2134 = vpack.c.b16 %v1774, %v1766
    %v2135 = vpack.c.b16 %v1775, %v1767
    %v2136 = vpack.c.b16 %v1776, %v1768
    %v2137 = vpack.c.b16 %v1777, %v1769
    %v2138 = vpack.c.b16 %v1778, %v1770
    %v2139 = vpack.c.b16 %v1779, %v1771
    %v2140 = vpack.c.b16 %v1780, %v1772
    %v2141 = vpack.c.b16 %v1781, %v1773
    %v2142 = vpack.c.b16 %v1790, %v1782
    %v2143 = vpack.c.b16 %v1791, %v1783
    %v2144 = vpack.c.b16 %v1792, %v1784
    %v2145 = vpack.c.b16 %v1793, %v1785
    %v2146 = vpack.c.b16 %v1794, %v1786
    %v2147 = vpack.c.b16 %v1795, %v1787
    %v2148 = vpack.c.b16 %v1796, %v1788
    %v2149 = vpack.c.b16 %v1797, %v1789
    %v2150 = vpack.c.b16 %v1806, %v1798
    %v2151 = vpack.c.b16 %v1807, %v1799
    %v2152 = vpack.c.b16 %v1808, %v1800
    %v2153 = vpack.c.b16 %v1809, %v1801
    %v2154 = vpack.c.b16 %v1810, %v1802
    %v2155 = vpack.c.b16 %v1811, %v1803
    %v2156 = vpack.c.b16 %v1812, %v1804
    %v2157 = vpack.c.b16 %v1813, %v1805
    %v2158 = vpack.c.b16 %v1822, %v1814
    %v2159 = vpack.c.b16 %v1823, %v1815
    %v2160 = vpack.c.b16 %v1824, %v1816
    %v2161 = vpack.c.b16 %v1825, %v1817
    %v2162 = vpack.c.b16 %v1826, %v1818
    %v2163 = vpack.c.b16 %v1827, %v1819
    %v2164 = vpack.c.b16 %v1828, %v1820
    %v2165 = vpack.c.b16 %v1829, %v1821
    %v2166 = vpack.c.b16 %v1838, %v1830
    %v2167 = vpack.c.b16 %v1839, %v1831
    %v2168 = vpack.c.b16 %v1840, %v1832
    %v2169 = vpack.c.b16 %v1841, %v1833
    %v2170 = vpack.c.b16 %v1842, %v1834
    %v2171 = vpack.c.b16 %v1843, %v1835
    %v2172 = vpack.c.b16 %v1844, %v1836
    %v2173 = vpack.c.b16 %v1845, %v1837
    %v2174 = vpack.c.b16 %v1854, %v1846
    %v2175 = vpack.c.b16 %v1855, %v1847
    %v2176 = vpack.c.b16 %v1856, %v1848
    %v2177 = vpack.c.b16 %v1857, %v1849
    %v2178 = vpack.c.b16 %v1858, %v1850
    %v2179 = vpack.c.b16 %v1859, %v1851
    %v2180 = vpack.c.b16 %v1860, %v1852
    %v2181 = vpack.c.b16 %v1861, %v1853
    %v2182 = vpack.c.b16 %v1870, %v1862
    %v2183 = vpack.c.b16 %v1871, %v1863
    %v2184 = vpack.c.b16 %v1872, %v1864
    %v2185 = vpack.c.b16 %v1873, %v1865
    %v2186 = vpack.c.b16 %v1874, %v1866
    %v2187 = vpack.c.b16 %v1875, %v1867
    %v2188 = vpack.c.b16 %v1876, %v1868
    %v2189 = vpack.c.b16 %v1877, %v1869
    %v2190 = vpack.c.b16 %v1886, %v1878
    %v2191 = vpack.c.b16 %v1887, %v1879
    %v2192 = vpack.c.b16 %v1888, %v1880
    %v2193 = vpack.c.b16 %v1889, %v1881
    %v2194 = vpack.c.b16 %v1890, %v1882
    %v2195 = vpack.c.b16 %v1891, %v1883
    %v2196 = vpack.c.b16 %v1892, %v1884
    %v2197 = vpack.c.b16 %v1893, %v1885
    %v2198 = vpack.c.b16 %v1902, %v1894
    %v2199 = vpack.c.b16 %v1903, %v1895
    %v2200 = vpack.c.b16 %v1904, %v1896
    %v2201 = vpack.c.b16 %v1905, %v1897
    %v2202 = vpack.c.b16 %v1906, %v1898
    %v2203 = vpack.c.b16 %v1907, %v1899
    %v2204 = vpack.c.b16 %v1908, %v1900
    %v2205 = vpack.c.b16 %v1909, %v1901
    %v2206 = vpack.c.b16 %v1918, %v1910
    %v2207 = vpack.c.b16 %v1919, %v1911
    %v2208 = vpack.c.b16 %v1920, %v1912
    %v2209 = vpack.c.b16 %v1921, %v1913
    %v2210 = vpack.c.b16 %v1922, %v1914
    %v2211 = vpack.c.b16 %v1923, %v1915
    %v2212 = vpack.c.b16 %v1924, %v1916
    %v2213 = vpack.c.b16 %v1925, %v1917
    %v2214 = vpack.c.b16 %v1934, %v1926
    %v2215 = vpack.c.b16 %v1935, %v1927
    %v2216 = vpack.c.b16 %v1936, %v1928
    %v2217 = vpack.c.b16 %v1937, %v1929
    %v2218 = vpack.c.b16 %v1938, %v1930
    %v2219 = vpack.c.b16 %v1939, %v1931
    %v2220 = vpack.c.b16 %v1940, %v1932
    %v2221 = vpack.c.b16 %v1941, %v1933
    %v2222 = vpack.c.b16 %v1950, %v1942
    %v2223 = vpack.c.b16 %v1951, %v1943
    %v2224 = vpack.c.b16 %v1952, %v1944
    %v2225 = vpack.c.b16 %v1953, %v1945
    %v2226 = vpack.c.b16 %v1954, %v1946
    %v2227 = vpack.c.b16 %v1955, %v1947
    %v2228 = vpack.c.b16 %v1956, %v1948
    %v2229 = vpack.c.b16 %v1957, %v1949
    %v2230 = vpack.c.b16 %v1966, %v1958
    %v2231 = vpack.c.b16 %v1967, %v1959
    %v2232 = vpack.c.b16 %v1968, %v1960
    %v2233 = vpack.c.b16 %v1969, %v1961
    %v2234 = vpack.c.b16 %v1970, %v1962
    %v2235 = vpack.c.b16 %v1971, %v1963
    %v2236 = vpack.c.b16 %v1972, %v1964
    %v2237 = vpack.c.b16 %v1973, %v1965
    %v2238 = vpack.c.b16 %v1982, %v1974
    %v2239 = vpack.c.b16 %v1983, %v1975
    %v2240 = vpack.c.b16 %v1984, %v1976
    %v2241 = vpack.c.b16 %v1985, %v1977
    %v2242 = vpack.c.b16 %v1986, %v1978
    %v2243 = vpack.c.b16 %v1987, %v1979
    %v2244 = vpack.c.b16 %v1988, %v1980
    %v2245 = vpack.c.b16 %v1989, %v1981
    %2502 = vmatpush.bf16.msra.mxu0 %v2046
    %2503 = vmatpush.bf16.msra.mxu0 %v2038
    %2504 = vmatpush.bf16.msra.mxu0 %v2030
    %2505 = vmatpush.bf16.msra.mxu0 %v2022
    %2506 = vmatpush.bf16.msra.mxu0 %v2014
    %2507 = vmatpush.bf16.msra.mxu0 %v2006
    %2508 = vmatpush.bf16.msra.mxu0 %v1998
    %2509 = vmatpush.bf16.msra.mxu0 %v1990
    %2510 = vmatmul.bf16.gmra.mxu0 %v940
    %v2511 = vpop.f32.mrf.mxu0
    %v2512 = vadd.f32 %v1206, %v2511
    %v2513 = vpop.f32.mrf.mxu0
    %2514 = vdwg.mxu0
    %2515 = vmatpush.bf16.msra.mxu0 %v2110
    %2516 = vmatpush.bf16.msra.mxu0 %v2102
    %2517 = vmatpush.bf16.msra.mxu0 %v2094
    %2518 = vmatpush.bf16.msra.mxu0 %v2086
    %2519 = vmatpush.bf16.msra.mxu0 %v2078
    %2520 = vmatpush.bf16.msra.mxu0 %v2070
    %2521 = vmatpush.bf16.msra.mxu0 %v2062
    %2522 = vmatpush.bf16.msra.mxu0 %v2054
    %2523 = vmatmul.bf16.gmra.mxu0 %v941
    %v2524 = vpop.f32.mrf.mxu0
    %v2525 = vadd.f32 %v2512, %v2524
    %v2526 = vpop.f32.mrf.mxu0
    %2527 = vdwg.mxu0
    %2528 = vmatpush.bf16.msra.mxu0 %v2174
    %2529 = vmatpush.bf16.msra.mxu0 %v2166
    %2530 = vmatpush.bf16.msra.mxu0 %v2158
    %2531 = vmatpush.bf16.msra.mxu0 %v2150
    %2532 = vmatpush.bf16.msra.mxu0 %v2142
    %2533 = vmatpush.bf16.msra.mxu0 %v2134
    %2534 = vmatpush.bf16.msra.mxu0 %v2126
    %2535 = vmatpush.bf16.msra.mxu0 %v2118
    %2536 = vmatmul.bf16.gmra.mxu0 %v942
    %v2537 = vpop.f32.mrf.mxu0
    %v2538 = vadd.f32 %v2525, %v2537
    %v2539 = vpop.f32.mrf.mxu0
    %2540 = vdwg.mxu0
    %2541 = vmatpush.bf16.msra.mxu0 %v2238
    %2542 = vmatpush.bf16.msra.mxu0 %v2230
    %2543 = vmatpush.bf16.msra.mxu0 %v2222
    %2544 = vmatpush.bf16.msra.mxu0 %v2214
    %2545 = vmatpush.bf16.msra.mxu0 %v2206
    %2546 = vmatpush.bf16.msra.mxu0 %v2198
    %2547 = vmatpush.bf16.msra.mxu0 %v2190
    %2548 = vmatpush.bf16.msra.mxu0 %v2182
    %2549 = vmatmul.bf16.gmra.mxu0 %v943
    %v2550 = vpop.f32.mrf.mxu0
    %v2551 = vadd.f32 %v2538, %v2550
    %v2552 = vpop.f32.mrf.mxu0
    %2553 = vdwg.mxu0
    %2554 = vmatpush.bf16.msra.mxu0 %v2047
    %2555 = vmatpush.bf16.msra.mxu0 %v2039
    %2556 = vmatpush.bf16.msra.mxu0 %v2031
    %2557 = vmatpush.bf16.msra.mxu0 %v2023
    %2558 = vmatpush.bf16.msra.mxu0 %v2015
    %2559 = vmatpush.bf16.msra.mxu0 %v2007
    %2560 = vmatpush.bf16.msra.mxu0 %v1999
    %2561 = vmatpush.bf16.msra.mxu0 %v1991
    %2562 = vmatmul.bf16.gmra.mxu0 %v940
    %v2563 = vpop.f32.mrf.mxu0
    %v2564 = vadd.f32 %v1207, %v2563
    %v2565 = vpop.f32.mrf.mxu0
    %2566 = vdwg.mxu0
    %2567 = vmatpush.bf16.msra.mxu0 %v2111
    %2568 = vmatpush.bf16.msra.mxu0 %v2103
    %2569 = vmatpush.bf16.msra.mxu0 %v2095
    %2570 = vmatpush.bf16.msra.mxu0 %v2087
    %2571 = vmatpush.bf16.msra.mxu0 %v2079
    %2572 = vmatpush.bf16.msra.mxu0 %v2071
    %2573 = vmatpush.bf16.msra.mxu0 %v2063
    %2574 = vmatpush.bf16.msra.mxu0 %v2055
    %2575 = vmatmul.bf16.gmra.mxu0 %v941
    %v2576 = vpop.f32.mrf.mxu0
    %v2577 = vadd.f32 %v2564, %v2576
    %v2578 = vpop.f32.mrf.mxu0
    %2579 = vdwg.mxu0
    %2580 = vmatpush.bf16.msra.mxu0 %v2175
    %2581 = vmatpush.bf16.msra.mxu0 %v2167
    %2582 = vmatpush.bf16.msra.mxu0 %v2159
    %2583 = vmatpush.bf16.msra.mxu0 %v2151
    %2584 = vmatpush.bf16.msra.mxu0 %v2143
    %2585 = vmatpush.bf16.msra.mxu0 %v2135
    %2586 = vmatpush.bf16.msra.mxu0 %v2127
    %2587 = vmatpush.bf16.msra.mxu0 %v2119
    %2588 = vmatmul.bf16.gmra.mxu0 %v942
    %v2589 = vpop.f32.mrf.mxu0
    %v2590 = vadd.f32 %v2577, %v2589
    %v2591 = vpop.f32.mrf.mxu0
    %2592 = vdwg.mxu0
    %2593 = vmatpush.bf16.msra.mxu0 %v2239
    %2594 = vmatpush.bf16.msra.mxu0 %v2231
    %2595 = vmatpush.bf16.msra.mxu0 %v2223
    %2596 = vmatpush.bf16.msra.mxu0 %v2215
    %2597 = vmatpush.bf16.msra.mxu0 %v2207
    %2598 = vmatpush.bf16.msra.mxu0 %v2199
    %2599 = vmatpush.bf16.msra.mxu0 %v2191
    %2600 = vmatpush.bf16.msra.mxu0 %v2183
    %2601 = vmatmul.bf16.gmra.mxu0 %v943
    %v2602 = vpop.f32.mrf.mxu0
    %v2603 = vadd.f32 %v2590, %v2602
    %v2604 = vpop.f32.mrf.mxu0
    %2605 = vdwg.mxu0
    %2606 = vmatpush.bf16.msra.mxu0 %v2048
    %2607 = vmatpush.bf16.msra.mxu0 %v2040
    %2608 = vmatpush.bf16.msra.mxu0 %v2032
    %2609 = vmatpush.bf16.msra.mxu0 %v2024
    %2610 = vmatpush.bf16.msra.mxu0 %v2016
    %2611 = vmatpush.bf16.msra.mxu0 %v2008
    %2612 = vmatpush.bf16.msra.mxu0 %v2000
    %2613 = vmatpush.bf16.msra.mxu0 %v1992
    %2614 = vmatmul.bf16.gmra.mxu0 %v940
    %v2615 = vpop.f32.mrf.mxu0
    %v2616 = vadd.f32 %v1208, %v2615
    %v2617 = vpop.f32.mrf.mxu0
    %2618 = vdwg.mxu0
    %2619 = vmatpush.bf16.msra.mxu0 %v2112
    %2620 = vmatpush.bf16.msra.mxu0 %v2104
    %2621 = vmatpush.bf16.msra.mxu0 %v2096
    %2622 = vmatpush.bf16.msra.mxu0 %v2088
    %2623 = vmatpush.bf16.msra.mxu0 %v2080
    %2624 = vmatpush.bf16.msra.mxu0 %v2072
    %2625 = vmatpush.bf16.msra.mxu0 %v2064
    %2626 = vmatpush.bf16.msra.mxu0 %v2056
    %2627 = vmatmul.bf16.gmra.mxu0 %v941
    %v2628 = vpop.f32.mrf.mxu0
    %v2629 = vadd.f32 %v2616, %v2628
    %v2630 = vpop.f32.mrf.mxu0
    %2631 = vdwg.mxu0
    %2632 = vmatpush.bf16.msra.mxu0 %v2176
    %2633 = vmatpush.bf16.msra.mxu0 %v2168
    %2634 = vmatpush.bf16.msra.mxu0 %v2160
    %2635 = vmatpush.bf16.msra.mxu0 %v2152
    %2636 = vmatpush.bf16.msra.mxu0 %v2144
    %2637 = vmatpush.bf16.msra.mxu0 %v2136
    %2638 = vmatpush.bf16.msra.mxu0 %v2128
    %2639 = vmatpush.bf16.msra.mxu0 %v2120
    %2640 = vmatmul.bf16.gmra.mxu0 %v942
    %v2641 = vpop.f32.mrf.mxu0
    %v2642 = vadd.f32 %v2629, %v2641
    %v2643 = vpop.f32.mrf.mxu0
    %2644 = vdwg.mxu0
    %2645 = vmatpush.bf16.msra.mxu0 %v2240
    %2646 = vmatpush.bf16.msra.mxu0 %v2232
    %2647 = vmatpush.bf16.msra.mxu0 %v2224
    %2648 = vmatpush.bf16.msra.mxu0 %v2216
    %2649 = vmatpush.bf16.msra.mxu0 %v2208
    %2650 = vmatpush.bf16.msra.mxu0 %v2200
    %2651 = vmatpush.bf16.msra.mxu0 %v2192
    %2652 = vmatpush.bf16.msra.mxu0 %v2184
    %2653 = vmatmul.bf16.gmra.mxu0 %v943
    %v2654 = vpop.f32.mrf.mxu0
    %v2655 = vadd.f32 %v2642, %v2654
    %v2656 = vpop.f32.mrf.mxu0
    %2657 = vdwg.mxu0
    %2658 = vmatpush.bf16.msra.mxu0 %v2049
    %2659 = vmatpush.bf16.msra.mxu0 %v2041
    %2660 = vmatpush.bf16.msra.mxu0 %v2033
    %2661 = vmatpush.bf16.msra.mxu0 %v2025
    %2662 = vmatpush.bf16.msra.mxu0 %v2017
    %2663 = vmatpush.bf16.msra.mxu0 %v2009
    %2664 = vmatpush.bf16.msra.mxu0 %v2001
    %2665 = vmatpush.bf16.msra.mxu0 %v1993
    %2666 = vmatmul.bf16.gmra.mxu0 %v940
    %v2667 = vpop.f32.mrf.mxu0
    %v2668 = vadd.f32 %v1209, %v2667
    %v2669 = vpop.f32.mrf.mxu0
    %2670 = vdwg.mxu0
    %2671 = vmatpush.bf16.msra.mxu0 %v2113
    %2672 = vmatpush.bf16.msra.mxu0 %v2105
    %2673 = vmatpush.bf16.msra.mxu0 %v2097
    %2674 = vmatpush.bf16.msra.mxu0 %v2089
    %2675 = vmatpush.bf16.msra.mxu0 %v2081
    %2676 = vmatpush.bf16.msra.mxu0 %v2073
    %2677 = vmatpush.bf16.msra.mxu0 %v2065
    %2678 = vmatpush.bf16.msra.mxu0 %v2057
    %2679 = vmatmul.bf16.gmra.mxu0 %v941
    %v2680 = vpop.f32.mrf.mxu0
    %v2681 = vadd.f32 %v2668, %v2680
    %v2682 = vpop.f32.mrf.mxu0
    %2683 = vdwg.mxu0
    %2684 = vmatpush.bf16.msra.mxu0 %v2177
    %2685 = vmatpush.bf16.msra.mxu0 %v2169
    %2686 = vmatpush.bf16.msra.mxu0 %v2161
    %2687 = vmatpush.bf16.msra.mxu0 %v2153
    %2688 = vmatpush.bf16.msra.mxu0 %v2145
    %2689 = vmatpush.bf16.msra.mxu0 %v2137
    %2690 = vmatpush.bf16.msra.mxu0 %v2129
    %2691 = vmatpush.bf16.msra.mxu0 %v2121
    %2692 = vmatmul.bf16.gmra.mxu0 %v942
    %v2693 = vpop.f32.mrf.mxu0
    %v2694 = vadd.f32 %v2681, %v2693
    %v2695 = vpop.f32.mrf.mxu0
    %2696 = vdwg.mxu0
    %2697 = vmatpush.bf16.msra.mxu0 %v2241
    %2698 = vmatpush.bf16.msra.mxu0 %v2233
    %2699 = vmatpush.bf16.msra.mxu0 %v2225
    %2700 = vmatpush.bf16.msra.mxu0 %v2217
    %2701 = vmatpush.bf16.msra.mxu0 %v2209
    %2702 = vmatpush.bf16.msra.mxu0 %v2201
    %2703 = vmatpush.bf16.msra.mxu0 %v2193
    %2704 = vmatpush.bf16.msra.mxu0 %v2185
    %2705 = vmatmul.bf16.gmra.mxu0 %v943
    %v2706 = vpop.f32.mrf.mxu0
    %v2707 = vadd.f32 %v2694, %v2706
    %v2708 = vpop.f32.mrf.mxu0
    %2709 = vdwg.mxu0
    %2710 = vmatpush.bf16.msra.mxu0 %v2050
    %2711 = vmatpush.bf16.msra.mxu0 %v2042
    %2712 = vmatpush.bf16.msra.mxu0 %v2034
    %2713 = vmatpush.bf16.msra.mxu0 %v2026
    %2714 = vmatpush.bf16.msra.mxu0 %v2018
    %2715 = vmatpush.bf16.msra.mxu0 %v2010
    %2716 = vmatpush.bf16.msra.mxu0 %v2002
    %2717 = vmatpush.bf16.msra.mxu0 %v1994
    %2718 = vmatmul.bf16.gmra.mxu0 %v940
    %v2719 = vpop.f32.mrf.mxu0
    %v2720 = vadd.f32 %v1210, %v2719
    %v2721 = vpop.f32.mrf.mxu0
    %2722 = vdwg.mxu0
    %2723 = vmatpush.bf16.msra.mxu0 %v2114
    %2724 = vmatpush.bf16.msra.mxu0 %v2106
    %2725 = vmatpush.bf16.msra.mxu0 %v2098
    %2726 = vmatpush.bf16.msra.mxu0 %v2090
    %2727 = vmatpush.bf16.msra.mxu0 %v2082
    %2728 = vmatpush.bf16.msra.mxu0 %v2074
    %2729 = vmatpush.bf16.msra.mxu0 %v2066
    %2730 = vmatpush.bf16.msra.mxu0 %v2058
    %2731 = vmatmul.bf16.gmra.mxu0 %v941
    %v2732 = vpop.f32.mrf.mxu0
    %v2733 = vadd.f32 %v2720, %v2732
    %v2734 = vpop.f32.mrf.mxu0
    %2735 = vdwg.mxu0
    %2736 = vmatpush.bf16.msra.mxu0 %v2178
    %2737 = vmatpush.bf16.msra.mxu0 %v2170
    %2738 = vmatpush.bf16.msra.mxu0 %v2162
    %2739 = vmatpush.bf16.msra.mxu0 %v2154
    %2740 = vmatpush.bf16.msra.mxu0 %v2146
    %2741 = vmatpush.bf16.msra.mxu0 %v2138
    %2742 = vmatpush.bf16.msra.mxu0 %v2130
    %2743 = vmatpush.bf16.msra.mxu0 %v2122
    %2744 = vmatmul.bf16.gmra.mxu0 %v942
    %v2745 = vpop.f32.mrf.mxu0
    %v2746 = vadd.f32 %v2733, %v2745
    %v2747 = vpop.f32.mrf.mxu0
    %2748 = vdwg.mxu0
    %2749 = vmatpush.bf16.msra.mxu0 %v2242
    %2750 = vmatpush.bf16.msra.mxu0 %v2234
    %2751 = vmatpush.bf16.msra.mxu0 %v2226
    %2752 = vmatpush.bf16.msra.mxu0 %v2218
    %2753 = vmatpush.bf16.msra.mxu0 %v2210
    %2754 = vmatpush.bf16.msra.mxu0 %v2202
    %2755 = vmatpush.bf16.msra.mxu0 %v2194
    %2756 = vmatpush.bf16.msra.mxu0 %v2186
    %2757 = vmatmul.bf16.gmra.mxu0 %v943
    %v2758 = vpop.f32.mrf.mxu0
    %v2759 = vadd.f32 %v2746, %v2758
    %v2760 = vpop.f32.mrf.mxu0
    %2761 = vdwg.mxu0
    %2762 = vmatpush.bf16.msra.mxu0 %v2051
    %2763 = vmatpush.bf16.msra.mxu0 %v2043
    %2764 = vmatpush.bf16.msra.mxu0 %v2035
    %2765 = vmatpush.bf16.msra.mxu0 %v2027
    %2766 = vmatpush.bf16.msra.mxu0 %v2019
    %2767 = vmatpush.bf16.msra.mxu0 %v2011
    %2768 = vmatpush.bf16.msra.mxu0 %v2003
    %2769 = vmatpush.bf16.msra.mxu0 %v1995
    %2770 = vmatmul.bf16.gmra.mxu0 %v940
    %v2771 = vpop.f32.mrf.mxu0
    %v2772 = vadd.f32 %v1211, %v2771
    %v2773 = vpop.f32.mrf.mxu0
    %2774 = vdwg.mxu0
    %2775 = vmatpush.bf16.msra.mxu0 %v2115
    %2776 = vmatpush.bf16.msra.mxu0 %v2107
    %2777 = vmatpush.bf16.msra.mxu0 %v2099
    %2778 = vmatpush.bf16.msra.mxu0 %v2091
    %2779 = vmatpush.bf16.msra.mxu0 %v2083
    %2780 = vmatpush.bf16.msra.mxu0 %v2075
    %2781 = vmatpush.bf16.msra.mxu0 %v2067
    %2782 = vmatpush.bf16.msra.mxu0 %v2059
    %2783 = vmatmul.bf16.gmra.mxu0 %v941
    %v2784 = vpop.f32.mrf.mxu0
    %v2785 = vadd.f32 %v2772, %v2784
    %v2786 = vpop.f32.mrf.mxu0
    %2787 = vdwg.mxu0
    %2788 = vmatpush.bf16.msra.mxu0 %v2179
    %2789 = vmatpush.bf16.msra.mxu0 %v2171
    %2790 = vmatpush.bf16.msra.mxu0 %v2163
    %2791 = vmatpush.bf16.msra.mxu0 %v2155
    %2792 = vmatpush.bf16.msra.mxu0 %v2147
    %2793 = vmatpush.bf16.msra.mxu0 %v2139
    %2794 = vmatpush.bf16.msra.mxu0 %v2131
    %2795 = vmatpush.bf16.msra.mxu0 %v2123
    %2796 = vmatmul.bf16.gmra.mxu0 %v942
    %v2797 = vpop.f32.mrf.mxu0
    %v2798 = vadd.f32 %v2785, %v2797
    %v2799 = vpop.f32.mrf.mxu0
    %2800 = vdwg.mxu0
    %2801 = vmatpush.bf16.msra.mxu0 %v2243
    %2802 = vmatpush.bf16.msra.mxu0 %v2235
    %2803 = vmatpush.bf16.msra.mxu0 %v2227
    %2804 = vmatpush.bf16.msra.mxu0 %v2219
    %2805 = vmatpush.bf16.msra.mxu0 %v2211
    %2806 = vmatpush.bf16.msra.mxu0 %v2203
    %2807 = vmatpush.bf16.msra.mxu0 %v2195
    %2808 = vmatpush.bf16.msra.mxu0 %v2187
    %2809 = vmatmul.bf16.gmra.mxu0 %v943
    %v2810 = vpop.f32.mrf.mxu0
    %v2811 = vadd.f32 %v2798, %v2810
    %v2812 = vpop.f32.mrf.mxu0
    %2813 = vdwg.mxu0
    %2814 = vmatpush.bf16.msra.mxu0 %v2052
    %2815 = vmatpush.bf16.msra.mxu0 %v2044
    %2816 = vmatpush.bf16.msra.mxu0 %v2036
    %2817 = vmatpush.bf16.msra.mxu0 %v2028
    %2818 = vmatpush.bf16.msra.mxu0 %v2020
    %2819 = vmatpush.bf16.msra.mxu0 %v2012
    %2820 = vmatpush.bf16.msra.mxu0 %v2004
    %2821 = vmatpush.bf16.msra.mxu0 %v1996
    %2822 = vmatmul.bf16.gmra.mxu0 %v940
    %v2823 = vpop.f32.mrf.mxu0
    %v2824 = vadd.f32 %v1212, %v2823
    %v2825 = vpop.f32.mrf.mxu0
    %2826 = vdwg.mxu0
    %2827 = vmatpush.bf16.msra.mxu0 %v2116
    %2828 = vmatpush.bf16.msra.mxu0 %v2108
    %2829 = vmatpush.bf16.msra.mxu0 %v2100
    %2830 = vmatpush.bf16.msra.mxu0 %v2092
    %2831 = vmatpush.bf16.msra.mxu0 %v2084
    %2832 = vmatpush.bf16.msra.mxu0 %v2076
    %2833 = vmatpush.bf16.msra.mxu0 %v2068
    %2834 = vmatpush.bf16.msra.mxu0 %v2060
    %2835 = vmatmul.bf16.gmra.mxu0 %v941
    %v2836 = vpop.f32.mrf.mxu0
    %v2837 = vadd.f32 %v2824, %v2836
    %v2838 = vpop.f32.mrf.mxu0
    %2839 = vdwg.mxu0
    %2840 = vmatpush.bf16.msra.mxu0 %v2180
    %2841 = vmatpush.bf16.msra.mxu0 %v2172
    %2842 = vmatpush.bf16.msra.mxu0 %v2164
    %2843 = vmatpush.bf16.msra.mxu0 %v2156
    %2844 = vmatpush.bf16.msra.mxu0 %v2148
    %2845 = vmatpush.bf16.msra.mxu0 %v2140
    %2846 = vmatpush.bf16.msra.mxu0 %v2132
    %2847 = vmatpush.bf16.msra.mxu0 %v2124
    %2848 = vmatmul.bf16.gmra.mxu0 %v942
    %v2849 = vpop.f32.mrf.mxu0
    %v2850 = vadd.f32 %v2837, %v2849
    %v2851 = vpop.f32.mrf.mxu0
    %2852 = vdwg.mxu0
    %2853 = vmatpush.bf16.msra.mxu0 %v2244
    %2854 = vmatpush.bf16.msra.mxu0 %v2236
    %2855 = vmatpush.bf16.msra.mxu0 %v2228
    %2856 = vmatpush.bf16.msra.mxu0 %v2220
    %2857 = vmatpush.bf16.msra.mxu0 %v2212
    %2858 = vmatpush.bf16.msra.mxu0 %v2204
    %2859 = vmatpush.bf16.msra.mxu0 %v2196
    %2860 = vmatpush.bf16.msra.mxu0 %v2188
    %2861 = vmatmul.bf16.gmra.mxu0 %v943
    %v2862 = vpop.f32.mrf.mxu0
    %v2863 = vadd.f32 %v2850, %v2862
    %v2864 = vpop.f32.mrf.mxu0
    %2865 = vdwg.mxu0
    %2866 = vmatpush.bf16.msra.mxu0 %v2053
    %2867 = vmatpush.bf16.msra.mxu0 %v2045
    %2868 = vmatpush.bf16.msra.mxu0 %v2037
    %2869 = vmatpush.bf16.msra.mxu0 %v2029
    %2870 = vmatpush.bf16.msra.mxu0 %v2021
    %2871 = vmatpush.bf16.msra.mxu0 %v2013
    %2872 = vmatpush.bf16.msra.mxu0 %v2005
    %2873 = vmatpush.bf16.msra.mxu0 %v1997
    %2874 = vmatmul.bf16.gmra.mxu0 %v940
    %v2875 = vpop.f32.mrf.mxu0
    %v2876 = vadd.f32 %v1213, %v2875
    %v2877 = vpop.f32.mrf.mxu0
    %2878 = vdwg.mxu0
    %2879 = vmatpush.bf16.msra.mxu0 %v2117
    %2880 = vmatpush.bf16.msra.mxu0 %v2109
    %2881 = vmatpush.bf16.msra.mxu0 %v2101
    %2882 = vmatpush.bf16.msra.mxu0 %v2093
    %2883 = vmatpush.bf16.msra.mxu0 %v2085
    %2884 = vmatpush.bf16.msra.mxu0 %v2077
    %2885 = vmatpush.bf16.msra.mxu0 %v2069
    %2886 = vmatpush.bf16.msra.mxu0 %v2061
    %2887 = vmatmul.bf16.gmra.mxu0 %v941
    %v2888 = vpop.f32.mrf.mxu0
    %v2889 = vadd.f32 %v2876, %v2888
    %v2890 = vpop.f32.mrf.mxu0
    %2891 = vdwg.mxu0
    %2892 = vmatpush.bf16.msra.mxu0 %v2181
    %2893 = vmatpush.bf16.msra.mxu0 %v2173
    %2894 = vmatpush.bf16.msra.mxu0 %v2165
    %2895 = vmatpush.bf16.msra.mxu0 %v2157
    %2896 = vmatpush.bf16.msra.mxu0 %v2149
    %2897 = vmatpush.bf16.msra.mxu0 %v2141
    %2898 = vmatpush.bf16.msra.mxu0 %v2133
    %2899 = vmatpush.bf16.msra.mxu0 %v2125
    %2900 = vmatmul.bf16.gmra.mxu0 %v942
    %v2901 = vpop.f32.mrf.mxu0
    %v2902 = vadd.f32 %v2889, %v2901
    %v2903 = vpop.f32.mrf.mxu0
    %2904 = vdwg.mxu0
    %2905 = vmatpush.bf16.msra.mxu0 %v2245
    %2906 = vmatpush.bf16.msra.mxu0 %v2237
    %2907 = vmatpush.bf16.msra.mxu0 %v2229
    %2908 = vmatpush.bf16.msra.mxu0 %v2221
    %2909 = vmatpush.bf16.msra.mxu0 %v2213
    %2910 = vmatpush.bf16.msra.mxu0 %v2205
    %2911 = vmatpush.bf16.msra.mxu0 %v2197
    %2912 = vmatpush.bf16.msra.mxu0 %v2189
    %2913 = vmatmul.bf16.gmra.mxu0 %v943
    %v2914 = vpop.f32.mrf.mxu0
    %v2915 = vadd.f32 %v2902, %v2914
    %v2916 = vpop.f32.mrf.mxu0
    %2917 = vdwg.mxu0
    %v2918 = vmul.f32 %v2551, 0.01
    %v2919 = vmul.f32 %v2603, 0.01
    %v2920 = vmul.f32 %v2655, 0.01
    %v2921 = vmul.f32 %v2707, 0.01
    %v2922 = vmul.f32 %v2759, 0.01
    %v2923 = vmul.f32 %v2811, 0.01
    %v2924 = vmul.f32 %v2863, 0.01
    %v2925 = vmul.f32 %v2915, 0.01
    %v2926 = vmax.f32 %v2551, %v2918
    %v2927 = vmax.f32 %v2603, %v2919
    %v2928 = vmax.f32 %v2655, %v2920
    %v2929 = vmax.f32 %v2707, %v2921
    %v2930 = vmax.f32 %v2759, %v2922
    %v2931 = vmax.f32 %v2811, %v2923
    %v2932 = vmax.f32 %v2863, %v2924
    %v2933 = vmax.f32 %v2915, %v2925
    %v2934 = vpack.c.bf16 %v2926, %v2926
    %v2935 = vpack.c.bf16 %v2927, %v2927
    %v2936 = vpack.c.bf16 %v2928, %v2928
    %v2937 = vpack.c.bf16 %v2929, %v2929
    %v2938 = vpack.c.bf16 %v2930, %v2930
    %v2939 = vpack.c.bf16 %v2931, %v2931
    %v2940 = vpack.c.bf16 %v2932, %v2932
    %v2941 = vpack.c.bf16 %v2933, %v2933
    %s2942 = smul.u32 4, 128
    %s2943 = smul.u32 %s2942, 8
    %s2944 = sshll.u32 %s2943, 4
    %2945 = dma.done %s174, %s2944
    %v2946 = vld [vmem:[#allocation3] sm:$0xff]
    %v2947 = vld [vmem:[#allocation3 + $0x8] sm:$0xff]
    %v2948 = vld [vmem:[#allocation3 + $0x10] sm:$0xff]
    %v2949 = vld [vmem:[#allocation3 + $0x18] sm:$0xff]
    %v2950 = vld [vmem:[#allocation3 + $0x20] sm:$0xff]
    %v2951 = vld [vmem:[#allocation3 + $0x28] sm:$0xff]
    %v2952 = vld [vmem:[#allocation3 + $0x30] sm:$0xff]
    %v2953 = vld [vmem:[#allocation3 + $0x38] sm:$0xff]
    %v2954 = vld [vmem:[#allocation3 + $0x40] sm:$0xff]
    %v2955 = vld [vmem:[#allocation3 + $0x48] sm:$0xff]
    %v2956 = vld [vmem:[#allocation3 + $0x50] sm:$0xff]
    %v2957 = vld [vmem:[#allocation3 + $0x58] sm:$0xff]
    %v2958 = vld [vmem:[#allocation3 + $0x60] sm:$0xff]
    %v2959 = vld [vmem:[#allocation3 + $0x68] sm:$0xff]
    %v2960 = vld [vmem:[#allocation3 + $0x70] sm:$0xff]
    %v2961 = vld [vmem:[#allocation3 + $0x78] sm:$0xff]
    %v2962 = vld [vmem:[#allocation3 + $0x80] sm:$0xff]
    %v2963 = vld [vmem:[#allocation3 + $0x88] sm:$0xff]
    %v2964 = vld [vmem:[#allocation3 + $0x90] sm:$0xff]
    %v2965 = vld [vmem:[#allocation3 + $0x98] sm:$0xff]
    %v2966 = vld [vmem:[#allocation3 + $0xa0] sm:$0xff]
    %v2967 = vld [vmem:[#allocation3 + $0xa8] sm:$0xff]
    %v2968 = vld [vmem:[#allocation3 + $0xb0] sm:$0xff]
    %v2969 = vld [vmem:[#allocation3 + $0xb8] sm:$0xff]
    %v2970 = vld [vmem:[#allocation3 + $0xc0] sm:$0xff]
    %v2971 = vld [vmem:[#allocation3 + $0xc8] sm:$0xff]
    %v2972 = vld [vmem:[#allocation3 + $0xd0] sm:$0xff]
    %v2973 = vld [vmem:[#allocation3 + $0xd8] sm:$0xff]
    %v2974 = vld [vmem:[#allocation3 + $0xe0] sm:$0xff]
    %v2975 = vld [vmem:[#allocation3 + $0xe8] sm:$0xff]
    %v2976 = vld [vmem:[#allocation3 + $0xf0] sm:$0xff]
    %v2977 = vld [vmem:[#allocation3 + $0xf8] sm:$0xff]
    %v2978 = vld [vmem:[#allocation3 + $0x100] sm:$0xff]
    %v2979 = vld [vmem:[#allocation3 + $0x108] sm:$0xff]
    %v2980 = vld [vmem:[#allocation3 + $0x110] sm:$0xff]
    %v2981 = vld [vmem:[#allocation3 + $0x118] sm:$0xff]
    %v2982 = vld [vmem:[#allocation3 + $0x120] sm:$0xff]
    %v2983 = vld [vmem:[#allocation3 + $0x128] sm:$0xff]
    %v2984 = vld [vmem:[#allocation3 + $0x130] sm:$0xff]
    %v2985 = vld [vmem:[#allocation3 + $0x138] sm:$0xff]
    %v2986 = vld [vmem:[#allocation3 + $0x140] sm:$0xff]
    %v2987 = vld [vmem:[#allocation3 + $0x148] sm:$0xff]
    %v2988 = vld [vmem:[#allocation3 + $0x150] sm:$0xff]
    %v2989 = vld [vmem:[#allocation3 + $0x158] sm:$0xff]
    %v2990 = vld [vmem:[#allocation3 + $0x160] sm:$0xff]
    %v2991 = vld [vmem:[#allocation3 + $0x168] sm:$0xff]
    %v2992 = vld [vmem:[#allocation3 + $0x170] sm:$0xff]
    %v2993 = vld [vmem:[#allocation3 + $0x178] sm:$0xff]
    %v2994 = vld [vmem:[#allocation3 + $0x180] sm:$0xff]
    %v2995 = vld [vmem:[#allocation3 + $0x188] sm:$0xff]
    %v2996 = vld [vmem:[#allocation3 + $0x190] sm:$0xff]
    %v2997 = vld [vmem:[#allocation3 + $0x198] sm:$0xff]
    %v2998 = vld [vmem:[#allocation3 + $0x1a0] sm:$0xff]
    %v2999 = vld [vmem:[#allocation3 + $0x1a8] sm:$0xff]
    %v3000 = vld [vmem:[#allocation3 + $0x1b0] sm:$0xff]
    %v3001 = vld [vmem:[#allocation3 + $0x1b8] sm:$0xff]
    %v3002 = vld [vmem:[#allocation3 + $0x1c0] sm:$0xff]
    %v3003 = vld [vmem:[#allocation3 + $0x1c8] sm:$0xff]
    %v3004 = vld [vmem:[#allocation3 + $0x1d0] sm:$0xff]
    %v3005 = vld [vmem:[#allocation3 + $0x1d8] sm:$0xff]
    %v3006 = vld [vmem:[#allocation3 + $0x1e0] sm:$0xff]
    %v3007 = vld [vmem:[#allocation3 + $0x1e8] sm:$0xff]
    %v3008 = vld [vmem:[#allocation3 + $0x1f0] sm:$0xff]
    %v3009 = vld [vmem:[#allocation3 + $0x1f8] sm:$0xff]
    %v3010 = vld [vmem:[#allocation3 + $0x200] sm:$0xff]
    %v3011 = vld [vmem:[#allocation3 + $0x208] sm:$0xff]
    %v3012 = vld [vmem:[#allocation3 + $0x210] sm:$0xff]
    %v3013 = vld [vmem:[#allocation3 + $0x218] sm:$0xff]
    %v3014 = vld [vmem:[#allocation3 + $0x220] sm:$0xff]
    %v3015 = vld [vmem:[#allocation3 + $0x228] sm:$0xff]
    %v3016 = vld [vmem:[#allocation3 + $0x230] sm:$0xff]
    %v3017 = vld [vmem:[#allocation3 + $0x238] sm:$0xff]
    %v3018 = vld [vmem:[#allocation3 + $0x240] sm:$0xff]
    %v3019 = vld [vmem:[#allocation3 + $0x248] sm:$0xff]
    %v3020 = vld [vmem:[#allocation3 + $0x250] sm:$0xff]
    %v3021 = vld [vmem:[#allocation3 + $0x258] sm:$0xff]
    %v3022 = vld [vmem:[#allocation3 + $0x260] sm:$0xff]
    %v3023 = vld [vmem:[#allocation3 + $0x268] sm:$0xff]
    %v3024 = vld [vmem:[#allocation3 + $0x270] sm:$0xff]
    %v3025 = vld [vmem:[#allocation3 + $0x278] sm:$0xff]
    %v3026 = vld [vmem:[#allocation3 + $0x280] sm:$0xff]
    %v3027 = vld [vmem:[#allocation3 + $0x288] sm:$0xff]
    %v3028 = vld [vmem:[#allocation3 + $0x290] sm:$0xff]
    %v3029 = vld [vmem:[#allocation3 + $0x298] sm:$0xff]
    %v3030 = vld [vmem:[#allocation3 + $0x2a0] sm:$0xff]
    %v3031 = vld [vmem:[#allocation3 + $0x2a8] sm:$0xff]
    %v3032 = vld [vmem:[#allocation3 + $0x2b0] sm:$0xff]
    %v3033 = vld [vmem:[#allocation3 + $0x2b8] sm:$0xff]
    %v3034 = vld [vmem:[#allocation3 + $0x2c0] sm:$0xff]
    %v3035 = vld [vmem:[#allocation3 + $0x2c8] sm:$0xff]
    %v3036 = vld [vmem:[#allocation3 + $0x2d0] sm:$0xff]
    %v3037 = vld [vmem:[#allocation3 + $0x2d8] sm:$0xff]
    %v3038 = vld [vmem:[#allocation3 + $0x2e0] sm:$0xff]
    %v3039 = vld [vmem:[#allocation3 + $0x2e8] sm:$0xff]
    %v3040 = vld [vmem:[#allocation3 + $0x2f0] sm:$0xff]
    %v3041 = vld [vmem:[#allocation3 + $0x2f8] sm:$0xff]
    %v3042 = vld [vmem:[#allocation3 + $0x300] sm:$0xff]
    %v3043 = vld [vmem:[#allocation3 + $0x308] sm:$0xff]
    %v3044 = vld [vmem:[#allocation3 + $0x310] sm:$0xff]
    %v3045 = vld [vmem:[#allocation3 + $0x318] sm:$0xff]
    %v3046 = vld [vmem:[#allocation3 + $0x320] sm:$0xff]
    %v3047 = vld [vmem:[#allocation3 + $0x328] sm:$0xff]
    %v3048 = vld [vmem:[#allocation3 + $0x330] sm:$0xff]
    %v3049 = vld [vmem:[#allocation3 + $0x338] sm:$0xff]
    %v3050 = vld [vmem:[#allocation3 + $0x340] sm:$0xff]
    %v3051 = vld [vmem:[#allocation3 + $0x348] sm:$0xff]
    %v3052 = vld [vmem:[#allocation3 + $0x350] sm:$0xff]
    %v3053 = vld [vmem:[#allocation3 + $0x358] sm:$0xff]
    %v3054 = vld [vmem:[#allocation3 + $0x360] sm:$0xff]
    %v3055 = vld [vmem:[#allocation3 + $0x368] sm:$0xff]
    %v3056 = vld [vmem:[#allocation3 + $0x370] sm:$0xff]
    %v3057 = vld [vmem:[#allocation3 + $0x378] sm:$0xff]
    %v3058 = vld [vmem:[#allocation3 + $0x380] sm:$0xff]
    %v3059 = vld [vmem:[#allocation3 + $0x388] sm:$0xff]
    %v3060 = vld [vmem:[#allocation3 + $0x390] sm:$0xff]
    %v3061 = vld [vmem:[#allocation3 + $0x398] sm:$0xff]
    %v3062 = vld [vmem:[#allocation3 + $0x3a0] sm:$0xff]
    %v3063 = vld [vmem:[#allocation3 + $0x3a8] sm:$0xff]
    %v3064 = vld [vmem:[#allocation3 + $0x3b0] sm:$0xff]
    %v3065 = vld [vmem:[#allocation3 + $0x3b8] sm:$0xff]
    %v3066 = vld [vmem:[#allocation3 + $0x3c0] sm:$0xff]
    %v3067 = vld [vmem:[#allocation3 + $0x3c8] sm:$0xff]
    %v3068 = vld [vmem:[#allocation3 + $0x3d0] sm:$0xff]
    %v3069 = vld [vmem:[#allocation3 + $0x3d8] sm:$0xff]
    %v3070 = vld [vmem:[#allocation3 + $0x3e0] sm:$0xff]
    %v3071 = vld [vmem:[#allocation3 + $0x3e8] sm:$0xff]
    %v3072 = vld [vmem:[#allocation3 + $0x3f0] sm:$0xff]
    %v3073 = vld [vmem:[#allocation3 + $0x3f8] sm:$0xff]
    %v3074 = vld [vmem:[#allocation3 + $0x400] sm:$0xff]
    %v3075 = vld [vmem:[#allocation3 + $0x408] sm:$0xff]
    %v3076 = vld [vmem:[#allocation3 + $0x410] sm:$0xff]
    %v3077 = vld [vmem:[#allocation3 + $0x418] sm:$0xff]
    %v3078 = vld [vmem:[#allocation3 + $0x420] sm:$0xff]
    %v3079 = vld [vmem:[#allocation3 + $0x428] sm:$0xff]
    %v3080 = vld [vmem:[#allocation3 + $0x430] sm:$0xff]
    %v3081 = vld [vmem:[#allocation3 + $0x438] sm:$0xff]
    %v3082 = vld [vmem:[#allocation3 + $0x440] sm:$0xff]
    %v3083 = vld [vmem:[#allocation3 + $0x448] sm:$0xff]
    %v3084 = vld [vmem:[#allocation3 + $0x450] sm:$0xff]
    %v3085 = vld [vmem:[#allocation3 + $0x458] sm:$0xff]
    %v3086 = vld [vmem:[#allocation3 + $0x460] sm:$0xff]
    %v3087 = vld [vmem:[#allocation3 + $0x468] sm:$0xff]
    %v3088 = vld [vmem:[#allocation3 + $0x470] sm:$0xff]
    %v3089 = vld [vmem:[#allocation3 + $0x478] sm:$0xff]
    %v3090 = vld [vmem:[#allocation3 + $0x480] sm:$0xff]
    %v3091 = vld [vmem:[#allocation3 + $0x488] sm:$0xff]
    %v3092 = vld [vmem:[#allocation3 + $0x490] sm:$0xff]
    %v3093 = vld [vmem:[#allocation3 + $0x498] sm:$0xff]
    %v3094 = vld [vmem:[#allocation3 + $0x4a0] sm:$0xff]
    %v3095 = vld [vmem:[#allocation3 + $0x4a8] sm:$0xff]
    %v3096 = vld [vmem:[#allocation3 + $0x4b0] sm:$0xff]
    %v3097 = vld [vmem:[#allocation3 + $0x4b8] sm:$0xff]
    %v3098 = vld [vmem:[#allocation3 + $0x4c0] sm:$0xff]
    %v3099 = vld [vmem:[#allocation3 + $0x4c8] sm:$0xff]
    %v3100 = vld [vmem:[#allocation3 + $0x4d0] sm:$0xff]
    %v3101 = vld [vmem:[#allocation3 + $0x4d8] sm:$0xff]
    %v3102 = vld [vmem:[#allocation3 + $0x4e0] sm:$0xff]
    %v3103 = vld [vmem:[#allocation3 + $0x4e8] sm:$0xff]
    %v3104 = vld [vmem:[#allocation3 + $0x4f0] sm:$0xff]
    %v3105 = vld [vmem:[#allocation3 + $0x4f8] sm:$0xff]
    %v3106 = vld [vmem:[#allocation3 + $0x500] sm:$0xff]
    %v3107 = vld [vmem:[#allocation3 + $0x508] sm:$0xff]
    %v3108 = vld [vmem:[#allocation3 + $0x510] sm:$0xff]
    %v3109 = vld [vmem:[#allocation3 + $0x518] sm:$0xff]
    %v3110 = vld [vmem:[#allocation3 + $0x520] sm:$0xff]
    %v3111 = vld [vmem:[#allocation3 + $0x528] sm:$0xff]
    %v3112 = vld [vmem:[#allocation3 + $0x530] sm:$0xff]
    %v3113 = vld [vmem:[#allocation3 + $0x538] sm:$0xff]
    %v3114 = vld [vmem:[#allocation3 + $0x540] sm:$0xff]
    %v3115 = vld [vmem:[#allocation3 + $0x548] sm:$0xff]
    %v3116 = vld [vmem:[#allocation3 + $0x550] sm:$0xff]
    %v3117 = vld [vmem:[#allocation3 + $0x558] sm:$0xff]
    %v3118 = vld [vmem:[#allocation3 + $0x560] sm:$0xff]
    %v3119 = vld [vmem:[#allocation3 + $0x568] sm:$0xff]
    %v3120 = vld [vmem:[#allocation3 + $0x570] sm:$0xff]
    %v3121 = vld [vmem:[#allocation3 + $0x578] sm:$0xff]
    %v3122 = vld [vmem:[#allocation3 + $0x580] sm:$0xff]
    %v3123 = vld [vmem:[#allocation3 + $0x588] sm:$0xff]
    %v3124 = vld [vmem:[#allocation3 + $0x590] sm:$0xff]
    %v3125 = vld [vmem:[#allocation3 + $0x598] sm:$0xff]
    %v3126 = vld [vmem:[#allocation3 + $0x5a0] sm:$0xff]
    %v3127 = vld [vmem:[#allocation3 + $0x5a8] sm:$0xff]
    %v3128 = vld [vmem:[#allocation3 + $0x5b0] sm:$0xff]
    %v3129 = vld [vmem:[#allocation3 + $0x5b8] sm:$0xff]
    %v3130 = vld [vmem:[#allocation3 + $0x5c0] sm:$0xff]
    %v3131 = vld [vmem:[#allocation3 + $0x5c8] sm:$0xff]
    %v3132 = vld [vmem:[#allocation3 + $0x5d0] sm:$0xff]
    %v3133 = vld [vmem:[#allocation3 + $0x5d8] sm:$0xff]
    %v3134 = vld [vmem:[#allocation3 + $0x5e0] sm:$0xff]
    %v3135 = vld [vmem:[#allocation3 + $0x5e8] sm:$0xff]
    %v3136 = vld [vmem:[#allocation3 + $0x5f0] sm:$0xff]
    %v3137 = vld [vmem:[#allocation3 + $0x5f8] sm:$0xff]
    %v3138 = vld [vmem:[#allocation3 + $0x600] sm:$0xff]
    %v3139 = vld [vmem:[#allocation3 + $0x608] sm:$0xff]
    %v3140 = vld [vmem:[#allocation3 + $0x610] sm:$0xff]
    %v3141 = vld [vmem:[#allocation3 + $0x618] sm:$0xff]
    %v3142 = vld [vmem:[#allocation3 + $0x620] sm:$0xff]
    %v3143 = vld [vmem:[#allocation3 + $0x628] sm:$0xff]
    %v3144 = vld [vmem:[#allocation3 + $0x630] sm:$0xff]
    %v3145 = vld [vmem:[#allocation3 + $0x638] sm:$0xff]
    %v3146 = vld [vmem:[#allocation3 + $0x640] sm:$0xff]
    %v3147 = vld [vmem:[#allocation3 + $0x648] sm:$0xff]
    %v3148 = vld [vmem:[#allocation3 + $0x650] sm:$0xff]
    %v3149 = vld [vmem:[#allocation3 + $0x658] sm:$0xff]
    %v3150 = vld [vmem:[#allocation3 + $0x660] sm:$0xff]
    %v3151 = vld [vmem:[#allocation3 + $0x668] sm:$0xff]
    %v3152 = vld [vmem:[#allocation3 + $0x670] sm:$0xff]
    %v3153 = vld [vmem:[#allocation3 + $0x678] sm:$0xff]
    %v3154 = vld [vmem:[#allocation3 + $0x680] sm:$0xff]
    %v3155 = vld [vmem:[#allocation3 + $0x688] sm:$0xff]
    %v3156 = vld [vmem:[#allocation3 + $0x690] sm:$0xff]
    %v3157 = vld [vmem:[#allocation3 + $0x698] sm:$0xff]
    %v3158 = vld [vmem:[#allocation3 + $0x6a0] sm:$0xff]
    %v3159 = vld [vmem:[#allocation3 + $0x6a8] sm:$0xff]
    %v3160 = vld [vmem:[#allocation3 + $0x6b0] sm:$0xff]
    %v3161 = vld [vmem:[#allocation3 + $0x6b8] sm:$0xff]
    %v3162 = vld [vmem:[#allocation3 + $0x6c0] sm:$0xff]
    %v3163 = vld [vmem:[#allocation3 + $0x6c8] sm:$0xff]
    %v3164 = vld [vmem:[#allocation3 + $0x6d0] sm:$0xff]
    %v3165 = vld [vmem:[#allocation3 + $0x6d8] sm:$0xff]
    %v3166 = vld [vmem:[#allocation3 + $0x6e0] sm:$0xff]
    %v3167 = vld [vmem:[#allocation3 + $0x6e8] sm:$0xff]
    %v3168 = vld [vmem:[#allocation3 + $0x6f0] sm:$0xff]
    %v3169 = vld [vmem:[#allocation3 + $0x6f8] sm:$0xff]
    %v3170 = vld [vmem:[#allocation3 + $0x700] sm:$0xff]
    %v3171 = vld [vmem:[#allocation3 + $0x708] sm:$0xff]
    %v3172 = vld [vmem:[#allocation3 + $0x710] sm:$0xff]
    %v3173 = vld [vmem:[#allocation3 + $0x718] sm:$0xff]
    %v3174 = vld [vmem:[#allocation3 + $0x720] sm:$0xff]
    %v3175 = vld [vmem:[#allocation3 + $0x728] sm:$0xff]
    %v3176 = vld [vmem:[#allocation3 + $0x730] sm:$0xff]
    %v3177 = vld [vmem:[#allocation3 + $0x738] sm:$0xff]
    %v3178 = vld [vmem:[#allocation3 + $0x740] sm:$0xff]
    %v3179 = vld [vmem:[#allocation3 + $0x748] sm:$0xff]
    %v3180 = vld [vmem:[#allocation3 + $0x750] sm:$0xff]
    %v3181 = vld [vmem:[#allocation3 + $0x758] sm:$0xff]
    %v3182 = vld [vmem:[#allocation3 + $0x760] sm:$0xff]
    %v3183 = vld [vmem:[#allocation3 + $0x768] sm:$0xff]
    %v3184 = vld [vmem:[#allocation3 + $0x770] sm:$0xff]
    %v3185 = vld [vmem:[#allocation3 + $0x778] sm:$0xff]
    %v3186 = vld [vmem:[#allocation3 + $0x780] sm:$0xff]
    %v3187 = vld [vmem:[#allocation3 + $0x788] sm:$0xff]
    %v3188 = vld [vmem:[#allocation3 + $0x790] sm:$0xff]
    %v3189 = vld [vmem:[#allocation3 + $0x798] sm:$0xff]
    %v3190 = vld [vmem:[#allocation3 + $0x7a0] sm:$0xff]
    %v3191 = vld [vmem:[#allocation3 + $0x7a8] sm:$0xff]
    %v3192 = vld [vmem:[#allocation3 + $0x7b0] sm:$0xff]
    %v3193 = vld [vmem:[#allocation3 + $0x7b8] sm:$0xff]
    %v3194 = vld [vmem:[#allocation3 + $0x7c0] sm:$0xff]
    %v3195 = vld [vmem:[#allocation3 + $0x7c8] sm:$0xff]
    %v3196 = vld [vmem:[#allocation3 + $0x7d0] sm:$0xff]
    %v3197 = vld [vmem:[#allocation3 + $0x7d8] sm:$0xff]
    %v3198 = vld [vmem:[#allocation3 + $0x7e0] sm:$0xff]
    %v3199 = vld [vmem:[#allocation3 + $0x7e8] sm:$0xff]
    %v3200 = vld [vmem:[#allocation3 + $0x7f0] sm:$0xff]
    %v3201 = vld [vmem:[#allocation3 + $0x7f8] sm:$0xff]
    %v3202 = vld [vmem:[#allocation3 + $0x800] sm:$0xff]
    %v3203 = vld [vmem:[#allocation3 + $0x808] sm:$0xff]
    %v3204 = vld [vmem:[#allocation3 + $0x810] sm:$0xff]
    %v3205 = vld [vmem:[#allocation3 + $0x818] sm:$0xff]
    %v3206 = vld [vmem:[#allocation3 + $0x820] sm:$0xff]
    %v3207 = vld [vmem:[#allocation3 + $0x828] sm:$0xff]
    %v3208 = vld [vmem:[#allocation3 + $0x830] sm:$0xff]
    %v3209 = vld [vmem:[#allocation3 + $0x838] sm:$0xff]
    %v3210 = vld [vmem:[#allocation3 + $0x840] sm:$0xff]
    %v3211 = vld [vmem:[#allocation3 + $0x848] sm:$0xff]
    %v3212 = vld [vmem:[#allocation3 + $0x850] sm:$0xff]
    %v3213 = vld [vmem:[#allocation3 + $0x858] sm:$0xff]
    %v3214 = vld [vmem:[#allocation3 + $0x860] sm:$0xff]
    %v3215 = vld [vmem:[#allocation3 + $0x868] sm:$0xff]
    %v3216 = vld [vmem:[#allocation3 + $0x870] sm:$0xff]
    %v3217 = vld [vmem:[#allocation3 + $0x878] sm:$0xff]
    %v3218 = vld [vmem:[#allocation3 + $0x880] sm:$0xff]
    %v3219 = vld [vmem:[#allocation3 + $0x888] sm:$0xff]
    %v3220 = vld [vmem:[#allocation3 + $0x890] sm:$0xff]
    %v3221 = vld [vmem:[#allocation3 + $0x898] sm:$0xff]
    %v3222 = vld [vmem:[#allocation3 + $0x8a0] sm:$0xff]
    %v3223 = vld [vmem:[#allocation3 + $0x8a8] sm:$0xff]
    %v3224 = vld [vmem:[#allocation3 + $0x8b0] sm:$0xff]
    %v3225 = vld [vmem:[#allocation3 + $0x8b8] sm:$0xff]
    %v3226 = vld [vmem:[#allocation3 + $0x8c0] sm:$0xff]
    %v3227 = vld [vmem:[#allocation3 + $0x8c8] sm:$0xff]
    %v3228 = vld [vmem:[#allocation3 + $0x8d0] sm:$0xff]
    %v3229 = vld [vmem:[#allocation3 + $0x8d8] sm:$0xff]
    %v3230 = vld [vmem:[#allocation3 + $0x8e0] sm:$0xff]
    %v3231 = vld [vmem:[#allocation3 + $0x8e8] sm:$0xff]
    %v3232 = vld [vmem:[#allocation3 + $0x8f0] sm:$0xff]
    %v3233 = vld [vmem:[#allocation3 + $0x8f8] sm:$0xff]
    %v3234 = vld [vmem:[#allocation3 + $0x900] sm:$0xff]
    %v3235 = vld [vmem:[#allocation3 + $0x908] sm:$0xff]
    %v3236 = vld [vmem:[#allocation3 + $0x910] sm:$0xff]
    %v3237 = vld [vmem:[#allocation3 + $0x918] sm:$0xff]
    %v3238 = vld [vmem:[#allocation3 + $0x920] sm:$0xff]
    %v3239 = vld [vmem:[#allocation3 + $0x928] sm:$0xff]
    %v3240 = vld [vmem:[#allocation3 + $0x930] sm:$0xff]
    %v3241 = vld [vmem:[#allocation3 + $0x938] sm:$0xff]
    %v3242 = vld [vmem:[#allocation3 + $0x940] sm:$0xff]
    %v3243 = vld [vmem:[#allocation3 + $0x948] sm:$0xff]
    %v3244 = vld [vmem:[#allocation3 + $0x950] sm:$0xff]
    %v3245 = vld [vmem:[#allocation3 + $0x958] sm:$0xff]
    %v3246 = vld [vmem:[#allocation3 + $0x960] sm:$0xff]
    %v3247 = vld [vmem:[#allocation3 + $0x968] sm:$0xff]
    %v3248 = vld [vmem:[#allocation3 + $0x970] sm:$0xff]
    %v3249 = vld [vmem:[#allocation3 + $0x978] sm:$0xff]
    %v3250 = vld [vmem:[#allocation3 + $0x980] sm:$0xff]
    %v3251 = vld [vmem:[#allocation3 + $0x988] sm:$0xff]
    %v3252 = vld [vmem:[#allocation3 + $0x990] sm:$0xff]
    %v3253 = vld [vmem:[#allocation3 + $0x998] sm:$0xff]
    %v3254 = vld [vmem:[#allocation3 + $0x9a0] sm:$0xff]
    %v3255 = vld [vmem:[#allocation3 + $0x9a8] sm:$0xff]
    %v3256 = vld [vmem:[#allocation3 + $0x9b0] sm:$0xff]
    %v3257 = vld [vmem:[#allocation3 + $0x9b8] sm:$0xff]
    %v3258 = vld [vmem:[#allocation3 + $0x9c0] sm:$0xff]
    %v3259 = vld [vmem:[#allocation3 + $0x9c8] sm:$0xff]
    %v3260 = vld [vmem:[#allocation3 + $0x9d0] sm:$0xff]
    %v3261 = vld [vmem:[#allocation3 + $0x9d8] sm:$0xff]
    %v3262 = vld [vmem:[#allocation3 + $0x9e0] sm:$0xff]
    %v3263 = vld [vmem:[#allocation3 + $0x9e8] sm:$0xff]
    %v3264 = vld [vmem:[#allocation3 + $0x9f0] sm:$0xff]
    %v3265 = vld [vmem:[#allocation3 + $0x9f8] sm:$0xff]
    %v3266 = vld [vmem:[#allocation3 + $0xa00] sm:$0xff]
    %v3267 = vld [vmem:[#allocation3 + $0xa08] sm:$0xff]
    %v3268 = vld [vmem:[#allocation3 + $0xa10] sm:$0xff]
    %v3269 = vld [vmem:[#allocation3 + $0xa18] sm:$0xff]
    %v3270 = vld [vmem:[#allocation3 + $0xa20] sm:$0xff]
    %v3271 = vld [vmem:[#allocation3 + $0xa28] sm:$0xff]
    %v3272 = vld [vmem:[#allocation3 + $0xa30] sm:$0xff]
    %v3273 = vld [vmem:[#allocation3 + $0xa38] sm:$0xff]
    %v3274 = vld [vmem:[#allocation3 + $0xa40] sm:$0xff]
    %v3275 = vld [vmem:[#allocation3 + $0xa48] sm:$0xff]
    %v3276 = vld [vmem:[#allocation3 + $0xa50] sm:$0xff]
    %v3277 = vld [vmem:[#allocation3 + $0xa58] sm:$0xff]
    %v3278 = vld [vmem:[#allocation3 + $0xa60] sm:$0xff]
    %v3279 = vld [vmem:[#allocation3 + $0xa68] sm:$0xff]
    %v3280 = vld [vmem:[#allocation3 + $0xa70] sm:$0xff]
    %v3281 = vld [vmem:[#allocation3 + $0xa78] sm:$0xff]
    %v3282 = vld [vmem:[#allocation3 + $0xa80] sm:$0xff]
    %v3283 = vld [vmem:[#allocation3 + $0xa88] sm:$0xff]
    %v3284 = vld [vmem:[#allocation3 + $0xa90] sm:$0xff]
    %v3285 = vld [vmem:[#allocation3 + $0xa98] sm:$0xff]
    %v3286 = vld [vmem:[#allocation3 + $0xaa0] sm:$0xff]
    %v3287 = vld [vmem:[#allocation3 + $0xaa8] sm:$0xff]
    %v3288 = vld [vmem:[#allocation3 + $0xab0] sm:$0xff]
    %v3289 = vld [vmem:[#allocation3 + $0xab8] sm:$0xff]
    %v3290 = vld [vmem:[#allocation3 + $0xac0] sm:$0xff]
    %v3291 = vld [vmem:[#allocation3 + $0xac8] sm:$0xff]
    %v3292 = vld [vmem:[#allocation3 + $0xad0] sm:$0xff]
    %v3293 = vld [vmem:[#allocation3 + $0xad8] sm:$0xff]
    %v3294 = vld [vmem:[#allocation3 + $0xae0] sm:$0xff]
    %v3295 = vld [vmem:[#allocation3 + $0xae8] sm:$0xff]
    %v3296 = vld [vmem:[#allocation3 + $0xaf0] sm:$0xff]
    %v3297 = vld [vmem:[#allocation3 + $0xaf8] sm:$0xff]
    %v3298 = vld [vmem:[#allocation3 + $0xb00] sm:$0xff]
    %v3299 = vld [vmem:[#allocation3 + $0xb08] sm:$0xff]
    %v3300 = vld [vmem:[#allocation3 + $0xb10] sm:$0xff]
    %v3301 = vld [vmem:[#allocation3 + $0xb18] sm:$0xff]
    %v3302 = vld [vmem:[#allocation3 + $0xb20] sm:$0xff]
    %v3303 = vld [vmem:[#allocation3 + $0xb28] sm:$0xff]
    %v3304 = vld [vmem:[#allocation3 + $0xb30] sm:$0xff]
    %v3305 = vld [vmem:[#allocation3 + $0xb38] sm:$0xff]
    %v3306 = vld [vmem:[#allocation3 + $0xb40] sm:$0xff]
    %v3307 = vld [vmem:[#allocation3 + $0xb48] sm:$0xff]
    %v3308 = vld [vmem:[#allocation3 + $0xb50] sm:$0xff]
    %v3309 = vld [vmem:[#allocation3 + $0xb58] sm:$0xff]
    %v3310 = vld [vmem:[#allocation3 + $0xb60] sm:$0xff]
    %v3311 = vld [vmem:[#allocation3 + $0xb68] sm:$0xff]
    %v3312 = vld [vmem:[#allocation3 + $0xb70] sm:$0xff]
    %v3313 = vld [vmem:[#allocation3 + $0xb78] sm:$0xff]
    %v3314 = vld [vmem:[#allocation3 + $0xb80] sm:$0xff]
    %v3315 = vld [vmem:[#allocation3 + $0xb88] sm:$0xff]
    %v3316 = vld [vmem:[#allocation3 + $0xb90] sm:$0xff]
    %v3317 = vld [vmem:[#allocation3 + $0xb98] sm:$0xff]
    %v3318 = vld [vmem:[#allocation3 + $0xba0] sm:$0xff]
    %v3319 = vld [vmem:[#allocation3 + $0xba8] sm:$0xff]
    %v3320 = vld [vmem:[#allocation3 + $0xbb0] sm:$0xff]
    %v3321 = vld [vmem:[#allocation3 + $0xbb8] sm:$0xff]
    %v3322 = vld [vmem:[#allocation3 + $0xbc0] sm:$0xff]
    %v3323 = vld [vmem:[#allocation3 + $0xbc8] sm:$0xff]
    %v3324 = vld [vmem:[#allocation3 + $0xbd0] sm:$0xff]
    %v3325 = vld [vmem:[#allocation3 + $0xbd8] sm:$0xff]
    %v3326 = vld [vmem:[#allocation3 + $0xbe0] sm:$0xff]
    %v3327 = vld [vmem:[#allocation3 + $0xbe8] sm:$0xff]
    %v3328 = vld [vmem:[#allocation3 + $0xbf0] sm:$0xff]
    %v3329 = vld [vmem:[#allocation3 + $0xbf8] sm:$0xff]
    %v3330 = vld [vmem:[#allocation3 + $0xc00] sm:$0xff]
    %v3331 = vld [vmem:[#allocation3 + $0xc08] sm:$0xff]
    %v3332 = vld [vmem:[#allocation3 + $0xc10] sm:$0xff]
    %v3333 = vld [vmem:[#allocation3 + $0xc18] sm:$0xff]
    %v3334 = vld [vmem:[#allocation3 + $0xc20] sm:$0xff]
    %v3335 = vld [vmem:[#allocation3 + $0xc28] sm:$0xff]
    %v3336 = vld [vmem:[#allocation3 + $0xc30] sm:$0xff]
    %v3337 = vld [vmem:[#allocation3 + $0xc38] sm:$0xff]
    %v3338 = vld [vmem:[#allocation3 + $0xc40] sm:$0xff]
    %v3339 = vld [vmem:[#allocation3 + $0xc48] sm:$0xff]
    %v3340 = vld [vmem:[#allocation3 + $0xc50] sm:$0xff]
    %v3341 = vld [vmem:[#allocation3 + $0xc58] sm:$0xff]
    %v3342 = vld [vmem:[#allocation3 + $0xc60] sm:$0xff]
    %v3343 = vld [vmem:[#allocation3 + $0xc68] sm:$0xff]
    %v3344 = vld [vmem:[#allocation3 + $0xc70] sm:$0xff]
    %v3345 = vld [vmem:[#allocation3 + $0xc78] sm:$0xff]
    %v3346 = vld [vmem:[#allocation3 + $0xc80] sm:$0xff]
    %v3347 = vld [vmem:[#allocation3 + $0xc88] sm:$0xff]
    %v3348 = vld [vmem:[#allocation3 + $0xc90] sm:$0xff]
    %v3349 = vld [vmem:[#allocation3 + $0xc98] sm:$0xff]
    %v3350 = vld [vmem:[#allocation3 + $0xca0] sm:$0xff]
    %v3351 = vld [vmem:[#allocation3 + $0xca8] sm:$0xff]
    %v3352 = vld [vmem:[#allocation3 + $0xcb0] sm:$0xff]
    %v3353 = vld [vmem:[#allocation3 + $0xcb8] sm:$0xff]
    %v3354 = vld [vmem:[#allocation3 + $0xcc0] sm:$0xff]
    %v3355 = vld [vmem:[#allocation3 + $0xcc8] sm:$0xff]
    %v3356 = vld [vmem:[#allocation3 + $0xcd0] sm:$0xff]
    %v3357 = vld [vmem:[#allocation3 + $0xcd8] sm:$0xff]
    %v3358 = vld [vmem:[#allocation3 + $0xce0] sm:$0xff]
    %v3359 = vld [vmem:[#allocation3 + $0xce8] sm:$0xff]
    %v3360 = vld [vmem:[#allocation3 + $0xcf0] sm:$0xff]
    %v3361 = vld [vmem:[#allocation3 + $0xcf8] sm:$0xff]
    %v3362 = vld [vmem:[#allocation3 + $0xd00] sm:$0xff]
    %v3363 = vld [vmem:[#allocation3 + $0xd08] sm:$0xff]
    %v3364 = vld [vmem:[#allocation3 + $0xd10] sm:$0xff]
    %v3365 = vld [vmem:[#allocation3 + $0xd18] sm:$0xff]
    %v3366 = vld [vmem:[#allocation3 + $0xd20] sm:$0xff]
    %v3367 = vld [vmem:[#allocation3 + $0xd28] sm:$0xff]
    %v3368 = vld [vmem:[#allocation3 + $0xd30] sm:$0xff]
    %v3369 = vld [vmem:[#allocation3 + $0xd38] sm:$0xff]
    %v3370 = vld [vmem:[#allocation3 + $0xd40] sm:$0xff]
    %v3371 = vld [vmem:[#allocation3 + $0xd48] sm:$0xff]
    %v3372 = vld [vmem:[#allocation3 + $0xd50] sm:$0xff]
    %v3373 = vld [vmem:[#allocation3 + $0xd58] sm:$0xff]
    %v3374 = vld [vmem:[#allocation3 + $0xd60] sm:$0xff]
    %v3375 = vld [vmem:[#allocation3 + $0xd68] sm:$0xff]
    %v3376 = vld [vmem:[#allocation3 + $0xd70] sm:$0xff]
    %v3377 = vld [vmem:[#allocation3 + $0xd78] sm:$0xff]
    %v3378 = vld [vmem:[#allocation3 + $0xd80] sm:$0xff]
    %v3379 = vld [vmem:[#allocation3 + $0xd88] sm:$0xff]
    %v3380 = vld [vmem:[#allocation3 + $0xd90] sm:$0xff]
    %v3381 = vld [vmem:[#allocation3 + $0xd98] sm:$0xff]
    %v3382 = vld [vmem:[#allocation3 + $0xda0] sm:$0xff]
    %v3383 = vld [vmem:[#allocation3 + $0xda8] sm:$0xff]
    %v3384 = vld [vmem:[#allocation3 + $0xdb0] sm:$0xff]
    %v3385 = vld [vmem:[#allocation3 + $0xdb8] sm:$0xff]
    %v3386 = vld [vmem:[#allocation3 + $0xdc0] sm:$0xff]
    %v3387 = vld [vmem:[#allocation3 + $0xdc8] sm:$0xff]
    %v3388 = vld [vmem:[#allocation3 + $0xdd0] sm:$0xff]
    %v3389 = vld [vmem:[#allocation3 + $0xdd8] sm:$0xff]
    %v3390 = vld [vmem:[#allocation3 + $0xde0] sm:$0xff]
    %v3391 = vld [vmem:[#allocation3 + $0xde8] sm:$0xff]
    %v3392 = vld [vmem:[#allocation3 + $0xdf0] sm:$0xff]
    %v3393 = vld [vmem:[#allocation3 + $0xdf8] sm:$0xff]
    %v3394 = vld [vmem:[#allocation3 + $0xe00] sm:$0xff]
    %v3395 = vld [vmem:[#allocation3 + $0xe08] sm:$0xff]
    %v3396 = vld [vmem:[#allocation3 + $0xe10] sm:$0xff]
    %v3397 = vld [vmem:[#allocation3 + $0xe18] sm:$0xff]
    %v3398 = vld [vmem:[#allocation3 + $0xe20] sm:$0xff]
    %v3399 = vld [vmem:[#allocation3 + $0xe28] sm:$0xff]
    %v3400 = vld [vmem:[#allocation3 + $0xe30] sm:$0xff]
    %v3401 = vld [vmem:[#allocation3 + $0xe38] sm:$0xff]
    %v3402 = vld [vmem:[#allocation3 + $0xe40] sm:$0xff]
    %v3403 = vld [vmem:[#allocation3 + $0xe48] sm:$0xff]
    %v3404 = vld [vmem:[#allocation3 + $0xe50] sm:$0xff]
    %v3405 = vld [vmem:[#allocation3 + $0xe58] sm:$0xff]
    %v3406 = vld [vmem:[#allocation3 + $0xe60] sm:$0xff]
    %v3407 = vld [vmem:[#allocation3 + $0xe68] sm:$0xff]
    %v3408 = vld [vmem:[#allocation3 + $0xe70] sm:$0xff]
    %v3409 = vld [vmem:[#allocation3 + $0xe78] sm:$0xff]
    %v3410 = vld [vmem:[#allocation3 + $0xe80] sm:$0xff]
    %v3411 = vld [vmem:[#allocation3 + $0xe88] sm:$0xff]
    %v3412 = vld [vmem:[#allocation3 + $0xe90] sm:$0xff]
    %v3413 = vld [vmem:[#allocation3 + $0xe98] sm:$0xff]
    %v3414 = vld [vmem:[#allocation3 + $0xea0] sm:$0xff]
    %v3415 = vld [vmem:[#allocation3 + $0xea8] sm:$0xff]
    %v3416 = vld [vmem:[#allocation3 + $0xeb0] sm:$0xff]
    %v3417 = vld [vmem:[#allocation3 + $0xeb8] sm:$0xff]
    %v3418 = vld [vmem:[#allocation3 + $0xec0] sm:$0xff]
    %v3419 = vld [vmem:[#allocation3 + $0xec8] sm:$0xff]
    %v3420 = vld [vmem:[#allocation3 + $0xed0] sm:$0xff]
    %v3421 = vld [vmem:[#allocation3 + $0xed8] sm:$0xff]
    %v3422 = vld [vmem:[#allocation3 + $0xee0] sm:$0xff]
    %v3423 = vld [vmem:[#allocation3 + $0xee8] sm:$0xff]
    %v3424 = vld [vmem:[#allocation3 + $0xef0] sm:$0xff]
    %v3425 = vld [vmem:[#allocation3 + $0xef8] sm:$0xff]
    %v3426 = vld [vmem:[#allocation3 + $0xf00] sm:$0xff]
    %v3427 = vld [vmem:[#allocation3 + $0xf08] sm:$0xff]
    %v3428 = vld [vmem:[#allocation3 + $0xf10] sm:$0xff]
    %v3429 = vld [vmem:[#allocation3 + $0xf18] sm:$0xff]
    %v3430 = vld [vmem:[#allocation3 + $0xf20] sm:$0xff]
    %v3431 = vld [vmem:[#allocation3 + $0xf28] sm:$0xff]
    %v3432 = vld [vmem:[#allocation3 + $0xf30] sm:$0xff]
    %v3433 = vld [vmem:[#allocation3 + $0xf38] sm:$0xff]
    %v3434 = vld [vmem:[#allocation3 + $0xf40] sm:$0xff]
    %v3435 = vld [vmem:[#allocation3 + $0xf48] sm:$0xff]
    %v3436 = vld [vmem:[#allocation3 + $0xf50] sm:$0xff]
    %v3437 = vld [vmem:[#allocation3 + $0xf58] sm:$0xff]
    %v3438 = vld [vmem:[#allocation3 + $0xf60] sm:$0xff]
    %v3439 = vld [vmem:[#allocation3 + $0xf68] sm:$0xff]
    %v3440 = vld [vmem:[#allocation3 + $0xf70] sm:$0xff]
    %v3441 = vld [vmem:[#allocation3 + $0xf78] sm:$0xff]
    %v3442 = vld [vmem:[#allocation3 + $0xf80] sm:$0xff]
    %v3443 = vld [vmem:[#allocation3 + $0xf88] sm:$0xff]
    %v3444 = vld [vmem:[#allocation3 + $0xf90] sm:$0xff]
    %v3445 = vld [vmem:[#allocation3 + $0xf98] sm:$0xff]
    %v3446 = vld [vmem:[#allocation3 + $0xfa0] sm:$0xff]
    %v3447 = vld [vmem:[#allocation3 + $0xfa8] sm:$0xff]
    %v3448 = vld [vmem:[#allocation3 + $0xfb0] sm:$0xff]
    %v3449 = vld [vmem:[#allocation3 + $0xfb8] sm:$0xff]
    %v3450 = vld [vmem:[#allocation3 + $0xfc0] sm:$0xff]
    %v3451 = vld [vmem:[#allocation3 + $0xfc8] sm:$0xff]
    %v3452 = vld [vmem:[#allocation3 + $0xfd0] sm:$0xff]
    %v3453 = vld [vmem:[#allocation3 + $0xfd8] sm:$0xff]
    %v3454 = vld [vmem:[#allocation3 + $0xfe0] sm:$0xff]
    %v3455 = vld [vmem:[#allocation3 + $0xfe8] sm:$0xff]
    %v3456 = vld [vmem:[#allocation3 + $0xff0] sm:$0xff]
    %v3457 = vld [vmem:[#allocation3 + $0xff8] sm:$0xff]
    %v3458 = vld [vmem:[#allocation9 + $0x10] sm:$0xff]
    %v3460 = vperm.slane %v3458, 0
    %v3461 = vperm.slane %v3458, 1
    %v3462 = vperm.slane %v3458, 2
    %v3463 = vperm.slane %v3458, 3
    %v3464 = vperm.slane %v3458, 4
    %v3465 = vperm.slane %v3458, 5
    %v3466 = vperm.slane %v3458, 6
    %v3467 = vperm.slane %v3458, 7
    %v3988 = vunpack.c.l.b16 %v2946
    %v3989 = vunpack.c.h.b16 %v2946
    %v3990 = vunpack.c.l.b16 %v2947
    %v3991 = vunpack.c.h.b16 %v2947
    %v3992 = vunpack.c.l.b16 %v2948
    %v3993 = vunpack.c.h.b16 %v2948
    %v3994 = vunpack.c.l.b16 %v2949
    %v3995 = vunpack.c.h.b16 %v2949
    %v3996 = vunpack.c.l.b16 %v2950
    %v3997 = vunpack.c.h.b16 %v2950
    %v3998 = vunpack.c.l.b16 %v2951
    %v3999 = vunpack.c.h.b16 %v2951
    %v4000 = vunpack.c.l.b16 %v2952
    %v4001 = vunpack.c.h.b16 %v2952
    %v4002 = vunpack.c.l.b16 %v2953
    %v4003 = vunpack.c.h.b16 %v2953
    %v4004 = vunpack.c.l.b16 %v2954
    %v4005 = vunpack.c.h.b16 %v2954
    %v4006 = vunpack.c.l.b16 %v2955
    %v4007 = vunpack.c.h.b16 %v2955
    %v4008 = vunpack.c.l.b16 %v2956
    %v4009 = vunpack.c.h.b16 %v2956
    %v4010 = vunpack.c.l.b16 %v2957
    %v4011 = vunpack.c.h.b16 %v2957
    %v4012 = vunpack.c.l.b16 %v2958
    %v4013 = vunpack.c.h.b16 %v2958
    %v4014 = vunpack.c.l.b16 %v2959
    %v4015 = vunpack.c.h.b16 %v2959
    %v4016 = vunpack.c.l.b16 %v2960
    %v4017 = vunpack.c.h.b16 %v2960
    %v4018 = vunpack.c.l.b16 %v2961
    %v4019 = vunpack.c.h.b16 %v2961
    %v4020 = vunpack.c.l.b16 %v2962
    %v4021 = vunpack.c.h.b16 %v2962
    %v4022 = vunpack.c.l.b16 %v2963
    %v4023 = vunpack.c.h.b16 %v2963
    %v4024 = vunpack.c.l.b16 %v2964
    %v4025 = vunpack.c.h.b16 %v2964
    %v4026 = vunpack.c.l.b16 %v2965
    %v4027 = vunpack.c.h.b16 %v2965
    %v4028 = vunpack.c.l.b16 %v2966
    %v4029 = vunpack.c.h.b16 %v2966
    %v4030 = vunpack.c.l.b16 %v2967
    %v4031 = vunpack.c.h.b16 %v2967
    %v4032 = vunpack.c.l.b16 %v2968
    %v4033 = vunpack.c.h.b16 %v2968
    %v4034 = vunpack.c.l.b16 %v2969
    %v4035 = vunpack.c.h.b16 %v2969
    %v4036 = vunpack.c.l.b16 %v2970
    %v4037 = vunpack.c.h.b16 %v2970
    %v4038 = vunpack.c.l.b16 %v2971
    %v4039 = vunpack.c.h.b16 %v2971
    %v4040 = vunpack.c.l.b16 %v2972
    %v4041 = vunpack.c.h.b16 %v2972
    %v4042 = vunpack.c.l.b16 %v2973
    %v4043 = vunpack.c.h.b16 %v2973
    %v4044 = vunpack.c.l.b16 %v2974
    %v4045 = vunpack.c.h.b16 %v2974
    %v4046 = vunpack.c.l.b16 %v2975
    %v4047 = vunpack.c.h.b16 %v2975
    %v4048 = vunpack.c.l.b16 %v2976
    %v4049 = vunpack.c.h.b16 %v2976
    %v4050 = vunpack.c.l.b16 %v2977
    %v4051 = vunpack.c.h.b16 %v2977
    %v4052 = vunpack.c.l.b16 %v2978
    %v4053 = vunpack.c.h.b16 %v2978
    %v4054 = vunpack.c.l.b16 %v2979
    %v4055 = vunpack.c.h.b16 %v2979
    %v4056 = vunpack.c.l.b16 %v2980
    %v4057 = vunpack.c.h.b16 %v2980
    %v4058 = vunpack.c.l.b16 %v2981
    %v4059 = vunpack.c.h.b16 %v2981
    %v4060 = vunpack.c.l.b16 %v2982
    %v4061 = vunpack.c.h.b16 %v2982
    %v4062 = vunpack.c.l.b16 %v2983
    %v4063 = vunpack.c.h.b16 %v2983
    %v4064 = vunpack.c.l.b16 %v2984
    %v4065 = vunpack.c.h.b16 %v2984
    %v4066 = vunpack.c.l.b16 %v2985
    %v4067 = vunpack.c.h.b16 %v2985
    %v4068 = vunpack.c.l.b16 %v2986
    %v4069 = vunpack.c.h.b16 %v2986
    %v4070 = vunpack.c.l.b16 %v2987
    %v4071 = vunpack.c.h.b16 %v2987
    %v4072 = vunpack.c.l.b16 %v2988
    %v4073 = vunpack.c.h.b16 %v2988
    %v4074 = vunpack.c.l.b16 %v2989
    %v4075 = vunpack.c.h.b16 %v2989
    %v4076 = vunpack.c.l.b16 %v2990
    %v4077 = vunpack.c.h.b16 %v2990
    %v4078 = vunpack.c.l.b16 %v2991
    %v4079 = vunpack.c.h.b16 %v2991
    %v4080 = vunpack.c.l.b16 %v2992
    %v4081 = vunpack.c.h.b16 %v2992
    %v4082 = vunpack.c.l.b16 %v2993
    %v4083 = vunpack.c.h.b16 %v2993
    %v4084 = vunpack.c.l.b16 %v2994
    %v4085 = vunpack.c.h.b16 %v2994
    %v4086 = vunpack.c.l.b16 %v2995
    %v4087 = vunpack.c.h.b16 %v2995
    %v4088 = vunpack.c.l.b16 %v2996
    %v4089 = vunpack.c.h.b16 %v2996
    %v4090 = vunpack.c.l.b16 %v2997
    %v4091 = vunpack.c.h.b16 %v2997
    %v4092 = vunpack.c.l.b16 %v2998
    %v4093 = vunpack.c.h.b16 %v2998
    %v4094 = vunpack.c.l.b16 %v2999
    %v4095 = vunpack.c.h.b16 %v2999
    %v4096 = vunpack.c.l.b16 %v3000
    %v4097 = vunpack.c.h.b16 %v3000
    %v4098 = vunpack.c.l.b16 %v3001
    %v4099 = vunpack.c.h.b16 %v3001
    %v4100 = vunpack.c.l.b16 %v3002
    %v4101 = vunpack.c.h.b16 %v3002
    %v4102 = vunpack.c.l.b16 %v3003
    %v4103 = vunpack.c.h.b16 %v3003
    %v4104 = vunpack.c.l.b16 %v3004
    %v4105 = vunpack.c.h.b16 %v3004
    %v4106 = vunpack.c.l.b16 %v3005
    %v4107 = vunpack.c.h.b16 %v3005
    %v4108 = vunpack.c.l.b16 %v3006
    %v4109 = vunpack.c.h.b16 %v3006
    %v4110 = vunpack.c.l.b16 %v3007
    %v4111 = vunpack.c.h.b16 %v3007
    %v4112 = vunpack.c.l.b16 %v3008
    %v4113 = vunpack.c.h.b16 %v3008
    %v4114 = vunpack.c.l.b16 %v3009
    %v4115 = vunpack.c.h.b16 %v3009
    %v4116 = vunpack.c.l.b16 %v3010
    %v4117 = vunpack.c.h.b16 %v3010
    %v4118 = vunpack.c.l.b16 %v3011
    %v4119 = vunpack.c.h.b16 %v3011
    %v4120 = vunpack.c.l.b16 %v3012
    %v4121 = vunpack.c.h.b16 %v3012
    %v4122 = vunpack.c.l.b16 %v3013
    %v4123 = vunpack.c.h.b16 %v3013
    %v4124 = vunpack.c.l.b16 %v3014
    %v4125 = vunpack.c.h.b16 %v3014
    %v4126 = vunpack.c.l.b16 %v3015
    %v4127 = vunpack.c.h.b16 %v3015
    %v4128 = vunpack.c.l.b16 %v3016
    %v4129 = vunpack.c.h.b16 %v3016
    %v4130 = vunpack.c.l.b16 %v3017
    %v4131 = vunpack.c.h.b16 %v3017
    %v4132 = vunpack.c.l.b16 %v3018
    %v4133 = vunpack.c.h.b16 %v3018
    %v4134 = vunpack.c.l.b16 %v3019
    %v4135 = vunpack.c.h.b16 %v3019
    %v4136 = vunpack.c.l.b16 %v3020
    %v4137 = vunpack.c.h.b16 %v3020
    %v4138 = vunpack.c.l.b16 %v3021
    %v4139 = vunpack.c.h.b16 %v3021
    %v4140 = vunpack.c.l.b16 %v3022
    %v4141 = vunpack.c.h.b16 %v3022
    %v4142 = vunpack.c.l.b16 %v3023
    %v4143 = vunpack.c.h.b16 %v3023
    %v4144 = vunpack.c.l.b16 %v3024
    %v4145 = vunpack.c.h.b16 %v3024
    %v4146 = vunpack.c.l.b16 %v3025
    %v4147 = vunpack.c.h.b16 %v3025
    %v4148 = vunpack.c.l.b16 %v3026
    %v4149 = vunpack.c.h.b16 %v3026
    %v4150 = vunpack.c.l.b16 %v3027
    %v4151 = vunpack.c.h.b16 %v3027
    %v4152 = vunpack.c.l.b16 %v3028
    %v4153 = vunpack.c.h.b16 %v3028
    %v4154 = vunpack.c.l.b16 %v3029
    %v4155 = vunpack.c.h.b16 %v3029
    %v4156 = vunpack.c.l.b16 %v3030
    %v4157 = vunpack.c.h.b16 %v3030
    %v4158 = vunpack.c.l.b16 %v3031
    %v4159 = vunpack.c.h.b16 %v3031
    %v4160 = vunpack.c.l.b16 %v3032
    %v4161 = vunpack.c.h.b16 %v3032
    %v4162 = vunpack.c.l.b16 %v3033
    %v4163 = vunpack.c.h.b16 %v3033
    %v4164 = vunpack.c.l.b16 %v3034
    %v4165 = vunpack.c.h.b16 %v3034
    %v4166 = vunpack.c.l.b16 %v3035
    %v4167 = vunpack.c.h.b16 %v3035
    %v4168 = vunpack.c.l.b16 %v3036
    %v4169 = vunpack.c.h.b16 %v3036
    %v4170 = vunpack.c.l.b16 %v3037
    %v4171 = vunpack.c.h.b16 %v3037
    %v4172 = vunpack.c.l.b16 %v3038
    %v4173 = vunpack.c.h.b16 %v3038
    %v4174 = vunpack.c.l.b16 %v3039
    %v4175 = vunpack.c.h.b16 %v3039
    %v4176 = vunpack.c.l.b16 %v3040
    %v4177 = vunpack.c.h.b16 %v3040
    %v4178 = vunpack.c.l.b16 %v3041
    %v4179 = vunpack.c.h.b16 %v3041
    %v4180 = vunpack.c.l.b16 %v3042
    %v4181 = vunpack.c.h.b16 %v3042
    %v4182 = vunpack.c.l.b16 %v3043
    %v4183 = vunpack.c.h.b16 %v3043
    %v4184 = vunpack.c.l.b16 %v3044
    %v4185 = vunpack.c.h.b16 %v3044
    %v4186 = vunpack.c.l.b16 %v3045
    %v4187 = vunpack.c.h.b16 %v3045
    %v4188 = vunpack.c.l.b16 %v3046
    %v4189 = vunpack.c.h.b16 %v3046
    %v4190 = vunpack.c.l.b16 %v3047
    %v4191 = vunpack.c.h.b16 %v3047
    %v4192 = vunpack.c.l.b16 %v3048
    %v4193 = vunpack.c.h.b16 %v3048
    %v4194 = vunpack.c.l.b16 %v3049
    %v4195 = vunpack.c.h.b16 %v3049
    %v4196 = vunpack.c.l.b16 %v3050
    %v4197 = vunpack.c.h.b16 %v3050
    %v4198 = vunpack.c.l.b16 %v3051
    %v4199 = vunpack.c.h.b16 %v3051
    %v4200 = vunpack.c.l.b16 %v3052
    %v4201 = vunpack.c.h.b16 %v3052
    %v4202 = vunpack.c.l.b16 %v3053
    %v4203 = vunpack.c.h.b16 %v3053
    %v4204 = vunpack.c.l.b16 %v3054
    %v4205 = vunpack.c.h.b16 %v3054
    %v4206 = vunpack.c.l.b16 %v3055
    %v4207 = vunpack.c.h.b16 %v3055
    %v4208 = vunpack.c.l.b16 %v3056
    %v4209 = vunpack.c.h.b16 %v3056
    %v4210 = vunpack.c.l.b16 %v3057
    %v4211 = vunpack.c.h.b16 %v3057
    %v4212 = vunpack.c.l.b16 %v3058
    %v4213 = vunpack.c.h.b16 %v3058
    %v4214 = vunpack.c.l.b16 %v3059
    %v4215 = vunpack.c.h.b16 %v3059
    %v4216 = vunpack.c.l.b16 %v3060
    %v4217 = vunpack.c.h.b16 %v3060
    %v4218 = vunpack.c.l.b16 %v3061
    %v4219 = vunpack.c.h.b16 %v3061
    %v4220 = vunpack.c.l.b16 %v3062
    %v4221 = vunpack.c.h.b16 %v3062
    %v4222 = vunpack.c.l.b16 %v3063
    %v4223 = vunpack.c.h.b16 %v3063
    %v4224 = vunpack.c.l.b16 %v3064
    %v4225 = vunpack.c.h.b16 %v3064
    %v4226 = vunpack.c.l.b16 %v3065
    %v4227 = vunpack.c.h.b16 %v3065
    %v4228 = vunpack.c.l.b16 %v3066
    %v4229 = vunpack.c.h.b16 %v3066
    %v4230 = vunpack.c.l.b16 %v3067
    %v4231 = vunpack.c.h.b16 %v3067
    %v4232 = vunpack.c.l.b16 %v3068
    %v4233 = vunpack.c.h.b16 %v3068
    %v4234 = vunpack.c.l.b16 %v3069
    %v4235 = vunpack.c.h.b16 %v3069
    %v4236 = vunpack.c.l.b16 %v3070
    %v4237 = vunpack.c.h.b16 %v3070
    %v4238 = vunpack.c.l.b16 %v3071
    %v4239 = vunpack.c.h.b16 %v3071
    %v4240 = vunpack.c.l.b16 %v3072
    %v4241 = vunpack.c.h.b16 %v3072
    %v4242 = vunpack.c.l.b16 %v3073
    %v4243 = vunpack.c.h.b16 %v3073
    %v4244 = vunpack.c.l.b16 %v3074
    %v4245 = vunpack.c.h.b16 %v3074
    %v4246 = vunpack.c.l.b16 %v3075
    %v4247 = vunpack.c.h.b16 %v3075
    %v4248 = vunpack.c.l.b16 %v3076
    %v4249 = vunpack.c.h.b16 %v3076
    %v4250 = vunpack.c.l.b16 %v3077
    %v4251 = vunpack.c.h.b16 %v3077
    %v4252 = vunpack.c.l.b16 %v3078
    %v4253 = vunpack.c.h.b16 %v3078
    %v4254 = vunpack.c.l.b16 %v3079
    %v4255 = vunpack.c.h.b16 %v3079
    %v4256 = vunpack.c.l.b16 %v3080
    %v4257 = vunpack.c.h.b16 %v3080
    %v4258 = vunpack.c.l.b16 %v3081
    %v4259 = vunpack.c.h.b16 %v3081
    %v4260 = vunpack.c.l.b16 %v3082
    %v4261 = vunpack.c.h.b16 %v3082
    %v4262 = vunpack.c.l.b16 %v3083
    %v4263 = vunpack.c.h.b16 %v3083
    %v4264 = vunpack.c.l.b16 %v3084
    %v4265 = vunpack.c.h.b16 %v3084
    %v4266 = vunpack.c.l.b16 %v3085
    %v4267 = vunpack.c.h.b16 %v3085
    %v4268 = vunpack.c.l.b16 %v3086
    %v4269 = vunpack.c.h.b16 %v3086
    %v4270 = vunpack.c.l.b16 %v3087
    %v4271 = vunpack.c.h.b16 %v3087
    %v4272 = vunpack.c.l.b16 %v3088
    %v4273 = vunpack.c.h.b16 %v3088
    %v4274 = vunpack.c.l.b16 %v3089
    %v4275 = vunpack.c.h.b16 %v3089
    %v4276 = vunpack.c.l.b16 %v3090
    %v4277 = vunpack.c.h.b16 %v3090
    %v4278 = vunpack.c.l.b16 %v3091
    %v4279 = vunpack.c.h.b16 %v3091
    %v4280 = vunpack.c.l.b16 %v3092
    %v4281 = vunpack.c.h.b16 %v3092
    %v4282 = vunpack.c.l.b16 %v3093
    %v4283 = vunpack.c.h.b16 %v3093
    %v4284 = vunpack.c.l.b16 %v3094
    %v4285 = vunpack.c.h.b16 %v3094
    %v4286 = vunpack.c.l.b16 %v3095
    %v4287 = vunpack.c.h.b16 %v3095
    %v4288 = vunpack.c.l.b16 %v3096
    %v4289 = vunpack.c.h.b16 %v3096
    %v4290 = vunpack.c.l.b16 %v3097
    %v4291 = vunpack.c.h.b16 %v3097
    %v4292 = vunpack.c.l.b16 %v3098
    %v4293 = vunpack.c.h.b16 %v3098
    %v4294 = vunpack.c.l.b16 %v3099
    %v4295 = vunpack.c.h.b16 %v3099
    %v4296 = vunpack.c.l.b16 %v3100
    %v4297 = vunpack.c.h.b16 %v3100
    %v4298 = vunpack.c.l.b16 %v3101
    %v4299 = vunpack.c.h.b16 %v3101
    %v4300 = vunpack.c.l.b16 %v3102
    %v4301 = vunpack.c.h.b16 %v3102
    %v4302 = vunpack.c.l.b16 %v3103
    %v4303 = vunpack.c.h.b16 %v3103
    %v4304 = vunpack.c.l.b16 %v3104
    %v4305 = vunpack.c.h.b16 %v3104
    %v4306 = vunpack.c.l.b16 %v3105
    %v4307 = vunpack.c.h.b16 %v3105
    %v4308 = vunpack.c.l.b16 %v3106
    %v4309 = vunpack.c.h.b16 %v3106
    %v4310 = vunpack.c.l.b16 %v3107
    %v4311 = vunpack.c.h.b16 %v3107
    %v4312 = vunpack.c.l.b16 %v3108
    %v4313 = vunpack.c.h.b16 %v3108
    %v4314 = vunpack.c.l.b16 %v3109
    %v4315 = vunpack.c.h.b16 %v3109
    %v4316 = vunpack.c.l.b16 %v3110
    %v4317 = vunpack.c.h.b16 %v3110
    %v4318 = vunpack.c.l.b16 %v3111
    %v4319 = vunpack.c.h.b16 %v3111
    %v4320 = vunpack.c.l.b16 %v3112
    %v4321 = vunpack.c.h.b16 %v3112
    %v4322 = vunpack.c.l.b16 %v3113
    %v4323 = vunpack.c.h.b16 %v3113
    %v4324 = vunpack.c.l.b16 %v3114
    %v4325 = vunpack.c.h.b16 %v3114
    %v4326 = vunpack.c.l.b16 %v3115
    %v4327 = vunpack.c.h.b16 %v3115
    %v4328 = vunpack.c.l.b16 %v3116
    %v4329 = vunpack.c.h.b16 %v3116
    %v4330 = vunpack.c.l.b16 %v3117
    %v4331 = vunpack.c.h.b16 %v3117
    %v4332 = vunpack.c.l.b16 %v3118
    %v4333 = vunpack.c.h.b16 %v3118
    %v4334 = vunpack.c.l.b16 %v3119
    %v4335 = vunpack.c.h.b16 %v3119
    %v4336 = vunpack.c.l.b16 %v3120
    %v4337 = vunpack.c.h.b16 %v3120
    %v4338 = vunpack.c.l.b16 %v3121
    %v4339 = vunpack.c.h.b16 %v3121
    %v4340 = vunpack.c.l.b16 %v3122
    %v4341 = vunpack.c.h.b16 %v3122
    %v4342 = vunpack.c.l.b16 %v3123
    %v4343 = vunpack.c.h.b16 %v3123
    %v4344 = vunpack.c.l.b16 %v3124
    %v4345 = vunpack.c.h.b16 %v3124
    %v4346 = vunpack.c.l.b16 %v3125
    %v4347 = vunpack.c.h.b16 %v3125
    %v4348 = vunpack.c.l.b16 %v3126
    %v4349 = vunpack.c.h.b16 %v3126
    %v4350 = vunpack.c.l.b16 %v3127
    %v4351 = vunpack.c.h.b16 %v3127
    %v4352 = vunpack.c.l.b16 %v3128
    %v4353 = vunpack.c.h.b16 %v3128
    %v4354 = vunpack.c.l.b16 %v3129
    %v4355 = vunpack.c.h.b16 %v3129
    %v4356 = vunpack.c.l.b16 %v3130
    %v4357 = vunpack.c.h.b16 %v3130
    %v4358 = vunpack.c.l.b16 %v3131
    %v4359 = vunpack.c.h.b16 %v3131
    %v4360 = vunpack.c.l.b16 %v3132
    %v4361 = vunpack.c.h.b16 %v3132
    %v4362 = vunpack.c.l.b16 %v3133
    %v4363 = vunpack.c.h.b16 %v3133
    %v4364 = vunpack.c.l.b16 %v3134
    %v4365 = vunpack.c.h.b16 %v3134
    %v4366 = vunpack.c.l.b16 %v3135
    %v4367 = vunpack.c.h.b16 %v3135
    %v4368 = vunpack.c.l.b16 %v3136
    %v4369 = vunpack.c.h.b16 %v3136
    %v4370 = vunpack.c.l.b16 %v3137
    %v4371 = vunpack.c.h.b16 %v3137
    %v4372 = vunpack.c.l.b16 %v3138
    %v4373 = vunpack.c.h.b16 %v3138
    %v4374 = vunpack.c.l.b16 %v3139
    %v4375 = vunpack.c.h.b16 %v3139
    %v4376 = vunpack.c.l.b16 %v3140
    %v4377 = vunpack.c.h.b16 %v3140
    %v4378 = vunpack.c.l.b16 %v3141
    %v4379 = vunpack.c.h.b16 %v3141
    %v4380 = vunpack.c.l.b16 %v3142
    %v4381 = vunpack.c.h.b16 %v3142
    %v4382 = vunpack.c.l.b16 %v3143
    %v4383 = vunpack.c.h.b16 %v3143
    %v4384 = vunpack.c.l.b16 %v3144
    %v4385 = vunpack.c.h.b16 %v3144
    %v4386 = vunpack.c.l.b16 %v3145
    %v4387 = vunpack.c.h.b16 %v3145
    %v4388 = vunpack.c.l.b16 %v3146
    %v4389 = vunpack.c.h.b16 %v3146
    %v4390 = vunpack.c.l.b16 %v3147
    %v4391 = vunpack.c.h.b16 %v3147
    %v4392 = vunpack.c.l.b16 %v3148
    %v4393 = vunpack.c.h.b16 %v3148
    %v4394 = vunpack.c.l.b16 %v3149
    %v4395 = vunpack.c.h.b16 %v3149
    %v4396 = vunpack.c.l.b16 %v3150
    %v4397 = vunpack.c.h.b16 %v3150
    %v4398 = vunpack.c.l.b16 %v3151
    %v4399 = vunpack.c.h.b16 %v3151
    %v4400 = vunpack.c.l.b16 %v3152
    %v4401 = vunpack.c.h.b16 %v3152
    %v4402 = vunpack.c.l.b16 %v3153
    %v4403 = vunpack.c.h.b16 %v3153
    %v4404 = vunpack.c.l.b16 %v3154
    %v4405 = vunpack.c.h.b16 %v3154
    %v4406 = vunpack.c.l.b16 %v3155
    %v4407 = vunpack.c.h.b16 %v3155
    %v4408 = vunpack.c.l.b16 %v3156
    %v4409 = vunpack.c.h.b16 %v3156
    %v4410 = vunpack.c.l.b16 %v3157
    %v4411 = vunpack.c.h.b16 %v3157
    %v4412 = vunpack.c.l.b16 %v3158
    %v4413 = vunpack.c.h.b16 %v3158
    %v4414 = vunpack.c.l.b16 %v3159
    %v4415 = vunpack.c.h.b16 %v3159
    %v4416 = vunpack.c.l.b16 %v3160
    %v4417 = vunpack.c.h.b16 %v3160
    %v4418 = vunpack.c.l.b16 %v3161
    %v4419 = vunpack.c.h.b16 %v3161
    %v4420 = vunpack.c.l.b16 %v3162
    %v4421 = vunpack.c.h.b16 %v3162
    %v4422 = vunpack.c.l.b16 %v3163
    %v4423 = vunpack.c.h.b16 %v3163
    %v4424 = vunpack.c.l.b16 %v3164
    %v4425 = vunpack.c.h.b16 %v3164
    %v4426 = vunpack.c.l.b16 %v3165
    %v4427 = vunpack.c.h.b16 %v3165
    %v4428 = vunpack.c.l.b16 %v3166
    %v4429 = vunpack.c.h.b16 %v3166
    %v4430 = vunpack.c.l.b16 %v3167
    %v4431 = vunpack.c.h.b16 %v3167
    %v4432 = vunpack.c.l.b16 %v3168
    %v4433 = vunpack.c.h.b16 %v3168
    %v4434 = vunpack.c.l.b16 %v3169
    %v4435 = vunpack.c.h.b16 %v3169
    %v4436 = vunpack.c.l.b16 %v3170
    %v4437 = vunpack.c.h.b16 %v3170
    %v4438 = vunpack.c.l.b16 %v3171
    %v4439 = vunpack.c.h.b16 %v3171
    %v4440 = vunpack.c.l.b16 %v3172
    %v4441 = vunpack.c.h.b16 %v3172
    %v4442 = vunpack.c.l.b16 %v3173
    %v4443 = vunpack.c.h.b16 %v3173
    %v4444 = vunpack.c.l.b16 %v3174
    %v4445 = vunpack.c.h.b16 %v3174
    %v4446 = vunpack.c.l.b16 %v3175
    %v4447 = vunpack.c.h.b16 %v3175
    %v4448 = vunpack.c.l.b16 %v3176
    %v4449 = vunpack.c.h.b16 %v3176
    %v4450 = vunpack.c.l.b16 %v3177
    %v4451 = vunpack.c.h.b16 %v3177
    %v4452 = vunpack.c.l.b16 %v3178
    %v4453 = vunpack.c.h.b16 %v3178
    %v4454 = vunpack.c.l.b16 %v3179
    %v4455 = vunpack.c.h.b16 %v3179
    %v4456 = vunpack.c.l.b16 %v3180
    %v4457 = vunpack.c.h.b16 %v3180
    %v4458 = vunpack.c.l.b16 %v3181
    %v4459 = vunpack.c.h.b16 %v3181
    %v4460 = vunpack.c.l.b16 %v3182
    %v4461 = vunpack.c.h.b16 %v3182
    %v4462 = vunpack.c.l.b16 %v3183
    %v4463 = vunpack.c.h.b16 %v3183
    %v4464 = vunpack.c.l.b16 %v3184
    %v4465 = vunpack.c.h.b16 %v3184
    %v4466 = vunpack.c.l.b16 %v3185
    %v4467 = vunpack.c.h.b16 %v3185
    %v4468 = vunpack.c.l.b16 %v3186
    %v4469 = vunpack.c.h.b16 %v3186
    %v4470 = vunpack.c.l.b16 %v3187
    %v4471 = vunpack.c.h.b16 %v3187
    %v4472 = vunpack.c.l.b16 %v3188
    %v4473 = vunpack.c.h.b16 %v3188
    %v4474 = vunpack.c.l.b16 %v3189
    %v4475 = vunpack.c.h.b16 %v3189
    %v4476 = vunpack.c.l.b16 %v3190
    %v4477 = vunpack.c.h.b16 %v3190
    %v4478 = vunpack.c.l.b16 %v3191
    %v4479 = vunpack.c.h.b16 %v3191
    %v4480 = vunpack.c.l.b16 %v3192
    %v4481 = vunpack.c.h.b16 %v3192
    %v4482 = vunpack.c.l.b16 %v3193
    %v4483 = vunpack.c.h.b16 %v3193
    %v4484 = vunpack.c.l.b16 %v3194
    %v4485 = vunpack.c.h.b16 %v3194
    %v4486 = vunpack.c.l.b16 %v3195
    %v4487 = vunpack.c.h.b16 %v3195
    %v4488 = vunpack.c.l.b16 %v3196
    %v4489 = vunpack.c.h.b16 %v3196
    %v4490 = vunpack.c.l.b16 %v3197
    %v4491 = vunpack.c.h.b16 %v3197
    %v4492 = vunpack.c.l.b16 %v3198
    %v4493 = vunpack.c.h.b16 %v3198
    %v4494 = vunpack.c.l.b16 %v3199
    %v4495 = vunpack.c.h.b16 %v3199
    %v4496 = vunpack.c.l.b16 %v3200
    %v4497 = vunpack.c.h.b16 %v3200
    %v4498 = vunpack.c.l.b16 %v3201
    %v4499 = vunpack.c.h.b16 %v3201
    %v4500 = vunpack.c.l.b16 %v3202
    %v4501 = vunpack.c.h.b16 %v3202
    %v4502 = vunpack.c.l.b16 %v3203
    %v4503 = vunpack.c.h.b16 %v3203
    %v4504 = vunpack.c.l.b16 %v3204
    %v4505 = vunpack.c.h.b16 %v3204
    %v4506 = vunpack.c.l.b16 %v3205
    %v4507 = vunpack.c.h.b16 %v3205
    %v4508 = vunpack.c.l.b16 %v3206
    %v4509 = vunpack.c.h.b16 %v3206
    %v4510 = vunpack.c.l.b16 %v3207
    %v4511 = vunpack.c.h.b16 %v3207
    %v4512 = vunpack.c.l.b16 %v3208
    %v4513 = vunpack.c.h.b16 %v3208
    %v4514 = vunpack.c.l.b16 %v3209
    %v4515 = vunpack.c.h.b16 %v3209
    %v4516 = vunpack.c.l.b16 %v3210
    %v4517 = vunpack.c.h.b16 %v3210
    %v4518 = vunpack.c.l.b16 %v3211
    %v4519 = vunpack.c.h.b16 %v3211
    %v4520 = vunpack.c.l.b16 %v3212
    %v4521 = vunpack.c.h.b16 %v3212
    %v4522 = vunpack.c.l.b16 %v3213
    %v4523 = vunpack.c.h.b16 %v3213
    %v4524 = vunpack.c.l.b16 %v3214
    %v4525 = vunpack.c.h.b16 %v3214
    %v4526 = vunpack.c.l.b16 %v3215
    %v4527 = vunpack.c.h.b16 %v3215
    %v4528 = vunpack.c.l.b16 %v3216
    %v4529 = vunpack.c.h.b16 %v3216
    %v4530 = vunpack.c.l.b16 %v3217
    %v4531 = vunpack.c.h.b16 %v3217
    %v4532 = vunpack.c.l.b16 %v3218
    %v4533 = vunpack.c.h.b16 %v3218
    %v4534 = vunpack.c.l.b16 %v3219
    %v4535 = vunpack.c.h.b16 %v3219
    %v4536 = vunpack.c.l.b16 %v3220
    %v4537 = vunpack.c.h.b16 %v3220
    %v4538 = vunpack.c.l.b16 %v3221
    %v4539 = vunpack.c.h.b16 %v3221
    %v4540 = vunpack.c.l.b16 %v3222
    %v4541 = vunpack.c.h.b16 %v3222
    %v4542 = vunpack.c.l.b16 %v3223
    %v4543 = vunpack.c.h.b16 %v3223
    %v4544 = vunpack.c.l.b16 %v3224
    %v4545 = vunpack.c.h.b16 %v3224
    %v4546 = vunpack.c.l.b16 %v3225
    %v4547 = vunpack.c.h.b16 %v3225
    %v4548 = vunpack.c.l.b16 %v3226
    %v4549 = vunpack.c.h.b16 %v3226
    %v4550 = vunpack.c.l.b16 %v3227
    %v4551 = vunpack.c.h.b16 %v3227
    %v4552 = vunpack.c.l.b16 %v3228
    %v4553 = vunpack.c.h.b16 %v3228
    %v4554 = vunpack.c.l.b16 %v3229
    %v4555 = vunpack.c.h.b16 %v3229
    %v4556 = vunpack.c.l.b16 %v3230
    %v4557 = vunpack.c.h.b16 %v3230
    %v4558 = vunpack.c.l.b16 %v3231
    %v4559 = vunpack.c.h.b16 %v3231
    %v4560 = vunpack.c.l.b16 %v3232
    %v4561 = vunpack.c.h.b16 %v3232
    %v4562 = vunpack.c.l.b16 %v3233
    %v4563 = vunpack.c.h.b16 %v3233
    %v4564 = vunpack.c.l.b16 %v3234
    %v4565 = vunpack.c.h.b16 %v3234
    %v4566 = vunpack.c.l.b16 %v3235
    %v4567 = vunpack.c.h.b16 %v3235
    %v4568 = vunpack.c.l.b16 %v3236
    %v4569 = vunpack.c.h.b16 %v3236
    %v4570 = vunpack.c.l.b16 %v3237
    %v4571 = vunpack.c.h.b16 %v3237
    %v4572 = vunpack.c.l.b16 %v3238
    %v4573 = vunpack.c.h.b16 %v3238
    %v4574 = vunpack.c.l.b16 %v3239
    %v4575 = vunpack.c.h.b16 %v3239
    %v4576 = vunpack.c.l.b16 %v3240
    %v4577 = vunpack.c.h.b16 %v3240
    %v4578 = vunpack.c.l.b16 %v3241
    %v4579 = vunpack.c.h.b16 %v3241
    %v4580 = vunpack.c.l.b16 %v3242
    %v4581 = vunpack.c.h.b16 %v3242
    %v4582 = vunpack.c.l.b16 %v3243
    %v4583 = vunpack.c.h.b16 %v3243
    %v4584 = vunpack.c.l.b16 %v3244
    %v4585 = vunpack.c.h.b16 %v3244
    %v4586 = vunpack.c.l.b16 %v3245
    %v4587 = vunpack.c.h.b16 %v3245
    %v4588 = vunpack.c.l.b16 %v3246
    %v4589 = vunpack.c.h.b16 %v3246
    %v4590 = vunpack.c.l.b16 %v3247
    %v4591 = vunpack.c.h.b16 %v3247
    %v4592 = vunpack.c.l.b16 %v3248
    %v4593 = vunpack.c.h.b16 %v3248
    %v4594 = vunpack.c.l.b16 %v3249
    %v4595 = vunpack.c.h.b16 %v3249
    %v4596 = vunpack.c.l.b16 %v3250
    %v4597 = vunpack.c.h.b16 %v3250
    %v4598 = vunpack.c.l.b16 %v3251
    %v4599 = vunpack.c.h.b16 %v3251
    %v4600 = vunpack.c.l.b16 %v3252
    %v4601 = vunpack.c.h.b16 %v3252
    %v4602 = vunpack.c.l.b16 %v3253
    %v4603 = vunpack.c.h.b16 %v3253
    %v4604 = vunpack.c.l.b16 %v3254
    %v4605 = vunpack.c.h.b16 %v3254
    %v4606 = vunpack.c.l.b16 %v3255
    %v4607 = vunpack.c.h.b16 %v3255
    %v4608 = vunpack.c.l.b16 %v3256
    %v4609 = vunpack.c.h.b16 %v3256
    %v4610 = vunpack.c.l.b16 %v3257
    %v4611 = vunpack.c.h.b16 %v3257
    %v4612 = vunpack.c.l.b16 %v3258
    %v4613 = vunpack.c.h.b16 %v3258
    %v4614 = vunpack.c.l.b16 %v3259
    %v4615 = vunpack.c.h.b16 %v3259
    %v4616 = vunpack.c.l.b16 %v3260
    %v4617 = vunpack.c.h.b16 %v3260
    %v4618 = vunpack.c.l.b16 %v3261
    %v4619 = vunpack.c.h.b16 %v3261
    %v4620 = vunpack.c.l.b16 %v3262
    %v4621 = vunpack.c.h.b16 %v3262
    %v4622 = vunpack.c.l.b16 %v3263
    %v4623 = vunpack.c.h.b16 %v3263
    %v4624 = vunpack.c.l.b16 %v3264
    %v4625 = vunpack.c.h.b16 %v3264
    %v4626 = vunpack.c.l.b16 %v3265
    %v4627 = vunpack.c.h.b16 %v3265
    %v4628 = vunpack.c.l.b16 %v3266
    %v4629 = vunpack.c.h.b16 %v3266
    %v4630 = vunpack.c.l.b16 %v3267
    %v4631 = vunpack.c.h.b16 %v3267
    %v4632 = vunpack.c.l.b16 %v3268
    %v4633 = vunpack.c.h.b16 %v3268
    %v4634 = vunpack.c.l.b16 %v3269
    %v4635 = vunpack.c.h.b16 %v3269
    %v4636 = vunpack.c.l.b16 %v3270
    %v4637 = vunpack.c.h.b16 %v3270
    %v4638 = vunpack.c.l.b16 %v3271
    %v4639 = vunpack.c.h.b16 %v3271
    %v4640 = vunpack.c.l.b16 %v3272
    %v4641 = vunpack.c.h.b16 %v3272
    %v4642 = vunpack.c.l.b16 %v3273
    %v4643 = vunpack.c.h.b16 %v3273
    %v4644 = vunpack.c.l.b16 %v3274
    %v4645 = vunpack.c.h.b16 %v3274
    %v4646 = vunpack.c.l.b16 %v3275
    %v4647 = vunpack.c.h.b16 %v3275
    %v4648 = vunpack.c.l.b16 %v3276
    %v4649 = vunpack.c.h.b16 %v3276
    %v4650 = vunpack.c.l.b16 %v3277
    %v4651 = vunpack.c.h.b16 %v3277
    %v4652 = vunpack.c.l.b16 %v3278
    %v4653 = vunpack.c.h.b16 %v3278
    %v4654 = vunpack.c.l.b16 %v3279
    %v4655 = vunpack.c.h.b16 %v3279
    %v4656 = vunpack.c.l.b16 %v3280
    %v4657 = vunpack.c.h.b16 %v3280
    %v4658 = vunpack.c.l.b16 %v3281
    %v4659 = vunpack.c.h.b16 %v3281
    %v4660 = vunpack.c.l.b16 %v3282
    %v4661 = vunpack.c.h.b16 %v3282
    %v4662 = vunpack.c.l.b16 %v3283
    %v4663 = vunpack.c.h.b16 %v3283
    %v4664 = vunpack.c.l.b16 %v3284
    %v4665 = vunpack.c.h.b16 %v3284
    %v4666 = vunpack.c.l.b16 %v3285
    %v4667 = vunpack.c.h.b16 %v3285
    %v4668 = vunpack.c.l.b16 %v3286
    %v4669 = vunpack.c.h.b16 %v3286
    %v4670 = vunpack.c.l.b16 %v3287
    %v4671 = vunpack.c.h.b16 %v3287
    %v4672 = vunpack.c.l.b16 %v3288
    %v4673 = vunpack.c.h.b16 %v3288
    %v4674 = vunpack.c.l.b16 %v3289
    %v4675 = vunpack.c.h.b16 %v3289
    %v4676 = vunpack.c.l.b16 %v3290
    %v4677 = vunpack.c.h.b16 %v3290
    %v4678 = vunpack.c.l.b16 %v3291
    %v4679 = vunpack.c.h.b16 %v3291
    %v4680 = vunpack.c.l.b16 %v3292
    %v4681 = vunpack.c.h.b16 %v3292
    %v4682 = vunpack.c.l.b16 %v3293
    %v4683 = vunpack.c.h.b16 %v3293
    %v4684 = vunpack.c.l.b16 %v3294
    %v4685 = vunpack.c.h.b16 %v3294
    %v4686 = vunpack.c.l.b16 %v3295
    %v4687 = vunpack.c.h.b16 %v3295
    %v4688 = vunpack.c.l.b16 %v3296
    %v4689 = vunpack.c.h.b16 %v3296
    %v4690 = vunpack.c.l.b16 %v3297
    %v4691 = vunpack.c.h.b16 %v3297
    %v4692 = vunpack.c.l.b16 %v3298
    %v4693 = vunpack.c.h.b16 %v3298
    %v4694 = vunpack.c.l.b16 %v3299
    %v4695 = vunpack.c.h.b16 %v3299
    %v4696 = vunpack.c.l.b16 %v3300
    %v4697 = vunpack.c.h.b16 %v3300
    %v4698 = vunpack.c.l.b16 %v3301
    %v4699 = vunpack.c.h.b16 %v3301
    %v4700 = vunpack.c.l.b16 %v3302
    %v4701 = vunpack.c.h.b16 %v3302
    %v4702 = vunpack.c.l.b16 %v3303
    %v4703 = vunpack.c.h.b16 %v3303
    %v4704 = vunpack.c.l.b16 %v3304
    %v4705 = vunpack.c.h.b16 %v3304
    %v4706 = vunpack.c.l.b16 %v3305
    %v4707 = vunpack.c.h.b16 %v3305
    %v4708 = vunpack.c.l.b16 %v3306
    %v4709 = vunpack.c.h.b16 %v3306
    %v4710 = vunpack.c.l.b16 %v3307
    %v4711 = vunpack.c.h.b16 %v3307
    %v4712 = vunpack.c.l.b16 %v3308
    %v4713 = vunpack.c.h.b16 %v3308
    %v4714 = vunpack.c.l.b16 %v3309
    %v4715 = vunpack.c.h.b16 %v3309
    %v4716 = vunpack.c.l.b16 %v3310
    %v4717 = vunpack.c.h.b16 %v3310
    %v4718 = vunpack.c.l.b16 %v3311
    %v4719 = vunpack.c.h.b16 %v3311
    %v4720 = vunpack.c.l.b16 %v3312
    %v4721 = vunpack.c.h.b16 %v3312
    %v4722 = vunpack.c.l.b16 %v3313
    %v4723 = vunpack.c.h.b16 %v3313
    %v4724 = vunpack.c.l.b16 %v3314
    %v4725 = vunpack.c.h.b16 %v3314
    %v4726 = vunpack.c.l.b16 %v3315
    %v4727 = vunpack.c.h.b16 %v3315
    %v4728 = vunpack.c.l.b16 %v3316
    %v4729 = vunpack.c.h.b16 %v3316
    %v4730 = vunpack.c.l.b16 %v3317
    %v4731 = vunpack.c.h.b16 %v3317
    %v4732 = vunpack.c.l.b16 %v3318
    %v4733 = vunpack.c.h.b16 %v3318
    %v4734 = vunpack.c.l.b16 %v3319
    %v4735 = vunpack.c.h.b16 %v3319
    %v4736 = vunpack.c.l.b16 %v3320
    %v4737 = vunpack.c.h.b16 %v3320
    %v4738 = vunpack.c.l.b16 %v3321
    %v4739 = vunpack.c.h.b16 %v3321
    %v4740 = vunpack.c.l.b16 %v3322
    %v4741 = vunpack.c.h.b16 %v3322
    %v4742 = vunpack.c.l.b16 %v3323
    %v4743 = vunpack.c.h.b16 %v3323
    %v4744 = vunpack.c.l.b16 %v3324
    %v4745 = vunpack.c.h.b16 %v3324
    %v4746 = vunpack.c.l.b16 %v3325
    %v4747 = vunpack.c.h.b16 %v3325
    %v4748 = vunpack.c.l.b16 %v3326
    %v4749 = vunpack.c.h.b16 %v3326
    %v4750 = vunpack.c.l.b16 %v3327
    %v4751 = vunpack.c.h.b16 %v3327
    %v4752 = vunpack.c.l.b16 %v3328
    %v4753 = vunpack.c.h.b16 %v3328
    %v4754 = vunpack.c.l.b16 %v3329
    %v4755 = vunpack.c.h.b16 %v3329
    %v4756 = vunpack.c.l.b16 %v3330
    %v4757 = vunpack.c.h.b16 %v3330
    %v4758 = vunpack.c.l.b16 %v3331
    %v4759 = vunpack.c.h.b16 %v3331
    %v4760 = vunpack.c.l.b16 %v3332
    %v4761 = vunpack.c.h.b16 %v3332
    %v4762 = vunpack.c.l.b16 %v3333
    %v4763 = vunpack.c.h.b16 %v3333
    %v4764 = vunpack.c.l.b16 %v3334
    %v4765 = vunpack.c.h.b16 %v3334
    %v4766 = vunpack.c.l.b16 %v3335
    %v4767 = vunpack.c.h.b16 %v3335
    %v4768 = vunpack.c.l.b16 %v3336
    %v4769 = vunpack.c.h.b16 %v3336
    %v4770 = vunpack.c.l.b16 %v3337
    %v4771 = vunpack.c.h.b16 %v3337
    %v4772 = vunpack.c.l.b16 %v3338
    %v4773 = vunpack.c.h.b16 %v3338
    %v4774 = vunpack.c.l.b16 %v3339
    %v4775 = vunpack.c.h.b16 %v3339
    %v4776 = vunpack.c.l.b16 %v3340
    %v4777 = vunpack.c.h.b16 %v3340
    %v4778 = vunpack.c.l.b16 %v3341
    %v4779 = vunpack.c.h.b16 %v3341
    %v4780 = vunpack.c.l.b16 %v3342
    %v4781 = vunpack.c.h.b16 %v3342
    %v4782 = vunpack.c.l.b16 %v3343
    %v4783 = vunpack.c.h.b16 %v3343
    %v4784 = vunpack.c.l.b16 %v3344
    %v4785 = vunpack.c.h.b16 %v3344
    %v4786 = vunpack.c.l.b16 %v3345
    %v4787 = vunpack.c.h.b16 %v3345
    %v4788 = vunpack.c.l.b16 %v3346
    %v4789 = vunpack.c.h.b16 %v3346
    %v4790 = vunpack.c.l.b16 %v3347
    %v4791 = vunpack.c.h.b16 %v3347
    %v4792 = vunpack.c.l.b16 %v3348
    %v4793 = vunpack.c.h.b16 %v3348
    %v4794 = vunpack.c.l.b16 %v3349
    %v4795 = vunpack.c.h.b16 %v3349
    %v4796 = vunpack.c.l.b16 %v3350
    %v4797 = vunpack.c.h.b16 %v3350
    %v4798 = vunpack.c.l.b16 %v3351
    %v4799 = vunpack.c.h.b16 %v3351
    %v4800 = vunpack.c.l.b16 %v3352
    %v4801 = vunpack.c.h.b16 %v3352
    %v4802 = vunpack.c.l.b16 %v3353
    %v4803 = vunpack.c.h.b16 %v3353
    %v4804 = vunpack.c.l.b16 %v3354
    %v4805 = vunpack.c.h.b16 %v3354
    %v4806 = vunpack.c.l.b16 %v3355
    %v4807 = vunpack.c.h.b16 %v3355
    %v4808 = vunpack.c.l.b16 %v3356
    %v4809 = vunpack.c.h.b16 %v3356
    %v4810 = vunpack.c.l.b16 %v3357
    %v4811 = vunpack.c.h.b16 %v3357
    %v4812 = vunpack.c.l.b16 %v3358
    %v4813 = vunpack.c.h.b16 %v3358
    %v4814 = vunpack.c.l.b16 %v3359
    %v4815 = vunpack.c.h.b16 %v3359
    %v4816 = vunpack.c.l.b16 %v3360
    %v4817 = vunpack.c.h.b16 %v3360
    %v4818 = vunpack.c.l.b16 %v3361
    %v4819 = vunpack.c.h.b16 %v3361
    %v4820 = vunpack.c.l.b16 %v3362
    %v4821 = vunpack.c.h.b16 %v3362
    %v4822 = vunpack.c.l.b16 %v3363
    %v4823 = vunpack.c.h.b16 %v3363
    %v4824 = vunpack.c.l.b16 %v3364
    %v4825 = vunpack.c.h.b16 %v3364
    %v4826 = vunpack.c.l.b16 %v3365
    %v4827 = vunpack.c.h.b16 %v3365
    %v4828 = vunpack.c.l.b16 %v3366
    %v4829 = vunpack.c.h.b16 %v3366
    %v4830 = vunpack.c.l.b16 %v3367
    %v4831 = vunpack.c.h.b16 %v3367
    %v4832 = vunpack.c.l.b16 %v3368
    %v4833 = vunpack.c.h.b16 %v3368
    %v4834 = vunpack.c.l.b16 %v3369
    %v4835 = vunpack.c.h.b16 %v3369
    %v4836 = vunpack.c.l.b16 %v3370
    %v4837 = vunpack.c.h.b16 %v3370
    %v4838 = vunpack.c.l.b16 %v3371
    %v4839 = vunpack.c.h.b16 %v3371
    %v4840 = vunpack.c.l.b16 %v3372
    %v4841 = vunpack.c.h.b16 %v3372
    %v4842 = vunpack.c.l.b16 %v3373
    %v4843 = vunpack.c.h.b16 %v3373
    %v4844 = vunpack.c.l.b16 %v3374
    %v4845 = vunpack.c.h.b16 %v3374
    %v4846 = vunpack.c.l.b16 %v3375
    %v4847 = vunpack.c.h.b16 %v3375
    %v4848 = vunpack.c.l.b16 %v3376
    %v4849 = vunpack.c.h.b16 %v3376
    %v4850 = vunpack.c.l.b16 %v3377
    %v4851 = vunpack.c.h.b16 %v3377
    %v4852 = vunpack.c.l.b16 %v3378
    %v4853 = vunpack.c.h.b16 %v3378
    %v4854 = vunpack.c.l.b16 %v3379
    %v4855 = vunpack.c.h.b16 %v3379
    %v4856 = vunpack.c.l.b16 %v3380
    %v4857 = vunpack.c.h.b16 %v3380
    %v4858 = vunpack.c.l.b16 %v3381
    %v4859 = vunpack.c.h.b16 %v3381
    %v4860 = vunpack.c.l.b16 %v3382
    %v4861 = vunpack.c.h.b16 %v3382
    %v4862 = vunpack.c.l.b16 %v3383
    %v4863 = vunpack.c.h.b16 %v3383
    %v4864 = vunpack.c.l.b16 %v3384
    %v4865 = vunpack.c.h.b16 %v3384
    %v4866 = vunpack.c.l.b16 %v3385
    %v4867 = vunpack.c.h.b16 %v3385
    %v4868 = vunpack.c.l.b16 %v3386
    %v4869 = vunpack.c.h.b16 %v3386
    %v4870 = vunpack.c.l.b16 %v3387
    %v4871 = vunpack.c.h.b16 %v3387
    %v4872 = vunpack.c.l.b16 %v3388
    %v4873 = vunpack.c.h.b16 %v3388
    %v4874 = vunpack.c.l.b16 %v3389
    %v4875 = vunpack.c.h.b16 %v3389
    %v4876 = vunpack.c.l.b16 %v3390
    %v4877 = vunpack.c.h.b16 %v3390
    %v4878 = vunpack.c.l.b16 %v3391
    %v4879 = vunpack.c.h.b16 %v3391
    %v4880 = vunpack.c.l.b16 %v3392
    %v4881 = vunpack.c.h.b16 %v3392
    %v4882 = vunpack.c.l.b16 %v3393
    %v4883 = vunpack.c.h.b16 %v3393
    %v4884 = vunpack.c.l.b16 %v3394
    %v4885 = vunpack.c.h.b16 %v3394
    %v4886 = vunpack.c.l.b16 %v3395
    %v4887 = vunpack.c.h.b16 %v3395
    %v4888 = vunpack.c.l.b16 %v3396
    %v4889 = vunpack.c.h.b16 %v3396
    %v4890 = vunpack.c.l.b16 %v3397
    %v4891 = vunpack.c.h.b16 %v3397
    %v4892 = vunpack.c.l.b16 %v3398
    %v4893 = vunpack.c.h.b16 %v3398
    %v4894 = vunpack.c.l.b16 %v3399
    %v4895 = vunpack.c.h.b16 %v3399
    %v4896 = vunpack.c.l.b16 %v3400
    %v4897 = vunpack.c.h.b16 %v3400
    %v4898 = vunpack.c.l.b16 %v3401
    %v4899 = vunpack.c.h.b16 %v3401
    %v4900 = vunpack.c.l.b16 %v3402
    %v4901 = vunpack.c.h.b16 %v3402
    %v4902 = vunpack.c.l.b16 %v3403
    %v4903 = vunpack.c.h.b16 %v3403
    %v4904 = vunpack.c.l.b16 %v3404
    %v4905 = vunpack.c.h.b16 %v3404
    %v4906 = vunpack.c.l.b16 %v3405
    %v4907 = vunpack.c.h.b16 %v3405
    %v4908 = vunpack.c.l.b16 %v3406
    %v4909 = vunpack.c.h.b16 %v3406
    %v4910 = vunpack.c.l.b16 %v3407
    %v4911 = vunpack.c.h.b16 %v3407
    %v4912 = vunpack.c.l.b16 %v3408
    %v4913 = vunpack.c.h.b16 %v3408
    %v4914 = vunpack.c.l.b16 %v3409
    %v4915 = vunpack.c.h.b16 %v3409
    %v4916 = vunpack.c.l.b16 %v3410
    %v4917 = vunpack.c.h.b16 %v3410
    %v4918 = vunpack.c.l.b16 %v3411
    %v4919 = vunpack.c.h.b16 %v3411
    %v4920 = vunpack.c.l.b16 %v3412
    %v4921 = vunpack.c.h.b16 %v3412
    %v4922 = vunpack.c.l.b16 %v3413
    %v4923 = vunpack.c.h.b16 %v3413
    %v4924 = vunpack.c.l.b16 %v3414
    %v4925 = vunpack.c.h.b16 %v3414
    %v4926 = vunpack.c.l.b16 %v3415
    %v4927 = vunpack.c.h.b16 %v3415
    %v4928 = vunpack.c.l.b16 %v3416
    %v4929 = vunpack.c.h.b16 %v3416
    %v4930 = vunpack.c.l.b16 %v3417
    %v4931 = vunpack.c.h.b16 %v3417
    %v4932 = vunpack.c.l.b16 %v3418
    %v4933 = vunpack.c.h.b16 %v3418
    %v4934 = vunpack.c.l.b16 %v3419
    %v4935 = vunpack.c.h.b16 %v3419
    %v4936 = vunpack.c.l.b16 %v3420
    %v4937 = vunpack.c.h.b16 %v3420
    %v4938 = vunpack.c.l.b16 %v3421
    %v4939 = vunpack.c.h.b16 %v3421
    %v4940 = vunpack.c.l.b16 %v3422
    %v4941 = vunpack.c.h.b16 %v3422
    %v4942 = vunpack.c.l.b16 %v3423
    %v4943 = vunpack.c.h.b16 %v3423
    %v4944 = vunpack.c.l.b16 %v3424
    %v4945 = vunpack.c.h.b16 %v3424
    %v4946 = vunpack.c.l.b16 %v3425
    %v4947 = vunpack.c.h.b16 %v3425
    %v4948 = vunpack.c.l.b16 %v3426
    %v4949 = vunpack.c.h.b16 %v3426
    %v4950 = vunpack.c.l.b16 %v3427
    %v4951 = vunpack.c.h.b16 %v3427
    %v4952 = vunpack.c.l.b16 %v3428
    %v4953 = vunpack.c.h.b16 %v3428
    %v4954 = vunpack.c.l.b16 %v3429
    %v4955 = vunpack.c.h.b16 %v3429
    %v4956 = vunpack.c.l.b16 %v3430
    %v4957 = vunpack.c.h.b16 %v3430
    %v4958 = vunpack.c.l.b16 %v3431
    %v4959 = vunpack.c.h.b16 %v3431
    %v4960 = vunpack.c.l.b16 %v3432
    %v4961 = vunpack.c.h.b16 %v3432
    %v4962 = vunpack.c.l.b16 %v3433
    %v4963 = vunpack.c.h.b16 %v3433
    %v4964 = vunpack.c.l.b16 %v3434
    %v4965 = vunpack.c.h.b16 %v3434
    %v4966 = vunpack.c.l.b16 %v3435
    %v4967 = vunpack.c.h.b16 %v3435
    %v4968 = vunpack.c.l.b16 %v3436
    %v4969 = vunpack.c.h.b16 %v3436
    %v4970 = vunpack.c.l.b16 %v3437
    %v4971 = vunpack.c.h.b16 %v3437
    %v4972 = vunpack.c.l.b16 %v3438
    %v4973 = vunpack.c.h.b16 %v3438
    %v4974 = vunpack.c.l.b16 %v3439
    %v4975 = vunpack.c.h.b16 %v3439
    %v4976 = vunpack.c.l.b16 %v3440
    %v4977 = vunpack.c.h.b16 %v3440
    %v4978 = vunpack.c.l.b16 %v3441
    %v4979 = vunpack.c.h.b16 %v3441
    %v4980 = vunpack.c.l.b16 %v3442
    %v4981 = vunpack.c.h.b16 %v3442
    %v4982 = vunpack.c.l.b16 %v3443
    %v4983 = vunpack.c.h.b16 %v3443
    %v4984 = vunpack.c.l.b16 %v3444
    %v4985 = vunpack.c.h.b16 %v3444
    %v4986 = vunpack.c.l.b16 %v3445
    %v4987 = vunpack.c.h.b16 %v3445
    %v4988 = vunpack.c.l.b16 %v3446
    %v4989 = vunpack.c.h.b16 %v3446
    %v4990 = vunpack.c.l.b16 %v3447
    %v4991 = vunpack.c.h.b16 %v3447
    %v4992 = vunpack.c.l.b16 %v3448
    %v4993 = vunpack.c.h.b16 %v3448
    %v4994 = vunpack.c.l.b16 %v3449
    %v4995 = vunpack.c.h.b16 %v3449
    %v4996 = vunpack.c.l.b16 %v3450
    %v4997 = vunpack.c.h.b16 %v3450
    %v4998 = vunpack.c.l.b16 %v3451
    %v4999 = vunpack.c.h.b16 %v3451
    %v5000 = vunpack.c.l.b16 %v3452
    %v5001 = vunpack.c.h.b16 %v3452
    %v5002 = vunpack.c.l.b16 %v3453
    %v5003 = vunpack.c.h.b16 %v3453
    %v5004 = vunpack.c.l.b16 %v3454
    %v5005 = vunpack.c.h.b16 %v3454
    %v5006 = vunpack.c.l.b16 %v3455
    %v5007 = vunpack.c.h.b16 %v3455
    %v5008 = vunpack.c.l.b16 %v3456
    %v5009 = vunpack.c.h.b16 %v3456
    %v5010 = vunpack.c.l.b16 %v3457
    %v5011 = vunpack.c.h.b16 %v3457
    %v5012 = vpack.c.b16 %v3996, %v3988
    %v5013 = vpack.c.b16 %v3997, %v3989
    %v5014 = vpack.c.b16 %v3998, %v3990
    %v5015 = vpack.c.b16 %v3999, %v3991
    %v5016 = vpack.c.b16 %v4000, %v3992
    %v5017 = vpack.c.b16 %v4001, %v3993
    %v5018 = vpack.c.b16 %v4002, %v3994
    %v5019 = vpack.c.b16 %v4003, %v3995
    %v5020 = vpack.c.b16 %v4012, %v4004
    %v5021 = vpack.c.b16 %v4013, %v4005
    %v5022 = vpack.c.b16 %v4014, %v4006
    %v5023 = vpack.c.b16 %v4015, %v4007
    %v5024 = vpack.c.b16 %v4016, %v4008
    %v5025 = vpack.c.b16 %v4017, %v4009
    %v5026 = vpack.c.b16 %v4018, %v4010
    %v5027 = vpack.c.b16 %v4019, %v4011
    %v5028 = vpack.c.b16 %v4028, %v4020
    %v5029 = vpack.c.b16 %v4029, %v4021
    %v5030 = vpack.c.b16 %v4030, %v4022
    %v5031 = vpack.c.b16 %v4031, %v4023
    %v5032 = vpack.c.b16 %v4032, %v4024
    %v5033 = vpack.c.b16 %v4033, %v4025
    %v5034 = vpack.c.b16 %v4034, %v4026
    %v5035 = vpack.c.b16 %v4035, %v4027
    %v5036 = vpack.c.b16 %v4044, %v4036
    %v5037 = vpack.c.b16 %v4045, %v4037
    %v5038 = vpack.c.b16 %v4046, %v4038
    %v5039 = vpack.c.b16 %v4047, %v4039
    %v5040 = vpack.c.b16 %v4048, %v4040
    %v5041 = vpack.c.b16 %v4049, %v4041
    %v5042 = vpack.c.b16 %v4050, %v4042
    %v5043 = vpack.c.b16 %v4051, %v4043
    %v5044 = vpack.c.b16 %v4060, %v4052
    %v5045 = vpack.c.b16 %v4061, %v4053
    %v5046 = vpack.c.b16 %v4062, %v4054
    %v5047 = vpack.c.b16 %v4063, %v4055
    %v5048 = vpack.c.b16 %v4064, %v4056
    %v5049 = vpack.c.b16 %v4065, %v4057
    %v5050 = vpack.c.b16 %v4066, %v4058
    %v5051 = vpack.c.b16 %v4067, %v4059
    %v5052 = vpack.c.b16 %v4076, %v4068
    %v5053 = vpack.c.b16 %v4077, %v4069
    %v5054 = vpack.c.b16 %v4078, %v4070
    %v5055 = vpack.c.b16 %v4079, %v4071
    %v5056 = vpack.c.b16 %v4080, %v4072
    %v5057 = vpack.c.b16 %v4081, %v4073
    %v5058 = vpack.c.b16 %v4082, %v4074
    %v5059 = vpack.c.b16 %v4083, %v4075
    %v5060 = vpack.c.b16 %v4092, %v4084
    %v5061 = vpack.c.b16 %v4093, %v4085
    %v5062 = vpack.c.b16 %v4094, %v4086
    %v5063 = vpack.c.b16 %v4095, %v4087
    %v5064 = vpack.c.b16 %v4096, %v4088
    %v5065 = vpack.c.b16 %v4097, %v4089
    %v5066 = vpack.c.b16 %v4098, %v4090
    %v5067 = vpack.c.b16 %v4099, %v4091
    %v5068 = vpack.c.b16 %v4108, %v4100
    %v5069 = vpack.c.b16 %v4109, %v4101
    %v5070 = vpack.c.b16 %v4110, %v4102
    %v5071 = vpack.c.b16 %v4111, %v4103
    %v5072 = vpack.c.b16 %v4112, %v4104
    %v5073 = vpack.c.b16 %v4113, %v4105
    %v5074 = vpack.c.b16 %v4114, %v4106
    %v5075 = vpack.c.b16 %v4115, %v4107
    %v5076 = vpack.c.b16 %v4124, %v4116
    %v5077 = vpack.c.b16 %v4125, %v4117
    %v5078 = vpack.c.b16 %v4126, %v4118
    %v5079 = vpack.c.b16 %v4127, %v4119
    %v5080 = vpack.c.b16 %v4128, %v4120
    %v5081 = vpack.c.b16 %v4129, %v4121
    %v5082 = vpack.c.b16 %v4130, %v4122
    %v5083 = vpack.c.b16 %v4131, %v4123
    %v5084 = vpack.c.b16 %v4140, %v4132
    %v5085 = vpack.c.b16 %v4141, %v4133
    %v5086 = vpack.c.b16 %v4142, %v4134
    %v5087 = vpack.c.b16 %v4143, %v4135
    %v5088 = vpack.c.b16 %v4144, %v4136
    %v5089 = vpack.c.b16 %v4145, %v4137
    %v5090 = vpack.c.b16 %v4146, %v4138
    %v5091 = vpack.c.b16 %v4147, %v4139
    %v5092 = vpack.c.b16 %v4156, %v4148
    %v5093 = vpack.c.b16 %v4157, %v4149
    %v5094 = vpack.c.b16 %v4158, %v4150
    %v5095 = vpack.c.b16 %v4159, %v4151
    %v5096 = vpack.c.b16 %v4160, %v4152
    %v5097 = vpack.c.b16 %v4161, %v4153
    %v5098 = vpack.c.b16 %v4162, %v4154
    %v5099 = vpack.c.b16 %v4163, %v4155
    %v5100 = vpack.c.b16 %v4172, %v4164
    %v5101 = vpack.c.b16 %v4173, %v4165
    %v5102 = vpack.c.b16 %v4174, %v4166
    %v5103 = vpack.c.b16 %v4175, %v4167
    %v5104 = vpack.c.b16 %v4176, %v4168
    %v5105 = vpack.c.b16 %v4177, %v4169
    %v5106 = vpack.c.b16 %v4178, %v4170
    %v5107 = vpack.c.b16 %v4179, %v4171
    %v5108 = vpack.c.b16 %v4188, %v4180
    %v5109 = vpack.c.b16 %v4189, %v4181
    %v5110 = vpack.c.b16 %v4190, %v4182
    %v5111 = vpack.c.b16 %v4191, %v4183
    %v5112 = vpack.c.b16 %v4192, %v4184
    %v5113 = vpack.c.b16 %v4193, %v4185
    %v5114 = vpack.c.b16 %v4194, %v4186
    %v5115 = vpack.c.b16 %v4195, %v4187
    %v5116 = vpack.c.b16 %v4204, %v4196
    %v5117 = vpack.c.b16 %v4205, %v4197
    %v5118 = vpack.c.b16 %v4206, %v4198
    %v5119 = vpack.c.b16 %v4207, %v4199
    %v5120 = vpack.c.b16 %v4208, %v4200
    %v5121 = vpack.c.b16 %v4209, %v4201
    %v5122 = vpack.c.b16 %v4210, %v4202
    %v5123 = vpack.c.b16 %v4211, %v4203
    %v5124 = vpack.c.b16 %v4220, %v4212
    %v5125 = vpack.c.b16 %v4221, %v4213
    %v5126 = vpack.c.b16 %v4222, %v4214
    %v5127 = vpack.c.b16 %v4223, %v4215
    %v5128 = vpack.c.b16 %v4224, %v4216
    %v5129 = vpack.c.b16 %v4225, %v4217
    %v5130 = vpack.c.b16 %v4226, %v4218
    %v5131 = vpack.c.b16 %v4227, %v4219
    %v5132 = vpack.c.b16 %v4236, %v4228
    %v5133 = vpack.c.b16 %v4237, %v4229
    %v5134 = vpack.c.b16 %v4238, %v4230
    %v5135 = vpack.c.b16 %v4239, %v4231
    %v5136 = vpack.c.b16 %v4240, %v4232
    %v5137 = vpack.c.b16 %v4241, %v4233
    %v5138 = vpack.c.b16 %v4242, %v4234
    %v5139 = vpack.c.b16 %v4243, %v4235
    %v5140 = vpack.c.b16 %v4252, %v4244
    %v5141 = vpack.c.b16 %v4253, %v4245
    %v5142 = vpack.c.b16 %v4254, %v4246
    %v5143 = vpack.c.b16 %v4255, %v4247
    %v5144 = vpack.c.b16 %v4256, %v4248
    %v5145 = vpack.c.b16 %v4257, %v4249
    %v5146 = vpack.c.b16 %v4258, %v4250
    %v5147 = vpack.c.b16 %v4259, %v4251
    %v5148 = vpack.c.b16 %v4268, %v4260
    %v5149 = vpack.c.b16 %v4269, %v4261
    %v5150 = vpack.c.b16 %v4270, %v4262
    %v5151 = vpack.c.b16 %v4271, %v4263
    %v5152 = vpack.c.b16 %v4272, %v4264
    %v5153 = vpack.c.b16 %v4273, %v4265
    %v5154 = vpack.c.b16 %v4274, %v4266
    %v5155 = vpack.c.b16 %v4275, %v4267
    %v5156 = vpack.c.b16 %v4284, %v4276
    %v5157 = vpack.c.b16 %v4285, %v4277
    %v5158 = vpack.c.b16 %v4286, %v4278
    %v5159 = vpack.c.b16 %v4287, %v4279
    %v5160 = vpack.c.b16 %v4288, %v4280
    %v5161 = vpack.c.b16 %v4289, %v4281
    %v5162 = vpack.c.b16 %v4290, %v4282
    %v5163 = vpack.c.b16 %v4291, %v4283
    %v5164 = vpack.c.b16 %v4300, %v4292
    %v5165 = vpack.c.b16 %v4301, %v4293
    %v5166 = vpack.c.b16 %v4302, %v4294
    %v5167 = vpack.c.b16 %v4303, %v4295
    %v5168 = vpack.c.b16 %v4304, %v4296
    %v5169 = vpack.c.b16 %v4305, %v4297
    %v5170 = vpack.c.b16 %v4306, %v4298
    %v5171 = vpack.c.b16 %v4307, %v4299
    %v5172 = vpack.c.b16 %v4316, %v4308
    %v5173 = vpack.c.b16 %v4317, %v4309
    %v5174 = vpack.c.b16 %v4318, %v4310
    %v5175 = vpack.c.b16 %v4319, %v4311
    %v5176 = vpack.c.b16 %v4320, %v4312
    %v5177 = vpack.c.b16 %v4321, %v4313
    %v5178 = vpack.c.b16 %v4322, %v4314
    %v5179 = vpack.c.b16 %v4323, %v4315
    %v5180 = vpack.c.b16 %v4332, %v4324
    %v5181 = vpack.c.b16 %v4333, %v4325
    %v5182 = vpack.c.b16 %v4334, %v4326
    %v5183 = vpack.c.b16 %v4335, %v4327
    %v5184 = vpack.c.b16 %v4336, %v4328
    %v5185 = vpack.c.b16 %v4337, %v4329
    %v5186 = vpack.c.b16 %v4338, %v4330
    %v5187 = vpack.c.b16 %v4339, %v4331
    %v5188 = vpack.c.b16 %v4348, %v4340
    %v5189 = vpack.c.b16 %v4349, %v4341
    %v5190 = vpack.c.b16 %v4350, %v4342
    %v5191 = vpack.c.b16 %v4351, %v4343
    %v5192 = vpack.c.b16 %v4352, %v4344
    %v5193 = vpack.c.b16 %v4353, %v4345
    %v5194 = vpack.c.b16 %v4354, %v4346
    %v5195 = vpack.c.b16 %v4355, %v4347
    %v5196 = vpack.c.b16 %v4364, %v4356
    %v5197 = vpack.c.b16 %v4365, %v4357
    %v5198 = vpack.c.b16 %v4366, %v4358
    %v5199 = vpack.c.b16 %v4367, %v4359
    %v5200 = vpack.c.b16 %v4368, %v4360
    %v5201 = vpack.c.b16 %v4369, %v4361
    %v5202 = vpack.c.b16 %v4370, %v4362
    %v5203 = vpack.c.b16 %v4371, %v4363
    %v5204 = vpack.c.b16 %v4380, %v4372
    %v5205 = vpack.c.b16 %v4381, %v4373
    %v5206 = vpack.c.b16 %v4382, %v4374
    %v5207 = vpack.c.b16 %v4383, %v4375
    %v5208 = vpack.c.b16 %v4384, %v4376
    %v5209 = vpack.c.b16 %v4385, %v4377
    %v5210 = vpack.c.b16 %v4386, %v4378
    %v5211 = vpack.c.b16 %v4387, %v4379
    %v5212 = vpack.c.b16 %v4396, %v4388
    %v5213 = vpack.c.b16 %v4397, %v4389
    %v5214 = vpack.c.b16 %v4398, %v4390
    %v5215 = vpack.c.b16 %v4399, %v4391
    %v5216 = vpack.c.b16 %v4400, %v4392
    %v5217 = vpack.c.b16 %v4401, %v4393
    %v5218 = vpack.c.b16 %v4402, %v4394
    %v5219 = vpack.c.b16 %v4403, %v4395
    %v5220 = vpack.c.b16 %v4412, %v4404
    %v5221 = vpack.c.b16 %v4413, %v4405
    %v5222 = vpack.c.b16 %v4414, %v4406
    %v5223 = vpack.c.b16 %v4415, %v4407
    %v5224 = vpack.c.b16 %v4416, %v4408
    %v5225 = vpack.c.b16 %v4417, %v4409
    %v5226 = vpack.c.b16 %v4418, %v4410
    %v5227 = vpack.c.b16 %v4419, %v4411
    %v5228 = vpack.c.b16 %v4428, %v4420
    %v5229 = vpack.c.b16 %v4429, %v4421
    %v5230 = vpack.c.b16 %v4430, %v4422
    %v5231 = vpack.c.b16 %v4431, %v4423
    %v5232 = vpack.c.b16 %v4432, %v4424
    %v5233 = vpack.c.b16 %v4433, %v4425
    %v5234 = vpack.c.b16 %v4434, %v4426
    %v5235 = vpack.c.b16 %v4435, %v4427
    %v5236 = vpack.c.b16 %v4444, %v4436
    %v5237 = vpack.c.b16 %v4445, %v4437
    %v5238 = vpack.c.b16 %v4446, %v4438
    %v5239 = vpack.c.b16 %v4447, %v4439
    %v5240 = vpack.c.b16 %v4448, %v4440
    %v5241 = vpack.c.b16 %v4449, %v4441
    %v5242 = vpack.c.b16 %v4450, %v4442
    %v5243 = vpack.c.b16 %v4451, %v4443
    %v5244 = vpack.c.b16 %v4460, %v4452
    %v5245 = vpack.c.b16 %v4461, %v4453
    %v5246 = vpack.c.b16 %v4462, %v4454
    %v5247 = vpack.c.b16 %v4463, %v4455
    %v5248 = vpack.c.b16 %v4464, %v4456
    %v5249 = vpack.c.b16 %v4465, %v4457
    %v5250 = vpack.c.b16 %v4466, %v4458
    %v5251 = vpack.c.b16 %v4467, %v4459
    %v5252 = vpack.c.b16 %v4476, %v4468
    %v5253 = vpack.c.b16 %v4477, %v4469
    %v5254 = vpack.c.b16 %v4478, %v4470
    %v5255 = vpack.c.b16 %v4479, %v4471
    %v5256 = vpack.c.b16 %v4480, %v4472
    %v5257 = vpack.c.b16 %v4481, %v4473
    %v5258 = vpack.c.b16 %v4482, %v4474
    %v5259 = vpack.c.b16 %v4483, %v4475
    %v5260 = vpack.c.b16 %v4492, %v4484
    %v5261 = vpack.c.b16 %v4493, %v4485
    %v5262 = vpack.c.b16 %v4494, %v4486
    %v5263 = vpack.c.b16 %v4495, %v4487
    %v5264 = vpack.c.b16 %v4496, %v4488
    %v5265 = vpack.c.b16 %v4497, %v4489
    %v5266 = vpack.c.b16 %v4498, %v4490
    %v5267 = vpack.c.b16 %v4499, %v4491
    %v5268 = vpack.c.b16 %v4508, %v4500
    %v5269 = vpack.c.b16 %v4509, %v4501
    %v5270 = vpack.c.b16 %v4510, %v4502
    %v5271 = vpack.c.b16 %v4511, %v4503
    %v5272 = vpack.c.b16 %v4512, %v4504
    %v5273 = vpack.c.b16 %v4513, %v4505
    %v5274 = vpack.c.b16 %v4514, %v4506
    %v5275 = vpack.c.b16 %v4515, %v4507
    %v5276 = vpack.c.b16 %v4524, %v4516
    %v5277 = vpack.c.b16 %v4525, %v4517
    %v5278 = vpack.c.b16 %v4526, %v4518
    %v5279 = vpack.c.b16 %v4527, %v4519
    %v5280 = vpack.c.b16 %v4528, %v4520
    %v5281 = vpack.c.b16 %v4529, %v4521
    %v5282 = vpack.c.b16 %v4530, %v4522
    %v5283 = vpack.c.b16 %v4531, %v4523
    %v5284 = vpack.c.b16 %v4540, %v4532
    %v5285 = vpack.c.b16 %v4541, %v4533
    %v5286 = vpack.c.b16 %v4542, %v4534
    %v5287 = vpack.c.b16 %v4543, %v4535
    %v5288 = vpack.c.b16 %v4544, %v4536
    %v5289 = vpack.c.b16 %v4545, %v4537
    %v5290 = vpack.c.b16 %v4546, %v4538
    %v5291 = vpack.c.b16 %v4547, %v4539
    %v5292 = vpack.c.b16 %v4556, %v4548
    %v5293 = vpack.c.b16 %v4557, %v4549
    %v5294 = vpack.c.b16 %v4558, %v4550
    %v5295 = vpack.c.b16 %v4559, %v4551
    %v5296 = vpack.c.b16 %v4560, %v4552
    %v5297 = vpack.c.b16 %v4561, %v4553
    %v5298 = vpack.c.b16 %v4562, %v4554
    %v5299 = vpack.c.b16 %v4563, %v4555
    %v5300 = vpack.c.b16 %v4572, %v4564
    %v5301 = vpack.c.b16 %v4573, %v4565
    %v5302 = vpack.c.b16 %v4574, %v4566
    %v5303 = vpack.c.b16 %v4575, %v4567
    %v5304 = vpack.c.b16 %v4576, %v4568
    %v5305 = vpack.c.b16 %v4577, %v4569
    %v5306 = vpack.c.b16 %v4578, %v4570
    %v5307 = vpack.c.b16 %v4579, %v4571
    %v5308 = vpack.c.b16 %v4588, %v4580
    %v5309 = vpack.c.b16 %v4589, %v4581
    %v5310 = vpack.c.b16 %v4590, %v4582
    %v5311 = vpack.c.b16 %v4591, %v4583
    %v5312 = vpack.c.b16 %v4592, %v4584
    %v5313 = vpack.c.b16 %v4593, %v4585
    %v5314 = vpack.c.b16 %v4594, %v4586
    %v5315 = vpack.c.b16 %v4595, %v4587
    %v5316 = vpack.c.b16 %v4604, %v4596
    %v5317 = vpack.c.b16 %v4605, %v4597
    %v5318 = vpack.c.b16 %v4606, %v4598
    %v5319 = vpack.c.b16 %v4607, %v4599
    %v5320 = vpack.c.b16 %v4608, %v4600
    %v5321 = vpack.c.b16 %v4609, %v4601
    %v5322 = vpack.c.b16 %v4610, %v4602
    %v5323 = vpack.c.b16 %v4611, %v4603
    %v5324 = vpack.c.b16 %v4620, %v4612
    %v5325 = vpack.c.b16 %v4621, %v4613
    %v5326 = vpack.c.b16 %v4622, %v4614
    %v5327 = vpack.c.b16 %v4623, %v4615
    %v5328 = vpack.c.b16 %v4624, %v4616
    %v5329 = vpack.c.b16 %v4625, %v4617
    %v5330 = vpack.c.b16 %v4626, %v4618
    %v5331 = vpack.c.b16 %v4627, %v4619
    %v5332 = vpack.c.b16 %v4636, %v4628
    %v5333 = vpack.c.b16 %v4637, %v4629
    %v5334 = vpack.c.b16 %v4638, %v4630
    %v5335 = vpack.c.b16 %v4639, %v4631
    %v5336 = vpack.c.b16 %v4640, %v4632
    %v5337 = vpack.c.b16 %v4641, %v4633
    %v5338 = vpack.c.b16 %v4642, %v4634
    %v5339 = vpack.c.b16 %v4643, %v4635
    %v5340 = vpack.c.b16 %v4652, %v4644
    %v5341 = vpack.c.b16 %v4653, %v4645
    %v5342 = vpack.c.b16 %v4654, %v4646
    %v5343 = vpack.c.b16 %v4655, %v4647
    %v5344 = vpack.c.b16 %v4656, %v4648
    %v5345 = vpack.c.b16 %v4657, %v4649
    %v5346 = vpack.c.b16 %v4658, %v4650
    %v5347 = vpack.c.b16 %v4659, %v4651
    %v5348 = vpack.c.b16 %v4668, %v4660
    %v5349 = vpack.c.b16 %v4669, %v4661
    %v5350 = vpack.c.b16 %v4670, %v4662
    %v5351 = vpack.c.b16 %v4671, %v4663
    %v5352 = vpack.c.b16 %v4672, %v4664
    %v5353 = vpack.c.b16 %v4673, %v4665
    %v5354 = vpack.c.b16 %v4674, %v4666
    %v5355 = vpack.c.b16 %v4675, %v4667
    %v5356 = vpack.c.b16 %v4684, %v4676
    %v5357 = vpack.c.b16 %v4685, %v4677
    %v5358 = vpack.c.b16 %v4686, %v4678
    %v5359 = vpack.c.b16 %v4687, %v4679
    %v5360 = vpack.c.b16 %v4688, %v4680
    %v5361 = vpack.c.b16 %v4689, %v4681
    %v5362 = vpack.c.b16 %v4690, %v4682
    %v5363 = vpack.c.b16 %v4691, %v4683
    %v5364 = vpack.c.b16 %v4700, %v4692
    %v5365 = vpack.c.b16 %v4701, %v4693
    %v5366 = vpack.c.b16 %v4702, %v4694
    %v5367 = vpack.c.b16 %v4703, %v4695
    %v5368 = vpack.c.b16 %v4704, %v4696
    %v5369 = vpack.c.b16 %v4705, %v4697
    %v5370 = vpack.c.b16 %v4706, %v4698
    %v5371 = vpack.c.b16 %v4707, %v4699
    %v5372 = vpack.c.b16 %v4716, %v4708
    %v5373 = vpack.c.b16 %v4717, %v4709
    %v5374 = vpack.c.b16 %v4718, %v4710
    %v5375 = vpack.c.b16 %v4719, %v4711
    %v5376 = vpack.c.b16 %v4720, %v4712
    %v5377 = vpack.c.b16 %v4721, %v4713
    %v5378 = vpack.c.b16 %v4722, %v4714
    %v5379 = vpack.c.b16 %v4723, %v4715
    %v5380 = vpack.c.b16 %v4732, %v4724
    %v5381 = vpack.c.b16 %v4733, %v4725
    %v5382 = vpack.c.b16 %v4734, %v4726
    %v5383 = vpack.c.b16 %v4735, %v4727
    %v5384 = vpack.c.b16 %v4736, %v4728
    %v5385 = vpack.c.b16 %v4737, %v4729
    %v5386 = vpack.c.b16 %v4738, %v4730
    %v5387 = vpack.c.b16 %v4739, %v4731
    %v5388 = vpack.c.b16 %v4748, %v4740
    %v5389 = vpack.c.b16 %v4749, %v4741
    %v5390 = vpack.c.b16 %v4750, %v4742
    %v5391 = vpack.c.b16 %v4751, %v4743
    %v5392 = vpack.c.b16 %v4752, %v4744
    %v5393 = vpack.c.b16 %v4753, %v4745
    %v5394 = vpack.c.b16 %v4754, %v4746
    %v5395 = vpack.c.b16 %v4755, %v4747
    %v5396 = vpack.c.b16 %v4764, %v4756
    %v5397 = vpack.c.b16 %v4765, %v4757
    %v5398 = vpack.c.b16 %v4766, %v4758
    %v5399 = vpack.c.b16 %v4767, %v4759
    %v5400 = vpack.c.b16 %v4768, %v4760
    %v5401 = vpack.c.b16 %v4769, %v4761
    %v5402 = vpack.c.b16 %v4770, %v4762
    %v5403 = vpack.c.b16 %v4771, %v4763
    %v5404 = vpack.c.b16 %v4780, %v4772
    %v5405 = vpack.c.b16 %v4781, %v4773
    %v5406 = vpack.c.b16 %v4782, %v4774
    %v5407 = vpack.c.b16 %v4783, %v4775
    %v5408 = vpack.c.b16 %v4784, %v4776
    %v5409 = vpack.c.b16 %v4785, %v4777
    %v5410 = vpack.c.b16 %v4786, %v4778
    %v5411 = vpack.c.b16 %v4787, %v4779
    %v5412 = vpack.c.b16 %v4796, %v4788
    %v5413 = vpack.c.b16 %v4797, %v4789
    %v5414 = vpack.c.b16 %v4798, %v4790
    %v5415 = vpack.c.b16 %v4799, %v4791
    %v5416 = vpack.c.b16 %v4800, %v4792
    %v5417 = vpack.c.b16 %v4801, %v4793
    %v5418 = vpack.c.b16 %v4802, %v4794
    %v5419 = vpack.c.b16 %v4803, %v4795
    %v5420 = vpack.c.b16 %v4812, %v4804
    %v5421 = vpack.c.b16 %v4813, %v4805
    %v5422 = vpack.c.b16 %v4814, %v4806
    %v5423 = vpack.c.b16 %v4815, %v4807
    %v5424 = vpack.c.b16 %v4816, %v4808
    %v5425 = vpack.c.b16 %v4817, %v4809
    %v5426 = vpack.c.b16 %v4818, %v4810
    %v5427 = vpack.c.b16 %v4819, %v4811
    %v5428 = vpack.c.b16 %v4828, %v4820
    %v5429 = vpack.c.b16 %v4829, %v4821
    %v5430 = vpack.c.b16 %v4830, %v4822
    %v5431 = vpack.c.b16 %v4831, %v4823
    %v5432 = vpack.c.b16 %v4832, %v4824
    %v5433 = vpack.c.b16 %v4833, %v4825
    %v5434 = vpack.c.b16 %v4834, %v4826
    %v5435 = vpack.c.b16 %v4835, %v4827
    %v5436 = vpack.c.b16 %v4844, %v4836
    %v5437 = vpack.c.b16 %v4845, %v4837
    %v5438 = vpack.c.b16 %v4846, %v4838
    %v5439 = vpack.c.b16 %v4847, %v4839
    %v5440 = vpack.c.b16 %v4848, %v4840
    %v5441 = vpack.c.b16 %v4849, %v4841
    %v5442 = vpack.c.b16 %v4850, %v4842
    %v5443 = vpack.c.b16 %v4851, %v4843
    %v5444 = vpack.c.b16 %v4860, %v4852
    %v5445 = vpack.c.b16 %v4861, %v4853
    %v5446 = vpack.c.b16 %v4862, %v4854
    %v5447 = vpack.c.b16 %v4863, %v4855
    %v5448 = vpack.c.b16 %v4864, %v4856
    %v5449 = vpack.c.b16 %v4865, %v4857
    %v5450 = vpack.c.b16 %v4866, %v4858
    %v5451 = vpack.c.b16 %v4867, %v4859
    %v5452 = vpack.c.b16 %v4876, %v4868
    %v5453 = vpack.c.b16 %v4877, %v4869
    %v5454 = vpack.c.b16 %v4878, %v4870
    %v5455 = vpack.c.b16 %v4879, %v4871
    %v5456 = vpack.c.b16 %v4880, %v4872
    %v5457 = vpack.c.b16 %v4881, %v4873
    %v5458 = vpack.c.b16 %v4882, %v4874
    %v5459 = vpack.c.b16 %v4883, %v4875
    %v5460 = vpack.c.b16 %v4892, %v4884
    %v5461 = vpack.c.b16 %v4893, %v4885
    %v5462 = vpack.c.b16 %v4894, %v4886
    %v5463 = vpack.c.b16 %v4895, %v4887
    %v5464 = vpack.c.b16 %v4896, %v4888
    %v5465 = vpack.c.b16 %v4897, %v4889
    %v5466 = vpack.c.b16 %v4898, %v4890
    %v5467 = vpack.c.b16 %v4899, %v4891
    %v5468 = vpack.c.b16 %v4908, %v4900
    %v5469 = vpack.c.b16 %v4909, %v4901
    %v5470 = vpack.c.b16 %v4910, %v4902
    %v5471 = vpack.c.b16 %v4911, %v4903
    %v5472 = vpack.c.b16 %v4912, %v4904
    %v5473 = vpack.c.b16 %v4913, %v4905
    %v5474 = vpack.c.b16 %v4914, %v4906
    %v5475 = vpack.c.b16 %v4915, %v4907
    %v5476 = vpack.c.b16 %v4924, %v4916
    %v5477 = vpack.c.b16 %v4925, %v4917
    %v5478 = vpack.c.b16 %v4926, %v4918
    %v5479 = vpack.c.b16 %v4927, %v4919
    %v5480 = vpack.c.b16 %v4928, %v4920
    %v5481 = vpack.c.b16 %v4929, %v4921
    %v5482 = vpack.c.b16 %v4930, %v4922
    %v5483 = vpack.c.b16 %v4931, %v4923
    %v5484 = vpack.c.b16 %v4940, %v4932
    %v5485 = vpack.c.b16 %v4941, %v4933
    %v5486 = vpack.c.b16 %v4942, %v4934
    %v5487 = vpack.c.b16 %v4943, %v4935
    %v5488 = vpack.c.b16 %v4944, %v4936
    %v5489 = vpack.c.b16 %v4945, %v4937
    %v5490 = vpack.c.b16 %v4946, %v4938
    %v5491 = vpack.c.b16 %v4947, %v4939
    %v5492 = vpack.c.b16 %v4956, %v4948
    %v5493 = vpack.c.b16 %v4957, %v4949
    %v5494 = vpack.c.b16 %v4958, %v4950
    %v5495 = vpack.c.b16 %v4959, %v4951
    %v5496 = vpack.c.b16 %v4960, %v4952
    %v5497 = vpack.c.b16 %v4961, %v4953
    %v5498 = vpack.c.b16 %v4962, %v4954
    %v5499 = vpack.c.b16 %v4963, %v4955
    %v5500 = vpack.c.b16 %v4972, %v4964
    %v5501 = vpack.c.b16 %v4973, %v4965
    %v5502 = vpack.c.b16 %v4974, %v4966
    %v5503 = vpack.c.b16 %v4975, %v4967
    %v5504 = vpack.c.b16 %v4976, %v4968
    %v5505 = vpack.c.b16 %v4977, %v4969
    %v5506 = vpack.c.b16 %v4978, %v4970
    %v5507 = vpack.c.b16 %v4979, %v4971
    %v5508 = vpack.c.b16 %v4988, %v4980
    %v5509 = vpack.c.b16 %v4989, %v4981
    %v5510 = vpack.c.b16 %v4990, %v4982
    %v5511 = vpack.c.b16 %v4991, %v4983
    %v5512 = vpack.c.b16 %v4992, %v4984
    %v5513 = vpack.c.b16 %v4993, %v4985
    %v5514 = vpack.c.b16 %v4994, %v4986
    %v5515 = vpack.c.b16 %v4995, %v4987
    %v5516 = vpack.c.b16 %v5004, %v4996
    %v5517 = vpack.c.b16 %v5005, %v4997
    %v5518 = vpack.c.b16 %v5006, %v4998
    %v5519 = vpack.c.b16 %v5007, %v4999
    %v5520 = vpack.c.b16 %v5008, %v5000
    %v5521 = vpack.c.b16 %v5009, %v5001
    %v5522 = vpack.c.b16 %v5010, %v5002
    %v5523 = vpack.c.b16 %v5011, %v5003
    %6036 = vmatpush.bf16.msra.mxu0 %v5068
    %6037 = vmatpush.bf16.msra.mxu0 %v5060
    %6038 = vmatpush.bf16.msra.mxu0 %v5052
    %6039 = vmatpush.bf16.msra.mxu0 %v5044
    %6040 = vmatpush.bf16.msra.mxu0 %v5036
    %6041 = vmatpush.bf16.msra.mxu0 %v5028
    %6042 = vmatpush.bf16.msra.mxu0 %v5020
    %6043 = vmatpush.bf16.msra.mxu0 %v5012
    %6044 = vmatmul.bf16.gmra.mxu0 %v2934
    %v6045 = vpop.f32.mrf.mxu0
    %v6046 = vadd.f32 %v3460, %v6045
    %v6047 = vpop.f32.mrf.mxu0
    %6048 = vdwg.mxu0
    %6049 = vmatpush.bf16.msra.mxu0 %v5132
    %6050 = vmatpush.bf16.msra.mxu0 %v5124
    %6051 = vmatpush.bf16.msra.mxu0 %v5116
    %6052 = vmatpush.bf16.msra.mxu0 %v5108
    %6053 = vmatpush.bf16.msra.mxu0 %v5100
    %6054 = vmatpush.bf16.msra.mxu0 %v5092
    %6055 = vmatpush.bf16.msra.mxu0 %v5084
    %6056 = vmatpush.bf16.msra.mxu0 %v5076
    %6057 = vmatmul.bf16.gmra.mxu0 %v2935
    %v6058 = vpop.f32.mrf.mxu0
    %v6059 = vadd.f32 %v6046, %v6058
    %v6060 = vpop.f32.mrf.mxu0
    %6061 = vdwg.mxu0
    %6062 = vmatpush.bf16.msra.mxu0 %v5196
    %6063 = vmatpush.bf16.msra.mxu0 %v5188
    %6064 = vmatpush.bf16.msra.mxu0 %v5180
    %6065 = vmatpush.bf16.msra.mxu0 %v5172
    %6066 = vmatpush.bf16.msra.mxu0 %v5164
    %6067 = vmatpush.bf16.msra.mxu0 %v5156
    %6068 = vmatpush.bf16.msra.mxu0 %v5148
    %6069 = vmatpush.bf16.msra.mxu0 %v5140
    %6070 = vmatmul.bf16.gmra.mxu0 %v2936
    %v6071 = vpop.f32.mrf.mxu0
    %v6072 = vadd.f32 %v6059, %v6071
    %v6073 = vpop.f32.mrf.mxu0
    %6074 = vdwg.mxu0
    %6075 = vmatpush.bf16.msra.mxu0 %v5260
    %6076 = vmatpush.bf16.msra.mxu0 %v5252
    %6077 = vmatpush.bf16.msra.mxu0 %v5244
    %6078 = vmatpush.bf16.msra.mxu0 %v5236
    %6079 = vmatpush.bf16.msra.mxu0 %v5228
    %6080 = vmatpush.bf16.msra.mxu0 %v5220
    %6081 = vmatpush.bf16.msra.mxu0 %v5212
    %6082 = vmatpush.bf16.msra.mxu0 %v5204
    %6083 = vmatmul.bf16.gmra.mxu0 %v2937
    %v6084 = vpop.f32.mrf.mxu0
    %v6085 = vadd.f32 %v6072, %v6084
    %v6086 = vpop.f32.mrf.mxu0
    %6087 = vdwg.mxu0
    %6088 = vmatpush.bf16.msra.mxu0 %v5324
    %6089 = vmatpush.bf16.msra.mxu0 %v5316
    %6090 = vmatpush.bf16.msra.mxu0 %v5308
    %6091 = vmatpush.bf16.msra.mxu0 %v5300
    %6092 = vmatpush.bf16.msra.mxu0 %v5292
    %6093 = vmatpush.bf16.msra.mxu0 %v5284
    %6094 = vmatpush.bf16.msra.mxu0 %v5276
    %6095 = vmatpush.bf16.msra.mxu0 %v5268
    %6096 = vmatmul.bf16.gmra.mxu0 %v2938
    %v6097 = vpop.f32.mrf.mxu0
    %v6098 = vadd.f32 %v6085, %v6097
    %v6099 = vpop.f32.mrf.mxu0
    %6100 = vdwg.mxu0
    %6101 = vmatpush.bf16.msra.mxu0 %v5388
    %6102 = vmatpush.bf16.msra.mxu0 %v5380
    %6103 = vmatpush.bf16.msra.mxu0 %v5372
    %6104 = vmatpush.bf16.msra.mxu0 %v5364
    %6105 = vmatpush.bf16.msra.mxu0 %v5356
    %6106 = vmatpush.bf16.msra.mxu0 %v5348
    %6107 = vmatpush.bf16.msra.mxu0 %v5340
    %6108 = vmatpush.bf16.msra.mxu0 %v5332
    %6109 = vmatmul.bf16.gmra.mxu0 %v2939
    %v6110 = vpop.f32.mrf.mxu0
    %v6111 = vadd.f32 %v6098, %v6110
    %v6112 = vpop.f32.mrf.mxu0
    %6113 = vdwg.mxu0
    %6114 = vmatpush.bf16.msra.mxu0 %v5452
    %6115 = vmatpush.bf16.msra.mxu0 %v5444
    %6116 = vmatpush.bf16.msra.mxu0 %v5436
    %6117 = vmatpush.bf16.msra.mxu0 %v5428
    %6118 = vmatpush.bf16.msra.mxu0 %v5420
    %6119 = vmatpush.bf16.msra.mxu0 %v5412
    %6120 = vmatpush.bf16.msra.mxu0 %v5404
    %6121 = vmatpush.bf16.msra.mxu0 %v5396
    %6122 = vmatmul.bf16.gmra.mxu0 %v2940
    %v6123 = vpop.f32.mrf.mxu0
    %v6124 = vadd.f32 %v6111, %v6123
    %v6125 = vpop.f32.mrf.mxu0
    %6126 = vdwg.mxu0
    %6127 = vmatpush.bf16.msra.mxu0 %v5516
    %6128 = vmatpush.bf16.msra.mxu0 %v5508
    %6129 = vmatpush.bf16.msra.mxu0 %v5500
    %6130 = vmatpush.bf16.msra.mxu0 %v5492
    %6131 = vmatpush.bf16.msra.mxu0 %v5484
    %6132 = vmatpush.bf16.msra.mxu0 %v5476
    %6133 = vmatpush.bf16.msra.mxu0 %v5468
    %6134 = vmatpush.bf16.msra.mxu0 %v5460
    %6135 = vmatmul.bf16.gmra.mxu0 %v2941
    %v6136 = vpop.f32.mrf.mxu0
    %v6137 = vadd.f32 %v6124, %v6136
    %v6138 = vpop.f32.mrf.mxu0
    %6139 = vdwg.mxu0
    %6140 = vmatpush.bf16.msra.mxu0 %v5069
    %6141 = vmatpush.bf16.msra.mxu0 %v5061
    %6142 = vmatpush.bf16.msra.mxu0 %v5053
    %6143 = vmatpush.bf16.msra.mxu0 %v5045
    %6144 = vmatpush.bf16.msra.mxu0 %v5037
    %6145 = vmatpush.bf16.msra.mxu0 %v5029
    %6146 = vmatpush.bf16.msra.mxu0 %v5021
    %6147 = vmatpush.bf16.msra.mxu0 %v5013
    %6148 = vmatmul.bf16.gmra.mxu0 %v2934
    %v6149 = vpop.f32.mrf.mxu0
    %v6150 = vadd.f32 %v3461, %v6149
    %v6151 = vpop.f32.mrf.mxu0
    %6152 = vdwg.mxu0
    %6153 = vmatpush.bf16.msra.mxu0 %v5133
    %6154 = vmatpush.bf16.msra.mxu0 %v5125
    %6155 = vmatpush.bf16.msra.mxu0 %v5117
    %6156 = vmatpush.bf16.msra.mxu0 %v5109
    %6157 = vmatpush.bf16.msra.mxu0 %v5101
    %6158 = vmatpush.bf16.msra.mxu0 %v5093
    %6159 = vmatpush.bf16.msra.mxu0 %v5085
    %6160 = vmatpush.bf16.msra.mxu0 %v5077
    %6161 = vmatmul.bf16.gmra.mxu0 %v2935
    %v6162 = vpop.f32.mrf.mxu0
    %v6163 = vadd.f32 %v6150, %v6162
    %v6164 = vpop.f32.mrf.mxu0
    %6165 = vdwg.mxu0
    %6166 = vmatpush.bf16.msra.mxu0 %v5197
    %6167 = vmatpush.bf16.msra.mxu0 %v5189
    %6168 = vmatpush.bf16.msra.mxu0 %v5181
    %6169 = vmatpush.bf16.msra.mxu0 %v5173
    %6170 = vmatpush.bf16.msra.mxu0 %v5165
    %6171 = vmatpush.bf16.msra.mxu0 %v5157
    %6172 = vmatpush.bf16.msra.mxu0 %v5149
    %6173 = vmatpush.bf16.msra.mxu0 %v5141
    %6174 = vmatmul.bf16.gmra.mxu0 %v2936
    %v6175 = vpop.f32.mrf.mxu0
    %v6176 = vadd.f32 %v6163, %v6175
    %v6177 = vpop.f32.mrf.mxu0
    %6178 = vdwg.mxu0
    %6179 = vmatpush.bf16.msra.mxu0 %v5261
    %6180 = vmatpush.bf16.msra.mxu0 %v5253
    %6181 = vmatpush.bf16.msra.mxu0 %v5245
    %6182 = vmatpush.bf16.msra.mxu0 %v5237
    %6183 = vmatpush.bf16.msra.mxu0 %v5229
    %6184 = vmatpush.bf16.msra.mxu0 %v5221
    %6185 = vmatpush.bf16.msra.mxu0 %v5213
    %6186 = vmatpush.bf16.msra.mxu0 %v5205
    %6187 = vmatmul.bf16.gmra.mxu0 %v2937
    %v6188 = vpop.f32.mrf.mxu0
    %v6189 = vadd.f32 %v6176, %v6188
    %v6190 = vpop.f32.mrf.mxu0
    %6191 = vdwg.mxu0
    %6192 = vmatpush.bf16.msra.mxu0 %v5325
    %6193 = vmatpush.bf16.msra.mxu0 %v5317
    %6194 = vmatpush.bf16.msra.mxu0 %v5309
    %6195 = vmatpush.bf16.msra.mxu0 %v5301
    %6196 = vmatpush.bf16.msra.mxu0 %v5293
    %6197 = vmatpush.bf16.msra.mxu0 %v5285
    %6198 = vmatpush.bf16.msra.mxu0 %v5277
    %6199 = vmatpush.bf16.msra.mxu0 %v5269
    %6200 = vmatmul.bf16.gmra.mxu0 %v2938
    %v6201 = vpop.f32.mrf.mxu0
    %v6202 = vadd.f32 %v6189, %v6201
    %v6203 = vpop.f32.mrf.mxu0
    %6204 = vdwg.mxu0
    %6205 = vmatpush.bf16.msra.mxu0 %v5389
    %6206 = vmatpush.bf16.msra.mxu0 %v5381
    %6207 = vmatpush.bf16.msra.mxu0 %v5373
    %6208 = vmatpush.bf16.msra.mxu0 %v5365
    %6209 = vmatpush.bf16.msra.mxu0 %v5357
    %6210 = vmatpush.bf16.msra.mxu0 %v5349
    %6211 = vmatpush.bf16.msra.mxu0 %v5341
    %6212 = vmatpush.bf16.msra.mxu0 %v5333
    %6213 = vmatmul.bf16.gmra.mxu0 %v2939
    %v6214 = vpop.f32.mrf.mxu0
    %v6215 = vadd.f32 %v6202, %v6214
    %v6216 = vpop.f32.mrf.mxu0
    %6217 = vdwg.mxu0
    %6218 = vmatpush.bf16.msra.mxu0 %v5453
    %6219 = vmatpush.bf16.msra.mxu0 %v5445
    %6220 = vmatpush.bf16.msra.mxu0 %v5437
    %6221 = vmatpush.bf16.msra.mxu0 %v5429
    %6222 = vmatpush.bf16.msra.mxu0 %v5421
    %6223 = vmatpush.bf16.msra.mxu0 %v5413
    %6224 = vmatpush.bf16.msra.mxu0 %v5405
    %6225 = vmatpush.bf16.msra.mxu0 %v5397
    %6226 = vmatmul.bf16.gmra.mxu0 %v2940
    %v6227 = vpop.f32.mrf.mxu0
    %v6228 = vadd.f32 %v6215, %v6227
    %v6229 = vpop.f32.mrf.mxu0
    %6230 = vdwg.mxu0
    %6231 = vmatpush.bf16.msra.mxu0 %v5517
    %6232 = vmatpush.bf16.msra.mxu0 %v5509
    %6233 = vmatpush.bf16.msra.mxu0 %v5501
    %6234 = vmatpush.bf16.msra.mxu0 %v5493
    %6235 = vmatpush.bf16.msra.mxu0 %v5485
    %6236 = vmatpush.bf16.msra.mxu0 %v5477
    %6237 = vmatpush.bf16.msra.mxu0 %v5469
    %6238 = vmatpush.bf16.msra.mxu0 %v5461
    %6239 = vmatmul.bf16.gmra.mxu0 %v2941
    %v6240 = vpop.f32.mrf.mxu0
    %v6241 = vadd.f32 %v6228, %v6240
    %v6242 = vpop.f32.mrf.mxu0
    %6243 = vdwg.mxu0
    %6244 = vmatpush.bf16.msra.mxu0 %v5070
    %6245 = vmatpush.bf16.msra.mxu0 %v5062
    %6246 = vmatpush.bf16.msra.mxu0 %v5054
    %6247 = vmatpush.bf16.msra.mxu0 %v5046
    %6248 = vmatpush.bf16.msra.mxu0 %v5038
    %6249 = vmatpush.bf16.msra.mxu0 %v5030
    %6250 = vmatpush.bf16.msra.mxu0 %v5022
    %6251 = vmatpush.bf16.msra.mxu0 %v5014
    %6252 = vmatmul.bf16.gmra.mxu0 %v2934
    %v6253 = vpop.f32.mrf.mxu0
    %v6254 = vadd.f32 %v3462, %v6253
    %v6255 = vpop.f32.mrf.mxu0
    %6256 = vdwg.mxu0
    %6257 = vmatpush.bf16.msra.mxu0 %v5134
    %6258 = vmatpush.bf16.msra.mxu0 %v5126
    %6259 = vmatpush.bf16.msra.mxu0 %v5118
    %6260 = vmatpush.bf16.msra.mxu0 %v5110
    %6261 = vmatpush.bf16.msra.mxu0 %v5102
    %6262 = vmatpush.bf16.msra.mxu0 %v5094
    %6263 = vmatpush.bf16.msra.mxu0 %v5086
    %6264 = vmatpush.bf16.msra.mxu0 %v5078
    %6265 = vmatmul.bf16.gmra.mxu0 %v2935
    %v6266 = vpop.f32.mrf.mxu0
    %v6267 = vadd.f32 %v6254, %v6266
    %v6268 = vpop.f32.mrf.mxu0
    %6269 = vdwg.mxu0
    %6270 = vmatpush.bf16.msra.mxu0 %v5198
    %6271 = vmatpush.bf16.msra.mxu0 %v5190
    %6272 = vmatpush.bf16.msra.mxu0 %v5182
    %6273 = vmatpush.bf16.msra.mxu0 %v5174
    %6274 = vmatpush.bf16.msra.mxu0 %v5166
    %6275 = vmatpush.bf16.msra.mxu0 %v5158
    %6276 = vmatpush.bf16.msra.mxu0 %v5150
    %6277 = vmatpush.bf16.msra.mxu0 %v5142
    %6278 = vmatmul.bf16.gmra.mxu0 %v2936
    %v6279 = vpop.f32.mrf.mxu0
    %v6280 = vadd.f32 %v6267, %v6279
    %v6281 = vpop.f32.mrf.mxu0
    %6282 = vdwg.mxu0
    %6283 = vmatpush.bf16.msra.mxu0 %v5262
    %6284 = vmatpush.bf16.msra.mxu0 %v5254
    %6285 = vmatpush.bf16.msra.mxu0 %v5246
    %6286 = vmatpush.bf16.msra.mxu0 %v5238
    %6287 = vmatpush.bf16.msra.mxu0 %v5230
    %6288 = vmatpush.bf16.msra.mxu0 %v5222
    %6289 = vmatpush.bf16.msra.mxu0 %v5214
    %6290 = vmatpush.bf16.msra.mxu0 %v5206
    %6291 = vmatmul.bf16.gmra.mxu0 %v2937
    %v6292 = vpop.f32.mrf.mxu0
    %v6293 = vadd.f32 %v6280, %v6292
    %v6294 = vpop.f32.mrf.mxu0
    %6295 = vdwg.mxu0
    %6296 = vmatpush.bf16.msra.mxu0 %v5326
    %6297 = vmatpush.bf16.msra.mxu0 %v5318
    %6298 = vmatpush.bf16.msra.mxu0 %v5310
    %6299 = vmatpush.bf16.msra.mxu0 %v5302
    %6300 = vmatpush.bf16.msra.mxu0 %v5294
    %6301 = vmatpush.bf16.msra.mxu0 %v5286
    %6302 = vmatpush.bf16.msra.mxu0 %v5278
    %6303 = vmatpush.bf16.msra.mxu0 %v5270
    %6304 = vmatmul.bf16.gmra.mxu0 %v2938
    %v6305 = vpop.f32.mrf.mxu0
    %v6306 = vadd.f32 %v6293, %v6305
    %v6307 = vpop.f32.mrf.mxu0
    %6308 = vdwg.mxu0
    %6309 = vmatpush.bf16.msra.mxu0 %v5390
    %6310 = vmatpush.bf16.msra.mxu0 %v5382
    %6311 = vmatpush.bf16.msra.mxu0 %v5374
    %6312 = vmatpush.bf16.msra.mxu0 %v5366
    %6313 = vmatpush.bf16.msra.mxu0 %v5358
    %6314 = vmatpush.bf16.msra.mxu0 %v5350
    %6315 = vmatpush.bf16.msra.mxu0 %v5342
    %6316 = vmatpush.bf16.msra.mxu0 %v5334
    %6317 = vmatmul.bf16.gmra.mxu0 %v2939
    %v6318 = vpop.f32.mrf.mxu0
    %v6319 = vadd.f32 %v6306, %v6318
    %v6320 = vpop.f32.mrf.mxu0
    %6321 = vdwg.mxu0
    %6322 = vmatpush.bf16.msra.mxu0 %v5454
    %6323 = vmatpush.bf16.msra.mxu0 %v5446
    %6324 = vmatpush.bf16.msra.mxu0 %v5438
    %6325 = vmatpush.bf16.msra.mxu0 %v5430
    %6326 = vmatpush.bf16.msra.mxu0 %v5422
    %6327 = vmatpush.bf16.msra.mxu0 %v5414
    %6328 = vmatpush.bf16.msra.mxu0 %v5406
    %6329 = vmatpush.bf16.msra.mxu0 %v5398
    %6330 = vmatmul.bf16.gmra.mxu0 %v2940
    %v6331 = vpop.f32.mrf.mxu0
    %v6332 = vadd.f32 %v6319, %v6331
    %v6333 = vpop.f32.mrf.mxu0
    %6334 = vdwg.mxu0
    %6335 = vmatpush.bf16.msra.mxu0 %v5518
    %6336 = vmatpush.bf16.msra.mxu0 %v5510
    %6337 = vmatpush.bf16.msra.mxu0 %v5502
    %6338 = vmatpush.bf16.msra.mxu0 %v5494
    %6339 = vmatpush.bf16.msra.mxu0 %v5486
    %6340 = vmatpush.bf16.msra.mxu0 %v5478
    %6341 = vmatpush.bf16.msra.mxu0 %v5470
    %6342 = vmatpush.bf16.msra.mxu0 %v5462
    %6343 = vmatmul.bf16.gmra.mxu0 %v2941
    %v6344 = vpop.f32.mrf.mxu0
    %v6345 = vadd.f32 %v6332, %v6344
    %v6346 = vpop.f32.mrf.mxu0
    %6347 = vdwg.mxu0
    %6348 = vmatpush.bf16.msra.mxu0 %v5071
    %6349 = vmatpush.bf16.msra.mxu0 %v5063
    %6350 = vmatpush.bf16.msra.mxu0 %v5055
    %6351 = vmatpush.bf16.msra.mxu0 %v5047
    %6352 = vmatpush.bf16.msra.mxu0 %v5039
    %6353 = vmatpush.bf16.msra.mxu0 %v5031
    %6354 = vmatpush.bf16.msra.mxu0 %v5023
    %6355 = vmatpush.bf16.msra.mxu0 %v5015
    %6356 = vmatmul.bf16.gmra.mxu0 %v2934
    %v6357 = vpop.f32.mrf.mxu0
    %v6358 = vadd.f32 %v3463, %v6357
    %v6359 = vpop.f32.mrf.mxu0
    %6360 = vdwg.mxu0
    %6361 = vmatpush.bf16.msra.mxu0 %v5135
    %6362 = vmatpush.bf16.msra.mxu0 %v5127
    %6363 = vmatpush.bf16.msra.mxu0 %v5119
    %6364 = vmatpush.bf16.msra.mxu0 %v5111
    %6365 = vmatpush.bf16.msra.mxu0 %v5103
    %6366 = vmatpush.bf16.msra.mxu0 %v5095
    %6367 = vmatpush.bf16.msra.mxu0 %v5087
    %6368 = vmatpush.bf16.msra.mxu0 %v5079
    %6369 = vmatmul.bf16.gmra.mxu0 %v2935
    %v6370 = vpop.f32.mrf.mxu0
    %v6371 = vadd.f32 %v6358, %v6370
    %v6372 = vpop.f32.mrf.mxu0
    %6373 = vdwg.mxu0
    %6374 = vmatpush.bf16.msra.mxu0 %v5199
    %6375 = vmatpush.bf16.msra.mxu0 %v5191
    %6376 = vmatpush.bf16.msra.mxu0 %v5183
    %6377 = vmatpush.bf16.msra.mxu0 %v5175
    %6378 = vmatpush.bf16.msra.mxu0 %v5167
    %6379 = vmatpush.bf16.msra.mxu0 %v5159
    %6380 = vmatpush.bf16.msra.mxu0 %v5151
    %6381 = vmatpush.bf16.msra.mxu0 %v5143
    %6382 = vmatmul.bf16.gmra.mxu0 %v2936
    %v6383 = vpop.f32.mrf.mxu0
    %v6384 = vadd.f32 %v6371, %v6383
    %v6385 = vpop.f32.mrf.mxu0
    %6386 = vdwg.mxu0
    %6387 = vmatpush.bf16.msra.mxu0 %v5263
    %6388 = vmatpush.bf16.msra.mxu0 %v5255
    %6389 = vmatpush.bf16.msra.mxu0 %v5247
    %6390 = vmatpush.bf16.msra.mxu0 %v5239
    %6391 = vmatpush.bf16.msra.mxu0 %v5231
    %6392 = vmatpush.bf16.msra.mxu0 %v5223
    %6393 = vmatpush.bf16.msra.mxu0 %v5215
    %6394 = vmatpush.bf16.msra.mxu0 %v5207
    %6395 = vmatmul.bf16.gmra.mxu0 %v2937
    %v6396 = vpop.f32.mrf.mxu0
    %v6397 = vadd.f32 %v6384, %v6396
    %v6398 = vpop.f32.mrf.mxu0
    %6399 = vdwg.mxu0
    %6400 = vmatpush.bf16.msra.mxu0 %v5327
    %6401 = vmatpush.bf16.msra.mxu0 %v5319
    %6402 = vmatpush.bf16.msra.mxu0 %v5311
    %6403 = vmatpush.bf16.msra.mxu0 %v5303
    %6404 = vmatpush.bf16.msra.mxu0 %v5295
    %6405 = vmatpush.bf16.msra.mxu0 %v5287
    %6406 = vmatpush.bf16.msra.mxu0 %v5279
    %6407 = vmatpush.bf16.msra.mxu0 %v5271
    %6408 = vmatmul.bf16.gmra.mxu0 %v2938
    %v6409 = vpop.f32.mrf.mxu0
    %v6410 = vadd.f32 %v6397, %v6409
    %v6411 = vpop.f32.mrf.mxu0
    %6412 = vdwg.mxu0
    %6413 = vmatpush.bf16.msra.mxu0 %v5391
    %6414 = vmatpush.bf16.msra.mxu0 %v5383
    %6415 = vmatpush.bf16.msra.mxu0 %v5375
    %6416 = vmatpush.bf16.msra.mxu0 %v5367
    %6417 = vmatpush.bf16.msra.mxu0 %v5359
    %6418 = vmatpush.bf16.msra.mxu0 %v5351
    %6419 = vmatpush.bf16.msra.mxu0 %v5343
    %6420 = vmatpush.bf16.msra.mxu0 %v5335
    %6421 = vmatmul.bf16.gmra.mxu0 %v2939
    %v6422 = vpop.f32.mrf.mxu0
    %v6423 = vadd.f32 %v6410, %v6422
    %v6424 = vpop.f32.mrf.mxu0
    %6425 = vdwg.mxu0
    %6426 = vmatpush.bf16.msra.mxu0 %v5455
    %6427 = vmatpush.bf16.msra.mxu0 %v5447
    %6428 = vmatpush.bf16.msra.mxu0 %v5439
    %6429 = vmatpush.bf16.msra.mxu0 %v5431
    %6430 = vmatpush.bf16.msra.mxu0 %v5423
    %6431 = vmatpush.bf16.msra.mxu0 %v5415
    %6432 = vmatpush.bf16.msra.mxu0 %v5407
    %6433 = vmatpush.bf16.msra.mxu0 %v5399
    %6434 = vmatmul.bf16.gmra.mxu0 %v2940
    %v6435 = vpop.f32.mrf.mxu0
    %v6436 = vadd.f32 %v6423, %v6435
    %v6437 = vpop.f32.mrf.mxu0
    %6438 = vdwg.mxu0
    %6439 = vmatpush.bf16.msra.mxu0 %v5519
    %6440 = vmatpush.bf16.msra.mxu0 %v5511
    %6441 = vmatpush.bf16.msra.mxu0 %v5503
    %6442 = vmatpush.bf16.msra.mxu0 %v5495
    %6443 = vmatpush.bf16.msra.mxu0 %v5487
    %6444 = vmatpush.bf16.msra.mxu0 %v5479
    %6445 = vmatpush.bf16.msra.mxu0 %v5471
    %6446 = vmatpush.bf16.msra.mxu0 %v5463
    %6447 = vmatmul.bf16.gmra.mxu0 %v2941
    %v6448 = vpop.f32.mrf.mxu0
    %v6449 = vadd.f32 %v6436, %v6448
    %v6450 = vpop.f32.mrf.mxu0
    %6451 = vdwg.mxu0
    %6452 = vmatpush.bf16.msra.mxu0 %v5072
    %6453 = vmatpush.bf16.msra.mxu0 %v5064
    %6454 = vmatpush.bf16.msra.mxu0 %v5056
    %6455 = vmatpush.bf16.msra.mxu0 %v5048
    %6456 = vmatpush.bf16.msra.mxu0 %v5040
    %6457 = vmatpush.bf16.msra.mxu0 %v5032
    %6458 = vmatpush.bf16.msra.mxu0 %v5024
    %6459 = vmatpush.bf16.msra.mxu0 %v5016
    %6460 = vmatmul.bf16.gmra.mxu0 %v2934
    %v6461 = vpop.f32.mrf.mxu0
    %v6462 = vadd.f32 %v3464, %v6461
    %v6463 = vpop.f32.mrf.mxu0
    %6464 = vdwg.mxu0
    %6465 = vmatpush.bf16.msra.mxu0 %v5136
    %6466 = vmatpush.bf16.msra.mxu0 %v5128
    %6467 = vmatpush.bf16.msra.mxu0 %v5120
    %6468 = vmatpush.bf16.msra.mxu0 %v5112
    %6469 = vmatpush.bf16.msra.mxu0 %v5104
    %6470 = vmatpush.bf16.msra.mxu0 %v5096
    %6471 = vmatpush.bf16.msra.mxu0 %v5088
    %6472 = vmatpush.bf16.msra.mxu0 %v5080
    %6473 = vmatmul.bf16.gmra.mxu0 %v2935
    %v6474 = vpop.f32.mrf.mxu0
    %v6475 = vadd.f32 %v6462, %v6474
    %v6476 = vpop.f32.mrf.mxu0
    %6477 = vdwg.mxu0
    %6478 = vmatpush.bf16.msra.mxu0 %v5200
    %6479 = vmatpush.bf16.msra.mxu0 %v5192
    %6480 = vmatpush.bf16.msra.mxu0 %v5184
    %6481 = vmatpush.bf16.msra.mxu0 %v5176
    %6482 = vmatpush.bf16.msra.mxu0 %v5168
    %6483 = vmatpush.bf16.msra.mxu0 %v5160
    %6484 = vmatpush.bf16.msra.mxu0 %v5152
    %6485 = vmatpush.bf16.msra.mxu0 %v5144
    %6486 = vmatmul.bf16.gmra.mxu0 %v2936
    %v6487 = vpop.f32.mrf.mxu0
    %v6488 = vadd.f32 %v6475, %v6487
    %v6489 = vpop.f32.mrf.mxu0
    %6490 = vdwg.mxu0
    %6491 = vmatpush.bf16.msra.mxu0 %v5264
    %6492 = vmatpush.bf16.msra.mxu0 %v5256
    %6493 = vmatpush.bf16.msra.mxu0 %v5248
    %6494 = vmatpush.bf16.msra.mxu0 %v5240
    %6495 = vmatpush.bf16.msra.mxu0 %v5232
    %6496 = vmatpush.bf16.msra.mxu0 %v5224
    %6497 = vmatpush.bf16.msra.mxu0 %v5216
    %6498 = vmatpush.bf16.msra.mxu0 %v5208
    %6499 = vmatmul.bf16.gmra.mxu0 %v2937
    %v6500 = vpop.f32.mrf.mxu0
    %v6501 = vadd.f32 %v6488, %v6500
    %v6502 = vpop.f32.mrf.mxu0
    %6503 = vdwg.mxu0
    %6504 = vmatpush.bf16.msra.mxu0 %v5328
    %6505 = vmatpush.bf16.msra.mxu0 %v5320
    %6506 = vmatpush.bf16.msra.mxu0 %v5312
    %6507 = vmatpush.bf16.msra.mxu0 %v5304
    %6508 = vmatpush.bf16.msra.mxu0 %v5296
    %6509 = vmatpush.bf16.msra.mxu0 %v5288
    %6510 = vmatpush.bf16.msra.mxu0 %v5280
    %6511 = vmatpush.bf16.msra.mxu0 %v5272
    %6512 = vmatmul.bf16.gmra.mxu0 %v2938
    %v6513 = vpop.f32.mrf.mxu0
    %v6514 = vadd.f32 %v6501, %v6513
    %v6515 = vpop.f32.mrf.mxu0
    %6516 = vdwg.mxu0
    %6517 = vmatpush.bf16.msra.mxu0 %v5392
    %6518 = vmatpush.bf16.msra.mxu0 %v5384
    %6519 = vmatpush.bf16.msra.mxu0 %v5376
    %6520 = vmatpush.bf16.msra.mxu0 %v5368
    %6521 = vmatpush.bf16.msra.mxu0 %v5360
    %6522 = vmatpush.bf16.msra.mxu0 %v5352
    %6523 = vmatpush.bf16.msra.mxu0 %v5344
    %6524 = vmatpush.bf16.msra.mxu0 %v5336
    %6525 = vmatmul.bf16.gmra.mxu0 %v2939
    %v6526 = vpop.f32.mrf.mxu0
    %v6527 = vadd.f32 %v6514, %v6526
    %v6528 = vpop.f32.mrf.mxu0
    %6529 = vdwg.mxu0
    %6530 = vmatpush.bf16.msra.mxu0 %v5456
    %6531 = vmatpush.bf16.msra.mxu0 %v5448
    %6532 = vmatpush.bf16.msra.mxu0 %v5440
    %6533 = vmatpush.bf16.msra.mxu0 %v5432
    %6534 = vmatpush.bf16.msra.mxu0 %v5424
    %6535 = vmatpush.bf16.msra.mxu0 %v5416
    %6536 = vmatpush.bf16.msra.mxu0 %v5408
    %6537 = vmatpush.bf16.msra.mxu0 %v5400
    %6538 = vmatmul.bf16.gmra.mxu0 %v2940
    %v6539 = vpop.f32.mrf.mxu0
    %v6540 = vadd.f32 %v6527, %v6539
    %v6541 = vpop.f32.mrf.mxu0
    %6542 = vdwg.mxu0
    %6543 = vmatpush.bf16.msra.mxu0 %v5520
    %6544 = vmatpush.bf16.msra.mxu0 %v5512
    %6545 = vmatpush.bf16.msra.mxu0 %v5504
    %6546 = vmatpush.bf16.msra.mxu0 %v5496
    %6547 = vmatpush.bf16.msra.mxu0 %v5488
    %6548 = vmatpush.bf16.msra.mxu0 %v5480
    %6549 = vmatpush.bf16.msra.mxu0 %v5472
    %6550 = vmatpush.bf16.msra.mxu0 %v5464
    %6551 = vmatmul.bf16.gmra.mxu0 %v2941
    %v6552 = vpop.f32.mrf.mxu0
    %v6553 = vadd.f32 %v6540, %v6552
    %v6554 = vpop.f32.mrf.mxu0
    %6555 = vdwg.mxu0
    %6556 = vmatpush.bf16.msra.mxu0 %v5073
    %6557 = vmatpush.bf16.msra.mxu0 %v5065
    %6558 = vmatpush.bf16.msra.mxu0 %v5057
    %6559 = vmatpush.bf16.msra.mxu0 %v5049
    %6560 = vmatpush.bf16.msra.mxu0 %v5041
    %6561 = vmatpush.bf16.msra.mxu0 %v5033
    %6562 = vmatpush.bf16.msra.mxu0 %v5025
    %6563 = vmatpush.bf16.msra.mxu0 %v5017
    %6564 = vmatmul.bf16.gmra.mxu0 %v2934
    %v6565 = vpop.f32.mrf.mxu0
    %v6566 = vadd.f32 %v3465, %v6565
    %v6567 = vpop.f32.mrf.mxu0
    %6568 = vdwg.mxu0
    %6569 = vmatpush.bf16.msra.mxu0 %v5137
    %6570 = vmatpush.bf16.msra.mxu0 %v5129
    %6571 = vmatpush.bf16.msra.mxu0 %v5121
    %6572 = vmatpush.bf16.msra.mxu0 %v5113
    %6573 = vmatpush.bf16.msra.mxu0 %v5105
    %6574 = vmatpush.bf16.msra.mxu0 %v5097
    %6575 = vmatpush.bf16.msra.mxu0 %v5089
    %6576 = vmatpush.bf16.msra.mxu0 %v5081
    %6577 = vmatmul.bf16.gmra.mxu0 %v2935
    %v6578 = vpop.f32.mrf.mxu0
    %v6579 = vadd.f32 %v6566, %v6578
    %v6580 = vpop.f32.mrf.mxu0
    %6581 = vdwg.mxu0
    %6582 = vmatpush.bf16.msra.mxu0 %v5201
    %6583 = vmatpush.bf16.msra.mxu0 %v5193
    %6584 = vmatpush.bf16.msra.mxu0 %v5185
    %6585 = vmatpush.bf16.msra.mxu0 %v5177
    %6586 = vmatpush.bf16.msra.mxu0 %v5169
    %6587 = vmatpush.bf16.msra.mxu0 %v5161
    %6588 = vmatpush.bf16.msra.mxu0 %v5153
    %6589 = vmatpush.bf16.msra.mxu0 %v5145
    %6590 = vmatmul.bf16.gmra.mxu0 %v2936
    %v6591 = vpop.f32.mrf.mxu0
    %v6592 = vadd.f32 %v6579, %v6591
    %v6593 = vpop.f32.mrf.mxu0
    %6594 = vdwg.mxu0
    %6595 = vmatpush.bf16.msra.mxu0 %v5265
    %6596 = vmatpush.bf16.msra.mxu0 %v5257
    %6597 = vmatpush.bf16.msra.mxu0 %v5249
    %6598 = vmatpush.bf16.msra.mxu0 %v5241
    %6599 = vmatpush.bf16.msra.mxu0 %v5233
    %6600 = vmatpush.bf16.msra.mxu0 %v5225
    %6601 = vmatpush.bf16.msra.mxu0 %v5217
    %6602 = vmatpush.bf16.msra.mxu0 %v5209
    %6603 = vmatmul.bf16.gmra.mxu0 %v2937
    %v6604 = vpop.f32.mrf.mxu0
    %v6605 = vadd.f32 %v6592, %v6604
    %v6606 = vpop.f32.mrf.mxu0
    %6607 = vdwg.mxu0
    %6608 = vmatpush.bf16.msra.mxu0 %v5329
    %6609 = vmatpush.bf16.msra.mxu0 %v5321
    %6610 = vmatpush.bf16.msra.mxu0 %v5313
    %6611 = vmatpush.bf16.msra.mxu0 %v5305
    %6612 = vmatpush.bf16.msra.mxu0 %v5297
    %6613 = vmatpush.bf16.msra.mxu0 %v5289
    %6614 = vmatpush.bf16.msra.mxu0 %v5281
    %6615 = vmatpush.bf16.msra.mxu0 %v5273
    %6616 = vmatmul.bf16.gmra.mxu0 %v2938
    %v6617 = vpop.f32.mrf.mxu0
    %v6618 = vadd.f32 %v6605, %v6617
    %v6619 = vpop.f32.mrf.mxu0
    %6620 = vdwg.mxu0
    %6621 = vmatpush.bf16.msra.mxu0 %v5393
    %6622 = vmatpush.bf16.msra.mxu0 %v5385
    %6623 = vmatpush.bf16.msra.mxu0 %v5377
    %6624 = vmatpush.bf16.msra.mxu0 %v5369
    %6625 = vmatpush.bf16.msra.mxu0 %v5361
    %6626 = vmatpush.bf16.msra.mxu0 %v5353
    %6627 = vmatpush.bf16.msra.mxu0 %v5345
    %6628 = vmatpush.bf16.msra.mxu0 %v5337
    %6629 = vmatmul.bf16.gmra.mxu0 %v2939
    %v6630 = vpop.f32.mrf.mxu0
    %v6631 = vadd.f32 %v6618, %v6630
    %v6632 = vpop.f32.mrf.mxu0
    %6633 = vdwg.mxu0
    %6634 = vmatpush.bf16.msra.mxu0 %v5457
    %6635 = vmatpush.bf16.msra.mxu0 %v5449
    %6636 = vmatpush.bf16.msra.mxu0 %v5441
    %6637 = vmatpush.bf16.msra.mxu0 %v5433
    %6638 = vmatpush.bf16.msra.mxu0 %v5425
    %6639 = vmatpush.bf16.msra.mxu0 %v5417
    %6640 = vmatpush.bf16.msra.mxu0 %v5409
    %6641 = vmatpush.bf16.msra.mxu0 %v5401
    %6642 = vmatmul.bf16.gmra.mxu0 %v2940
    %v6643 = vpop.f32.mrf.mxu0
    %v6644 = vadd.f32 %v6631, %v6643
    %v6645 = vpop.f32.mrf.mxu0
    %6646 = vdwg.mxu0
    %6647 = vmatpush.bf16.msra.mxu0 %v5521
    %6648 = vmatpush.bf16.msra.mxu0 %v5513
    %6649 = vmatpush.bf16.msra.mxu0 %v5505
    %6650 = vmatpush.bf16.msra.mxu0 %v5497
    %6651 = vmatpush.bf16.msra.mxu0 %v5489
    %6652 = vmatpush.bf16.msra.mxu0 %v5481
    %6653 = vmatpush.bf16.msra.mxu0 %v5473
    %6654 = vmatpush.bf16.msra.mxu0 %v5465
    %6655 = vmatmul.bf16.gmra.mxu0 %v2941
    %v6656 = vpop.f32.mrf.mxu0
    %v6657 = vadd.f32 %v6644, %v6656
    %v6658 = vpop.f32.mrf.mxu0
    %6659 = vdwg.mxu0
    %6660 = vmatpush.bf16.msra.mxu0 %v5074
    %6661 = vmatpush.bf16.msra.mxu0 %v5066
    %6662 = vmatpush.bf16.msra.mxu0 %v5058
    %6663 = vmatpush.bf16.msra.mxu0 %v5050
    %6664 = vmatpush.bf16.msra.mxu0 %v5042
    %6665 = vmatpush.bf16.msra.mxu0 %v5034
    %6666 = vmatpush.bf16.msra.mxu0 %v5026
    %6667 = vmatpush.bf16.msra.mxu0 %v5018
    %6668 = vmatmul.bf16.gmra.mxu0 %v2934
    %v6669 = vpop.f32.mrf.mxu0
    %v6670 = vadd.f32 %v3466, %v6669
    %v6671 = vpop.f32.mrf.mxu0
    %6672 = vdwg.mxu0
    %6673 = vmatpush.bf16.msra.mxu0 %v5138
    %6674 = vmatpush.bf16.msra.mxu0 %v5130
    %6675 = vmatpush.bf16.msra.mxu0 %v5122
    %6676 = vmatpush.bf16.msra.mxu0 %v5114
    %6677 = vmatpush.bf16.msra.mxu0 %v5106
    %6678 = vmatpush.bf16.msra.mxu0 %v5098
    %6679 = vmatpush.bf16.msra.mxu0 %v5090
    %6680 = vmatpush.bf16.msra.mxu0 %v5082
    %6681 = vmatmul.bf16.gmra.mxu0 %v2935
    %v6682 = vpop.f32.mrf.mxu0
    %v6683 = vadd.f32 %v6670, %v6682
    %v6684 = vpop.f32.mrf.mxu0
    %6685 = vdwg.mxu0
    %6686 = vmatpush.bf16.msra.mxu0 %v5202
    %6687 = vmatpush.bf16.msra.mxu0 %v5194
    %6688 = vmatpush.bf16.msra.mxu0 %v5186
    %6689 = vmatpush.bf16.msra.mxu0 %v5178
    %6690 = vmatpush.bf16.msra.mxu0 %v5170
    %6691 = vmatpush.bf16.msra.mxu0 %v5162
    %6692 = vmatpush.bf16.msra.mxu0 %v5154
    %6693 = vmatpush.bf16.msra.mxu0 %v5146
    %6694 = vmatmul.bf16.gmra.mxu0 %v2936
    %v6695 = vpop.f32.mrf.mxu0
    %v6696 = vadd.f32 %v6683, %v6695
    %v6697 = vpop.f32.mrf.mxu0
    %6698 = vdwg.mxu0
    %6699 = vmatpush.bf16.msra.mxu0 %v5266
    %6700 = vmatpush.bf16.msra.mxu0 %v5258
    %6701 = vmatpush.bf16.msra.mxu0 %v5250
    %6702 = vmatpush.bf16.msra.mxu0 %v5242
    %6703 = vmatpush.bf16.msra.mxu0 %v5234
    %6704 = vmatpush.bf16.msra.mxu0 %v5226
    %6705 = vmatpush.bf16.msra.mxu0 %v5218
    %6706 = vmatpush.bf16.msra.mxu0 %v5210
    %6707 = vmatmul.bf16.gmra.mxu0 %v2937
    %v6708 = vpop.f32.mrf.mxu0
    %v6709 = vadd.f32 %v6696, %v6708
    %v6710 = vpop.f32.mrf.mxu0
    %6711 = vdwg.mxu0
    %6712 = vmatpush.bf16.msra.mxu0 %v5330
    %6713 = vmatpush.bf16.msra.mxu0 %v5322
    %6714 = vmatpush.bf16.msra.mxu0 %v5314
    %6715 = vmatpush.bf16.msra.mxu0 %v5306
    %6716 = vmatpush.bf16.msra.mxu0 %v5298
    %6717 = vmatpush.bf16.msra.mxu0 %v5290
    %6718 = vmatpush.bf16.msra.mxu0 %v5282
    %6719 = vmatpush.bf16.msra.mxu0 %v5274
    %6720 = vmatmul.bf16.gmra.mxu0 %v2938
    %v6721 = vpop.f32.mrf.mxu0
    %v6722 = vadd.f32 %v6709, %v6721
    %v6723 = vpop.f32.mrf.mxu0
    %6724 = vdwg.mxu0
    %6725 = vmatpush.bf16.msra.mxu0 %v5394
    %6726 = vmatpush.bf16.msra.mxu0 %v5386
    %6727 = vmatpush.bf16.msra.mxu0 %v5378
    %6728 = vmatpush.bf16.msra.mxu0 %v5370
    %6729 = vmatpush.bf16.msra.mxu0 %v5362
    %6730 = vmatpush.bf16.msra.mxu0 %v5354
    %6731 = vmatpush.bf16.msra.mxu0 %v5346
    %6732 = vmatpush.bf16.msra.mxu0 %v5338
    %6733 = vmatmul.bf16.gmra.mxu0 %v2939
    %v6734 = vpop.f32.mrf.mxu0
    %v6735 = vadd.f32 %v6722, %v6734
    %v6736 = vpop.f32.mrf.mxu0
    %6737 = vdwg.mxu0
    %6738 = vmatpush.bf16.msra.mxu0 %v5458
    %6739 = vmatpush.bf16.msra.mxu0 %v5450
    %6740 = vmatpush.bf16.msra.mxu0 %v5442
    %6741 = vmatpush.bf16.msra.mxu0 %v5434
    %6742 = vmatpush.bf16.msra.mxu0 %v5426
    %6743 = vmatpush.bf16.msra.mxu0 %v5418
    %6744 = vmatpush.bf16.msra.mxu0 %v5410
    %6745 = vmatpush.bf16.msra.mxu0 %v5402
    %6746 = vmatmul.bf16.gmra.mxu0 %v2940
    %v6747 = vpop.f32.mrf.mxu0
    %v6748 = vadd.f32 %v6735, %v6747
    %v6749 = vpop.f32.mrf.mxu0
    %6750 = vdwg.mxu0
    %6751 = vmatpush.bf16.msra.mxu0 %v5522
    %6752 = vmatpush.bf16.msra.mxu0 %v5514
    %6753 = vmatpush.bf16.msra.mxu0 %v5506
    %6754 = vmatpush.bf16.msra.mxu0 %v5498
    %6755 = vmatpush.bf16.msra.mxu0 %v5490
    %6756 = vmatpush.bf16.msra.mxu0 %v5482
    %6757 = vmatpush.bf16.msra.mxu0 %v5474
    %6758 = vmatpush.bf16.msra.mxu0 %v5466
    %6759 = vmatmul.bf16.gmra.mxu0 %v2941
    %v6760 = vpop.f32.mrf.mxu0
    %v6761 = vadd.f32 %v6748, %v6760
    %v6762 = vpop.f32.mrf.mxu0
    %6763 = vdwg.mxu0
    %6764 = vmatpush.bf16.msra.mxu0 %v5075
    %6765 = vmatpush.bf16.msra.mxu0 %v5067
    %6766 = vmatpush.bf16.msra.mxu0 %v5059
    %6767 = vmatpush.bf16.msra.mxu0 %v5051
    %6768 = vmatpush.bf16.msra.mxu0 %v5043
    %6769 = vmatpush.bf16.msra.mxu0 %v5035
    %6770 = vmatpush.bf16.msra.mxu0 %v5027
    %6771 = vmatpush.bf16.msra.mxu0 %v5019
    %6772 = vmatmul.bf16.gmra.mxu0 %v2934
    %v6773 = vpop.f32.mrf.mxu0
    %v6774 = vadd.f32 %v3467, %v6773
    %v6775 = vpop.f32.mrf.mxu0
    %6776 = vdwg.mxu0
    %6777 = vmatpush.bf16.msra.mxu0 %v5139
    %6778 = vmatpush.bf16.msra.mxu0 %v5131
    %6779 = vmatpush.bf16.msra.mxu0 %v5123
    %6780 = vmatpush.bf16.msra.mxu0 %v5115
    %6781 = vmatpush.bf16.msra.mxu0 %v5107
    %6782 = vmatpush.bf16.msra.mxu0 %v5099
    %6783 = vmatpush.bf16.msra.mxu0 %v5091
    %6784 = vmatpush.bf16.msra.mxu0 %v5083
    %6785 = vmatmul.bf16.gmra.mxu0 %v2935
    %v6786 = vpop.f32.mrf.mxu0
    %v6787 = vadd.f32 %v6774, %v6786
    %v6788 = vpop.f32.mrf.mxu0
    %6789 = vdwg.mxu0
    %6790 = vmatpush.bf16.msra.mxu0 %v5203
    %6791 = vmatpush.bf16.msra.mxu0 %v5195
    %6792 = vmatpush.bf16.msra.mxu0 %v5187
    %6793 = vmatpush.bf16.msra.mxu0 %v5179
    %6794 = vmatpush.bf16.msra.mxu0 %v5171
    %6795 = vmatpush.bf16.msra.mxu0 %v5163
    %6796 = vmatpush.bf16.msra.mxu0 %v5155
    %6797 = vmatpush.bf16.msra.mxu0 %v5147
    %6798 = vmatmul.bf16.gmra.mxu0 %v2936
    %v6799 = vpop.f32.mrf.mxu0
    %v6800 = vadd.f32 %v6787, %v6799
    %v6801 = vpop.f32.mrf.mxu0
    %6802 = vdwg.mxu0
    %6803 = vmatpush.bf16.msra.mxu0 %v5267
    %6804 = vmatpush.bf16.msra.mxu0 %v5259
    %6805 = vmatpush.bf16.msra.mxu0 %v5251
    %6806 = vmatpush.bf16.msra.mxu0 %v5243
    %6807 = vmatpush.bf16.msra.mxu0 %v5235
    %6808 = vmatpush.bf16.msra.mxu0 %v5227
    %6809 = vmatpush.bf16.msra.mxu0 %v5219
    %6810 = vmatpush.bf16.msra.mxu0 %v5211
    %6811 = vmatmul.bf16.gmra.mxu0 %v2937
    %v6812 = vpop.f32.mrf.mxu0
    %v6813 = vadd.f32 %v6800, %v6812
    %v6814 = vpop.f32.mrf.mxu0
    %6815 = vdwg.mxu0
    %6816 = vmatpush.bf16.msra.mxu0 %v5331
    %6817 = vmatpush.bf16.msra.mxu0 %v5323
    %6818 = vmatpush.bf16.msra.mxu0 %v5315
    %6819 = vmatpush.bf16.msra.mxu0 %v5307
    %6820 = vmatpush.bf16.msra.mxu0 %v5299
    %6821 = vmatpush.bf16.msra.mxu0 %v5291
    %6822 = vmatpush.bf16.msra.mxu0 %v5283
    %6823 = vmatpush.bf16.msra.mxu0 %v5275
    %6824 = vmatmul.bf16.gmra.mxu0 %v2938
    %v6825 = vpop.f32.mrf.mxu0
    %v6826 = vadd.f32 %v6813, %v6825
    %v6827 = vpop.f32.mrf.mxu0
    %6828 = vdwg.mxu0
    %6829 = vmatpush.bf16.msra.mxu0 %v5395
    %6830 = vmatpush.bf16.msra.mxu0 %v5387
    %6831 = vmatpush.bf16.msra.mxu0 %v5379
    %6832 = vmatpush.bf16.msra.mxu0 %v5371
    %6833 = vmatpush.bf16.msra.mxu0 %v5363
    %6834 = vmatpush.bf16.msra.mxu0 %v5355
    %6835 = vmatpush.bf16.msra.mxu0 %v5347
    %6836 = vmatpush.bf16.msra.mxu0 %v5339
    %6837 = vmatmul.bf16.gmra.mxu0 %v2939
    %v6838 = vpop.f32.mrf.mxu0
    %v6839 = vadd.f32 %v6826, %v6838
    %v6840 = vpop.f32.mrf.mxu0
    %6841 = vdwg.mxu0
    %6842 = vmatpush.bf16.msra.mxu0 %v5459
    %6843 = vmatpush.bf16.msra.mxu0 %v5451
    %6844 = vmatpush.bf16.msra.mxu0 %v5443
    %6845 = vmatpush.bf16.msra.mxu0 %v5435
    %6846 = vmatpush.bf16.msra.mxu0 %v5427
    %6847 = vmatpush.bf16.msra.mxu0 %v5419
    %6848 = vmatpush.bf16.msra.mxu0 %v5411
    %6849 = vmatpush.bf16.msra.mxu0 %v5403
    %6850 = vmatmul.bf16.gmra.mxu0 %v2940
    %v6851 = vpop.f32.mrf.mxu0
    %v6852 = vadd.f32 %v6839, %v6851
    %v6853 = vpop.f32.mrf.mxu0
    %6854 = vdwg.mxu0
    %6855 = vmatpush.bf16.msra.mxu0 %v5523
    %6856 = vmatpush.bf16.msra.mxu0 %v5515
    %6857 = vmatpush.bf16.msra.mxu0 %v5507
    %6858 = vmatpush.bf16.msra.mxu0 %v5499
    %6859 = vmatpush.bf16.msra.mxu0 %v5491
    %6860 = vmatpush.bf16.msra.mxu0 %v5483
    %6861 = vmatpush.bf16.msra.mxu0 %v5475
    %6862 = vmatpush.bf16.msra.mxu0 %v5467
    %6863 = vmatmul.bf16.gmra.mxu0 %v2941
    %v6864 = vpop.f32.mrf.mxu0
    %v6865 = vadd.f32 %v6852, %v6864
    %v6866 = vpop.f32.mrf.mxu0
    %6867 = vdwg.mxu0
    %v6868 = vmul.f32 %v6137, 0.01
    %v6869 = vmul.f32 %v6241, 0.01
    %v6870 = vmul.f32 %v6345, 0.01
    %v6871 = vmul.f32 %v6449, 0.01
    %v6872 = vmul.f32 %v6553, 0.01
    %v6873 = vmul.f32 %v6657, 0.01
    %v6874 = vmul.f32 %v6761, 0.01
    %v6875 = vmul.f32 %v6865, 0.01
    %v6876 = vmax.f32 %v6137, %v6868
    %v6877 = vmax.f32 %v6241, %v6869
    %v6878 = vmax.f32 %v6345, %v6870
    %v6879 = vmax.f32 %v6449, %v6871
    %v6880 = vmax.f32 %v6553, %v6872
    %v6881 = vmax.f32 %v6657, %v6873
    %v6882 = vmax.f32 %v6761, %v6874
    %v6883 = vmax.f32 %v6865, %v6875
    %v6884 = vpack.c.bf16 %v6876, %v6876
    %v6885 = vpack.c.bf16 %v6877, %v6877
    %v6886 = vpack.c.bf16 %v6878, %v6878
    %v6887 = vpack.c.bf16 %v6879, %v6879
    %v6888 = vpack.c.bf16 %v6880, %v6880
    %v6889 = vpack.c.bf16 %v6881, %v6881
    %v6890 = vpack.c.bf16 %v6882, %v6882
    %v6891 = vpack.c.bf16 %v6883, %v6883
    %s6892 = smul.u32 %s2942, 4
    %s6893 = sshll.u32 %s6892, 4
    %6894 = dma.done %s188, %s6893
    %v6895 = vld [vmem:[#allocation4] sm:$0xff]
    %v6896 = vld [vmem:[#allocation4 + $0x8] sm:$0xff]
    %v6897 = vld [vmem:[#allocation4 + $0x10] sm:$0xff]
    %v6898 = vld [vmem:[#allocation4 + $0x18] sm:$0xff]
    %v6899 = vld [vmem:[#allocation4 + $0x20] sm:$0xff]
    %v6900 = vld [vmem:[#allocation4 + $0x28] sm:$0xff]
    %v6901 = vld [vmem:[#allocation4 + $0x30] sm:$0xff]
    %v6902 = vld [vmem:[#allocation4 + $0x38] sm:$0xff]
    %v6903 = vld [vmem:[#allocation4 + $0x40] sm:$0xff]
    %v6904 = vld [vmem:[#allocation4 + $0x48] sm:$0xff]
    %v6905 = vld [vmem:[#allocation4 + $0x50] sm:$0xff]
    %v6906 = vld [vmem:[#allocation4 + $0x58] sm:$0xff]
    %v6907 = vld [vmem:[#allocation4 + $0x60] sm:$0xff]
    %v6908 = vld [vmem:[#allocation4 + $0x68] sm:$0xff]
    %v6909 = vld [vmem:[#allocation4 + $0x70] sm:$0xff]
    %v6910 = vld [vmem:[#allocation4 + $0x78] sm:$0xff]
    %v6911 = vld [vmem:[#allocation4 + $0x80] sm:$0xff]
    %v6912 = vld [vmem:[#allocation4 + $0x88] sm:$0xff]
    %v6913 = vld [vmem:[#allocation4 + $0x90] sm:$0xff]
    %v6914 = vld [vmem:[#allocation4 + $0x98] sm:$0xff]
    %v6915 = vld [vmem:[#allocation4 + $0xa0] sm:$0xff]
    %v6916 = vld [vmem:[#allocation4 + $0xa8] sm:$0xff]
    %v6917 = vld [vmem:[#allocation4 + $0xb0] sm:$0xff]
    %v6918 = vld [vmem:[#allocation4 + $0xb8] sm:$0xff]
    %v6919 = vld [vmem:[#allocation4 + $0xc0] sm:$0xff]
    %v6920 = vld [vmem:[#allocation4 + $0xc8] sm:$0xff]
    %v6921 = vld [vmem:[#allocation4 + $0xd0] sm:$0xff]
    %v6922 = vld [vmem:[#allocation4 + $0xd8] sm:$0xff]
    %v6923 = vld [vmem:[#allocation4 + $0xe0] sm:$0xff]
    %v6924 = vld [vmem:[#allocation4 + $0xe8] sm:$0xff]
    %v6925 = vld [vmem:[#allocation4 + $0xf0] sm:$0xff]
    %v6926 = vld [vmem:[#allocation4 + $0xf8] sm:$0xff]
    %v6927 = vld [vmem:[#allocation4 + $0x100] sm:$0xff]
    %v6928 = vld [vmem:[#allocation4 + $0x108] sm:$0xff]
    %v6929 = vld [vmem:[#allocation4 + $0x110] sm:$0xff]
    %v6930 = vld [vmem:[#allocation4 + $0x118] sm:$0xff]
    %v6931 = vld [vmem:[#allocation4 + $0x120] sm:$0xff]
    %v6932 = vld [vmem:[#allocation4 + $0x128] sm:$0xff]
    %v6933 = vld [vmem:[#allocation4 + $0x130] sm:$0xff]
    %v6934 = vld [vmem:[#allocation4 + $0x138] sm:$0xff]
    %v6935 = vld [vmem:[#allocation4 + $0x140] sm:$0xff]
    %v6936 = vld [vmem:[#allocation4 + $0x148] sm:$0xff]
    %v6937 = vld [vmem:[#allocation4 + $0x150] sm:$0xff]
    %v6938 = vld [vmem:[#allocation4 + $0x158] sm:$0xff]
    %v6939 = vld [vmem:[#allocation4 + $0x160] sm:$0xff]
    %v6940 = vld [vmem:[#allocation4 + $0x168] sm:$0xff]
    %v6941 = vld [vmem:[#allocation4 + $0x170] sm:$0xff]
    %v6942 = vld [vmem:[#allocation4 + $0x178] sm:$0xff]
    %v6943 = vld [vmem:[#allocation4 + $0x180] sm:$0xff]
    %v6944 = vld [vmem:[#allocation4 + $0x188] sm:$0xff]
    %v6945 = vld [vmem:[#allocation4 + $0x190] sm:$0xff]
    %v6946 = vld [vmem:[#allocation4 + $0x198] sm:$0xff]
    %v6947 = vld [vmem:[#allocation4 + $0x1a0] sm:$0xff]
    %v6948 = vld [vmem:[#allocation4 + $0x1a8] sm:$0xff]
    %v6949 = vld [vmem:[#allocation4 + $0x1b0] sm:$0xff]
    %v6950 = vld [vmem:[#allocation4 + $0x1b8] sm:$0xff]
    %v6951 = vld [vmem:[#allocation4 + $0x1c0] sm:$0xff]
    %v6952 = vld [vmem:[#allocation4 + $0x1c8] sm:$0xff]
    %v6953 = vld [vmem:[#allocation4 + $0x1d0] sm:$0xff]
    %v6954 = vld [vmem:[#allocation4 + $0x1d8] sm:$0xff]
    %v6955 = vld [vmem:[#allocation4 + $0x1e0] sm:$0xff]
    %v6956 = vld [vmem:[#allocation4 + $0x1e8] sm:$0xff]
    %v6957 = vld [vmem:[#allocation4 + $0x1f0] sm:$0xff]
    %v6958 = vld [vmem:[#allocation4 + $0x1f8] sm:$0xff]
    %v6959 = vld [vmem:[#allocation4 + $0x200] sm:$0xff]
    %v6960 = vld [vmem:[#allocation4 + $0x208] sm:$0xff]
    %v6961 = vld [vmem:[#allocation4 + $0x210] sm:$0xff]
    %v6962 = vld [vmem:[#allocation4 + $0x218] sm:$0xff]
    %v6963 = vld [vmem:[#allocation4 + $0x220] sm:$0xff]
    %v6964 = vld [vmem:[#allocation4 + $0x228] sm:$0xff]
    %v6965 = vld [vmem:[#allocation4 + $0x230] sm:$0xff]
    %v6966 = vld [vmem:[#allocation4 + $0x238] sm:$0xff]
    %v6967 = vld [vmem:[#allocation4 + $0x240] sm:$0xff]
    %v6968 = vld [vmem:[#allocation4 + $0x248] sm:$0xff]
    %v6969 = vld [vmem:[#allocation4 + $0x250] sm:$0xff]
    %v6970 = vld [vmem:[#allocation4 + $0x258] sm:$0xff]
    %v6971 = vld [vmem:[#allocation4 + $0x260] sm:$0xff]
    %v6972 = vld [vmem:[#allocation4 + $0x268] sm:$0xff]
    %v6973 = vld [vmem:[#allocation4 + $0x270] sm:$0xff]
    %v6974 = vld [vmem:[#allocation4 + $0x278] sm:$0xff]
    %v6975 = vld [vmem:[#allocation4 + $0x280] sm:$0xff]
    %v6976 = vld [vmem:[#allocation4 + $0x288] sm:$0xff]
    %v6977 = vld [vmem:[#allocation4 + $0x290] sm:$0xff]
    %v6978 = vld [vmem:[#allocation4 + $0x298] sm:$0xff]
    %v6979 = vld [vmem:[#allocation4 + $0x2a0] sm:$0xff]
    %v6980 = vld [vmem:[#allocation4 + $0x2a8] sm:$0xff]
    %v6981 = vld [vmem:[#allocation4 + $0x2b0] sm:$0xff]
    %v6982 = vld [vmem:[#allocation4 + $0x2b8] sm:$0xff]
    %v6983 = vld [vmem:[#allocation4 + $0x2c0] sm:$0xff]
    %v6984 = vld [vmem:[#allocation4 + $0x2c8] sm:$0xff]
    %v6985 = vld [vmem:[#allocation4 + $0x2d0] sm:$0xff]
    %v6986 = vld [vmem:[#allocation4 + $0x2d8] sm:$0xff]
    %v6987 = vld [vmem:[#allocation4 + $0x2e0] sm:$0xff]
    %v6988 = vld [vmem:[#allocation4 + $0x2e8] sm:$0xff]
    %v6989 = vld [vmem:[#allocation4 + $0x2f0] sm:$0xff]
    %v6990 = vld [vmem:[#allocation4 + $0x2f8] sm:$0xff]
    %v6991 = vld [vmem:[#allocation4 + $0x300] sm:$0xff]
    %v6992 = vld [vmem:[#allocation4 + $0x308] sm:$0xff]
    %v6993 = vld [vmem:[#allocation4 + $0x310] sm:$0xff]
    %v6994 = vld [vmem:[#allocation4 + $0x318] sm:$0xff]
    %v6995 = vld [vmem:[#allocation4 + $0x320] sm:$0xff]
    %v6996 = vld [vmem:[#allocation4 + $0x328] sm:$0xff]
    %v6997 = vld [vmem:[#allocation4 + $0x330] sm:$0xff]
    %v6998 = vld [vmem:[#allocation4 + $0x338] sm:$0xff]
    %v6999 = vld [vmem:[#allocation4 + $0x340] sm:$0xff]
    %v7000 = vld [vmem:[#allocation4 + $0x348] sm:$0xff]
    %v7001 = vld [vmem:[#allocation4 + $0x350] sm:$0xff]
    %v7002 = vld [vmem:[#allocation4 + $0x358] sm:$0xff]
    %v7003 = vld [vmem:[#allocation4 + $0x360] sm:$0xff]
    %v7004 = vld [vmem:[#allocation4 + $0x368] sm:$0xff]
    %v7005 = vld [vmem:[#allocation4 + $0x370] sm:$0xff]
    %v7006 = vld [vmem:[#allocation4 + $0x378] sm:$0xff]
    %v7007 = vld [vmem:[#allocation4 + $0x380] sm:$0xff]
    %v7008 = vld [vmem:[#allocation4 + $0x388] sm:$0xff]
    %v7009 = vld [vmem:[#allocation4 + $0x390] sm:$0xff]
    %v7010 = vld [vmem:[#allocation4 + $0x398] sm:$0xff]
    %v7011 = vld [vmem:[#allocation4 + $0x3a0] sm:$0xff]
    %v7012 = vld [vmem:[#allocation4 + $0x3a8] sm:$0xff]
    %v7013 = vld [vmem:[#allocation4 + $0x3b0] sm:$0xff]
    %v7014 = vld [vmem:[#allocation4 + $0x3b8] sm:$0xff]
    %v7015 = vld [vmem:[#allocation4 + $0x3c0] sm:$0xff]
    %v7016 = vld [vmem:[#allocation4 + $0x3c8] sm:$0xff]
    %v7017 = vld [vmem:[#allocation4 + $0x3d0] sm:$0xff]
    %v7018 = vld [vmem:[#allocation4 + $0x3d8] sm:$0xff]
    %v7019 = vld [vmem:[#allocation4 + $0x3e0] sm:$0xff]
    %v7020 = vld [vmem:[#allocation4 + $0x3e8] sm:$0xff]
    %v7021 = vld [vmem:[#allocation4 + $0x3f0] sm:$0xff]
    %v7022 = vld [vmem:[#allocation4 + $0x3f8] sm:$0xff]
    %v7023 = vld [vmem:[#allocation4 + $0x400] sm:$0xff]
    %v7024 = vld [vmem:[#allocation4 + $0x408] sm:$0xff]
    %v7025 = vld [vmem:[#allocation4 + $0x410] sm:$0xff]
    %v7026 = vld [vmem:[#allocation4 + $0x418] sm:$0xff]
    %v7027 = vld [vmem:[#allocation4 + $0x420] sm:$0xff]
    %v7028 = vld [vmem:[#allocation4 + $0x428] sm:$0xff]
    %v7029 = vld [vmem:[#allocation4 + $0x430] sm:$0xff]
    %v7030 = vld [vmem:[#allocation4 + $0x438] sm:$0xff]
    %v7031 = vld [vmem:[#allocation4 + $0x440] sm:$0xff]
    %v7032 = vld [vmem:[#allocation4 + $0x448] sm:$0xff]
    %v7033 = vld [vmem:[#allocation4 + $0x450] sm:$0xff]
    %v7034 = vld [vmem:[#allocation4 + $0x458] sm:$0xff]
    %v7035 = vld [vmem:[#allocation4 + $0x460] sm:$0xff]
    %v7036 = vld [vmem:[#allocation4 + $0x468] sm:$0xff]
    %v7037 = vld [vmem:[#allocation4 + $0x470] sm:$0xff]
    %v7038 = vld [vmem:[#allocation4 + $0x478] sm:$0xff]
    %v7039 = vld [vmem:[#allocation4 + $0x480] sm:$0xff]
    %v7040 = vld [vmem:[#allocation4 + $0x488] sm:$0xff]
    %v7041 = vld [vmem:[#allocation4 + $0x490] sm:$0xff]
    %v7042 = vld [vmem:[#allocation4 + $0x498] sm:$0xff]
    %v7043 = vld [vmem:[#allocation4 + $0x4a0] sm:$0xff]
    %v7044 = vld [vmem:[#allocation4 + $0x4a8] sm:$0xff]
    %v7045 = vld [vmem:[#allocation4 + $0x4b0] sm:$0xff]
    %v7046 = vld [vmem:[#allocation4 + $0x4b8] sm:$0xff]
    %v7047 = vld [vmem:[#allocation4 + $0x4c0] sm:$0xff]
    %v7048 = vld [vmem:[#allocation4 + $0x4c8] sm:$0xff]
    %v7049 = vld [vmem:[#allocation4 + $0x4d0] sm:$0xff]
    %v7050 = vld [vmem:[#allocation4 + $0x4d8] sm:$0xff]
    %v7051 = vld [vmem:[#allocation4 + $0x4e0] sm:$0xff]
    %v7052 = vld [vmem:[#allocation4 + $0x4e8] sm:$0xff]
    %v7053 = vld [vmem:[#allocation4 + $0x4f0] sm:$0xff]
    %v7054 = vld [vmem:[#allocation4 + $0x4f8] sm:$0xff]
    %v7055 = vld [vmem:[#allocation4 + $0x500] sm:$0xff]
    %v7056 = vld [vmem:[#allocation4 + $0x508] sm:$0xff]
    %v7057 = vld [vmem:[#allocation4 + $0x510] sm:$0xff]
    %v7058 = vld [vmem:[#allocation4 + $0x518] sm:$0xff]
    %v7059 = vld [vmem:[#allocation4 + $0x520] sm:$0xff]
    %v7060 = vld [vmem:[#allocation4 + $0x528] sm:$0xff]
    %v7061 = vld [vmem:[#allocation4 + $0x530] sm:$0xff]
    %v7062 = vld [vmem:[#allocation4 + $0x538] sm:$0xff]
    %v7063 = vld [vmem:[#allocation4 + $0x540] sm:$0xff]
    %v7064 = vld [vmem:[#allocation4 + $0x548] sm:$0xff]
    %v7065 = vld [vmem:[#allocation4 + $0x550] sm:$0xff]
    %v7066 = vld [vmem:[#allocation4 + $0x558] sm:$0xff]
    %v7067 = vld [vmem:[#allocation4 + $0x560] sm:$0xff]
    %v7068 = vld [vmem:[#allocation4 + $0x568] sm:$0xff]
    %v7069 = vld [vmem:[#allocation4 + $0x570] sm:$0xff]
    %v7070 = vld [vmem:[#allocation4 + $0x578] sm:$0xff]
    %v7071 = vld [vmem:[#allocation4 + $0x580] sm:$0xff]
    %v7072 = vld [vmem:[#allocation4 + $0x588] sm:$0xff]
    %v7073 = vld [vmem:[#allocation4 + $0x590] sm:$0xff]
    %v7074 = vld [vmem:[#allocation4 + $0x598] sm:$0xff]
    %v7075 = vld [vmem:[#allocation4 + $0x5a0] sm:$0xff]
    %v7076 = vld [vmem:[#allocation4 + $0x5a8] sm:$0xff]
    %v7077 = vld [vmem:[#allocation4 + $0x5b0] sm:$0xff]
    %v7078 = vld [vmem:[#allocation4 + $0x5b8] sm:$0xff]
    %v7079 = vld [vmem:[#allocation4 + $0x5c0] sm:$0xff]
    %v7080 = vld [vmem:[#allocation4 + $0x5c8] sm:$0xff]
    %v7081 = vld [vmem:[#allocation4 + $0x5d0] sm:$0xff]
    %v7082 = vld [vmem:[#allocation4 + $0x5d8] sm:$0xff]
    %v7083 = vld [vmem:[#allocation4 + $0x5e0] sm:$0xff]
    %v7084 = vld [vmem:[#allocation4 + $0x5e8] sm:$0xff]
    %v7085 = vld [vmem:[#allocation4 + $0x5f0] sm:$0xff]
    %v7086 = vld [vmem:[#allocation4 + $0x5f8] sm:$0xff]
    %v7087 = vld [vmem:[#allocation4 + $0x600] sm:$0xff]
    %v7088 = vld [vmem:[#allocation4 + $0x608] sm:$0xff]
    %v7089 = vld [vmem:[#allocation4 + $0x610] sm:$0xff]
    %v7090 = vld [vmem:[#allocation4 + $0x618] sm:$0xff]
    %v7091 = vld [vmem:[#allocation4 + $0x620] sm:$0xff]
    %v7092 = vld [vmem:[#allocation4 + $0x628] sm:$0xff]
    %v7093 = vld [vmem:[#allocation4 + $0x630] sm:$0xff]
    %v7094 = vld [vmem:[#allocation4 + $0x638] sm:$0xff]
    %v7095 = vld [vmem:[#allocation4 + $0x640] sm:$0xff]
    %v7096 = vld [vmem:[#allocation4 + $0x648] sm:$0xff]
    %v7097 = vld [vmem:[#allocation4 + $0x650] sm:$0xff]
    %v7098 = vld [vmem:[#allocation4 + $0x658] sm:$0xff]
    %v7099 = vld [vmem:[#allocation4 + $0x660] sm:$0xff]
    %v7100 = vld [vmem:[#allocation4 + $0x668] sm:$0xff]
    %v7101 = vld [vmem:[#allocation4 + $0x670] sm:$0xff]
    %v7102 = vld [vmem:[#allocation4 + $0x678] sm:$0xff]
    %v7103 = vld [vmem:[#allocation4 + $0x680] sm:$0xff]
    %v7104 = vld [vmem:[#allocation4 + $0x688] sm:$0xff]
    %v7105 = vld [vmem:[#allocation4 + $0x690] sm:$0xff]
    %v7106 = vld [vmem:[#allocation4 + $0x698] sm:$0xff]
    %v7107 = vld [vmem:[#allocation4 + $0x6a0] sm:$0xff]
    %v7108 = vld [vmem:[#allocation4 + $0x6a8] sm:$0xff]
    %v7109 = vld [vmem:[#allocation4 + $0x6b0] sm:$0xff]
    %v7110 = vld [vmem:[#allocation4 + $0x6b8] sm:$0xff]
    %v7111 = vld [vmem:[#allocation4 + $0x6c0] sm:$0xff]
    %v7112 = vld [vmem:[#allocation4 + $0x6c8] sm:$0xff]
    %v7113 = vld [vmem:[#allocation4 + $0x6d0] sm:$0xff]
    %v7114 = vld [vmem:[#allocation4 + $0x6d8] sm:$0xff]
    %v7115 = vld [vmem:[#allocation4 + $0x6e0] sm:$0xff]
    %v7116 = vld [vmem:[#allocation4 + $0x6e8] sm:$0xff]
    %v7117 = vld [vmem:[#allocation4 + $0x6f0] sm:$0xff]
    %v7118 = vld [vmem:[#allocation4 + $0x6f8] sm:$0xff]
    %v7119 = vld [vmem:[#allocation4 + $0x700] sm:$0xff]
    %v7120 = vld [vmem:[#allocation4 + $0x708] sm:$0xff]
    %v7121 = vld [vmem:[#allocation4 + $0x710] sm:$0xff]
    %v7122 = vld [vmem:[#allocation4 + $0x718] sm:$0xff]
    %v7123 = vld [vmem:[#allocation4 + $0x720] sm:$0xff]
    %v7124 = vld [vmem:[#allocation4 + $0x728] sm:$0xff]
    %v7125 = vld [vmem:[#allocation4 + $0x730] sm:$0xff]
    %v7126 = vld [vmem:[#allocation4 + $0x738] sm:$0xff]
    %v7127 = vld [vmem:[#allocation4 + $0x740] sm:$0xff]
    %v7128 = vld [vmem:[#allocation4 + $0x748] sm:$0xff]
    %v7129 = vld [vmem:[#allocation4 + $0x750] sm:$0xff]
    %v7130 = vld [vmem:[#allocation4 + $0x758] sm:$0xff]
    %v7131 = vld [vmem:[#allocation4 + $0x760] sm:$0xff]
    %v7132 = vld [vmem:[#allocation4 + $0x768] sm:$0xff]
    %v7133 = vld [vmem:[#allocation4 + $0x770] sm:$0xff]
    %v7134 = vld [vmem:[#allocation4 + $0x778] sm:$0xff]
    %v7135 = vld [vmem:[#allocation4 + $0x780] sm:$0xff]
    %v7136 = vld [vmem:[#allocation4 + $0x788] sm:$0xff]
    %v7137 = vld [vmem:[#allocation4 + $0x790] sm:$0xff]
    %v7138 = vld [vmem:[#allocation4 + $0x798] sm:$0xff]
    %v7139 = vld [vmem:[#allocation4 + $0x7a0] sm:$0xff]
    %v7140 = vld [vmem:[#allocation4 + $0x7a8] sm:$0xff]
    %v7141 = vld [vmem:[#allocation4 + $0x7b0] sm:$0xff]
    %v7142 = vld [vmem:[#allocation4 + $0x7b8] sm:$0xff]
    %v7143 = vld [vmem:[#allocation4 + $0x7c0] sm:$0xff]
    %v7144 = vld [vmem:[#allocation4 + $0x7c8] sm:$0xff]
    %v7145 = vld [vmem:[#allocation4 + $0x7d0] sm:$0xff]
    %v7146 = vld [vmem:[#allocation4 + $0x7d8] sm:$0xff]
    %v7147 = vld [vmem:[#allocation4 + $0x7e0] sm:$0xff]
    %v7148 = vld [vmem:[#allocation4 + $0x7e8] sm:$0xff]
    %v7149 = vld [vmem:[#allocation4 + $0x7f0] sm:$0xff]
    %v7150 = vld [vmem:[#allocation4 + $0x7f8] sm:$0xff]
    %v7151 = vld [vmem:[#allocation9 + $0x18] sm:$0xf]
    %v7153 = vperm.slane %v7151, 0
    %v7154 = vperm.slane %v7151, 1
    %v7155 = vperm.slane %v7151, 2
    %v7156 = vperm.slane %v7151, 3
    %v7417 = vunpack.c.l.b16 %v6895
    %v7418 = vunpack.c.h.b16 %v6895
    %v7419 = vunpack.c.l.b16 %v6896
    %v7420 = vunpack.c.h.b16 %v6896
    %v7421 = vunpack.c.l.b16 %v6897
    %v7422 = vunpack.c.h.b16 %v6897
    %v7423 = vunpack.c.l.b16 %v6898
    %v7424 = vunpack.c.h.b16 %v6898
    %v7425 = vunpack.c.l.b16 %v6899
    %v7426 = vunpack.c.h.b16 %v6899
    %v7427 = vunpack.c.l.b16 %v6900
    %v7428 = vunpack.c.h.b16 %v6900
    %v7429 = vunpack.c.l.b16 %v6901
    %v7430 = vunpack.c.h.b16 %v6901
    %v7431 = vunpack.c.l.b16 %v6902
    %v7432 = vunpack.c.h.b16 %v6902
    %v7433 = vunpack.c.l.b16 %v6903
    %v7434 = vunpack.c.h.b16 %v6903
    %v7435 = vunpack.c.l.b16 %v6904
    %v7436 = vunpack.c.h.b16 %v6904
    %v7437 = vunpack.c.l.b16 %v6905
    %v7438 = vunpack.c.h.b16 %v6905
    %v7439 = vunpack.c.l.b16 %v6906
    %v7440 = vunpack.c.h.b16 %v6906
    %v7441 = vunpack.c.l.b16 %v6907
    %v7442 = vunpack.c.h.b16 %v6907
    %v7443 = vunpack.c.l.b16 %v6908
    %v7444 = vunpack.c.h.b16 %v6908
    %v7445 = vunpack.c.l.b16 %v6909
    %v7446 = vunpack.c.h.b16 %v6909
    %v7447 = vunpack.c.l.b16 %v6910
    %v7448 = vunpack.c.h.b16 %v6910
    %v7449 = vunpack.c.l.b16 %v6911
    %v7450 = vunpack.c.h.b16 %v6911
    %v7451 = vunpack.c.l.b16 %v6912
    %v7452 = vunpack.c.h.b16 %v6912
    %v7453 = vunpack.c.l.b16 %v6913
    %v7454 = vunpack.c.h.b16 %v6913
    %v7455 = vunpack.c.l.b16 %v6914
    %v7456 = vunpack.c.h.b16 %v6914
    %v7457 = vunpack.c.l.b16 %v6915
    %v7458 = vunpack.c.h.b16 %v6915
    %v7459 = vunpack.c.l.b16 %v6916
    %v7460 = vunpack.c.h.b16 %v6916
    %v7461 = vunpack.c.l.b16 %v6917
    %v7462 = vunpack.c.h.b16 %v6917
    %v7463 = vunpack.c.l.b16 %v6918
    %v7464 = vunpack.c.h.b16 %v6918
    %v7465 = vunpack.c.l.b16 %v6919
    %v7466 = vunpack.c.h.b16 %v6919
    %v7467 = vunpack.c.l.b16 %v6920
    %v7468 = vunpack.c.h.b16 %v6920
    %v7469 = vunpack.c.l.b16 %v6921
    %v7470 = vunpack.c.h.b16 %v6921
    %v7471 = vunpack.c.l.b16 %v6922
    %v7472 = vunpack.c.h.b16 %v6922
    %v7473 = vunpack.c.l.b16 %v6923
    %v7474 = vunpack.c.h.b16 %v6923
    %v7475 = vunpack.c.l.b16 %v6924
    %v7476 = vunpack.c.h.b16 %v6924
    %v7477 = vunpack.c.l.b16 %v6925
    %v7478 = vunpack.c.h.b16 %v6925
    %v7479 = vunpack.c.l.b16 %v6926
    %v7480 = vunpack.c.h.b16 %v6926
    %v7481 = vunpack.c.l.b16 %v6927
    %v7482 = vunpack.c.h.b16 %v6927
    %v7483 = vunpack.c.l.b16 %v6928
    %v7484 = vunpack.c.h.b16 %v6928
    %v7485 = vunpack.c.l.b16 %v6929
    %v7486 = vunpack.c.h.b16 %v6929
    %v7487 = vunpack.c.l.b16 %v6930
    %v7488 = vunpack.c.h.b16 %v6930
    %v7489 = vunpack.c.l.b16 %v6931
    %v7490 = vunpack.c.h.b16 %v6931
    %v7491 = vunpack.c.l.b16 %v6932
    %v7492 = vunpack.c.h.b16 %v6932
    %v7493 = vunpack.c.l.b16 %v6933
    %v7494 = vunpack.c.h.b16 %v6933
    %v7495 = vunpack.c.l.b16 %v6934
    %v7496 = vunpack.c.h.b16 %v6934
    %v7497 = vunpack.c.l.b16 %v6935
    %v7498 = vunpack.c.h.b16 %v6935
    %v7499 = vunpack.c.l.b16 %v6936
    %v7500 = vunpack.c.h.b16 %v6936
    %v7501 = vunpack.c.l.b16 %v6937
    %v7502 = vunpack.c.h.b16 %v6937
    %v7503 = vunpack.c.l.b16 %v6938
    %v7504 = vunpack.c.h.b16 %v6938
    %v7505 = vunpack.c.l.b16 %v6939
    %v7506 = vunpack.c.h.b16 %v6939
    %v7507 = vunpack.c.l.b16 %v6940
    %v7508 = vunpack.c.h.b16 %v6940
    %v7509 = vunpack.c.l.b16 %v6941
    %v7510 = vunpack.c.h.b16 %v6941
    %v7511 = vunpack.c.l.b16 %v6942
    %v7512 = vunpack.c.h.b16 %v6942
    %v7513 = vunpack.c.l.b16 %v6943
    %v7514 = vunpack.c.h.b16 %v6943
    %v7515 = vunpack.c.l.b16 %v6944
    %v7516 = vunpack.c.h.b16 %v6944
    %v7517 = vunpack.c.l.b16 %v6945
    %v7518 = vunpack.c.h.b16 %v6945
    %v7519 = vunpack.c.l.b16 %v6946
    %v7520 = vunpack.c.h.b16 %v6946
    %v7521 = vunpack.c.l.b16 %v6947
    %v7522 = vunpack.c.h.b16 %v6947
    %v7523 = vunpack.c.l.b16 %v6948
    %v7524 = vunpack.c.h.b16 %v6948
    %v7525 = vunpack.c.l.b16 %v6949
    %v7526 = vunpack.c.h.b16 %v6949
    %v7527 = vunpack.c.l.b16 %v6950
    %v7528 = vunpack.c.h.b16 %v6950
    %v7529 = vunpack.c.l.b16 %v6951
    %v7530 = vunpack.c.h.b16 %v6951
    %v7531 = vunpack.c.l.b16 %v6952
    %v7532 = vunpack.c.h.b16 %v6952
    %v7533 = vunpack.c.l.b16 %v6953
    %v7534 = vunpack.c.h.b16 %v6953
    %v7535 = vunpack.c.l.b16 %v6954
    %v7536 = vunpack.c.h.b16 %v6954
    %v7537 = vunpack.c.l.b16 %v6955
    %v7538 = vunpack.c.h.b16 %v6955
    %v7539 = vunpack.c.l.b16 %v6956
    %v7540 = vunpack.c.h.b16 %v6956
    %v7541 = vunpack.c.l.b16 %v6957
    %v7542 = vunpack.c.h.b16 %v6957
    %v7543 = vunpack.c.l.b16 %v6958
    %v7544 = vunpack.c.h.b16 %v6958
    %v7545 = vunpack.c.l.b16 %v6959
    %v7546 = vunpack.c.h.b16 %v6959
    %v7547 = vunpack.c.l.b16 %v6960
    %v7548 = vunpack.c.h.b16 %v6960
    %v7549 = vunpack.c.l.b16 %v6961
    %v7550 = vunpack.c.h.b16 %v6961
    %v7551 = vunpack.c.l.b16 %v6962
    %v7552 = vunpack.c.h.b16 %v6962
    %v7553 = vunpack.c.l.b16 %v6963
    %v7554 = vunpack.c.h.b16 %v6963
    %v7555 = vunpack.c.l.b16 %v6964
    %v7556 = vunpack.c.h.b16 %v6964
    %v7557 = vunpack.c.l.b16 %v6965
    %v7558 = vunpack.c.h.b16 %v6965
    %v7559 = vunpack.c.l.b16 %v6966
    %v7560 = vunpack.c.h.b16 %v6966
    %v7561 = vunpack.c.l.b16 %v6967
    %v7562 = vunpack.c.h.b16 %v6967
    %v7563 = vunpack.c.l.b16 %v6968
    %v7564 = vunpack.c.h.b16 %v6968
    %v7565 = vunpack.c.l.b16 %v6969
    %v7566 = vunpack.c.h.b16 %v6969
    %v7567 = vunpack.c.l.b16 %v6970
    %v7568 = vunpack.c.h.b16 %v6970
    %v7569 = vunpack.c.l.b16 %v6971
    %v7570 = vunpack.c.h.b16 %v6971
    %v7571 = vunpack.c.l.b16 %v6972
    %v7572 = vunpack.c.h.b16 %v6972
    %v7573 = vunpack.c.l.b16 %v6973
    %v7574 = vunpack.c.h.b16 %v6973
    %v7575 = vunpack.c.l.b16 %v6974
    %v7576 = vunpack.c.h.b16 %v6974
    %v7577 = vunpack.c.l.b16 %v6975
    %v7578 = vunpack.c.h.b16 %v6975
    %v7579 = vunpack.c.l.b16 %v6976
    %v7580 = vunpack.c.h.b16 %v6976
    %v7581 = vunpack.c.l.b16 %v6977
    %v7582 = vunpack.c.h.b16 %v6977
    %v7583 = vunpack.c.l.b16 %v6978
    %v7584 = vunpack.c.h.b16 %v6978
    %v7585 = vunpack.c.l.b16 %v6979
    %v7586 = vunpack.c.h.b16 %v6979
    %v7587 = vunpack.c.l.b16 %v6980
    %v7588 = vunpack.c.h.b16 %v6980
    %v7589 = vunpack.c.l.b16 %v6981
    %v7590 = vunpack.c.h.b16 %v6981
    %v7591 = vunpack.c.l.b16 %v6982
    %v7592 = vunpack.c.h.b16 %v6982
    %v7593 = vunpack.c.l.b16 %v6983
    %v7594 = vunpack.c.h.b16 %v6983
    %v7595 = vunpack.c.l.b16 %v6984
    %v7596 = vunpack.c.h.b16 %v6984
    %v7597 = vunpack.c.l.b16 %v6985
    %v7598 = vunpack.c.h.b16 %v6985
    %v7599 = vunpack.c.l.b16 %v6986
    %v7600 = vunpack.c.h.b16 %v6986
    %v7601 = vunpack.c.l.b16 %v6987
    %v7602 = vunpack.c.h.b16 %v6987
    %v7603 = vunpack.c.l.b16 %v6988
    %v7604 = vunpack.c.h.b16 %v6988
    %v7605 = vunpack.c.l.b16 %v6989
    %v7606 = vunpack.c.h.b16 %v6989
    %v7607 = vunpack.c.l.b16 %v6990
    %v7608 = vunpack.c.h.b16 %v6990
    %v7609 = vunpack.c.l.b16 %v6991
    %v7610 = vunpack.c.h.b16 %v6991
    %v7611 = vunpack.c.l.b16 %v6992
    %v7612 = vunpack.c.h.b16 %v6992
    %v7613 = vunpack.c.l.b16 %v6993
    %v7614 = vunpack.c.h.b16 %v6993
    %v7615 = vunpack.c.l.b16 %v6994
    %v7616 = vunpack.c.h.b16 %v6994
    %v7617 = vunpack.c.l.b16 %v6995
    %v7618 = vunpack.c.h.b16 %v6995
    %v7619 = vunpack.c.l.b16 %v6996
    %v7620 = vunpack.c.h.b16 %v6996
    %v7621 = vunpack.c.l.b16 %v6997
    %v7622 = vunpack.c.h.b16 %v6997
    %v7623 = vunpack.c.l.b16 %v6998
    %v7624 = vunpack.c.h.b16 %v6998
    %v7625 = vunpack.c.l.b16 %v6999
    %v7626 = vunpack.c.h.b16 %v6999
    %v7627 = vunpack.c.l.b16 %v7000
    %v7628 = vunpack.c.h.b16 %v7000
    %v7629 = vunpack.c.l.b16 %v7001
    %v7630 = vunpack.c.h.b16 %v7001
    %v7631 = vunpack.c.l.b16 %v7002
    %v7632 = vunpack.c.h.b16 %v7002
    %v7633 = vunpack.c.l.b16 %v7003
    %v7634 = vunpack.c.h.b16 %v7003
    %v7635 = vunpack.c.l.b16 %v7004
    %v7636 = vunpack.c.h.b16 %v7004
    %v7637 = vunpack.c.l.b16 %v7005
    %v7638 = vunpack.c.h.b16 %v7005
    %v7639 = vunpack.c.l.b16 %v7006
    %v7640 = vunpack.c.h.b16 %v7006
    %v7641 = vunpack.c.l.b16 %v7007
    %v7642 = vunpack.c.h.b16 %v7007
    %v7643 = vunpack.c.l.b16 %v7008
    %v7644 = vunpack.c.h.b16 %v7008
    %v7645 = vunpack.c.l.b16 %v7009
    %v7646 = vunpack.c.h.b16 %v7009
    %v7647 = vunpack.c.l.b16 %v7010
    %v7648 = vunpack.c.h.b16 %v7010
    %v7649 = vunpack.c.l.b16 %v7011
    %v7650 = vunpack.c.h.b16 %v7011
    %v7651 = vunpack.c.l.b16 %v7012
    %v7652 = vunpack.c.h.b16 %v7012
    %v7653 = vunpack.c.l.b16 %v7013
    %v7654 = vunpack.c.h.b16 %v7013
    %v7655 = vunpack.c.l.b16 %v7014
    %v7656 = vunpack.c.h.b16 %v7014
    %v7657 = vunpack.c.l.b16 %v7015
    %v7658 = vunpack.c.h.b16 %v7015
    %v7659 = vunpack.c.l.b16 %v7016
    %v7660 = vunpack.c.h.b16 %v7016
    %v7661 = vunpack.c.l.b16 %v7017
    %v7662 = vunpack.c.h.b16 %v7017
    %v7663 = vunpack.c.l.b16 %v7018
    %v7664 = vunpack.c.h.b16 %v7018
    %v7665 = vunpack.c.l.b16 %v7019
    %v7666 = vunpack.c.h.b16 %v7019
    %v7667 = vunpack.c.l.b16 %v7020
    %v7668 = vunpack.c.h.b16 %v7020
    %v7669 = vunpack.c.l.b16 %v7021
    %v7670 = vunpack.c.h.b16 %v7021
    %v7671 = vunpack.c.l.b16 %v7022
    %v7672 = vunpack.c.h.b16 %v7022
    %v7673 = vunpack.c.l.b16 %v7023
    %v7674 = vunpack.c.h.b16 %v7023
    %v7675 = vunpack.c.l.b16 %v7024
    %v7676 = vunpack.c.h.b16 %v7024
    %v7677 = vunpack.c.l.b16 %v7025
    %v7678 = vunpack.c.h.b16 %v7025
    %v7679 = vunpack.c.l.b16 %v7026
    %v7680 = vunpack.c.h.b16 %v7026
    %v7681 = vunpack.c.l.b16 %v7027
    %v7682 = vunpack.c.h.b16 %v7027
    %v7683 = vunpack.c.l.b16 %v7028
    %v7684 = vunpack.c.h.b16 %v7028
    %v7685 = vunpack.c.l.b16 %v7029
    %v7686 = vunpack.c.h.b16 %v7029
    %v7687 = vunpack.c.l.b16 %v7030
    %v7688 = vunpack.c.h.b16 %v7030
    %v7689 = vunpack.c.l.b16 %v7031
    %v7690 = vunpack.c.h.b16 %v7031
    %v7691 = vunpack.c.l.b16 %v7032
    %v7692 = vunpack.c.h.b16 %v7032
    %v7693 = vunpack.c.l.b16 %v7033
    %v7694 = vunpack.c.h.b16 %v7033
    %v7695 = vunpack.c.l.b16 %v7034
    %v7696 = vunpack.c.h.b16 %v7034
    %v7697 = vunpack.c.l.b16 %v7035
    %v7698 = vunpack.c.h.b16 %v7035
    %v7699 = vunpack.c.l.b16 %v7036
    %v7700 = vunpack.c.h.b16 %v7036
    %v7701 = vunpack.c.l.b16 %v7037
    %v7702 = vunpack.c.h.b16 %v7037
    %v7703 = vunpack.c.l.b16 %v7038
    %v7704 = vunpack.c.h.b16 %v7038
    %v7705 = vunpack.c.l.b16 %v7039
    %v7706 = vunpack.c.h.b16 %v7039
    %v7707 = vunpack.c.l.b16 %v7040
    %v7708 = vunpack.c.h.b16 %v7040
    %v7709 = vunpack.c.l.b16 %v7041
    %v7710 = vunpack.c.h.b16 %v7041
    %v7711 = vunpack.c.l.b16 %v7042
    %v7712 = vunpack.c.h.b16 %v7042
    %v7713 = vunpack.c.l.b16 %v7043
    %v7714 = vunpack.c.h.b16 %v7043
    %v7715 = vunpack.c.l.b16 %v7044
    %v7716 = vunpack.c.h.b16 %v7044
    %v7717 = vunpack.c.l.b16 %v7045
    %v7718 = vunpack.c.h.b16 %v7045
    %v7719 = vunpack.c.l.b16 %v7046
    %v7720 = vunpack.c.h.b16 %v7046
    %v7721 = vunpack.c.l.b16 %v7047
    %v7722 = vunpack.c.h.b16 %v7047
    %v7723 = vunpack.c.l.b16 %v7048
    %v7724 = vunpack.c.h.b16 %v7048
    %v7725 = vunpack.c.l.b16 %v7049
    %v7726 = vunpack.c.h.b16 %v7049
    %v7727 = vunpack.c.l.b16 %v7050
    %v7728 = vunpack.c.h.b16 %v7050
    %v7729 = vunpack.c.l.b16 %v7051
    %v7730 = vunpack.c.h.b16 %v7051
    %v7731 = vunpack.c.l.b16 %v7052
    %v7732 = vunpack.c.h.b16 %v7052
    %v7733 = vunpack.c.l.b16 %v7053
    %v7734 = vunpack.c.h.b16 %v7053
    %v7735 = vunpack.c.l.b16 %v7054
    %v7736 = vunpack.c.h.b16 %v7054
    %v7737 = vunpack.c.l.b16 %v7055
    %v7738 = vunpack.c.h.b16 %v7055
    %v7739 = vunpack.c.l.b16 %v7056
    %v7740 = vunpack.c.h.b16 %v7056
    %v7741 = vunpack.c.l.b16 %v7057
    %v7742 = vunpack.c.h.b16 %v7057
    %v7743 = vunpack.c.l.b16 %v7058
    %v7744 = vunpack.c.h.b16 %v7058
    %v7745 = vunpack.c.l.b16 %v7059
    %v7746 = vunpack.c.h.b16 %v7059
    %v7747 = vunpack.c.l.b16 %v7060
    %v7748 = vunpack.c.h.b16 %v7060
    %v7749 = vunpack.c.l.b16 %v7061
    %v7750 = vunpack.c.h.b16 %v7061
    %v7751 = vunpack.c.l.b16 %v7062
    %v7752 = vunpack.c.h.b16 %v7062
    %v7753 = vunpack.c.l.b16 %v7063
    %v7754 = vunpack.c.h.b16 %v7063
    %v7755 = vunpack.c.l.b16 %v7064
    %v7756 = vunpack.c.h.b16 %v7064
    %v7757 = vunpack.c.l.b16 %v7065
    %v7758 = vunpack.c.h.b16 %v7065
    %v7759 = vunpack.c.l.b16 %v7066
    %v7760 = vunpack.c.h.b16 %v7066
    %v7761 = vunpack.c.l.b16 %v7067
    %v7762 = vunpack.c.h.b16 %v7067
    %v7763 = vunpack.c.l.b16 %v7068
    %v7764 = vunpack.c.h.b16 %v7068
    %v7765 = vunpack.c.l.b16 %v7069
    %v7766 = vunpack.c.h.b16 %v7069
    %v7767 = vunpack.c.l.b16 %v7070
    %v7768 = vunpack.c.h.b16 %v7070
    %v7769 = vunpack.c.l.b16 %v7071
    %v7770 = vunpack.c.h.b16 %v7071
    %v7771 = vunpack.c.l.b16 %v7072
    %v7772 = vunpack.c.h.b16 %v7072
    %v7773 = vunpack.c.l.b16 %v7073
    %v7774 = vunpack.c.h.b16 %v7073
    %v7775 = vunpack.c.l.b16 %v7074
    %v7776 = vunpack.c.h.b16 %v7074
    %v7777 = vunpack.c.l.b16 %v7075
    %v7778 = vunpack.c.h.b16 %v7075
    %v7779 = vunpack.c.l.b16 %v7076
    %v7780 = vunpack.c.h.b16 %v7076
    %v7781 = vunpack.c.l.b16 %v7077
    %v7782 = vunpack.c.h.b16 %v7077
    %v7783 = vunpack.c.l.b16 %v7078
    %v7784 = vunpack.c.h.b16 %v7078
    %v7785 = vunpack.c.l.b16 %v7079
    %v7786 = vunpack.c.h.b16 %v7079
    %v7787 = vunpack.c.l.b16 %v7080
    %v7788 = vunpack.c.h.b16 %v7080
    %v7789 = vunpack.c.l.b16 %v7081
    %v7790 = vunpack.c.h.b16 %v7081
    %v7791 = vunpack.c.l.b16 %v7082
    %v7792 = vunpack.c.h.b16 %v7082
    %v7793 = vunpack.c.l.b16 %v7083
    %v7794 = vunpack.c.h.b16 %v7083
    %v7795 = vunpack.c.l.b16 %v7084
    %v7796 = vunpack.c.h.b16 %v7084
    %v7797 = vunpack.c.l.b16 %v7085
    %v7798 = vunpack.c.h.b16 %v7085
    %v7799 = vunpack.c.l.b16 %v7086
    %v7800 = vunpack.c.h.b16 %v7086
    %v7801 = vunpack.c.l.b16 %v7087
    %v7802 = vunpack.c.h.b16 %v7087
    %v7803 = vunpack.c.l.b16 %v7088
    %v7804 = vunpack.c.h.b16 %v7088
    %v7805 = vunpack.c.l.b16 %v7089
    %v7806 = vunpack.c.h.b16 %v7089
    %v7807 = vunpack.c.l.b16 %v7090
    %v7808 = vunpack.c.h.b16 %v7090
    %v7809 = vunpack.c.l.b16 %v7091
    %v7810 = vunpack.c.h.b16 %v7091
    %v7811 = vunpack.c.l.b16 %v7092
    %v7812 = vunpack.c.h.b16 %v7092
    %v7813 = vunpack.c.l.b16 %v7093
    %v7814 = vunpack.c.h.b16 %v7093
    %v7815 = vunpack.c.l.b16 %v7094
    %v7816 = vunpack.c.h.b16 %v7094
    %v7817 = vunpack.c.l.b16 %v7095
    %v7818 = vunpack.c.h.b16 %v7095
    %v7819 = vunpack.c.l.b16 %v7096
    %v7820 = vunpack.c.h.b16 %v7096
    %v7821 = vunpack.c.l.b16 %v7097
    %v7822 = vunpack.c.h.b16 %v7097
    %v7823 = vunpack.c.l.b16 %v7098
    %v7824 = vunpack.c.h.b16 %v7098
    %v7825 = vunpack.c.l.b16 %v7099
    %v7826 = vunpack.c.h.b16 %v7099
    %v7827 = vunpack.c.l.b16 %v7100
    %v7828 = vunpack.c.h.b16 %v7100
    %v7829 = vunpack.c.l.b16 %v7101
    %v7830 = vunpack.c.h.b16 %v7101
    %v7831 = vunpack.c.l.b16 %v7102
    %v7832 = vunpack.c.h.b16 %v7102
    %v7833 = vunpack.c.l.b16 %v7103
    %v7834 = vunpack.c.h.b16 %v7103
    %v7835 = vunpack.c.l.b16 %v7104
    %v7836 = vunpack.c.h.b16 %v7104
    %v7837 = vunpack.c.l.b16 %v7105
    %v7838 = vunpack.c.h.b16 %v7105
    %v7839 = vunpack.c.l.b16 %v7106
    %v7840 = vunpack.c.h.b16 %v7106
    %v7841 = vunpack.c.l.b16 %v7107
    %v7842 = vunpack.c.h.b16 %v7107
    %v7843 = vunpack.c.l.b16 %v7108
    %v7844 = vunpack.c.h.b16 %v7108
    %v7845 = vunpack.c.l.b16 %v7109
    %v7846 = vunpack.c.h.b16 %v7109
    %v7847 = vunpack.c.l.b16 %v7110
    %v7848 = vunpack.c.h.b16 %v7110
    %v7849 = vunpack.c.l.b16 %v7111
    %v7850 = vunpack.c.h.b16 %v7111
    %v7851 = vunpack.c.l.b16 %v7112
    %v7852 = vunpack.c.h.b16 %v7112
    %v7853 = vunpack.c.l.b16 %v7113
    %v7854 = vunpack.c.h.b16 %v7113
    %v7855 = vunpack.c.l.b16 %v7114
    %v7856 = vunpack.c.h.b16 %v7114
    %v7857 = vunpack.c.l.b16 %v7115
    %v7858 = vunpack.c.h.b16 %v7115
    %v7859 = vunpack.c.l.b16 %v7116
    %v7860 = vunpack.c.h.b16 %v7116
    %v7861 = vunpack.c.l.b16 %v7117
    %v7862 = vunpack.c.h.b16 %v7117
    %v7863 = vunpack.c.l.b16 %v7118
    %v7864 = vunpack.c.h.b16 %v7118
    %v7865 = vunpack.c.l.b16 %v7119
    %v7866 = vunpack.c.h.b16 %v7119
    %v7867 = vunpack.c.l.b16 %v7120
    %v7868 = vunpack.c.h.b16 %v7120
    %v7869 = vunpack.c.l.b16 %v7121
    %v7870 = vunpack.c.h.b16 %v7121
    %v7871 = vunpack.c.l.b16 %v7122
    %v7872 = vunpack.c.h.b16 %v7122
    %v7873 = vunpack.c.l.b16 %v7123
    %v7874 = vunpack.c.h.b16 %v7123
    %v7875 = vunpack.c.l.b16 %v7124
    %v7876 = vunpack.c.h.b16 %v7124
    %v7877 = vunpack.c.l.b16 %v7125
    %v7878 = vunpack.c.h.b16 %v7125
    %v7879 = vunpack.c.l.b16 %v7126
    %v7880 = vunpack.c.h.b16 %v7126
    %v7881 = vunpack.c.l.b16 %v7127
    %v7882 = vunpack.c.h.b16 %v7127
    %v7883 = vunpack.c.l.b16 %v7128
    %v7884 = vunpack.c.h.b16 %v7128
    %v7885 = vunpack.c.l.b16 %v7129
    %v7886 = vunpack.c.h.b16 %v7129
    %v7887 = vunpack.c.l.b16 %v7130
    %v7888 = vunpack.c.h.b16 %v7130
    %v7889 = vunpack.c.l.b16 %v7131
    %v7890 = vunpack.c.h.b16 %v7131
    %v7891 = vunpack.c.l.b16 %v7132
    %v7892 = vunpack.c.h.b16 %v7132
    %v7893 = vunpack.c.l.b16 %v7133
    %v7894 = vunpack.c.h.b16 %v7133
    %v7895 = vunpack.c.l.b16 %v7134
    %v7896 = vunpack.c.h.b16 %v7134
    %v7897 = vunpack.c.l.b16 %v7135
    %v7898 = vunpack.c.h.b16 %v7135
    %v7899 = vunpack.c.l.b16 %v7136
    %v7900 = vunpack.c.h.b16 %v7136
    %v7901 = vunpack.c.l.b16 %v7137
    %v7902 = vunpack.c.h.b16 %v7137
    %v7903 = vunpack.c.l.b16 %v7138
    %v7904 = vunpack.c.h.b16 %v7138
    %v7905 = vunpack.c.l.b16 %v7139
    %v7906 = vunpack.c.h.b16 %v7139
    %v7907 = vunpack.c.l.b16 %v7140
    %v7908 = vunpack.c.h.b16 %v7140
    %v7909 = vunpack.c.l.b16 %v7141
    %v7910 = vunpack.c.h.b16 %v7141
    %v7911 = vunpack.c.l.b16 %v7142
    %v7912 = vunpack.c.h.b16 %v7142
    %v7913 = vunpack.c.l.b16 %v7143
    %v7914 = vunpack.c.h.b16 %v7143
    %v7915 = vunpack.c.l.b16 %v7144
    %v7916 = vunpack.c.h.b16 %v7144
    %v7917 = vunpack.c.l.b16 %v7145
    %v7918 = vunpack.c.h.b16 %v7145
    %v7919 = vunpack.c.l.b16 %v7146
    %v7920 = vunpack.c.h.b16 %v7146
    %v7921 = vunpack.c.l.b16 %v7147
    %v7922 = vunpack.c.h.b16 %v7147
    %v7923 = vunpack.c.l.b16 %v7148
    %v7924 = vunpack.c.h.b16 %v7148
    %v7925 = vunpack.c.l.b16 %v7149
    %v7926 = vunpack.c.h.b16 %v7149
    %v7927 = vunpack.c.l.b16 %v7150
    %v7928 = vunpack.c.h.b16 %v7150
    %v7929 = vpack.c.b16 %v7421, %v7417
    %v7930 = vpack.c.b16 %v7422, %v7418
    %v7931 = vpack.c.b16 %v7423, %v7419
    %v7932 = vpack.c.b16 %v7424, %v7420
    %v7933 = vpack.c.b16 %v7429, %v7425
    %v7934 = vpack.c.b16 %v7430, %v7426
    %v7935 = vpack.c.b16 %v7431, %v7427
    %v7936 = vpack.c.b16 %v7432, %v7428
    %v7937 = vpack.c.b16 %v7437, %v7433
    %v7938 = vpack.c.b16 %v7438, %v7434
    %v7939 = vpack.c.b16 %v7439, %v7435
    %v7940 = vpack.c.b16 %v7440, %v7436
    %v7941 = vpack.c.b16 %v7445, %v7441
    %v7942 = vpack.c.b16 %v7446, %v7442
    %v7943 = vpack.c.b16 %v7447, %v7443
    %v7944 = vpack.c.b16 %v7448, %v7444
    %v7945 = vpack.c.b16 %v7453, %v7449
    %v7946 = vpack.c.b16 %v7454, %v7450
    %v7947 = vpack.c.b16 %v7455, %v7451
    %v7948 = vpack.c.b16 %v7456, %v7452
    %v7949 = vpack.c.b16 %v7461, %v7457
    %v7950 = vpack.c.b16 %v7462, %v7458
    %v7951 = vpack.c.b16 %v7463, %v7459
    %v7952 = vpack.c.b16 %v7464, %v7460
    %v7953 = vpack.c.b16 %v7469, %v7465
    %v7954 = vpack.c.b16 %v7470, %v7466
    %v7955 = vpack.c.b16 %v7471, %v7467
    %v7956 = vpack.c.b16 %v7472, %v7468
    %v7957 = vpack.c.b16 %v7477, %v7473
    %v7958 = vpack.c.b16 %v7478, %v7474
    %v7959 = vpack.c.b16 %v7479, %v7475
    %v7960 = vpack.c.b16 %v7480, %v7476
    %v7961 = vpack.c.b16 %v7485, %v7481
    %v7962 = vpack.c.b16 %v7486, %v7482
    %v7963 = vpack.c.b16 %v7487, %v7483
    %v7964 = vpack.c.b16 %v7488, %v7484
    %v7965 = vpack.c.b16 %v7493, %v7489
    %v7966 = vpack.c.b16 %v7494, %v7490
    %v7967 = vpack.c.b16 %v7495, %v7491
    %v7968 = vpack.c.b16 %v7496, %v7492
    %v7969 = vpack.c.b16 %v7501, %v7497
    %v7970 = vpack.c.b16 %v7502, %v7498
    %v7971 = vpack.c.b16 %v7503, %v7499
    %v7972 = vpack.c.b16 %v7504, %v7500
    %v7973 = vpack.c.b16 %v7509, %v7505
    %v7974 = vpack.c.b16 %v7510, %v7506
    %v7975 = vpack.c.b16 %v7511, %v7507
    %v7976 = vpack.c.b16 %v7512, %v7508
    %v7977 = vpack.c.b16 %v7517, %v7513
    %v7978 = vpack.c.b16 %v7518, %v7514
    %v7979 = vpack.c.b16 %v7519, %v7515
    %v7980 = vpack.c.b16 %v7520, %v7516
    %v7981 = vpack.c.b16 %v7525, %v7521
    %v7982 = vpack.c.b16 %v7526, %v7522
    %v7983 = vpack.c.b16 %v7527, %v7523
    %v7984 = vpack.c.b16 %v7528, %v7524
    %v7985 = vpack.c.b16 %v7533, %v7529
    %v7986 = vpack.c.b16 %v7534, %v7530
    %v7987 = vpack.c.b16 %v7535, %v7531
    %v7988 = vpack.c.b16 %v7536, %v7532
    %v7989 = vpack.c.b16 %v7541, %v7537
    %v7990 = vpack.c.b16 %v7542, %v7538
    %v7991 = vpack.c.b16 %v7543, %v7539
    %v7992 = vpack.c.b16 %v7544, %v7540
    %v7993 = vpack.c.b16 %v7549, %v7545
    %v7994 = vpack.c.b16 %v7550, %v7546
    %v7995 = vpack.c.b16 %v7551, %v7547
    %v7996 = vpack.c.b16 %v7552, %v7548
    %v7997 = vpack.c.b16 %v7557, %v7553
    %v7998 = vpack.c.b16 %v7558, %v7554
    %v7999 = vpack.c.b16 %v7559, %v7555
    %v8000 = vpack.c.b16 %v7560, %v7556
    %v8001 = vpack.c.b16 %v7565, %v7561
    %v8002 = vpack.c.b16 %v7566, %v7562
    %v8003 = vpack.c.b16 %v7567, %v7563
    %v8004 = vpack.c.b16 %v7568, %v7564
    %v8005 = vpack.c.b16 %v7573, %v7569
    %v8006 = vpack.c.b16 %v7574, %v7570
    %v8007 = vpack.c.b16 %v7575, %v7571
    %v8008 = vpack.c.b16 %v7576, %v7572
    %v8009 = vpack.c.b16 %v7581, %v7577
    %v8010 = vpack.c.b16 %v7582, %v7578
    %v8011 = vpack.c.b16 %v7583, %v7579
    %v8012 = vpack.c.b16 %v7584, %v7580
    %v8013 = vpack.c.b16 %v7589, %v7585
    %v8014 = vpack.c.b16 %v7590, %v7586
    %v8015 = vpack.c.b16 %v7591, %v7587
    %v8016 = vpack.c.b16 %v7592, %v7588
    %v8017 = vpack.c.b16 %v7597, %v7593
    %v8018 = vpack.c.b16 %v7598, %v7594
    %v8019 = vpack.c.b16 %v7599, %v7595
    %v8020 = vpack.c.b16 %v7600, %v7596
    %v8021 = vpack.c.b16 %v7605, %v7601
    %v8022 = vpack.c.b16 %v7606, %v7602
    %v8023 = vpack.c.b16 %v7607, %v7603
    %v8024 = vpack.c.b16 %v7608, %v7604
    %v8025 = vpack.c.b16 %v7613, %v7609
    %v8026 = vpack.c.b16 %v7614, %v7610
    %v8027 = vpack.c.b16 %v7615, %v7611
    %v8028 = vpack.c.b16 %v7616, %v7612
    %v8029 = vpack.c.b16 %v7621, %v7617
    %v8030 = vpack.c.b16 %v7622, %v7618
    %v8031 = vpack.c.b16 %v7623, %v7619
    %v8032 = vpack.c.b16 %v7624, %v7620
    %v8033 = vpack.c.b16 %v7629, %v7625
    %v8034 = vpack.c.b16 %v7630, %v7626
    %v8035 = vpack.c.b16 %v7631, %v7627
    %v8036 = vpack.c.b16 %v7632, %v7628
    %v8037 = vpack.c.b16 %v7637, %v7633
    %v8038 = vpack.c.b16 %v7638, %v7634
    %v8039 = vpack.c.b16 %v7639, %v7635
    %v8040 = vpack.c.b16 %v7640, %v7636
    %v8041 = vpack.c.b16 %v7645, %v7641
    %v8042 = vpack.c.b16 %v7646, %v7642
    %v8043 = vpack.c.b16 %v7647, %v7643
    %v8044 = vpack.c.b16 %v7648, %v7644
    %v8045 = vpack.c.b16 %v7653, %v7649
    %v8046 = vpack.c.b16 %v7654, %v7650
    %v8047 = vpack.c.b16 %v7655, %v7651
    %v8048 = vpack.c.b16 %v7656, %v7652
    %v8049 = vpack.c.b16 %v7661, %v7657
    %v8050 = vpack.c.b16 %v7662, %v7658
    %v8051 = vpack.c.b16 %v7663, %v7659
    %v8052 = vpack.c.b16 %v7664, %v7660
    %v8053 = vpack.c.b16 %v7669, %v7665
    %v8054 = vpack.c.b16 %v7670, %v7666
    %v8055 = vpack.c.b16 %v7671, %v7667
    %v8056 = vpack.c.b16 %v7672, %v7668
    %v8057 = vpack.c.b16 %v7677, %v7673
    %v8058 = vpack.c.b16 %v7678, %v7674
    %v8059 = vpack.c.b16 %v7679, %v7675
    %v8060 = vpack.c.b16 %v7680, %v7676
    %v8061 = vpack.c.b16 %v7685, %v7681
    %v8062 = vpack.c.b16 %v7686, %v7682
    %v8063 = vpack.c.b16 %v7687, %v7683
    %v8064 = vpack.c.b16 %v7688, %v7684
    %v8065 = vpack.c.b16 %v7693, %v7689
    %v8066 = vpack.c.b16 %v7694, %v7690
    %v8067 = vpack.c.b16 %v7695, %v7691
    %v8068 = vpack.c.b16 %v7696, %v7692
    %v8069 = vpack.c.b16 %v7701, %v7697
    %v8070 = vpack.c.b16 %v7702, %v7698
    %v8071 = vpack.c.b16 %v7703, %v7699
    %v8072 = vpack.c.b16 %v7704, %v7700
    %v8073 = vpack.c.b16 %v7709, %v7705
    %v8074 = vpack.c.b16 %v7710, %v7706
    %v8075 = vpack.c.b16 %v7711, %v7707
    %v8076 = vpack.c.b16 %v7712, %v7708
    %v8077 = vpack.c.b16 %v7717, %v7713
    %v8078 = vpack.c.b16 %v7718, %v7714
    %v8079 = vpack.c.b16 %v7719, %v7715
    %v8080 = vpack.c.b16 %v7720, %v7716
    %v8081 = vpack.c.b16 %v7725, %v7721
    %v8082 = vpack.c.b16 %v7726, %v7722
    %v8083 = vpack.c.b16 %v7727, %v7723
    %v8084 = vpack.c.b16 %v7728, %v7724
    %v8085 = vpack.c.b16 %v7733, %v7729
    %v8086 = vpack.c.b16 %v7734, %v7730
    %v8087 = vpack.c.b16 %v7735, %v7731
    %v8088 = vpack.c.b16 %v7736, %v7732
    %v8089 = vpack.c.b16 %v7741, %v7737
    %v8090 = vpack.c.b16 %v7742, %v7738
    %v8091 = vpack.c.b16 %v7743, %v7739
    %v8092 = vpack.c.b16 %v7744, %v7740
    %v8093 = vpack.c.b16 %v7749, %v7745
    %v8094 = vpack.c.b16 %v7750, %v7746
    %v8095 = vpack.c.b16 %v7751, %v7747
    %v8096 = vpack.c.b16 %v7752, %v7748
    %v8097 = vpack.c.b16 %v7757, %v7753
    %v8098 = vpack.c.b16 %v7758, %v7754
    %v8099 = vpack.c.b16 %v7759, %v7755
    %v8100 = vpack.c.b16 %v7760, %v7756
    %v8101 = vpack.c.b16 %v7765, %v7761
    %v8102 = vpack.c.b16 %v7766, %v7762
    %v8103 = vpack.c.b16 %v7767, %v7763
    %v8104 = vpack.c.b16 %v7768, %v7764
    %v8105 = vpack.c.b16 %v7773, %v7769
    %v8106 = vpack.c.b16 %v7774, %v7770
    %v8107 = vpack.c.b16 %v7775, %v7771
    %v8108 = vpack.c.b16 %v7776, %v7772
    %v8109 = vpack.c.b16 %v7781, %v7777
    %v8110 = vpack.c.b16 %v7782, %v7778
    %v8111 = vpack.c.b16 %v7783, %v7779
    %v8112 = vpack.c.b16 %v7784, %v7780
    %v8113 = vpack.c.b16 %v7789, %v7785
    %v8114 = vpack.c.b16 %v7790, %v7786
    %v8115 = vpack.c.b16 %v7791, %v7787
    %v8116 = vpack.c.b16 %v7792, %v7788
    %v8117 = vpack.c.b16 %v7797, %v7793
    %v8118 = vpack.c.b16 %v7798, %v7794
    %v8119 = vpack.c.b16 %v7799, %v7795
    %v8120 = vpack.c.b16 %v7800, %v7796
    %v8121 = vpack.c.b16 %v7805, %v7801
    %v8122 = vpack.c.b16 %v7806, %v7802
    %v8123 = vpack.c.b16 %v7807, %v7803
    %v8124 = vpack.c.b16 %v7808, %v7804
    %v8125 = vpack.c.b16 %v7813, %v7809
    %v8126 = vpack.c.b16 %v7814, %v7810
    %v8127 = vpack.c.b16 %v7815, %v7811
    %v8128 = vpack.c.b16 %v7816, %v7812
    %v8129 = vpack.c.b16 %v7821, %v7817
    %v8130 = vpack.c.b16 %v7822, %v7818
    %v8131 = vpack.c.b16 %v7823, %v7819
    %v8132 = vpack.c.b16 %v7824, %v7820
    %v8133 = vpack.c.b16 %v7829, %v7825
    %v8134 = vpack.c.b16 %v7830, %v7826
    %v8135 = vpack.c.b16 %v7831, %v7827
    %v8136 = vpack.c.b16 %v7832, %v7828
    %v8137 = vpack.c.b16 %v7837, %v7833
    %v8138 = vpack.c.b16 %v7838, %v7834
    %v8139 = vpack.c.b16 %v7839, %v7835
    %v8140 = vpack.c.b16 %v7840, %v7836
    %v8141 = vpack.c.b16 %v7845, %v7841
    %v8142 = vpack.c.b16 %v7846, %v7842
    %v8143 = vpack.c.b16 %v7847, %v7843
    %v8144 = vpack.c.b16 %v7848, %v7844
    %v8145 = vpack.c.b16 %v7853, %v7849
    %v8146 = vpack.c.b16 %v7854, %v7850
    %v8147 = vpack.c.b16 %v7855, %v7851
    %v8148 = vpack.c.b16 %v7856, %v7852
    %v8149 = vpack.c.b16 %v7861, %v7857
    %v8150 = vpack.c.b16 %v7862, %v7858
    %v8151 = vpack.c.b16 %v7863, %v7859
    %v8152 = vpack.c.b16 %v7864, %v7860
    %v8153 = vpack.c.b16 %v7869, %v7865
    %v8154 = vpack.c.b16 %v7870, %v7866
    %v8155 = vpack.c.b16 %v7871, %v7867
    %v8156 = vpack.c.b16 %v7872, %v7868
    %v8157 = vpack.c.b16 %v7877, %v7873
    %v8158 = vpack.c.b16 %v7878, %v7874
    %v8159 = vpack.c.b16 %v7879, %v7875
    %v8160 = vpack.c.b16 %v7880, %v7876
    %v8161 = vpack.c.b16 %v7885, %v7881
    %v8162 = vpack.c.b16 %v7886, %v7882
    %v8163 = vpack.c.b16 %v7887, %v7883
    %v8164 = vpack.c.b16 %v7888, %v7884
    %v8165 = vpack.c.b16 %v7893, %v7889
    %v8166 = vpack.c.b16 %v7894, %v7890
    %v8167 = vpack.c.b16 %v7895, %v7891
    %v8168 = vpack.c.b16 %v7896, %v7892
    %v8169 = vpack.c.b16 %v7901, %v7897
    %v8170 = vpack.c.b16 %v7902, %v7898
    %v8171 = vpack.c.b16 %v7903, %v7899
    %v8172 = vpack.c.b16 %v7904, %v7900
    %v8173 = vpack.c.b16 %v7909, %v7905
    %v8174 = vpack.c.b16 %v7910, %v7906
    %v8175 = vpack.c.b16 %v7911, %v7907
    %v8176 = vpack.c.b16 %v7912, %v7908
    %v8177 = vpack.c.b16 %v7917, %v7913
    %v8178 = vpack.c.b16 %v7918, %v7914
    %v8179 = vpack.c.b16 %v7919, %v7915
    %v8180 = vpack.c.b16 %v7920, %v7916
    %v8181 = vpack.c.b16 %v7925, %v7921
    %v8182 = vpack.c.b16 %v7926, %v7922
    %v8183 = vpack.c.b16 %v7927, %v7923
    %v8184 = vpack.c.b16 %v7928, %v7924
    %8441 = vmatpush.bf16.msra.mxu0 %v7957
    %8442 = vmatpush.bf16.msra.mxu0 %v7953
    %8443 = vmatpush.bf16.msra.mxu0 %v7949
    %8444 = vmatpush.bf16.msra.mxu0 %v7945
    %8445 = vmatpush.bf16.msra.mxu0 %v7941
    %8446 = vmatpush.bf16.msra.mxu0 %v7937
    %8447 = vmatpush.bf16.msra.mxu0 %v7933
    %8448 = vmatpush.bf16.msra.mxu0 %v7929
    %8449 = vmatmul.bf16.gmra.mxu0 %v6884
    %v8450 = vpop.f32.mrf.mxu0
    %v8451 = vadd.f32 %v7153, %v8450
    %v8452 = vpop.f32.mrf.mxu0
    %8453 = vdwg.mxu0
    %8454 = vmatpush.bf16.msra.mxu0 %v7989
    %8455 = vmatpush.bf16.msra.mxu0 %v7985
    %8456 = vmatpush.bf16.msra.mxu0 %v7981
    %8457 = vmatpush.bf16.msra.mxu0 %v7977
    %8458 = vmatpush.bf16.msra.mxu0 %v7973
    %8459 = vmatpush.bf16.msra.mxu0 %v7969
    %8460 = vmatpush.bf16.msra.mxu0 %v7965
    %8461 = vmatpush.bf16.msra.mxu0 %v7961
    %8462 = vmatmul.bf16.gmra.mxu0 %v6885
    %v8463 = vpop.f32.mrf.mxu0
    %v8464 = vadd.f32 %v8451, %v8463
    %v8465 = vpop.f32.mrf.mxu0
    %8466 = vdwg.mxu0
    %8467 = vmatpush.bf16.msra.mxu0 %v8021
    %8468 = vmatpush.bf16.msra.mxu0 %v8017
    %8469 = vmatpush.bf16.msra.mxu0 %v8013
    %8470 = vmatpush.bf16.msra.mxu0 %v8009
    %8471 = vmatpush.bf16.msra.mxu0 %v8005
    %8472 = vmatpush.bf16.msra.mxu0 %v8001
    %8473 = vmatpush.bf16.msra.mxu0 %v7997
    %8474 = vmatpush.bf16.msra.mxu0 %v7993
    %8475 = vmatmul.bf16.gmra.mxu0 %v6886
    %v8476 = vpop.f32.mrf.mxu0
    %v8477 = vadd.f32 %v8464, %v8476
    %v8478 = vpop.f32.mrf.mxu0
    %8479 = vdwg.mxu0
    %8480 = vmatpush.bf16.msra.mxu0 %v8053
    %8481 = vmatpush.bf16.msra.mxu0 %v8049
    %8482 = vmatpush.bf16.msra.mxu0 %v8045
    %8483 = vmatpush.bf16.msra.mxu0 %v8041
    %8484 = vmatpush.bf16.msra.mxu0 %v8037
    %8485 = vmatpush.bf16.msra.mxu0 %v8033
    %8486 = vmatpush.bf16.msra.mxu0 %v8029
    %8487 = vmatpush.bf16.msra.mxu0 %v8025
    %8488 = vmatmul.bf16.gmra.mxu0 %v6887
    %v8489 = vpop.f32.mrf.mxu0
    %v8490 = vadd.f32 %v8477, %v8489
    %v8491 = vpop.f32.mrf.mxu0
    %8492 = vdwg.mxu0
    %8493 = vmatpush.bf16.msra.mxu0 %v8085
    %8494 = vmatpush.bf16.msra.mxu0 %v8081
    %8495 = vmatpush.bf16.msra.mxu0 %v8077
    %8496 = vmatpush.bf16.msra.mxu0 %v8073
    %8497 = vmatpush.bf16.msra.mxu0 %v8069
    %8498 = vmatpush.bf16.msra.mxu0 %v8065
    %8499 = vmatpush.bf16.msra.mxu0 %v8061
    %8500 = vmatpush.bf16.msra.mxu0 %v8057
    %8501 = vmatmul.bf16.gmra.mxu0 %v6888
    %v8502 = vpop.f32.mrf.mxu0
    %v8503 = vadd.f32 %v8490, %v8502
    %v8504 = vpop.f32.mrf.mxu0
    %8505 = vdwg.mxu0
    %8506 = vmatpush.bf16.msra.mxu0 %v8117
    %8507 = vmatpush.bf16.msra.mxu0 %v8113
    %8508 = vmatpush.bf16.msra.mxu0 %v8109
    %8509 = vmatpush.bf16.msra.mxu0 %v8105
    %8510 = vmatpush.bf16.msra.mxu0 %v8101
    %8511 = vmatpush.bf16.msra.mxu0 %v8097
    %8512 = vmatpush.bf16.msra.mxu0 %v8093
    %8513 = vmatpush.bf16.msra.mxu0 %v8089
    %8514 = vmatmul.bf16.gmra.mxu0 %v6889
    %v8515 = vpop.f32.mrf.mxu0
    %v8516 = vadd.f32 %v8503, %v8515
    %v8517 = vpop.f32.mrf.mxu0
    %8518 = vdwg.mxu0
    %8519 = vmatpush.bf16.msra.mxu0 %v8149
    %8520 = vmatpush.bf16.msra.mxu0 %v8145
    %8521 = vmatpush.bf16.msra.mxu0 %v8141
    %8522 = vmatpush.bf16.msra.mxu0 %v8137
    %8523 = vmatpush.bf16.msra.mxu0 %v8133
    %8524 = vmatpush.bf16.msra.mxu0 %v8129
    %8525 = vmatpush.bf16.msra.mxu0 %v8125
    %8526 = vmatpush.bf16.msra.mxu0 %v8121
    %8527 = vmatmul.bf16.gmra.mxu0 %v6890
    %v8528 = vpop.f32.mrf.mxu0
    %v8529 = vadd.f32 %v8516, %v8528
    %v8530 = vpop.f32.mrf.mxu0
    %8531 = vdwg.mxu0
    %8532 = vmatpush.bf16.msra.mxu0 %v8181
    %8533 = vmatpush.bf16.msra.mxu0 %v8177
    %8534 = vmatpush.bf16.msra.mxu0 %v8173
    %8535 = vmatpush.bf16.msra.mxu0 %v8169
    %8536 = vmatpush.bf16.msra.mxu0 %v8165
    %8537 = vmatpush.bf16.msra.mxu0 %v8161
    %8538 = vmatpush.bf16.msra.mxu0 %v8157
    %8539 = vmatpush.bf16.msra.mxu0 %v8153
    %8540 = vmatmul.bf16.gmra.mxu0 %v6891
    %v8541 = vpop.f32.mrf.mxu0
    %v8542 = vadd.f32 %v8529, %v8541
    %v8543 = vpop.f32.mrf.mxu0
    %8544 = vdwg.mxu0
    %8545 = vmatpush.bf16.msra.mxu0 %v7958
    %8546 = vmatpush.bf16.msra.mxu0 %v7954
    %8547 = vmatpush.bf16.msra.mxu0 %v7950
    %8548 = vmatpush.bf16.msra.mxu0 %v7946
    %8549 = vmatpush.bf16.msra.mxu0 %v7942
    %8550 = vmatpush.bf16.msra.mxu0 %v7938
    %8551 = vmatpush.bf16.msra.mxu0 %v7934
    %8552 = vmatpush.bf16.msra.mxu0 %v7930
    %8553 = vmatmul.bf16.gmra.mxu0 %v6884
    %v8554 = vpop.f32.mrf.mxu0
    %v8555 = vadd.f32 %v7154, %v8554
    %v8556 = vpop.f32.mrf.mxu0
    %8557 = vdwg.mxu0
    %8558 = vmatpush.bf16.msra.mxu0 %v7990
    %8559 = vmatpush.bf16.msra.mxu0 %v7986
    %8560 = vmatpush.bf16.msra.mxu0 %v7982
    %8561 = vmatpush.bf16.msra.mxu0 %v7978
    %8562 = vmatpush.bf16.msra.mxu0 %v7974
    %8563 = vmatpush.bf16.msra.mxu0 %v7970
    %8564 = vmatpush.bf16.msra.mxu0 %v7966
    %8565 = vmatpush.bf16.msra.mxu0 %v7962
    %8566 = vmatmul.bf16.gmra.mxu0 %v6885
    %v8567 = vpop.f32.mrf.mxu0
    %v8568 = vadd.f32 %v8555, %v8567
    %v8569 = vpop.f32.mrf.mxu0
    %8570 = vdwg.mxu0
    %8571 = vmatpush.bf16.msra.mxu0 %v8022
    %8572 = vmatpush.bf16.msra.mxu0 %v8018
    %8573 = vmatpush.bf16.msra.mxu0 %v8014
    %8574 = vmatpush.bf16.msra.mxu0 %v8010
    %8575 = vmatpush.bf16.msra.mxu0 %v8006
    %8576 = vmatpush.bf16.msra.mxu0 %v8002
    %8577 = vmatpush.bf16.msra.mxu0 %v7998
    %8578 = vmatpush.bf16.msra.mxu0 %v7994
    %8579 = vmatmul.bf16.gmra.mxu0 %v6886
    %v8580 = vpop.f32.mrf.mxu0
    %v8581 = vadd.f32 %v8568, %v8580
    %v8582 = vpop.f32.mrf.mxu0
    %8583 = vdwg.mxu0
    %8584 = vmatpush.bf16.msra.mxu0 %v8054
    %8585 = vmatpush.bf16.msra.mxu0 %v8050
    %8586 = vmatpush.bf16.msra.mxu0 %v8046
    %8587 = vmatpush.bf16.msra.mxu0 %v8042
    %8588 = vmatpush.bf16.msra.mxu0 %v8038
    %8589 = vmatpush.bf16.msra.mxu0 %v8034
    %8590 = vmatpush.bf16.msra.mxu0 %v8030
    %8591 = vmatpush.bf16.msra.mxu0 %v8026
    %8592 = vmatmul.bf16.gmra.mxu0 %v6887
    %v8593 = vpop.f32.mrf.mxu0
    %v8594 = vadd.f32 %v8581, %v8593
    %v8595 = vpop.f32.mrf.mxu0
    %8596 = vdwg.mxu0
    %8597 = vmatpush.bf16.msra.mxu0 %v8086
    %8598 = vmatpush.bf16.msra.mxu0 %v8082
    %8599 = vmatpush.bf16.msra.mxu0 %v8078
    %8600 = vmatpush.bf16.msra.mxu0 %v8074
    %8601 = vmatpush.bf16.msra.mxu0 %v8070
    %8602 = vmatpush.bf16.msra.mxu0 %v8066
    %8603 = vmatpush.bf16.msra.mxu0 %v8062
    %8604 = vmatpush.bf16.msra.mxu0 %v8058
    %8605 = vmatmul.bf16.gmra.mxu0 %v6888
    %v8606 = vpop.f32.mrf.mxu0
    %v8607 = vadd.f32 %v8594, %v8606
    %v8608 = vpop.f32.mrf.mxu0
    %8609 = vdwg.mxu0
    %8610 = vmatpush.bf16.msra.mxu0 %v8118
    %8611 = vmatpush.bf16.msra.mxu0 %v8114
    %8612 = vmatpush.bf16.msra.mxu0 %v8110
    %8613 = vmatpush.bf16.msra.mxu0 %v8106
    %8614 = vmatpush.bf16.msra.mxu0 %v8102
    %8615 = vmatpush.bf16.msra.mxu0 %v8098
    %8616 = vmatpush.bf16.msra.mxu0 %v8094
    %8617 = vmatpush.bf16.msra.mxu0 %v8090
    %8618 = vmatmul.bf16.gmra.mxu0 %v6889
    %v8619 = vpop.f32.mrf.mxu0
    %v8620 = vadd.f32 %v8607, %v8619
    %v8621 = vpop.f32.mrf.mxu0
    %8622 = vdwg.mxu0
    %8623 = vmatpush.bf16.msra.mxu0 %v8150
    %8624 = vmatpush.bf16.msra.mxu0 %v8146
    %8625 = vmatpush.bf16.msra.mxu0 %v8142
    %8626 = vmatpush.bf16.msra.mxu0 %v8138
    %8627 = vmatpush.bf16.msra.mxu0 %v8134
    %8628 = vmatpush.bf16.msra.mxu0 %v8130
    %8629 = vmatpush.bf16.msra.mxu0 %v8126
    %8630 = vmatpush.bf16.msra.mxu0 %v8122
    %8631 = vmatmul.bf16.gmra.mxu0 %v6890
    %v8632 = vpop.f32.mrf.mxu0
    %v8633 = vadd.f32 %v8620, %v8632
    %v8634 = vpop.f32.mrf.mxu0
    %8635 = vdwg.mxu0
    %8636 = vmatpush.bf16.msra.mxu0 %v8182
    %8637 = vmatpush.bf16.msra.mxu0 %v8178
    %8638 = vmatpush.bf16.msra.mxu0 %v8174
    %8639 = vmatpush.bf16.msra.mxu0 %v8170
    %8640 = vmatpush.bf16.msra.mxu0 %v8166
    %8641 = vmatpush.bf16.msra.mxu0 %v8162
    %8642 = vmatpush.bf16.msra.mxu0 %v8158
    %8643 = vmatpush.bf16.msra.mxu0 %v8154
    %8644 = vmatmul.bf16.gmra.mxu0 %v6891
    %v8645 = vpop.f32.mrf.mxu0
    %v8646 = vadd.f32 %v8633, %v8645
    %v8647 = vpop.f32.mrf.mxu0
    %8648 = vdwg.mxu0
    %8649 = vmatpush.bf16.msra.mxu0 %v7959
    %8650 = vmatpush.bf16.msra.mxu0 %v7955
    %8651 = vmatpush.bf16.msra.mxu0 %v7951
    %8652 = vmatpush.bf16.msra.mxu0 %v7947
    %8653 = vmatpush.bf16.msra.mxu0 %v7943
    %8654 = vmatpush.bf16.msra.mxu0 %v7939
    %8655 = vmatpush.bf16.msra.mxu0 %v7935
    %8656 = vmatpush.bf16.msra.mxu0 %v7931
    %8657 = vmatmul.bf16.gmra.mxu0 %v6884
    %v8658 = vpop.f32.mrf.mxu0
    %v8659 = vadd.f32 %v7155, %v8658
    %v8660 = vpop.f32.mrf.mxu0
    %8661 = vdwg.mxu0
    %8662 = vmatpush.bf16.msra.mxu0 %v7991
    %8663 = vmatpush.bf16.msra.mxu0 %v7987
    %8664 = vmatpush.bf16.msra.mxu0 %v7983
    %8665 = vmatpush.bf16.msra.mxu0 %v7979
    %8666 = vmatpush.bf16.msra.mxu0 %v7975
    %8667 = vmatpush.bf16.msra.mxu0 %v7971
    %8668 = vmatpush.bf16.msra.mxu0 %v7967
    %8669 = vmatpush.bf16.msra.mxu0 %v7963
    %8670 = vmatmul.bf16.gmra.mxu0 %v6885
    %v8671 = vpop.f32.mrf.mxu0
    %v8672 = vadd.f32 %v8659, %v8671
    %v8673 = vpop.f32.mrf.mxu0
    %8674 = vdwg.mxu0
    %8675 = vmatpush.bf16.msra.mxu0 %v8023
    %8676 = vmatpush.bf16.msra.mxu0 %v8019
    %8677 = vmatpush.bf16.msra.mxu0 %v8015
    %8678 = vmatpush.bf16.msra.mxu0 %v8011
    %8679 = vmatpush.bf16.msra.mxu0 %v8007
    %8680 = vmatpush.bf16.msra.mxu0 %v8003
    %8681 = vmatpush.bf16.msra.mxu0 %v7999
    %8682 = vmatpush.bf16.msra.mxu0 %v7995
    %8683 = vmatmul.bf16.gmra.mxu0 %v6886
    %v8684 = vpop.f32.mrf.mxu0
    %v8685 = vadd.f32 %v8672, %v8684
    %v8686 = vpop.f32.mrf.mxu0
    %8687 = vdwg.mxu0
    %8688 = vmatpush.bf16.msra.mxu0 %v8055
    %8689 = vmatpush.bf16.msra.mxu0 %v8051
    %8690 = vmatpush.bf16.msra.mxu0 %v8047
    %8691 = vmatpush.bf16.msra.mxu0 %v8043
    %8692 = vmatpush.bf16.msra.mxu0 %v8039
    %8693 = vmatpush.bf16.msra.mxu0 %v8035
    %8694 = vmatpush.bf16.msra.mxu0 %v8031
    %8695 = vmatpush.bf16.msra.mxu0 %v8027
    %8696 = vmatmul.bf16.gmra.mxu0 %v6887
    %v8697 = vpop.f32.mrf.mxu0
    %v8698 = vadd.f32 %v8685, %v8697
    %v8699 = vpop.f32.mrf.mxu0
    %8700 = vdwg.mxu0
    %8701 = vmatpush.bf16.msra.mxu0 %v8087
    %8702 = vmatpush.bf16.msra.mxu0 %v8083
    %8703 = vmatpush.bf16.msra.mxu0 %v8079
    %8704 = vmatpush.bf16.msra.mxu0 %v8075
    %8705 = vmatpush.bf16.msra.mxu0 %v8071
    %8706 = vmatpush.bf16.msra.mxu0 %v8067
    %8707 = vmatpush.bf16.msra.mxu0 %v8063
    %8708 = vmatpush.bf16.msra.mxu0 %v8059
    %8709 = vmatmul.bf16.gmra.mxu0 %v6888
    %v8710 = vpop.f32.mrf.mxu0
    %v8711 = vadd.f32 %v8698, %v8710
    %v8712 = vpop.f32.mrf.mxu0
    %8713 = vdwg.mxu0
    %8714 = vmatpush.bf16.msra.mxu0 %v8119
    %8715 = vmatpush.bf16.msra.mxu0 %v8115
    %8716 = vmatpush.bf16.msra.mxu0 %v8111
    %8717 = vmatpush.bf16.msra.mxu0 %v8107
    %8718 = vmatpush.bf16.msra.mxu0 %v8103
    %8719 = vmatpush.bf16.msra.mxu0 %v8099
    %8720 = vmatpush.bf16.msra.mxu0 %v8095
    %8721 = vmatpush.bf16.msra.mxu0 %v8091
    %8722 = vmatmul.bf16.gmra.mxu0 %v6889
    %v8723 = vpop.f32.mrf.mxu0
    %v8724 = vadd.f32 %v8711, %v8723
    %v8725 = vpop.f32.mrf.mxu0
    %8726 = vdwg.mxu0
    %8727 = vmatpush.bf16.msra.mxu0 %v8151
    %8728 = vmatpush.bf16.msra.mxu0 %v8147
    %8729 = vmatpush.bf16.msra.mxu0 %v8143
    %8730 = vmatpush.bf16.msra.mxu0 %v8139
    %8731 = vmatpush.bf16.msra.mxu0 %v8135
    %8732 = vmatpush.bf16.msra.mxu0 %v8131
    %8733 = vmatpush.bf16.msra.mxu0 %v8127
    %8734 = vmatpush.bf16.msra.mxu0 %v8123
    %8735 = vmatmul.bf16.gmra.mxu0 %v6890
    %v8736 = vpop.f32.mrf.mxu0
    %v8737 = vadd.f32 %v8724, %v8736
    %v8738 = vpop.f32.mrf.mxu0
    %8739 = vdwg.mxu0
    %8740 = vmatpush.bf16.msra.mxu0 %v8183
    %8741 = vmatpush.bf16.msra.mxu0 %v8179
    %8742 = vmatpush.bf16.msra.mxu0 %v8175
    %8743 = vmatpush.bf16.msra.mxu0 %v8171
    %8744 = vmatpush.bf16.msra.mxu0 %v8167
    %8745 = vmatpush.bf16.msra.mxu0 %v8163
    %8746 = vmatpush.bf16.msra.mxu0 %v8159
    %8747 = vmatpush.bf16.msra.mxu0 %v8155
    %8748 = vmatmul.bf16.gmra.mxu0 %v6891
    %v8749 = vpop.f32.mrf.mxu0
    %v8750 = vadd.f32 %v8737, %v8749
    %v8751 = vpop.f32.mrf.mxu0
    %8752 = vdwg.mxu0
    %8753 = vmatpush.bf16.msra.mxu0 %v7960
    %8754 = vmatpush.bf16.msra.mxu0 %v7956
    %8755 = vmatpush.bf16.msra.mxu0 %v7952
    %8756 = vmatpush.bf16.msra.mxu0 %v7948
    %8757 = vmatpush.bf16.msra.mxu0 %v7944
    %8758 = vmatpush.bf16.msra.mxu0 %v7940
    %8759 = vmatpush.bf16.msra.mxu0 %v7936
    %8760 = vmatpush.bf16.msra.mxu0 %v7932
    %8761 = vmatmul.bf16.gmra.mxu0 %v6884
    %v8762 = vpop.f32.mrf.mxu0
    %v8763 = vadd.f32 %v7156, %v8762
    %v8764 = vpop.f32.mrf.mxu0
    %8765 = vdwg.mxu0
    %8766 = vmatpush.bf16.msra.mxu0 %v7992
    %8767 = vmatpush.bf16.msra.mxu0 %v7988
    %8768 = vmatpush.bf16.msra.mxu0 %v7984
    %8769 = vmatpush.bf16.msra.mxu0 %v7980
    %8770 = vmatpush.bf16.msra.mxu0 %v7976
    %8771 = vmatpush.bf16.msra.mxu0 %v7972
    %8772 = vmatpush.bf16.msra.mxu0 %v7968
    %8773 = vmatpush.bf16.msra.mxu0 %v7964
    %8774 = vmatmul.bf16.gmra.mxu0 %v6885
    %v8775 = vpop.f32.mrf.mxu0
    %v8776 = vadd.f32 %v8763, %v8775
    %v8777 = vpop.f32.mrf.mxu0
    %8778 = vdwg.mxu0
    %8779 = vmatpush.bf16.msra.mxu0 %v8024
    %8780 = vmatpush.bf16.msra.mxu0 %v8020
    %8781 = vmatpush.bf16.msra.mxu0 %v8016
    %8782 = vmatpush.bf16.msra.mxu0 %v8012
    %8783 = vmatpush.bf16.msra.mxu0 %v8008
    %8784 = vmatpush.bf16.msra.mxu0 %v8004
    %8785 = vmatpush.bf16.msra.mxu0 %v8000
    %8786 = vmatpush.bf16.msra.mxu0 %v7996
    %8787 = vmatmul.bf16.gmra.mxu0 %v6886
    %v8788 = vpop.f32.mrf.mxu0
    %v8789 = vadd.f32 %v8776, %v8788
    %v8790 = vpop.f32.mrf.mxu0
    %8791 = vdwg.mxu0
    %8792 = vmatpush.bf16.msra.mxu0 %v8056
    %8793 = vmatpush.bf16.msra.mxu0 %v8052
    %8794 = vmatpush.bf16.msra.mxu0 %v8048
    %8795 = vmatpush.bf16.msra.mxu0 %v8044
    %8796 = vmatpush.bf16.msra.mxu0 %v8040
    %8797 = vmatpush.bf16.msra.mxu0 %v8036
    %8798 = vmatpush.bf16.msra.mxu0 %v8032
    %8799 = vmatpush.bf16.msra.mxu0 %v8028
    %8800 = vmatmul.bf16.gmra.mxu0 %v6887
    %v8801 = vpop.f32.mrf.mxu0
    %v8802 = vadd.f32 %v8789, %v8801
    %v8803 = vpop.f32.mrf.mxu0
    %8804 = vdwg.mxu0
    %8805 = vmatpush.bf16.msra.mxu0 %v8088
    %8806 = vmatpush.bf16.msra.mxu0 %v8084
    %8807 = vmatpush.bf16.msra.mxu0 %v8080
    %8808 = vmatpush.bf16.msra.mxu0 %v8076
    %8809 = vmatpush.bf16.msra.mxu0 %v8072
    %8810 = vmatpush.bf16.msra.mxu0 %v8068
    %8811 = vmatpush.bf16.msra.mxu0 %v8064
    %8812 = vmatpush.bf16.msra.mxu0 %v8060
    %8813 = vmatmul.bf16.gmra.mxu0 %v6888
    %v8814 = vpop.f32.mrf.mxu0
    %v8815 = vadd.f32 %v8802, %v8814
    %v8816 = vpop.f32.mrf.mxu0
    %8817 = vdwg.mxu0
    %8818 = vmatpush.bf16.msra.mxu0 %v8120
    %8819 = vmatpush.bf16.msra.mxu0 %v8116
    %8820 = vmatpush.bf16.msra.mxu0 %v8112
    %8821 = vmatpush.bf16.msra.mxu0 %v8108
    %8822 = vmatpush.bf16.msra.mxu0 %v8104
    %8823 = vmatpush.bf16.msra.mxu0 %v8100
    %8824 = vmatpush.bf16.msra.mxu0 %v8096
    %8825 = vmatpush.bf16.msra.mxu0 %v8092
    %8826 = vmatmul.bf16.gmra.mxu0 %v6889
    %v8827 = vpop.f32.mrf.mxu0
    %v8828 = vadd.f32 %v8815, %v8827
    %v8829 = vpop.f32.mrf.mxu0
    %8830 = vdwg.mxu0
    %8831 = vmatpush.bf16.msra.mxu0 %v8152
    %8832 = vmatpush.bf16.msra.mxu0 %v8148
    %8833 = vmatpush.bf16.msra.mxu0 %v8144
    %8834 = vmatpush.bf16.msra.mxu0 %v8140
    %8835 = vmatpush.bf16.msra.mxu0 %v8136
    %8836 = vmatpush.bf16.msra.mxu0 %v8132
    %8837 = vmatpush.bf16.msra.mxu0 %v8128
    %8838 = vmatpush.bf16.msra.mxu0 %v8124
    %8839 = vmatmul.bf16.gmra.mxu0 %v6890
    %v8840 = vpop.f32.mrf.mxu0
    %v8841 = vadd.f32 %v8828, %v8840
    %v8842 = vpop.f32.mrf.mxu0
    %8843 = vdwg.mxu0
    %8844 = vmatpush.bf16.msra.mxu0 %v8184
    %8845 = vmatpush.bf16.msra.mxu0 %v8180
    %8846 = vmatpush.bf16.msra.mxu0 %v8176
    %8847 = vmatpush.bf16.msra.mxu0 %v8172
    %8848 = vmatpush.bf16.msra.mxu0 %v8168
    %8849 = vmatpush.bf16.msra.mxu0 %v8164
    %8850 = vmatpush.bf16.msra.mxu0 %v8160
    %8851 = vmatpush.bf16.msra.mxu0 %v8156
    %8852 = vmatmul.bf16.gmra.mxu0 %v6891
    %v8853 = vpop.f32.mrf.mxu0
    %v8854 = vadd.f32 %v8841, %v8853
    %v8855 = vpop.f32.mrf.mxu0
    %8856 = vdwg.mxu0
    %v8857 = vmul.f32 %v8542, 0.01
    %v8858 = vmul.f32 %v8646, 0.01
    %v8859 = vmul.f32 %v8750, 0.01
    %v8860 = vmul.f32 %v8854, 0.01
    %v8861 = vmax.f32 %v8542, %v8857
    %v8862 = vmax.f32 %v8646, %v8858
    %v8863 = vmax.f32 %v8750, %v8859
    %v8864 = vmax.f32 %v8854, %v8860
    %v8865 = vpack.c.bf16 %v8861, %v8861
    %v8866 = vpack.c.bf16 %v8862, %v8862
    %v8867 = vpack.c.bf16 %v8863, %v8863
    %v8868 = vpack.c.bf16 %v8864, %v8864
    %v8869 = vld [vmem:[#allocation17] sm:$0xff]
    %v8870 = vld [vmem:[#allocation17 + $0x8] sm:$0xff]
    %v8871 = vld [vmem:[#allocation17 + $0x10] sm:$0xff]
    %v8872 = vld [vmem:[#allocation17 + $0x18] sm:$0xff]
    %v8873 = vld [vmem:[#allocation17 + $0x20] sm:$0xff]
    %v8874 = vld [vmem:[#allocation17 + $0x28] sm:$0xff]
    %v8875 = vld [vmem:[#allocation17 + $0x30] sm:$0xff]
    %v8876 = vld [vmem:[#allocation17 + $0x38] sm:$0xff]
    %v8877 = vld [vmem:[#allocation17 + $0x40] sm:$0xff]
    %v8878 = vld [vmem:[#allocation17 + $0x48] sm:$0xff]
    %v8879 = vld [vmem:[#allocation17 + $0x50] sm:$0xff]
    %v8880 = vld [vmem:[#allocation17 + $0x58] sm:$0xff]
    %v8881 = vld [vmem:[#allocation17 + $0x60] sm:$0xff]
    %v8882 = vld [vmem:[#allocation17 + $0x68] sm:$0xff]
    %v8883 = vld [vmem:[#allocation17 + $0x70] sm:$0xff]
    %v8884 = vld [vmem:[#allocation17 + $0x78] sm:$0xff]
    %v8885 = vld [vmem:[#allocation17 + $0x80] sm:$0xff]
    %v8886 = vld [vmem:[#allocation17 + $0x88] sm:$0xff]
    %v8887 = vld [vmem:[#allocation17 + $0x90] sm:$0xff]
    %v8888 = vld [vmem:[#allocation17 + $0x98] sm:$0xff]
    %v8889 = vld [vmem:[#allocation17 + $0xa0] sm:$0xff]
    %v8890 = vld [vmem:[#allocation17 + $0xa8] sm:$0xff]
    %v8891 = vld [vmem:[#allocation17 + $0xb0] sm:$0xff]
    %v8892 = vld [vmem:[#allocation17 + $0xb8] sm:$0xff]
    %v8893 = vld [vmem:[#allocation17 + $0xc0] sm:$0xff]
    %v8894 = vld [vmem:[#allocation17 + $0xc8] sm:$0xff]
    %v8895 = vld [vmem:[#allocation17 + $0xd0] sm:$0xff]
    %v8896 = vld [vmem:[#allocation17 + $0xd8] sm:$0xff]
    %v8897 = vld [vmem:[#allocation17 + $0xe0] sm:$0xff]
    %v8898 = vld [vmem:[#allocation17 + $0xe8] sm:$0xff]
    %v8899 = vld [vmem:[#allocation17 + $0xf0] sm:$0xff]
    %v8900 = vld [vmem:[#allocation17 + $0xf8] sm:$0xff]
    %v8901 = vld [vmem:[#allocation17 + $0x100] sm:$0xff]
    %v8902 = vld [vmem:[#allocation17 + $0x108] sm:$0xff]
    %v8903 = vld [vmem:[#allocation17 + $0x110] sm:$0xff]
    %v8904 = vld [vmem:[#allocation17 + $0x118] sm:$0xff]
    %v8905 = vld [vmem:[#allocation17 + $0x120] sm:$0xff]
    %v8906 = vld [vmem:[#allocation17 + $0x128] sm:$0xff]
    %v8907 = vld [vmem:[#allocation17 + $0x130] sm:$0xff]
    %v8908 = vld [vmem:[#allocation17 + $0x138] sm:$0xff]
    %v8909 = vld [vmem:[#allocation17 + $0x140] sm:$0xff]
    %v8910 = vld [vmem:[#allocation17 + $0x148] sm:$0xff]
    %v8911 = vld [vmem:[#allocation17 + $0x150] sm:$0xff]
    %v8912 = vld [vmem:[#allocation17 + $0x158] sm:$0xff]
    %v8913 = vld [vmem:[#allocation17 + $0x160] sm:$0xff]
    %v8914 = vld [vmem:[#allocation17 + $0x168] sm:$0xff]
    %v8915 = vld [vmem:[#allocation17 + $0x170] sm:$0xff]
    %v8916 = vld [vmem:[#allocation17 + $0x178] sm:$0xff]
    %v8917 = vld [vmem:[#allocation17 + $0x180] sm:$0xff]
    %v8918 = vld [vmem:[#allocation17 + $0x188] sm:$0xff]
    %v8919 = vld [vmem:[#allocation17 + $0x190] sm:$0xff]
    %v8920 = vld [vmem:[#allocation17 + $0x198] sm:$0xff]
    %v8921 = vld [vmem:[#allocation17 + $0x1a0] sm:$0xff]
    %v8922 = vld [vmem:[#allocation17 + $0x1a8] sm:$0xff]
    %v8923 = vld [vmem:[#allocation17 + $0x1b0] sm:$0xff]
    %v8924 = vld [vmem:[#allocation17 + $0x1b8] sm:$0xff]
    %v8925 = vld [vmem:[#allocation17 + $0x1c0] sm:$0xff]
    %v8926 = vld [vmem:[#allocation17 + $0x1c8] sm:$0xff]
    %v8927 = vld [vmem:[#allocation17 + $0x1d0] sm:$0xff]
    %v8928 = vld [vmem:[#allocation17 + $0x1d8] sm:$0xff]
    %v8929 = vld [vmem:[#allocation17 + $0x1e0] sm:$0xff]
    %v8930 = vld [vmem:[#allocation17 + $0x1e8] sm:$0xff]
    %v8931 = vld [vmem:[#allocation17 + $0x1f0] sm:$0xff]
    %v8932 = vld [vmem:[#allocation17 + $0x1f8] sm:$0xff]
    %v8933 = vld [vmem:[#allocation9 + $0x1c] sm:$0x3]
    %v8935 = vperm.slane %v8933, 0
    %v8936 = vperm.slane %v8933, 1
    %v9003 = vunpack.c.l.b16 %v8869
    %v9004 = vunpack.c.h.b16 %v8869
    %v9005 = vunpack.c.l.b16 %v8870
    %v9006 = vunpack.c.h.b16 %v8870
    %v9007 = vunpack.c.l.b16 %v8871
    %v9008 = vunpack.c.h.b16 %v8871
    %v9009 = vunpack.c.l.b16 %v8872
    %v9010 = vunpack.c.h.b16 %v8872
    %v9011 = vunpack.c.l.b16 %v8873
    %v9012 = vunpack.c.h.b16 %v8873
    %v9013 = vunpack.c.l.b16 %v8874
    %v9014 = vunpack.c.h.b16 %v8874
    %v9015 = vunpack.c.l.b16 %v8875
    %v9016 = vunpack.c.h.b16 %v8875
    %v9017 = vunpack.c.l.b16 %v8876
    %v9018 = vunpack.c.h.b16 %v8876
    %v9019 = vunpack.c.l.b16 %v8877
    %v9020 = vunpack.c.h.b16 %v8877
    %v9021 = vunpack.c.l.b16 %v8878
    %v9022 = vunpack.c.h.b16 %v8878
    %v9023 = vunpack.c.l.b16 %v8879
    %v9024 = vunpack.c.h.b16 %v8879
    %v9025 = vunpack.c.l.b16 %v8880
    %v9026 = vunpack.c.h.b16 %v8880
    %v9027 = vunpack.c.l.b16 %v8881
    %v9028 = vunpack.c.h.b16 %v8881
    %v9029 = vunpack.c.l.b16 %v8882
    %v9030 = vunpack.c.h.b16 %v8882
    %v9031 = vunpack.c.l.b16 %v8883
    %v9032 = vunpack.c.h.b16 %v8883
    %v9033 = vunpack.c.l.b16 %v8884
    %v9034 = vunpack.c.h.b16 %v8884
    %v9035 = vunpack.c.l.b16 %v8885
    %v9036 = vunpack.c.h.b16 %v8885
    %v9037 = vunpack.c.l.b16 %v8886
    %v9038 = vunpack.c.h.b16 %v8886
    %v9039 = vunpack.c.l.b16 %v8887
    %v9040 = vunpack.c.h.b16 %v8887
    %v9041 = vunpack.c.l.b16 %v8888
    %v9042 = vunpack.c.h.b16 %v8888
    %v9043 = vunpack.c.l.b16 %v8889
    %v9044 = vunpack.c.h.b16 %v8889
    %v9045 = vunpack.c.l.b16 %v8890
    %v9046 = vunpack.c.h.b16 %v8890
    %v9047 = vunpack.c.l.b16 %v8891
    %v9048 = vunpack.c.h.b16 %v8891
    %v9049 = vunpack.c.l.b16 %v8892
    %v9050 = vunpack.c.h.b16 %v8892
    %v9051 = vunpack.c.l.b16 %v8893
    %v9052 = vunpack.c.h.b16 %v8893
    %v9053 = vunpack.c.l.b16 %v8894
    %v9054 = vunpack.c.h.b16 %v8894
    %v9055 = vunpack.c.l.b16 %v8895
    %v9056 = vunpack.c.h.b16 %v8895
    %v9057 = vunpack.c.l.b16 %v8896
    %v9058 = vunpack.c.h.b16 %v8896
    %v9059 = vunpack.c.l.b16 %v8897
    %v9060 = vunpack.c.h.b16 %v8897
    %v9061 = vunpack.c.l.b16 %v8898
    %v9062 = vunpack.c.h.b16 %v8898
    %v9063 = vunpack.c.l.b16 %v8899
    %v9064 = vunpack.c.h.b16 %v8899
    %v9065 = vunpack.c.l.b16 %v8900
    %v9066 = vunpack.c.h.b16 %v8900
    %v9067 = vunpack.c.l.b16 %v8901
    %v9068 = vunpack.c.h.b16 %v8901
    %v9069 = vunpack.c.l.b16 %v8902
    %v9070 = vunpack.c.h.b16 %v8902
    %v9071 = vunpack.c.l.b16 %v8903
    %v9072 = vunpack.c.h.b16 %v8903
    %v9073 = vunpack.c.l.b16 %v8904
    %v9074 = vunpack.c.h.b16 %v8904
    %v9075 = vunpack.c.l.b16 %v8905
    %v9076 = vunpack.c.h.b16 %v8905
    %v9077 = vunpack.c.l.b16 %v8906
    %v9078 = vunpack.c.h.b16 %v8906
    %v9079 = vunpack.c.l.b16 %v8907
    %v9080 = vunpack.c.h.b16 %v8907
    %v9081 = vunpack.c.l.b16 %v8908
    %v9082 = vunpack.c.h.b16 %v8908
    %v9083 = vunpack.c.l.b16 %v8909
    %v9084 = vunpack.c.h.b16 %v8909
    %v9085 = vunpack.c.l.b16 %v8910
    %v9086 = vunpack.c.h.b16 %v8910
    %v9087 = vunpack.c.l.b16 %v8911
    %v9088 = vunpack.c.h.b16 %v8911
    %v9089 = vunpack.c.l.b16 %v8912
    %v9090 = vunpack.c.h.b16 %v8912
    %v9091 = vunpack.c.l.b16 %v8913
    %v9092 = vunpack.c.h.b16 %v8913
    %v9093 = vunpack.c.l.b16 %v8914
    %v9094 = vunpack.c.h.b16 %v8914
    %v9095 = vunpack.c.l.b16 %v8915
    %v9096 = vunpack.c.h.b16 %v8915
    %v9097 = vunpack.c.l.b16 %v8916
    %v9098 = vunpack.c.h.b16 %v8916
    %v9099 = vunpack.c.l.b16 %v8917
    %v9100 = vunpack.c.h.b16 %v8917
    %v9101 = vunpack.c.l.b16 %v8918
    %v9102 = vunpack.c.h.b16 %v8918
    %v9103 = vunpack.c.l.b16 %v8919
    %v9104 = vunpack.c.h.b16 %v8919
    %v9105 = vunpack.c.l.b16 %v8920
    %v9106 = vunpack.c.h.b16 %v8920
    %v9107 = vunpack.c.l.b16 %v8921
    %v9108 = vunpack.c.h.b16 %v8921
    %v9109 = vunpack.c.l.b16 %v8922
    %v9110 = vunpack.c.h.b16 %v8922
    %v9111 = vunpack.c.l.b16 %v8923
    %v9112 = vunpack.c.h.b16 %v8923
    %v9113 = vunpack.c.l.b16 %v8924
    %v9114 = vunpack.c.h.b16 %v8924
    %v9115 = vunpack.c.l.b16 %v8925
    %v9116 = vunpack.c.h.b16 %v8925
    %v9117 = vunpack.c.l.b16 %v8926
    %v9118 = vunpack.c.h.b16 %v8926
    %v9119 = vunpack.c.l.b16 %v8927
    %v9120 = vunpack.c.h.b16 %v8927
    %v9121 = vunpack.c.l.b16 %v8928
    %v9122 = vunpack.c.h.b16 %v8928
    %v9123 = vunpack.c.l.b16 %v8929
    %v9124 = vunpack.c.h.b16 %v8929
    %v9125 = vunpack.c.l.b16 %v8930
    %v9126 = vunpack.c.h.b16 %v8930
    %v9127 = vunpack.c.l.b16 %v8931
    %v9128 = vunpack.c.h.b16 %v8931
    %v9129 = vunpack.c.l.b16 %v8932
    %v9130 = vunpack.c.h.b16 %v8932
    %v9131 = vpack.c.b16 %v9005, %v9003
    %v9132 = vpack.c.b16 %v9006, %v9004
    %v9133 = vpack.c.b16 %v9009, %v9007
    %v9134 = vpack.c.b16 %v9010, %v9008
    %v9135 = vpack.c.b16 %v9013, %v9011
    %v9136 = vpack.c.b16 %v9014, %v9012
    %v9137 = vpack.c.b16 %v9017, %v9015
    %v9138 = vpack.c.b16 %v9018, %v9016
    %v9139 = vpack.c.b16 %v9021, %v9019
    %v9140 = vpack.c.b16 %v9022, %v9020
    %v9141 = vpack.c.b16 %v9025, %v9023
    %v9142 = vpack.c.b16 %v9026, %v9024
    %v9143 = vpack.c.b16 %v9029, %v9027
    %v9144 = vpack.c.b16 %v9030, %v9028
    %v9145 = vpack.c.b16 %v9033, %v9031
    %v9146 = vpack.c.b16 %v9034, %v9032
    %v9147 = vpack.c.b16 %v9037, %v9035
    %v9148 = vpack.c.b16 %v9038, %v9036
    %v9149 = vpack.c.b16 %v9041, %v9039
    %v9150 = vpack.c.b16 %v9042, %v9040
    %v9151 = vpack.c.b16 %v9045, %v9043
    %v9152 = vpack.c.b16 %v9046, %v9044
    %v9153 = vpack.c.b16 %v9049, %v9047
    %v9154 = vpack.c.b16 %v9050, %v9048
    %v9155 = vpack.c.b16 %v9053, %v9051
    %v9156 = vpack.c.b16 %v9054, %v9052
    %v9157 = vpack.c.b16 %v9057, %v9055
    %v9158 = vpack.c.b16 %v9058, %v9056
    %v9159 = vpack.c.b16 %v9061, %v9059
    %v9160 = vpack.c.b16 %v9062, %v9060
    %v9161 = vpack.c.b16 %v9065, %v9063
    %v9162 = vpack.c.b16 %v9066, %v9064
    %v9163 = vpack.c.b16 %v9069, %v9067
    %v9164 = vpack.c.b16 %v9070, %v9068
    %v9165 = vpack.c.b16 %v9073, %v9071
    %v9166 = vpack.c.b16 %v9074, %v9072
    %v9167 = vpack.c.b16 %v9077, %v9075
    %v9168 = vpack.c.b16 %v9078, %v9076
    %v9169 = vpack.c.b16 %v9081, %v9079
    %v9170 = vpack.c.b16 %v9082, %v9080
    %v9171 = vpack.c.b16 %v9085, %v9083
    %v9172 = vpack.c.b16 %v9086, %v9084
    %v9173 = vpack.c.b16 %v9089, %v9087
    %v9174 = vpack.c.b16 %v9090, %v9088
    %v9175 = vpack.c.b16 %v9093, %v9091
    %v9176 = vpack.c.b16 %v9094, %v9092
    %v9177 = vpack.c.b16 %v9097, %v9095
    %v9178 = vpack.c.b16 %v9098, %v9096
    %v9179 = vpack.c.b16 %v9101, %v9099
    %v9180 = vpack.c.b16 %v9102, %v9100
    %v9181 = vpack.c.b16 %v9105, %v9103
    %v9182 = vpack.c.b16 %v9106, %v9104
    %v9183 = vpack.c.b16 %v9109, %v9107
    %v9184 = vpack.c.b16 %v9110, %v9108
    %v9185 = vpack.c.b16 %v9113, %v9111
    %v9186 = vpack.c.b16 %v9114, %v9112
    %v9187 = vpack.c.b16 %v9117, %v9115
    %v9188 = vpack.c.b16 %v9118, %v9116
    %v9189 = vpack.c.b16 %v9121, %v9119
    %v9190 = vpack.c.b16 %v9122, %v9120
    %v9191 = vpack.c.b16 %v9125, %v9123
    %v9192 = vpack.c.b16 %v9126, %v9124
    %v9193 = vpack.c.b16 %v9129, %v9127
    %v9194 = vpack.c.b16 %v9130, %v9128
    %9259 = vmatpush.bf16.msra.mxu0 %v9145
    %9260 = vmatpush.bf16.msra.mxu0 %v9143
    %9261 = vmatpush.bf16.msra.mxu0 %v9141
    %9262 = vmatpush.bf16.msra.mxu0 %v9139
    %9263 = vmatpush.bf16.msra.mxu0 %v9137
    %9264 = vmatpush.bf16.msra.mxu0 %v9135
    %9265 = vmatpush.bf16.msra.mxu0 %v9133
    %9266 = vmatpush.bf16.msra.mxu0 %v9131
    %9267 = vmatmul.bf16.gmra.mxu0 %v8865
    %v9268 = vpop.f32.mrf.mxu0
    %v9269 = vadd.f32 %v8935, %v9268
    %v9270 = vpop.f32.mrf.mxu0
    %9271 = vdwg.mxu0
    %9272 = vmatpush.bf16.msra.mxu0 %v9161
    %9273 = vmatpush.bf16.msra.mxu0 %v9159
    %9274 = vmatpush.bf16.msra.mxu0 %v9157
    %9275 = vmatpush.bf16.msra.mxu0 %v9155
    %9276 = vmatpush.bf16.msra.mxu0 %v9153
    %9277 = vmatpush.bf16.msra.mxu0 %v9151
    %9278 = vmatpush.bf16.msra.mxu0 %v9149
    %9279 = vmatpush.bf16.msra.mxu0 %v9147
    %9280 = vmatmul.bf16.gmra.mxu0 %v8866
    %v9281 = vpop.f32.mrf.mxu0
    %v9282 = vadd.f32 %v9269, %v9281
    %v9283 = vpop.f32.mrf.mxu0
    %9284 = vdwg.mxu0
    %9285 = vmatpush.bf16.msra.mxu0 %v9177
    %9286 = vmatpush.bf16.msra.mxu0 %v9175
    %9287 = vmatpush.bf16.msra.mxu0 %v9173
    %9288 = vmatpush.bf16.msra.mxu0 %v9171
    %9289 = vmatpush.bf16.msra.mxu0 %v9169
    %9290 = vmatpush.bf16.msra.mxu0 %v9167
    %9291 = vmatpush.bf16.msra.mxu0 %v9165
    %9292 = vmatpush.bf16.msra.mxu0 %v9163
    %9293 = vmatmul.bf16.gmra.mxu0 %v8867
    %v9294 = vpop.f32.mrf.mxu0
    %v9295 = vadd.f32 %v9282, %v9294
    %v9296 = vpop.f32.mrf.mxu0
    %9297 = vdwg.mxu0
    %9298 = vmatpush.bf16.msra.mxu0 %v9193
    %9299 = vmatpush.bf16.msra.mxu0 %v9191
    %9300 = vmatpush.bf16.msra.mxu0 %v9189
    %9301 = vmatpush.bf16.msra.mxu0 %v9187
    %9302 = vmatpush.bf16.msra.mxu0 %v9185
    %9303 = vmatpush.bf16.msra.mxu0 %v9183
    %9304 = vmatpush.bf16.msra.mxu0 %v9181
    %9305 = vmatpush.bf16.msra.mxu0 %v9179
    %9306 = vmatmul.bf16.gmra.mxu0 %v8868
    %v9307 = vpop.f32.mrf.mxu0
    %v9308 = vadd.f32 %v9295, %v9307
    %v9309 = vpop.f32.mrf.mxu0
    %9310 = vdwg.mxu0
    %9311 = vmatpush.bf16.msra.mxu0 %v9146
    %9312 = vmatpush.bf16.msra.mxu0 %v9144
    %9313 = vmatpush.bf16.msra.mxu0 %v9142
    %9314 = vmatpush.bf16.msra.mxu0 %v9140
    %9315 = vmatpush.bf16.msra.mxu0 %v9138
    %9316 = vmatpush.bf16.msra.mxu0 %v9136
    %9317 = vmatpush.bf16.msra.mxu0 %v9134
    %9318 = vmatpush.bf16.msra.mxu0 %v9132
    %9319 = vmatmul.bf16.gmra.mxu0 %v8865
    %v9320 = vpop.f32.mrf.mxu0
    %v9321 = vadd.f32 %v8936, %v9320
    %v9322 = vpop.f32.mrf.mxu0
    %9323 = vdwg.mxu0
    %9324 = vmatpush.bf16.msra.mxu0 %v9162
    %9325 = vmatpush.bf16.msra.mxu0 %v9160
    %9326 = vmatpush.bf16.msra.mxu0 %v9158
    %9327 = vmatpush.bf16.msra.mxu0 %v9156
    %9328 = vmatpush.bf16.msra.mxu0 %v9154
    %9329 = vmatpush.bf16.msra.mxu0 %v9152
    %9330 = vmatpush.bf16.msra.mxu0 %v9150
    %9331 = vmatpush.bf16.msra.mxu0 %v9148
    %9332 = vmatmul.bf16.gmra.mxu0 %v8866
    %v9333 = vpop.f32.mrf.mxu0
    %v9334 = vadd.f32 %v9321, %v9333
    %v9335 = vpop.f32.mrf.mxu0
    %9336 = vdwg.mxu0
    %9337 = vmatpush.bf16.msra.mxu0 %v9178
    %9338 = vmatpush.bf16.msra.mxu0 %v9176
    %9339 = vmatpush.bf16.msra.mxu0 %v9174
    %9340 = vmatpush.bf16.msra.mxu0 %v9172
    %9341 = vmatpush.bf16.msra.mxu0 %v9170
    %9342 = vmatpush.bf16.msra.mxu0 %v9168
    %9343 = vmatpush.bf16.msra.mxu0 %v9166
    %9344 = vmatpush.bf16.msra.mxu0 %v9164
    %9345 = vmatmul.bf16.gmra.mxu0 %v8867
    %v9346 = vpop.f32.mrf.mxu0
    %v9347 = vadd.f32 %v9334, %v9346
    %v9348 = vpop.f32.mrf.mxu0
    %9349 = vdwg.mxu0
    %9350 = vmatpush.bf16.msra.mxu0 %v9194
    %9351 = vmatpush.bf16.msra.mxu0 %v9192
    %9352 = vmatpush.bf16.msra.mxu0 %v9190
    %9353 = vmatpush.bf16.msra.mxu0 %v9188
    %9354 = vmatpush.bf16.msra.mxu0 %v9186
    %9355 = vmatpush.bf16.msra.mxu0 %v9184
    %9356 = vmatpush.bf16.msra.mxu0 %v9182
    %9357 = vmatpush.bf16.msra.mxu0 %v9180
    %9358 = vmatmul.bf16.gmra.mxu0 %v8868
    %v9359 = vpop.f32.mrf.mxu0
    %v9360 = vadd.f32 %v9347, %v9359
    %v9361 = vpop.f32.mrf.mxu0
    %9362 = vdwg.mxu0
    %v9363 = vmul.f32 %v9308, 0.01
    %v9364 = vmul.f32 %v9360, 0.01
    %v9365 = vmax.f32 %v9308, %v9363
    %v9366 = vmax.f32 %v9360, %v9364
    %v9367 = vpack.c.bf16 %v9365, %v9365
    %v9368 = vpack.c.bf16 %v9366, %v9366
    %v9369 = vld [vmem:[#allocation18] sm:$0xf]
    %v9370 = vld [vmem:[#allocation18 + $0x4] sm:$0xf]
    %v9371 = vld [vmem:[#allocation18 + $0x8] sm:$0xf]
    %v9372 = vld [vmem:[#allocation18 + $0xc] sm:$0xf]
    %v9373 = vld [vmem:[#allocation18 + $0x10] sm:$0xf]
    %v9374 = vld [vmem:[#allocation18 + $0x14] sm:$0xf]
    %v9375 = vld [vmem:[#allocation18 + $0x18] sm:$0xf]
    %v9376 = vld [vmem:[#allocation18 + $0x1c] sm:$0xf]
    %v9377 = vld [vmem:[#allocation18 + $0x20] sm:$0xf]
    %v9378 = vld [vmem:[#allocation18 + $0x24] sm:$0xf]
    %v9379 = vld [vmem:[#allocation18 + $0x28] sm:$0xf]
    %v9380 = vld [vmem:[#allocation18 + $0x2c] sm:$0xf]
    %v9381 = vld [vmem:[#allocation18 + $0x30] sm:$0xf]
    %v9382 = vld [vmem:[#allocation18 + $0x34] sm:$0xf]
    %v9383 = vld [vmem:[#allocation18 + $0x38] sm:$0xf]
    %v9384 = vld [vmem:[#allocation18 + $0x3c] sm:$0xf]
    %v9385 = vld [vmem:[#allocation18 + $0x40] sm:$0xf]
    %v9386 = vld [vmem:[#allocation18 + $0x44] sm:$0xf]
    %v9387 = vld [vmem:[#allocation18 + $0x48] sm:$0xf]
    %v9388 = vld [vmem:[#allocation18 + $0x4c] sm:$0xf]
    %v9389 = vld [vmem:[#allocation18 + $0x50] sm:$0xf]
    %v9390 = vld [vmem:[#allocation18 + $0x54] sm:$0xf]
    %v9391 = vld [vmem:[#allocation18 + $0x58] sm:$0xf]
    %v9392 = vld [vmem:[#allocation18 + $0x5c] sm:$0xf]
    %v9393 = vld [vmem:[#allocation18 + $0x60] sm:$0xf]
    %v9394 = vld [vmem:[#allocation18 + $0x64] sm:$0xf]
    %v9395 = vld [vmem:[#allocation18 + $0x68] sm:$0xf]
    %v9396 = vld [vmem:[#allocation18 + $0x6c] sm:$0xf]
    %v9397 = vld [vmem:[#allocation18 + $0x70] sm:$0xf]
    %v9398 = vld [vmem:[#allocation18 + $0x74] sm:$0xf]
    %v9399 = vld [vmem:[#allocation18 + $0x78] sm:$0xf]
    %v9400 = vld [vmem:[#allocation18 + $0x7c] sm:$0xf]
    %v9401 = vld [vmem:[#allocation9 + $0x1e] sm:$0x1]
    %v9403 = vperm.slane %v9401, 0
    %v9437 = vunpack.c.l.b16 %v9369
    %v9438 = vunpack.c.l.b16 %v9370
    %v9439 = vunpack.c.l.b16 %v9371
    %v9440 = vunpack.c.l.b16 %v9372
    %v9441 = vunpack.c.l.b16 %v9373
    %v9442 = vunpack.c.l.b16 %v9374
    %v9443 = vunpack.c.l.b16 %v9375
    %v9444 = vunpack.c.l.b16 %v9376
    %v9445 = vunpack.c.l.b16 %v9377
    %v9446 = vunpack.c.l.b16 %v9378
    %v9447 = vunpack.c.l.b16 %v9379
    %v9448 = vunpack.c.l.b16 %v9380
    %v9449 = vunpack.c.l.b16 %v9381
    %v9450 = vunpack.c.l.b16 %v9382
    %v9451 = vunpack.c.l.b16 %v9383
    %v9452 = vunpack.c.l.b16 %v9384
    %v9453 = vunpack.c.l.b16 %v9385
    %v9454 = vunpack.c.l.b16 %v9386
    %v9455 = vunpack.c.l.b16 %v9387
    %v9456 = vunpack.c.l.b16 %v9388
    %v9457 = vunpack.c.l.b16 %v9389
    %v9458 = vunpack.c.l.b16 %v9390
    %v9459 = vunpack.c.l.b16 %v9391
    %v9460 = vunpack.c.l.b16 %v9392
    %v9461 = vunpack.c.l.b16 %v9393
    %v9462 = vunpack.c.l.b16 %v9394
    %v9463 = vunpack.c.l.b16 %v9395
    %v9464 = vunpack.c.l.b16 %v9396
    %v9465 = vunpack.c.l.b16 %v9397
    %v9466 = vunpack.c.l.b16 %v9398
    %v9467 = vunpack.c.l.b16 %v9399
    %v9468 = vunpack.c.l.b16 %v9400
    %v9469 = vpack.c.b16 %v9438, %v9437
    %v9470 = vpack.c.b16 %v9440, %v9439
    %v9471 = vpack.c.b16 %v9442, %v9441
    %v9472 = vpack.c.b16 %v9444, %v9443
    %v9473 = vpack.c.b16 %v9446, %v9445
    %v9474 = vpack.c.b16 %v9448, %v9447
    %v9475 = vpack.c.b16 %v9450, %v9449
    %v9476 = vpack.c.b16 %v9452, %v9451
    %v9477 = vpack.c.b16 %v9454, %v9453
    %v9478 = vpack.c.b16 %v9456, %v9455
    %v9479 = vpack.c.b16 %v9458, %v9457
    %v9480 = vpack.c.b16 %v9460, %v9459
    %v9481 = vpack.c.b16 %v9462, %v9461
    %v9482 = vpack.c.b16 %v9464, %v9463
    %v9483 = vpack.c.b16 %v9466, %v9465
    %v9484 = vpack.c.b16 %v9468, %v9467
    %9501 = vmatpush.bf16.msra.mxu0 %v9476
    %9502 = vmatpush.bf16.msra.mxu0 %v9475
    %9503 = vmatpush.bf16.msra.mxu0 %v9474
    %9504 = vmatpush.bf16.msra.mxu0 %v9473
    %9505 = vmatpush.bf16.msra.mxu0 %v9472
    %9506 = vmatpush.bf16.msra.mxu0 %v9471
    %9507 = vmatpush.bf16.msra.mxu0 %v9470
    %9508 = vmatpush.bf16.msra.mxu0 %v9469
    %9509 = vmatmul.bf16.gmra.mxu0 %v9367
    %v9510 = vpop.f32.mrf.mxu0
    %v9511 = vadd.f32 %v9403, %v9510
    %v9512 = vpop.f32.mrf.mxu0
    %9513 = vdwg.mxu0
    %9514 = vmatpush.bf16.msra.mxu0 %v9484
    %9515 = vmatpush.bf16.msra.mxu0 %v9483
    %9516 = vmatpush.bf16.msra.mxu0 %v9482
    %9517 = vmatpush.bf16.msra.mxu0 %v9481
    %9518 = vmatpush.bf16.msra.mxu0 %v9480
    %9519 = vmatpush.bf16.msra.mxu0 %v9479
    %9520 = vmatpush.bf16.msra.mxu0 %v9478
    %9521 = vmatpush.bf16.msra.mxu0 %v9477
    %9522 = vmatmul.bf16.gmra.mxu0 %v9368
    %v9523 = vpop.f32.mrf.mxu0
    %v9524 = vadd.f32 %v9511, %v9523
    %v9525 = vpop.f32.mrf.mxu0
    %9526 = vdwg.mxu0
    %v9527 = vmul.f32 %v9524, 0.01
    %v9528 = vmax.f32 %v9524, %v9527
    %v9529 = vpack.c.bf16 %v9528, %v9528
    %v9530 = vld [vmem:[%s8] sm:$0xf]
    %v9531 = vld [vmem:[%s8 + $0x4] sm:$0xf]
    %v9532 = vld [vmem:[%s8 + $0x8] sm:$0xf]
    %v9533 = vld [vmem:[%s8 + $0xc] sm:$0xf]
    %v9534 = vld [vmem:[%s8 + $0x10] sm:$0xf]
    %v9535 = vld [vmem:[%s8 + $0x14] sm:$0xf]
    %v9536 = vld [vmem:[%s8 + $0x18] sm:$0xf]
    %v9537 = vld [vmem:[%s8 + $0x1c] sm:$0xf]
    %v9538 = vld [vmem:[%s8 + $0x20] sm:$0xf]
    %v9539 = vld [vmem:[%s8 + $0x24] sm:$0xf]
    %v9540 = vld [vmem:[%s8 + $0x28] sm:$0xf]
    %v9541 = vld [vmem:[%s8 + $0x2c] sm:$0xf]
    %v9542 = vld [vmem:[%s8 + $0x30] sm:$0xf]
    %v9543 = vld [vmem:[%s8 + $0x34] sm:$0xf]
    %v9544 = vld [vmem:[%s8 + $0x38] sm:$0xf]
    %v9545 = vld [vmem:[%s8 + $0x3c] sm:$0xf]
    %v9546 = vld [vmem:[#allocation9 + $0x1f] sm:$0x1]
    %v9548 = vperm.slane %v9546, 0
    %v9566 = vunpack.c.l.b16 %v9530
    %v9567 = vunpack.c.l.b16 %v9531
    %v9568 = vunpack.c.l.b16 %v9532
    %v9569 = vunpack.c.l.b16 %v9533
    %v9570 = vunpack.c.l.b16 %v9534
    %v9571 = vunpack.c.l.b16 %v9535
    %v9572 = vunpack.c.l.b16 %v9536
    %v9573 = vunpack.c.l.b16 %v9537
    %v9574 = vunpack.c.l.b16 %v9538
    %v9575 = vunpack.c.l.b16 %v9539
    %v9576 = vunpack.c.l.b16 %v9540
    %v9577 = vunpack.c.l.b16 %v9541
    %v9578 = vunpack.c.l.b16 %v9542
    %v9579 = vunpack.c.l.b16 %v9543
    %v9580 = vunpack.c.l.b16 %v9544
    %v9581 = vunpack.c.l.b16 %v9545
    %v9582 = vpack.c.b16 %v9567, %v9566
    %v9583 = vpack.c.b16 %v9569, %v9568
    %v9584 = vpack.c.b16 %v9571, %v9570
    %v9585 = vpack.c.b16 %v9573, %v9572
    %v9586 = vpack.c.b16 %v9575, %v9574
    %v9587 = vpack.c.b16 %v9577, %v9576
    %v9588 = vpack.c.b16 %v9579, %v9578
    %v9589 = vpack.c.b16 %v9581, %v9580
    %9598 = vmatpush.bf16.msra.mxu0 %v9589
    %9599 = vmatpush.bf16.msra.mxu0 %v9588
    %9600 = vmatpush.bf16.msra.mxu0 %v9587
    %9601 = vmatpush.bf16.msra.mxu0 %v9586
    %9602 = vmatpush.bf16.msra.mxu0 %v9585
    %9603 = vmatpush.bf16.msra.mxu0 %v9584
    %9604 = vmatpush.bf16.msra.mxu0 %v9583
    %9605 = vmatpush.bf16.msra.mxu0 %v9582
    %9606 = vmatmul.bf16.gmra.mxu0 %v9529
    %v9607 = vpop.f32.mrf.mxu0
    %v9608 = vadd.f32 %v9548, %v9607
    %v9609 = vpop.f32.mrf.mxu0
    %9610 = vdwg.mxu0
    %v9611 = vmul.f32 %v9608, 0.01
    %v9612 = vmax.f32 %v9608, %v9611
    %v9613 = vpack.c.bf16 %v9612, %v9612
    %v9614 = vld [vmem:[%s9] sm:$0xf]
    %v9615 = vld [vmem:[%s9 + $0x4] sm:$0xf]
    %v9616 = vld [vmem:[%s9 + $0x8] sm:$0xf]
    %v9617 = vld [vmem:[%s9 + $0xc] sm:$0xf]
    %v9618 = vld [vmem:[%s9 + $0x10] sm:$0xf]
    %v9619 = vld [vmem:[%s9 + $0x14] sm:$0xf]
    %v9620 = vld [vmem:[%s9 + $0x18] sm:$0xf]
    %v9621 = vld [vmem:[%s9 + $0x1c] sm:$0xf]
    %v9622 = vld [vmem:[#allocation9 + $0x20] sm:$0x1]
    %v9624 = vperm.slane %v9622, 0
    %v9634 = vunpack.c.l.b16 %v9614
    %v9635 = vunpack.c.l.b16 %v9615
    %v9636 = vunpack.c.l.b16 %v9616
    %v9637 = vunpack.c.l.b16 %v9617
    %v9638 = vunpack.c.l.b16 %v9618
    %v9639 = vunpack.c.l.b16 %v9619
    %v9640 = vunpack.c.l.b16 %v9620
    %v9641 = vunpack.c.l.b16 %v9621
    %v9642 = vpack.c.b16 %v9635, %v9634
    %v9643 = vpack.c.b16 %v9637, %v9636
    %v9644 = vpack.c.b16 %v9639, %v9638
    %v9645 = vpack.c.b16 %v9641, %v9640
    %v9651 = vsel %vm280, %v9613, 0
    %9653 = vmatpush.bf16.msra.mxu0 0
    %9654 = vmatpush.bf16.msra.mxu0 0
    %9655 = vmatpush.bf16.msra.mxu0 0
    %9656 = vmatpush.bf16.msra.mxu0 0
    %9657 = vmatpush.bf16.msra.mxu0 %v9645
    %9658 = vmatpush.bf16.msra.mxu0 %v9644
    %9659 = vmatpush.bf16.msra.mxu0 %v9643
    %9660 = vmatpush.bf16.msra.mxu0 %v9642
    %9661 = vmatmul.bf16.gmra.mxu0 %v9651
    %v9662 = vpop.f32.mrf.mxu0
    %v9663 = vadd.f32 %v9624, %v9662
    %v9664 = vpop.f32.mrf.mxu0
    %9665 = vdwg.mxu0
    %vm9666 = vcmask 123904
    %9667 = vst.msk [vmem:[#allocation20] sm:$0x3] %vm9666, %v9663
    // Predicated region
    $region86: #{tpu_custom_call.1} parent=1 // pred_check
      _
    $region87: #{tpu_custom_call.1} parent=1 // pred_check_branch
      %9669 = sbr.rel (0) target = $region89
    $region88: #{tpu_custom_call.1} parent=1 // pred_region
      %9671 = vsyncadd [#allocation8], 0
      %s9673 = sshll.u32 [#allocation20], 4
      %s9674 = int_to_ptr.vmem [resolvable:$true] %s9673
      %s9675 = sshll.u32 %s13, 4
      %s9676 = int_to_ptr.hbm [resolvable:$true] %s9675
      %9678 = dma.vmem_to_hbm [thread:$0]  %s9674, 32, %s9676, [#allocation8]
    $region89: #{tpu_custom_call.1} parent=1 // pred_fallthru
      _
    // Predicated region
    $region90: #{tpu_custom_call.1} parent=1 // pred_check
      _
    $region91: #{tpu_custom_call.1} parent=1 // pred_check_branch
      %9680 = sbr.rel (0) target = $region93
    $region92: #{tpu_custom_call.1} parent=1 // pred_region
      %9682 = dma.done [#allocation8], 32
    $region93: #{tpu_custom_call.1} parent=1 // pred_fallthru
      _
    %9683 = vsyncpa [#allocation7], 1
    %9684 = vsyncpa [#allocation10], 1
    %9685 = vsyncpa [#allocation13], 1
    %9686 = vsyncpa [#allocation16], 1
    %9687 = vsyncpa [#allocation19], 1
    %9688 = vsyncpa [#allocation8], 1
  %9689 = vsyncmov [#allocation5]
  %s9690 = vpop.sfrf %9689
  %p9691 = scmp.eq.s32.totalorder %s9690, 0
  %p9692 = pneg %p9691
  %9694 = shalt.err (%p9692)
  %s9695 = scalar_lea.sflag [#allocation5], 1
  %9696 = vsyncmov %s9695
  %s9697 = vpop.sfrf %9696
  %p9698 = scmp.eq.s32.totalorder %s9697, 0
  %p9699 = pneg %p9698
  %9701 = shalt.err (%p9699)
  %s9702 = scalar_lea.sflag [#allocation5], 2
  %9703 = vsyncmov %s9702
  %s9704 = vpop.sfrf %9703
  %p9705 = scmp.eq.s32.totalorder %s9704, 0
  %p9706 = pneg %p9705
  %9708 = shalt.err (%p9706)

</llo_original>
